<compile_context>
chip_gen: v5e
topology: v5e:2x2
jax: 0.10.0
libtpu: 0.0.40
codegen_flags: <defaults>
</compile_context>

<pallas_src>
import functools

import jax
import jax.numpy as jnp
from jax.experimental import pallas as pl
from jax.experimental.pallas import tpu as pltpu

# ----------------------------------------------------------------------------
# Model hyper-parameters (small, consistent with the module's constructor)
# ----------------------------------------------------------------------------
INPUT_CHANNELS = 4
CONV_CHANNELS = [8, 16, 32]
KERNEL_SIZES = [3, 5, 7]
LSTM_HIDDEN = 32
NUM_LSTM_LAYERS = 2
NUM_CLASSES = 3
BATCH = 2
SEQ_LEN = 16
BN_EPS = 1e-5
LN_EPS = 1e-5

H = LSTM_HIDDEN
_VMEM = pl.BlockSpec(memory_space=pltpu.MemorySpace.VMEM)


# ----------------------------------------------------------------------------
# Single fused kernel: conv stack -> BiLSTM x2 -> head
# ----------------------------------------------------------------------------
def fused_forward_kernel(
    # conv input (channels-last) and conv/BN weights
    x_ref,
    w0_ref, s0_ref, t0_ref,
    w1_ref, s1_ref, t1_ref,
    w2_ref, s2_ref, t2_ref,
    # LSTM layer 1: interleaved gate layout [i_f i_b | f_f f_b | o_f o_b | g_f g_b]
    wih1f_ref, wih1b_ref, b1_ref, whh1_ref,
    # LSTM layer 2 forward direction (gate layout i|f|o|g)
    wih2ff_ref, wih2fb_ref, b2f_ref, whh2f_ref,
    # LSTM layer 2 backward direction (single zero-state step at t = L-1)
    wih2b_ref, b2b_ref,
    # head
    fc1w_ref, fc1b_ref, lng_ref, lnb_ref, fc2w_ref, fc2b_ref,
    # output
    out_ref,
    # scratch
    pad0_sc, pad1_sc, pad2_sc, gx1_sc, seqf_sc, seqb_sc, gx2_sc,
    *, B, L):

    # ---------------- Conv1d (same padding) + folded BN + ReLU ----------------
    def conv_bn_relu(pad_sc, src, w_ref, scale_ref, shift_ref, K):
        pad = K // 2
        c_in = src.shape[-1]
        halo = jnp.zeros((B, pad, c_in), jnp.float32)
        pad_sc[:, pl.ds(0, pad), :] = halo            # zero only the halo rows
        pad_sc[:, pl.ds(L + pad, pad), :] = halo
        pad_sc[:, pl.ds(pad, L), :] = src             # place input in the middle
        acc = jnp.einsum("blc,cd->bld", pad_sc[:, pl.ds(0, L), :], w_ref[0],
                         preferred_element_type=jnp.float32)
        for k in range(1, K):                         # static unrolled taps
            acc = acc + jnp.einsum("blc,cd->bld",
                                   pad_sc[:, pl.ds(k, L), :], w_ref[k],
                                   preferred_element_type=jnp.float32)
        return jnp.maximum(acc * scale_ref[...] + shift_ref[...], 0.0)

    h = conv_bn_relu(pad0_sc, x_ref[...], w0_ref, s0_ref, t0_ref, KERNEL_SIZES[0])
    h = conv_bn_relu(pad1_sc, h,          w1_ref, s1_ref, t1_ref, KERNEL_SIZES[1])
    h = conv_bn_relu(pad2_sc, h,          w2_ref, s2_ref, t2_ref, KERNEL_SIZES[2])
    # h: (B, L, 32)

    # ------------- Layer-1 BiLSTM: hoisted input projection (both dirs) -------
    # Interleaved-by-gate column layout; fwd weights occupy the even H-blocks,
    # bwd weights the odd H-blocks (other blocks are zero), so the two
    # projections can simply be ADDED with antiparallel time indices.
    gx1f = jnp.einsum("blc,cg->blg", h, wih1f_ref[...],
                      preferred_element_type=jnp.float32) + b1_ref[...]
    gx1b = jnp.einsum("blc,cg->blg", h, wih1b_ref[...],
                      preferred_element_type=jnp.float32)

    # One-shot fill of the TIME-MAJOR gate scratch (off the dependent chain):
    # step s consumes fwd gates at time s and bwd gates at time L-1-s.
    for t in range(L):
        gx1_sc[t] = gx1f[:, t, :] + gx1b[:, L - 1 - t, :]

    # ------------- Layer-1 recurrence: both directions stacked in (B, 2H) -----
    h_cat = jnp.zeros((B, 2 * H), jnp.float32)      # [h_fwd | h_bwd]
    c_cat = jnp.zeros((B, 2 * H), jnp.float32)
    h1b_last = None
    for s in range(L):                              # fully unrolled (L static)
        gates = gx1_sc[s] + jnp.dot(h_cat, whh1_ref[...],
                                    preferred_element_type=jnp.float32)  # (B, 8H)
        sig = jax.nn.sigmoid(gates[:, 0:6 * H])     # i,f,o for BOTH dirs, one pass
        g_cat = jnp.tanh(gates[:, 6 * H:8 * H])     # cell candidates, both dirs
        c_cat = sig[:, 2 * H:4 * H] * c_cat + sig[:, 0:2 * H] * g_cat
        h_cat = sig[:, 4 * H:6 * H] * jnp.tanh(c_cat)
        # Output-sequence stores are pure sinks (nothing in this loop reads them).
        seqf_sc[:, pl.ds(s, 1), :] = h_cat[:, None, 0:H]           # fwd at time s
        seqb_sc[:, pl.ds(L - 1 - s, 1), :] = h_cat[:, None, H:2 * H]  # bwd at L-1-s
        if s == 0:
            h1b_last = h_cat[:, H:2 * H]            # layer-1 bwd output at t = L-1
    h1f_last = h_cat[:, 0:H]                        # layer-1 fwd output at t = L-1

    # ------------- Layer-2: forward-gate projection only (4H, not 8H) ---------
    # TODO(synk): inter-layer LSTM dropout (p=0.3) is identity (eval mode).
    gx2 = (jnp.einsum("blh,hg->blg", seqf_sc[...], wih2ff_ref[...],
                      preferred_element_type=jnp.float32)
           + jnp.einsum("blh,hg->blg", seqb_sc[...], wih2fb_ref[...],
                        preferred_element_type=jnp.float32)
           + b2f_ref[...])                          # (B, L, 4H)
    for t in range(L):
        gx2_sc[t] = gx2[:, t, :]                    # time-major, off the chain

    # Layer-2 backward direction: its output at time L-1 is its FIRST step
    # (zero initial state), which is all lstm_out[:, -1, :] needs.
    x2_last = jnp.concatenate([h1f_last, h1b_last], axis=-1)        # (B, 2H)
    gates_b2 = (jnp.dot(x2_last, wih2b_ref[...],
                        preferred_element_type=jnp.float32) + b2b_ref[...])
    sig_b2 = jax.nn.sigmoid(gates_b2[:, 0:3 * H])
    g_b2 = jnp.tanh(gates_b2[:, 3 * H:4 * H])
    c_b2 = sig_b2[:, 0:H] * g_b2                    # f * 0 + i * g
    h_b2 = sig_b2[:, 2 * H:3 * H] * jnp.tanh(c_b2)

    # Layer-2 forward direction: full recurrence, keep only the final hidden.
    h2 = jnp.zeros((B, H), jnp.float32)
    c2 = jnp.zeros((B, H), jnp.float32)
    for s in range(L):
        gates = gx2_sc[s] + jnp.dot(h2, whh2f_ref[...],
                                    preferred_element_type=jnp.float32)  # (B, 4H)
        sig = jax.nn.sigmoid(gates[:, 0:3 * H])
        g = jnp.tanh(gates[:, 3 * H:4 * H])
        c2 = sig[:, H:2 * H] * c2 + sig[:, 0:H] * g
        h2 = sig[:, 2 * H:3 * H] * jnp.tanh(c2)

    # ---------------- Head: fc1 + ReLU + LayerNorm + (dropout) + fc2 ----------
    feat = jnp.concatenate([h2, h_b2], axis=-1)     # (B, 2H) = lstm_out[:, -1, :]
    z = jnp.dot(feat, fc1w_ref[...], preferred_element_type=jnp.float32) + fc1b_ref[...]
    z = jnp.maximum(z, 0.0)
    mean = jnp.mean(z, axis=-1, keepdims=True)
    var = jnp.mean((z - mean) ** 2, axis=-1, keepdims=True)
    zn = (z - mean) * jax.lax.rsqrt(var + LN_EPS)
    zn = zn * lng_ref[...] + lnb_ref[...]
    out_ref[...] = (jnp.dot(zn, fc2w_ref[...], preferred_element_type=jnp.float32)
                    + fc2b_ref[...])


# ----------------------------------------------------------------------------
# Parameter construction (deterministic, synthetic, PyTorch layouts)
# ----------------------------------------------------------------------------
def make_params(key):
    params = {"convs": [], "lstm": []}
    prev_c = INPUT_CHANNELS
    for c_out, k in zip(CONV_CHANNELS, KERNEL_SIZES):
        key, kw, kb, kg, kbe = jax.random.split(key, 5)
        params["convs"].append(dict(
            w=0.1 * jax.random.normal(kw, (c_out, prev_c, k), jnp.float32),
            b=0.1 * jax.random.normal(kb, (c_out,), jnp.float32),
            gamma=1.0 + 0.1 * jax.random.normal(kg, (c_out,), jnp.float32),
            beta=0.1 * jax.random.normal(kbe, (c_out,), jnp.float32),
            mean=jnp.zeros((c_out,), jnp.float32),
            var=jnp.ones((c_out,), jnp.float32),
            ksize=k))
        prev_c = c_out

    in_dim = CONV_CHANNELS[-1]
    for _ in range(NUM_LSTM_LAYERS):
        layer_p = {}
        for direction in ("fwd", "bwd"):
            key, k1, k2, k3, k4 = jax.random.split(key, 5)
            layer_p[direction] = (
                0.1 * jax.random.normal(k1, (4 * H, in_dim), jnp.float32),  # W_ih
                0.1 * jax.random.normal(k2, (4 * H, H), jnp.float32),       # W_hh
                0.05 * jax.random.normal(k3, (4 * H,), jnp.float32),        # b_ih
                0.05 * jax.random.normal(k4, (4 * H,), jnp.float32))        # b_hh
        params["lstm"].append(layer_p)
        in_dim = 2 * H

    key, k1, k2, k3, k4, k5, k6 = jax.random.split(key, 7)
    params["fc1_w"] = 0.1 * jax.random.normal(k1, (H, 2 * H), jnp.float32)
    params["fc1_b"] = 0.1 * jax.random.normal(k2, (H,), jnp.float32)
    params["ln_g"] = 1.0 + 0.1 * jax.random.normal(k3, (H,), jnp.float32)
    params["ln_b"] = 0.1 * jax.random.normal(k4, (H,), jnp.float32)
    params["fc2_w"] = 0.1 * jax.random.normal(k5, (NUM_CLASSES, H), jnp.float32)
    params["fc2_b"] = 0.1 * jax.random.normal(k6, (NUM_CLASSES,), jnp.float32)
    return params


# ----------------------------------------------------------------------------
# Offline weight preparation (gate reorder, transposes, interleave, BN folding)
# ----------------------------------------------------------------------------
def _permute_gates_rows(w):
    """PyTorch gate order (i, f, g, o) -> kernel order (i, f, o, g), leading axis."""
    return jnp.concatenate([w[0:H], w[H:2 * H], w[3 * H:4 * H], w[2 * H:3 * H]],
                           axis=0)


def _dir_weights(p):
    w_ih, w_hh, b_ih, b_hh = p
    return (_permute_gates_rows(w_ih).T,          # (D, 4H), column blocks [i f o g]
            _permute_gates_rows(w_hh).T,          # (H, 4H)
            _permute_gates_rows(b_ih + b_hh))     # (4H,)


def _interleave_cols(wf, wb):
    """[i f o g] fwd/bwd column blocks -> [i_f i_b f_f f_b o_f o_b g_f g_b]."""
    blocks = []
    for g in range(4):
        blocks.append(wf[..., g * H:(g + 1) * H])
        blocks.append(wb[..., g * H:(g + 1) * H])
    return jnp.concatenate(blocks, axis=-1)


def prepare_kernel_params(params):
    args = []
    # Conv + folded BN (eval-mode running stats).
    for cp in params["convs"]:
        scale = cp["gamma"] / jnp.sqrt(cp["var"] + BN_EPS)
        shift = cp["beta"] + (cp["b"] - cp["mean"]) * scale
        w_kco = jnp.transpose(cp["w"], (2, 1, 0))            # (K, C_in, C_out)
        args += [w_kco, scale.reshape(1, 1, -1), shift.reshape(1, 1, -1)]

    # LSTM layer 1: interleaved gate layout, block-diagonal recurrent weight.
    wihf, whhf, bf = _dir_weights(params["lstm"][0]["fwd"])
    wihb, whhb, bb = _dir_weights(params["lstm"][0]["bwd"])
    zero_ih = jnp.zeros_like(wihf)
    zero_hh = jnp.zeros_like(whhf)
    wih1f_il = _interleave_cols(wihf, zero_ih)               # (32, 8H)  fwd blocks
    wih1b_il = _interleave_cols(zero_ih, wihb)               # (32, 8H)  bwd blocks
    b1_il = _interleave_cols(bf, bb).reshape(1, 1, -1)       # (1, 1, 8H)
    whh1_bd = jnp.concatenate(
        [_interleave_cols(whhf, zero_hh),                    # rows 0:H  (from h_f)
         _interleave_cols(zero_hh, whhb)], axis=0)           # rows H:2H (from h_b)
    args += [wih1f_il, wih1b_il, b1_il, whh1_bd]

    # LSTM layer 2, forward direction (input split by fwd/bwd feature halves).
    wihf2, whhf2, bf2 = _dir_weights(params["lstm"][1]["fwd"])
    args += [wihf2[:H, :], wihf2[H:, :], bf2.reshape(1, 1, -1), whhf2]

    # LSTM layer 2, backward direction: only the zero-state step at t = L-1 is
    # needed, so W_hh of this direction is unused by the forward pass.
    wihb2, _whhb2, bb2 = _dir_weights(params["lstm"][1]["bwd"])
    args += [wihb2, bb2.reshape(1, -1)]

    # Head (PyTorch Linear weights are (out, in); kernel uses x @ W^T).
    args += [params["fc1_w"].T, params["fc1_b"].reshape(1, -1),
             params["ln_g"].reshape(1, -1), params["ln_b"].reshape(1, -1),
             params["fc2_w"].T, params["fc2_b"].reshape(1, -1)]
    return args


# ----------------------------------------------------------------------------
# Full forward pass: one pallas_call
# ----------------------------------------------------------------------------
def cnn_lstm_forward(x_ncl, params):
    kp = prepare_kernel_params(params)
    x_blc = jnp.transpose(x_ncl, (0, 2, 1)).astype(jnp.float32)   # NCL -> (B, L, C)
    B, L, _ = x_blc.shape

    kernel = functools.partial(fused_forward_kernel, B=B, L=L)
    cost = pl.CostEstimate(flops=3_200_000, transcendentals=16_000,
                           bytes_accessed=300_000)

    return pl.pallas_call(
        kernel,
        out_shape=jax.ShapeDtypeStruct((B, NUM_CLASSES), jnp.float32),
        in_specs=[_VMEM] * (1 + len(kp)),
        out_specs=_VMEM,
        scratch_shapes=[
            pltpu.VMEM((B, L + KERNEL_SIZES[0] - 1, INPUT_CHANNELS), jnp.float32),
            pltpu.VMEM((B, L + KERNEL_SIZES[1] - 1, CONV_CHANNELS[0]), jnp.float32),
            pltpu.VMEM((B, L + KERNEL_SIZES[2] - 1, CONV_CHANNELS[1]), jnp.float32),
            pltpu.VMEM((L, B, 8 * H), jnp.float32),   # layer-1 gates, time-major
            pltpu.VMEM((B, L, H), jnp.float32),       # layer-1 fwd outputs
            pltpu.VMEM((B, L, H), jnp.float32),       # layer-1 bwd outputs
            pltpu.VMEM((L, B, 4 * H), jnp.float32),   # layer-2 fwd gates, time-major
        ],
        compiler_params=pltpu.CompilerParams(vmem_limit_bytes=16 * 1024 * 1024),
        cost_estimate=cost,
    )(x_blc, *kp)


if __name__ == "__main__":
    root = jax.random.PRNGKey(0)
    k_x, k_p = jax.random.split(root)
    x = jax.random.normal(k_x, (BATCH, INPUT_CHANNELS, SEQ_LEN), jnp.float32)
    params = make_params(k_p)

    forward = jax.jit(cnn_lstm_forward)
    logits = forward(x, params)
    logits = jax.block_until_ready(logits)
    assert logits.shape == (BATCH, NUM_CLASSES)
    assert bool(jnp.all(jnp.isfinite(logits)))
    print("KERNEL_OK")
</pallas_src>

<mosaic_0001>
module attributes {stable_mosaic.version = 11 : i64} {
  func.func @fused_forward_kernel(%arg0: memref<2x16x4xf32, #tpu.memory_space<vmem>>, %arg1: memref<3x4x8xf32, #tpu.memory_space<vmem>>, %arg2: memref<1x1x8xf32, #tpu.memory_space<vmem>>, %arg3: memref<1x1x8xf32, #tpu.memory_space<vmem>>, %arg4: memref<5x8x16xf32, #tpu.memory_space<vmem>>, %arg5: memref<1x1x16xf32, #tpu.memory_space<vmem>>, %arg6: memref<1x1x16xf32, #tpu.memory_space<vmem>>, %arg7: memref<7x16x32xf32, #tpu.memory_space<vmem>>, %arg8: memref<1x1x32xf32, #tpu.memory_space<vmem>>, %arg9: memref<1x1x32xf32, #tpu.memory_space<vmem>>, %arg10: memref<32x256xf32, #tpu.memory_space<vmem>>, %arg11: memref<32x256xf32, #tpu.memory_space<vmem>>, %arg12: memref<1x1x256xf32, #tpu.memory_space<vmem>>, %arg13: memref<64x256xf32, #tpu.memory_space<vmem>>, %arg14: memref<32x128xf32, #tpu.memory_space<vmem>>, %arg15: memref<32x128xf32, #tpu.memory_space<vmem>>, %arg16: memref<1x1x128xf32, #tpu.memory_space<vmem>>, %arg17: memref<32x128xf32, #tpu.memory_space<vmem>>, %arg18: memref<64x128xf32, #tpu.memory_space<vmem>>, %arg19: memref<1x128xf32, #tpu.memory_space<vmem>>, %arg20: memref<64x32xf32, #tpu.memory_space<vmem>>, %arg21: memref<1x32xf32, #tpu.memory_space<vmem>>, %arg22: memref<1x32xf32, #tpu.memory_space<vmem>>, %arg23: memref<1x32xf32, #tpu.memory_space<vmem>>, %arg24: memref<32x3xf32, #tpu.memory_space<vmem>>, %arg25: memref<1x3xf32, #tpu.memory_space<vmem>>, %arg26: memref<2x3xf32, #tpu.memory_space<vmem>>, %arg27: memref<2x18x4xf32, #tpu.memory_space<vmem>>, %arg28: memref<2x20x8xf32, #tpu.memory_space<vmem>>, %arg29: memref<2x22x16xf32, #tpu.memory_space<vmem>>, %arg30: memref<16x2x256xf32, #tpu.memory_space<vmem>>, %arg31: memref<2x16x32xf32, #tpu.memory_space<vmem>>, %arg32: memref<2x16x32xf32, #tpu.memory_space<vmem>>, %arg33: memref<16x2x128xf32, #tpu.memory_space<vmem>>) attributes {dimension_semantics = [], scalar_prefetch = 0 : i64, scratch_operands = 7 : i64, tpu.core_type = #tpu.core_type<tc>} {
    %c0 = arith.constant 0 : index
    %c0_0 = arith.constant 0 : index
    %c0_1 = arith.constant 0 : index
    %0 = vector.load %arg0[%c0, %c0_0, %c0_1] : memref<2x16x4xf32, #tpu.memory_space<vmem>>, vector<2x16x4xf32>
    %cst = arith.constant 0.000000e+00 : f32
    %1 = vector.broadcast %cst : f32 to vector<2x1x4xf32>
    %c0_2 = arith.constant 0 : index
    %c0_3 = arith.constant 0 : index
    %c0_4 = arith.constant 0 : index
    %2 = vector.load %arg27[%c0_2, %c0_3, %c0_4] : memref<2x18x4xf32, #tpu.memory_space<vmem>>, vector<2x1x4xf32>
    tpu.vector_store %arg27[%c0_2, %c0_3, %c0_4], %1 {strides = array<i32>} : memref<2x18x4xf32, #tpu.memory_space<vmem>>, vector<2x1x4xf32>,
    %c0_5 = arith.constant 0 : index
    %c17 = arith.constant 17 : index
    %c0_6 = arith.constant 0 : index
    %3 = vector.load %arg27[%c0_5, %c17, %c0_6] : memref<2x18x4xf32, #tpu.memory_space<vmem>>, vector<2x1x4xf32>
    tpu.vector_store %arg27[%c0_5, %c17, %c0_6], %1 {strides = array<i32>} : memref<2x18x4xf32, #tpu.memory_space<vmem>>, vector<2x1x4xf32>,
    %c0_7 = arith.constant 0 : index
    %c1 = arith.constant 1 : index
    %c0_8 = arith.constant 0 : index
    %4 = vector.load %arg27[%c0_7, %c1, %c0_8] : memref<2x18x4xf32, #tpu.memory_space<vmem>>, vector<2x16x4xf32>
    tpu.vector_store %arg27[%c0_7, %c1, %c0_8], %0 {strides = array<i32>} : memref<2x18x4xf32, #tpu.memory_space<vmem>>, vector<2x16x4xf32>,
    %c0_9 = arith.constant 0 : index
    %c0_10 = arith.constant 0 : index
    %c0_11 = arith.constant 0 : index
    %5 = vector.load %arg27[%c0_9, %c0_10, %c0_11] : memref<2x18x4xf32, #tpu.memory_space<vmem>>, vector<2x16x4xf32>
    %c0_12 = arith.constant 0 : index
    %c0_13 = arith.constant 0 : index
    %c0_14 = arith.constant 0 : index
    %6 = vector.load %arg1[%c0_12, %c0_13, %c0_14] : memref<3x4x8xf32, #tpu.memory_space<vmem>>, vector<1x4x8xf32>
    %7 = vector.shape_cast %6 : vector<1x4x8xf32> to vector<4x8xf32>
    "tpu.trace_start"() <{level = 10 : i32, message = "blc,cd->bld"}> : () -> ()
    %cst_15 = arith.constant dense<0.000000e+00> : vector<2x16x8xf32>
    %8 = tpu.matmul %5, %7, %cst_15 {dimension_numbers = #tpu.dot_dimension_numbers<[2], [0], [0, 1], [1], [0, 0, 0, 1, 1, 1], [], []>} : vector<2x16x4xf32>, vector<4x8xf32>, vector<2x16x8xf32> -> vector<2x16x8xf32>
    "tpu.trace_stop"() : () -> ()
    %c0_16 = arith.constant 0 : index
    %c1_17 = arith.constant 1 : index
    %c0_18 = arith.constant 0 : index
    %9 = vector.load %arg27[%c0_16, %c1_17, %c0_18] : memref<2x18x4xf32, #tpu.memory_space<vmem>>, vector<2x16x4xf32>
    %c1_19 = arith.constant 1 : index
    %c0_20 = arith.constant 0 : index
    %c0_21 = arith.constant 0 : index
    %10 = vector.load %arg1[%c1_19, %c0_20, %c0_21] : memref<3x4x8xf32, #tpu.memory_space<vmem>>, vector<1x4x8xf32>
    %11 = vector.shape_cast %10 : vector<1x4x8xf32> to vector<4x8xf32>
    "tpu.trace_start"() <{level = 10 : i32, message = "blc,cd->bld"}> : () -> ()
    %cst_22 = arith.constant dense<0.000000e+00> : vector<2x16x8xf32>
    %12 = tpu.matmul %9, %11, %cst_22 {dimension_numbers = #tpu.dot_dimension_numbers<[2], [0], [0, 1], [1], [0, 0, 0, 1, 1, 1], [], []>} : vector<2x16x4xf32>, vector<4x8xf32>, vector<2x16x8xf32> -> vector<2x16x8xf32>
    "tpu.trace_stop"() : () -> ()
    %13 = arith.addf %8, %12 : vector<2x16x8xf32>
    %c0_23 = arith.constant 0 : index
    %c2 = arith.constant 2 : index
    %c0_24 = arith.constant 0 : index
    %14 = vector.load %arg27[%c0_23, %c2, %c0_24] : memref<2x18x4xf32, #tpu.memory_space<vmem>>, vector<2x16x4xf32>
    %c2_25 = arith.constant 2 : index
    %c0_26 = arith.constant 0 : index
    %c0_27 = arith.constant 0 : index
    %15 = vector.load %arg1[%c2_25, %c0_26, %c0_27] : memref<3x4x8xf32, #tpu.memory_space<vmem>>, vector<1x4x8xf32>
    %16 = vector.shape_cast %15 : vector<1x4x8xf32> to vector<4x8xf32>
    "tpu.trace_start"() <{level = 10 : i32, message = "blc,cd->bld"}> : () -> ()
    %cst_28 = arith.constant dense<0.000000e+00> : vector<2x16x8xf32>
    %17 = tpu.matmul %14, %16, %cst_28 {dimension_numbers = #tpu.dot_dimension_numbers<[2], [0], [0, 1], [1], [0, 0, 0, 1, 1, 1], [], []>} : vector<2x16x4xf32>, vector<4x8xf32>, vector<2x16x8xf32> -> vector<2x16x8xf32>
    "tpu.trace_stop"() : () -> ()
    %18 = arith.addf %13, %17 : vector<2x16x8xf32>
    %c0_29 = arith.constant 0 : index
    %c0_30 = arith.constant 0 : index
    %c0_31 = arith.constant 0 : index
    %19 = vector.load %arg2[%c0_29, %c0_30, %c0_31] : memref<1x1x8xf32, #tpu.memory_space<vmem>>, vector<1x1x8xf32>
    %20 = vector.broadcast %19 : vector<1x1x8xf32> to vector<2x16x8xf32>
    %21 = arith.mulf %18, %20 : vector<2x16x8xf32>
    %c0_32 = arith.constant 0 : index
    %c0_33 = arith.constant 0 : index
    %c0_34 = arith.constant 0 : index
    %22 = vector.load %arg3[%c0_32, %c0_33, %c0_34] : memref<1x1x8xf32, #tpu.memory_space<vmem>>, vector<1x1x8xf32>
    %23 = vector.broadcast %22 : vector<1x1x8xf32> to vector<2x16x8xf32>
    %24 = arith.addf %21, %23 : vector<2x16x8xf32>
    %cst_35 = arith.constant 0.000000e+00 : f32
    %25 = vector.broadcast %cst_35 : f32 to vector<2x16x8xf32>
    %26 = arith.maximumf %24, %25 : vector<2x16x8xf32>
    %cst_36 = arith.constant 0.000000e+00 : f32
    %27 = vector.broadcast %cst_36 : f32 to vector<2x2x8xf32>
    %c0_37 = arith.constant 0 : index
    %c0_38 = arith.constant 0 : index
    %c0_39 = arith.constant 0 : index
    %28 = vector.load %arg28[%c0_37, %c0_38, %c0_39] : memref<2x20x8xf32, #tpu.memory_space<vmem>>, vector<2x2x8xf32>
    tpu.vector_store %arg28[%c0_37, %c0_38, %c0_39], %27 {strides = array<i32>} : memref<2x20x8xf32, #tpu.memory_space<vmem>>, vector<2x2x8xf32>,
    %c0_40 = arith.constant 0 : index
    %c18 = arith.constant 18 : index
    %c0_41 = arith.constant 0 : index
    %29 = vector.load %arg28[%c0_40, %c18, %c0_41] : memref<2x20x8xf32, #tpu.memory_space<vmem>>, vector<2x2x8xf32>
    tpu.vector_store %arg28[%c0_40, %c18, %c0_41], %27 {strides = array<i32>} : memref<2x20x8xf32, #tpu.memory_space<vmem>>, vector<2x2x8xf32>,
    %c0_42 = arith.constant 0 : index
    %c2_43 = arith.constant 2 : index
    %c0_44 = arith.constant 0 : index
    %30 = vector.load %arg28[%c0_42, %c2_43, %c0_44] : memref<2x20x8xf32, #tpu.memory_space<vmem>>, vector<2x16x8xf32>
    tpu.vector_store %arg28[%c0_42, %c2_43, %c0_44], %26 {strides = array<i32>} : memref<2x20x8xf32, #tpu.memory_space<vmem>>, vector<2x16x8xf32>,
    %c0_45 = arith.constant 0 : index
    %c0_46 = arith.constant 0 : index
    %c0_47 = arith.constant 0 : index
    %31 = vector.load %arg28[%c0_45, %c0_46, %c0_47] : memref<2x20x8xf32, #tpu.memory_space<vmem>>, vector<2x16x8xf32>
    %c0_48 = arith.constant 0 : index
    %c0_49 = arith.constant 0 : index
    %c0_50 = arith.constant 0 : index
    %32 = vector.load %arg4[%c0_48, %c0_49, %c0_50] : memref<5x8x16xf32, #tpu.memory_space<vmem>>, vector<1x8x16xf32>
    %33 = vector.shape_cast %32 : vector<1x8x16xf32> to vector<8x16xf32>
    "tpu.trace_start"() <{level = 10 : i32, message = "blc,cd->bld"}> : () -> ()
    %cst_51 = arith.constant dense<0.000000e+00> : vector<2x16x16xf32>
    %34 = tpu.matmul %31, %33, %cst_51 {dimension_numbers = #tpu.dot_dimension_numbers<[2], [0], [0, 1], [1], [0, 0, 0, 1, 1, 1], [], []>} : vector<2x16x8xf32>, vector<8x16xf32>, vector<2x16x16xf32> -> vector<2x16x16xf32>
    "tpu.trace_stop"() : () -> ()
    %c0_52 = arith.constant 0 : index
    %c1_53 = arith.constant 1 : index
    %c0_54 = arith.constant 0 : index
    %35 = vector.load %arg28[%c0_52, %c1_53, %c0_54] : memref<2x20x8xf32, #tpu.memory_space<vmem>>, vector<2x16x8xf32>
    %c1_55 = arith.constant 1 : index
    %c0_56 = arith.constant 0 : index
    %c0_57 = arith.constant 0 : index
    %36 = vector.load %arg4[%c1_55, %c0_56, %c0_57] : memref<5x8x16xf32, #tpu.memory_space<vmem>>, vector<1x8x16xf32>
    %37 = vector.shape_cast %36 : vector<1x8x16xf32> to vector<8x16xf32>
    "tpu.trace_start"() <{level = 10 : i32, message = "blc,cd->bld"}> : () -> ()
    %cst_58 = arith.constant dense<0.000000e+00> : vector<2x16x16xf32>
    %38 = tpu.matmul %35, %37, %cst_58 {dimension_numbers = #tpu.dot_dimension_numbers<[2], [0], [0, 1], [1], [0, 0, 0, 1, 1, 1], [], []>} : vector<2x16x8xf32>, vector<8x16xf32>, vector<2x16x16xf32> -> vector<2x16x16xf32>
    "tpu.trace_stop"() : () -> ()
    %39 = arith.addf %34, %38 : vector<2x16x16xf32>
    %c0_59 = arith.constant 0 : index
    %c2_60 = arith.constant 2 : index
    %c0_61 = arith.constant 0 : index
    %40 = vector.load %arg28[%c0_59, %c2_60, %c0_61] : memref<2x20x8xf32, #tpu.memory_space<vmem>>, vector<2x16x8xf32>
    %c2_62 = arith.constant 2 : index
    %c0_63 = arith.constant 0 : index
    %c0_64 = arith.constant 0 : index
    %41 = vector.load %arg4[%c2_62, %c0_63, %c0_64] : memref<5x8x16xf32, #tpu.memory_space<vmem>>, vector<1x8x16xf32>
    %42 = vector.shape_cast %41 : vector<1x8x16xf32> to vector<8x16xf32>
    "tpu.trace_start"() <{level = 10 : i32, message = "blc,cd->bld"}> : () -> ()
    %cst_65 = arith.constant dense<0.000000e+00> : vector<2x16x16xf32>
    %43 = tpu.matmul %40, %42, %cst_65 {dimension_numbers = #tpu.dot_dimension_numbers<[2], [0], [0, 1], [1], [0, 0, 0, 1, 1, 1], [], []>} : vector<2x16x8xf32>, vector<8x16xf32>, vector<2x16x16xf32> -> vector<2x16x16xf32>
    "tpu.trace_stop"() : () -> ()
    %44 = arith.addf %39, %43 : vector<2x16x16xf32>
    %c0_66 = arith.constant 0 : index
    %c3 = arith.constant 3 : index
    %c0_67 = arith.constant 0 : index
    %45 = vector.load %arg28[%c0_66, %c3, %c0_67] : memref<2x20x8xf32, #tpu.memory_space<vmem>>, vector<2x16x8xf32>
    %c3_68 = arith.constant 3 : index
    %c0_69 = arith.constant 0 : index
    %c0_70 = arith.constant 0 : index
    %46 = vector.load %arg4[%c3_68, %c0_69, %c0_70] : memref<5x8x16xf32, #tpu.memory_space<vmem>>, vector<1x8x16xf32>
    %47 = vector.shape_cast %46 : vector<1x8x16xf32> to vector<8x16xf32>
    "tpu.trace_start"() <{level = 10 : i32, message = "blc,cd->bld"}> : () -> ()
    %cst_71 = arith.constant dense<0.000000e+00> : vector<2x16x16xf32>
    %48 = tpu.matmul %45, %47, %cst_71 {dimension_numbers = #tpu.dot_dimension_numbers<[2], [0], [0, 1], [1], [0, 0, 0, 1, 1, 1], [], []>} : vector<2x16x8xf32>, vector<8x16xf32>, vector<2x16x16xf32> -> vector<2x16x16xf32>
    "tpu.trace_stop"() : () -> ()
    %49 = arith.addf %44, %48 : vector<2x16x16xf32>
    %c0_72 = arith.constant 0 : index
    %c4 = arith.constant 4 : index
    %c0_73 = arith.constant 0 : index
    %50 = vector.load %arg28[%c0_72, %c4, %c0_73] : memref<2x20x8xf32, #tpu.memory_space<vmem>>, vector<2x16x8xf32>
    %c4_74 = arith.constant 4 : index
    %c0_75 = arith.constant 0 : index
    %c0_76 = arith.constant 0 : index
    %51 = vector.load %arg4[%c4_74, %c0_75, %c0_76] : memref<5x8x16xf32, #tpu.memory_space<vmem>>, vector<1x8x16xf32>
    %52 = vector.shape_cast %51 : vector<1x8x16xf32> to vector<8x16xf32>
    "tpu.trace_start"() <{level = 10 : i32, message = "blc,cd->bld"}> : () -> ()
    %cst_77 = arith.constant dense<0.000000e+00> : vector<2x16x16xf32>
    %53 = tpu.matmul %50, %52, %cst_77 {dimension_numbers = #tpu.dot_dimension_numbers<[2], [0], [0, 1], [1], [0, 0, 0, 1, 1, 1], [], []>} : vector<2x16x8xf32>, vector<8x16xf32>, vector<2x16x16xf32> -> vector<2x16x16xf32>
    "tpu.trace_stop"() : () -> ()
    %54 = arith.addf %49, %53 : vector<2x16x16xf32>
    %c0_78 = arith.constant 0 : index
    %c0_79 = arith.constant 0 : index
    %c0_80 = arith.constant 0 : index
    %55 = vector.load %arg5[%c0_78, %c0_79, %c0_80] : memref<1x1x16xf32, #tpu.memory_space<vmem>>, vector<1x1x16xf32>
    %56 = vector.broadcast %55 : vector<1x1x16xf32> to vector<2x16x16xf32>
    %57 = arith.mulf %54, %56 : vector<2x16x16xf32>
    %c0_81 = arith.constant 0 : index
    %c0_82 = arith.constant 0 : index
    %c0_83 = arith.constant 0 : index
    %58 = vector.load %arg6[%c0_81, %c0_82, %c0_83] : memref<1x1x16xf32, #tpu.memory_space<vmem>>, vector<1x1x16xf32>
    %59 = vector.broadcast %58 : vector<1x1x16xf32> to vector<2x16x16xf32>
    %60 = arith.addf %57, %59 : vector<2x16x16xf32>
    %cst_84 = arith.constant 0.000000e+00 : f32
    %61 = vector.broadcast %cst_84 : f32 to vector<2x16x16xf32>
    %62 = arith.maximumf %60, %61 : vector<2x16x16xf32>
    %cst_85 = arith.constant 0.000000e+00 : f32
    %63 = vector.broadcast %cst_85 : f32 to vector<2x3x16xf32>
    %c0_86 = arith.constant 0 : index
    %c0_87 = arith.constant 0 : index
    %c0_88 = arith.constant 0 : index
    %64 = vector.load %arg29[%c0_86, %c0_87, %c0_88] : memref<2x22x16xf32, #tpu.memory_space<vmem>>, vector<2x3x16xf32>
    tpu.vector_store %arg29[%c0_86, %c0_87, %c0_88], %63 {strides = array<i32>} : memref<2x22x16xf32, #tpu.memory_space<vmem>>, vector<2x3x16xf32>,
    %c0_89 = arith.constant 0 : index
    %c19 = arith.constant 19 : index
    %c0_90 = arith.constant 0 : index
    %65 = vector.load %arg29[%c0_89, %c19, %c0_90] : memref<2x22x16xf32, #tpu.memory_space<vmem>>, vector<2x3x16xf32>
    tpu.vector_store %arg29[%c0_89, %c19, %c0_90], %63 {strides = array<i32>} : memref<2x22x16xf32, #tpu.memory_space<vmem>>, vector<2x3x16xf32>,
    %c0_91 = arith.constant 0 : index
    %c3_92 = arith.constant 3 : index
    %c0_93 = arith.constant 0 : index
    %66 = vector.load %arg29[%c0_91, %c3_92, %c0_93] : memref<2x22x16xf32, #tpu.memory_space<vmem>>, vector<2x16x16xf32>
    tpu.vector_store %arg29[%c0_91, %c3_92, %c0_93], %62 {strides = array<i32>} : memref<2x22x16xf32, #tpu.memory_space<vmem>>, vector<2x16x16xf32>,
    %c0_94 = arith.constant 0 : index
    %c0_95 = arith.constant 0 : index
    %c0_96 = arith.constant 0 : index
    %67 = vector.load %arg29[%c0_94, %c0_95, %c0_96] : memref<2x22x16xf32, #tpu.memory_space<vmem>>, vector<2x16x16xf32>
    %c0_97 = arith.constant 0 : index
    %c0_98 = arith.constant 0 : index
    %c0_99 = arith.constant 0 : index
    %68 = vector.load %arg7[%c0_97, %c0_98, %c0_99] : memref<7x16x32xf32, #tpu.memory_space<vmem>>, vector<1x16x32xf32>
    %69 = vector.shape_cast %68 : vector<1x16x32xf32> to vector<16x32xf32>
    "tpu.trace_start"() <{level = 10 : i32, message = "blc,cd->bld"}> : () -> ()
    %cst_100 = arith.constant dense<0.000000e+00> : vector<2x16x32xf32>
    %70 = tpu.matmul %67, %69, %cst_100 {dimension_numbers = #tpu.dot_dimension_numbers<[2], [0], [0, 1], [1], [0, 0, 0, 1, 1, 1], [], []>} : vector<2x16x16xf32>, vector<16x32xf32>, vector<2x16x32xf32> -> vector<2x16x32xf32>
    "tpu.trace_stop"() : () -> ()
    %c0_101 = arith.constant 0 : index
    %c1_102 = arith.constant 1 : index
    %c0_103 = arith.constant 0 : index
    %71 = vector.load %arg29[%c0_101, %c1_102, %c0_103] : memref<2x22x16xf32, #tpu.memory_space<vmem>>, vector<2x16x16xf32>
    %c1_104 = arith.constant 1 : index
    %c0_105 = arith.constant 0 : index
    %c0_106 = arith.constant 0 : index
    %72 = vector.load %arg7[%c1_104, %c0_105, %c0_106] : memref<7x16x32xf32, #tpu.memory_space<vmem>>, vector<1x16x32xf32>
    %73 = vector.shape_cast %72 : vector<1x16x32xf32> to vector<16x32xf32>
    "tpu.trace_start"() <{level = 10 : i32, message = "blc,cd->bld"}> : () -> ()
    %cst_107 = arith.constant dense<0.000000e+00> : vector<2x16x32xf32>
    %74 = tpu.matmul %71, %73, %cst_107 {dimension_numbers = #tpu.dot_dimension_numbers<[2], [0], [0, 1], [1], [0, 0, 0, 1, 1, 1], [], []>} : vector<2x16x16xf32>, vector<16x32xf32>, vector<2x16x32xf32> -> vector<2x16x32xf32>
    "tpu.trace_stop"() : () -> ()
    %75 = arith.addf %70, %74 : vector<2x16x32xf32>
    %c0_108 = arith.constant 0 : index
    %c2_109 = arith.constant 2 : index
    %c0_110 = arith.constant 0 : index
    %76 = vector.load %arg29[%c0_108, %c2_109, %c0_110] : memref<2x22x16xf32, #tpu.memory_space<vmem>>, vector<2x16x16xf32>
    %c2_111 = arith.constant 2 : index
    %c0_112 = arith.constant 0 : index
    %c0_113 = arith.constant 0 : index
    %77 = vector.load %arg7[%c2_111, %c0_112, %c0_113] : memref<7x16x32xf32, #tpu.memory_space<vmem>>, vector<1x16x32xf32>
    %78 = vector.shape_cast %77 : vector<1x16x32xf32> to vector<16x32xf32>
    "tpu.trace_start"() <{level = 10 : i32, message = "blc,cd->bld"}> : () -> ()
    %cst_114 = arith.constant dense<0.000000e+00> : vector<2x16x32xf32>
    %79 = tpu.matmul %76, %78, %cst_114 {dimension_numbers = #tpu.dot_dimension_numbers<[2], [0], [0, 1], [1], [0, 0, 0, 1, 1, 1], [], []>} : vector<2x16x16xf32>, vector<16x32xf32>, vector<2x16x32xf32> -> vector<2x16x32xf32>
    "tpu.trace_stop"() : () -> ()
    %80 = arith.addf %75, %79 : vector<2x16x32xf32>
    %c0_115 = arith.constant 0 : index
    %c3_116 = arith.constant 3 : index
    %c0_117 = arith.constant 0 : index
    %81 = vector.load %arg29[%c0_115, %c3_116, %c0_117] : memref<2x22x16xf32, #tpu.memory_space<vmem>>, vector<2x16x16xf32>
    %c3_118 = arith.constant 3 : index
    %c0_119 = arith.constant 0 : index
    %c0_120 = arith.constant 0 : index
    %82 = vector.load %arg7[%c3_118, %c0_119, %c0_120] : memref<7x16x32xf32, #tpu.memory_space<vmem>>, vector<1x16x32xf32>
    %83 = vector.shape_cast %82 : vector<1x16x32xf32> to vector<16x32xf32>
    "tpu.trace_start"() <{level = 10 : i32, message = "blc,cd->bld"}> : () -> ()
    %cst_121 = arith.constant dense<0.000000e+00> : vector<2x16x32xf32>
    %84 = tpu.matmul %81, %83, %cst_121 {dimension_numbers = #tpu.dot_dimension_numbers<[2], [0], [0, 1], [1], [0, 0, 0, 1, 1, 1], [], []>} : vector<2x16x16xf32>, vector<16x32xf32>, vector<2x16x32xf32> -> vector<2x16x32xf32>
    "tpu.trace_stop"() : () -> ()
    %85 = arith.addf %80, %84 : vector<2x16x32xf32>
    %c0_122 = arith.constant 0 : index
    %c4_123 = arith.constant 4 : index
    %c0_124 = arith.constant 0 : index
    %86 = vector.load %arg29[%c0_122, %c4_123, %c0_124] : memref<2x22x16xf32, #tpu.memory_space<vmem>>, vector<2x16x16xf32>
    %c4_125 = arith.constant 4 : index
    %c0_126 = arith.constant 0 : index
    %c0_127 = arith.constant 0 : index
    %87 = vector.load %arg7[%c4_125, %c0_126, %c0_127] : memref<7x16x32xf32, #tpu.memory_space<vmem>>, vector<1x16x32xf32>
    %88 = vector.shape_cast %87 : vector<1x16x32xf32> to vector<16x32xf32>
    "tpu.trace_start"() <{level = 10 : i32, message = "blc,cd->bld"}> : () -> ()
    %cst_128 = arith.constant dense<0.000000e+00> : vector<2x16x32xf32>
    %89 = tpu.matmul %86, %88, %cst_128 {dimension_numbers = #tpu.dot_dimension_numbers<[2], [0], [0, 1], [1], [0, 0, 0, 1, 1, 1], [], []>} : vector<2x16x16xf32>, vector<16x32xf32>, vector<2x16x32xf32> -> vector<2x16x32xf32>
    "tpu.trace_stop"() : () -> ()
    %90 = arith.addf %85, %89 : vector<2x16x32xf32>
    %c0_129 = arith.constant 0 : index
    %c5 = arith.constant 5 : index
    %c0_130 = arith.constant 0 : index
    %91 = vector.load %arg29[%c0_129, %c5, %c0_130] : memref<2x22x16xf32, #tpu.memory_space<vmem>>, vector<2x16x16xf32>
    %c5_131 = arith.constant 5 : index
    %c0_132 = arith.constant 0 : index
    %c0_133 = arith.constant 0 : index
    %92 = vector.load %arg7[%c5_131, %c0_132, %c0_133] : memref<7x16x32xf32, #tpu.memory_space<vmem>>, vector<1x16x32xf32>
    %93 = vector.shape_cast %92 : vector<1x16x32xf32> to vector<16x32xf32>
    "tpu.trace_start"() <{level = 10 : i32, message = "blc,cd->bld"}> : () -> ()
    %cst_134 = arith.constant dense<0.000000e+00> : vector<2x16x32xf32>
    %94 = tpu.matmul %91, %93, %cst_134 {dimension_numbers = #tpu.dot_dimension_numbers<[2], [0], [0, 1], [1], [0, 0, 0, 1, 1, 1], [], []>} : vector<2x16x16xf32>, vector<16x32xf32>, vector<2x16x32xf32> -> vector<2x16x32xf32>
    "tpu.trace_stop"() : () -> ()
    %95 = arith.addf %90, %94 : vector<2x16x32xf32>
    %c0_135 = arith.constant 0 : index
    %c6 = arith.constant 6 : index
    %c0_136 = arith.constant 0 : index
    %96 = vector.load %arg29[%c0_135, %c6, %c0_136] : memref<2x22x16xf32, #tpu.memory_space<vmem>>, vector<2x16x16xf32>
    %c6_137 = arith.constant 6 : index
    %c0_138 = arith.constant 0 : index
    %c0_139 = arith.constant 0 : index
    %97 = vector.load %arg7[%c6_137, %c0_138, %c0_139] : memref<7x16x32xf32, #tpu.memory_space<vmem>>, vector<1x16x32xf32>
    %98 = vector.shape_cast %97 : vector<1x16x32xf32> to vector<16x32xf32>
    "tpu.trace_start"() <{level = 10 : i32, message = "blc,cd->bld"}> : () -> ()
    %cst_140 = arith.constant dense<0.000000e+00> : vector<2x16x32xf32>
    %99 = tpu.matmul %96, %98, %cst_140 {dimension_numbers = #tpu.dot_dimension_numbers<[2], [0], [0, 1], [1], [0, 0, 0, 1, 1, 1], [], []>} : vector<2x16x16xf32>, vector<16x32xf32>, vector<2x16x32xf32> -> vector<2x16x32xf32>
    "tpu.trace_stop"() : () -> ()
    %100 = arith.addf %95, %99 : vector<2x16x32xf32>
    %c0_141 = arith.constant 0 : index
    %c0_142 = arith.constant 0 : index
    %c0_143 = arith.constant 0 : index
    %101 = vector.load %arg8[%c0_141, %c0_142, %c0_143] : memref<1x1x32xf32, #tpu.memory_space<vmem>>, vector<1x1x32xf32>
    %102 = vector.broadcast %101 : vector<1x1x32xf32> to vector<2x16x32xf32>
    %103 = arith.mulf %100, %102 : vector<2x16x32xf32>
    %c0_144 = arith.constant 0 : index
    %c0_145 = arith.constant 0 : index
    %c0_146 = arith.constant 0 : index
    %104 = vector.load %arg9[%c0_144, %c0_145, %c0_146] : memref<1x1x32xf32, #tpu.memory_space<vmem>>, vector<1x1x32xf32>
    %105 = vector.broadcast %104 : vector<1x1x32xf32> to vector<2x16x32xf32>
    %106 = arith.addf %103, %105 : vector<2x16x32xf32>
    %cst_147 = arith.constant 0.000000e+00 : f32
    %107 = vector.broadcast %cst_147 : f32 to vector<2x16x32xf32>
    %108 = arith.maximumf %106, %107 : vector<2x16x32xf32>
    %c0_148 = arith.constant 0 : index
    %c0_149 = arith.constant 0 : index
    %109 = vector.load %arg10[%c0_148, %c0_149] : memref<32x256xf32, #tpu.memory_space<vmem>>, vector<32x256xf32>
    "tpu.trace_start"() <{level = 10 : i32, message = "blc,cg->blg"}> : () -> ()
    %cst_150 = arith.constant dense<0.000000e+00> : vector<2x16x256xf32>
    %110 = tpu.matmul %108, %109, %cst_150 {dimension_numbers = #tpu.dot_dimension_numbers<[2], [0], [0, 1], [1], [0, 0, 0, 1, 1, 1], [], []>} : vector<2x16x32xf32>, vector<32x256xf32>, vector<2x16x256xf32> -> vector<2x16x256xf32>
    "tpu.trace_stop"() : () -> ()
    %c0_151 = arith.constant 0 : index
    %c0_152 = arith.constant 0 : index
    %c0_153 = arith.constant 0 : index
    %111 = vector.load %arg12[%c0_151, %c0_152, %c0_153] : memref<1x1x256xf32, #tpu.memory_space<vmem>>, vector<1x1x256xf32>
    %112 = vector.broadcast %111 : vector<1x1x256xf32> to vector<2x16x256xf32>
    %113 = arith.addf %110, %112 : vector<2x16x256xf32>
    %c0_154 = arith.constant 0 : index
    %c0_155 = arith.constant 0 : index
    %114 = vector.load %arg11[%c0_154, %c0_155] : memref<32x256xf32, #tpu.memory_space<vmem>>, vector<32x256xf32>
    "tpu.trace_start"() <{level = 10 : i32, message = "blc,cg->blg"}> : () -> ()
    %cst_156 = arith.constant dense<0.000000e+00> : vector<2x16x256xf32>
    %115 = tpu.matmul %108, %114, %cst_156 {dimension_numbers = #tpu.dot_dimension_numbers<[2], [0], [0, 1], [1], [0, 0, 0, 1, 1, 1], [], []>} : vector<2x16x32xf32>, vector<32x256xf32>, vector<2x16x256xf32> -> vector<2x16x256xf32>
    "tpu.trace_stop"() : () -> ()
    %116 = vector.extract_strided_slice %113 {offsets = [0, 0, 0], sizes = [2, 1, 256], strides = [1, 1, 1]} : vector<2x16x256xf32> to vector<2x1x256xf32>
    %117 = vector.shape_cast %116 : vector<2x1x256xf32> to vector<2x256xf32>
    %118 = vector.extract_strided_slice %115 {offsets = [0, 15, 0], sizes = [2, 1, 256], strides = [1, 1, 1]} : vector<2x16x256xf32> to vector<2x1x256xf32>
    %119 = vector.shape_cast %118 : vector<2x1x256xf32> to vector<2x256xf32>
    %120 = arith.addf %117, %119 : vector<2x256xf32>
    %c0_157 = arith.constant 0 : index
    %c0_158 = arith.constant 0 : index
    %c0_159 = arith.constant 0 : index
    %121 = vector.load %arg30[%c0_157, %c0_158, %c0_159] : memref<16x2x256xf32, #tpu.memory_space<vmem>>, vector<1x2x256xf32>
    %122 = vector.shape_cast %121 : vector<1x2x256xf32> to vector<2x256xf32>
    %123 = vector.shape_cast %120 : vector<2x256xf32> to vector<1x2x256xf32>
    tpu.vector_store %arg30[%c0_157, %c0_158, %c0_159], %123 {strides = array<i32>} : memref<16x2x256xf32, #tpu.memory_space<vmem>>, vector<1x2x256xf32>,
    %124 = vector.extract_strided_slice %113 {offsets = [0, 1, 0], sizes = [2, 1, 256], strides = [1, 1, 1]} : vector<2x16x256xf32> to vector<2x1x256xf32>
    %125 = vector.shape_cast %124 : vector<2x1x256xf32> to vector<2x256xf32>
    %126 = vector.extract_strided_slice %115 {offsets = [0, 14, 0], sizes = [2, 1, 256], strides = [1, 1, 1]} : vector<2x16x256xf32> to vector<2x1x256xf32>
    %127 = vector.shape_cast %126 : vector<2x1x256xf32> to vector<2x256xf32>
    %128 = arith.addf %125, %127 : vector<2x256xf32>
    %c1_160 = arith.constant 1 : index
    %c0_161 = arith.constant 0 : index
    %c0_162 = arith.constant 0 : index
    %129 = vector.load %arg30[%c1_160, %c0_161, %c0_162] : memref<16x2x256xf32, #tpu.memory_space<vmem>>, vector<1x2x256xf32>
    %130 = vector.shape_cast %129 : vector<1x2x256xf32> to vector<2x256xf32>
    %131 = vector.shape_cast %128 : vector<2x256xf32> to vector<1x2x256xf32>
    tpu.vector_store %arg30[%c1_160, %c0_161, %c0_162], %131 {strides = array<i32>} : memref<16x2x256xf32, #tpu.memory_space<vmem>>, vector<1x2x256xf32>,
    %132 = vector.extract_strided_slice %113 {offsets = [0, 2, 0], sizes = [2, 1, 256], strides = [1, 1, 1]} : vector<2x16x256xf32> to vector<2x1x256xf32>
    %133 = vector.shape_cast %132 : vector<2x1x256xf32> to vector<2x256xf32>
    %134 = vector.extract_strided_slice %115 {offsets = [0, 13, 0], sizes = [2, 1, 256], strides = [1, 1, 1]} : vector<2x16x256xf32> to vector<2x1x256xf32>
    %135 = vector.shape_cast %134 : vector<2x1x256xf32> to vector<2x256xf32>
    %136 = arith.addf %133, %135 : vector<2x256xf32>
    %c2_163 = arith.constant 2 : index
    %c0_164 = arith.constant 0 : index
    %c0_165 = arith.constant 0 : index
    %137 = vector.load %arg30[%c2_163, %c0_164, %c0_165] : memref<16x2x256xf32, #tpu.memory_space<vmem>>, vector<1x2x256xf32>
    %138 = vector.shape_cast %137 : vector<1x2x256xf32> to vector<2x256xf32>
    %139 = vector.shape_cast %136 : vector<2x256xf32> to vector<1x2x256xf32>
    tpu.vector_store %arg30[%c2_163, %c0_164, %c0_165], %139 {strides = array<i32>} : memref<16x2x256xf32, #tpu.memory_space<vmem>>, vector<1x2x256xf32>,
    %140 = vector.extract_strided_slice %113 {offsets = [0, 3, 0], sizes = [2, 1, 256], strides = [1, 1, 1]} : vector<2x16x256xf32> to vector<2x1x256xf32>
    %141 = vector.shape_cast %140 : vector<2x1x256xf32> to vector<2x256xf32>
    %142 = vector.extract_strided_slice %115 {offsets = [0, 12, 0], sizes = [2, 1, 256], strides = [1, 1, 1]} : vector<2x16x256xf32> to vector<2x1x256xf32>
    %143 = vector.shape_cast %142 : vector<2x1x256xf32> to vector<2x256xf32>
    %144 = arith.addf %141, %143 : vector<2x256xf32>
    %c3_166 = arith.constant 3 : index
    %c0_167 = arith.constant 0 : index
    %c0_168 = arith.constant 0 : index
    %145 = vector.load %arg30[%c3_166, %c0_167, %c0_168] : memref<16x2x256xf32, #tpu.memory_space<vmem>>, vector<1x2x256xf32>
    %146 = vector.shape_cast %145 : vector<1x2x256xf32> to vector<2x256xf32>
    %147 = vector.shape_cast %144 : vector<2x256xf32> to vector<1x2x256xf32>
    tpu.vector_store %arg30[%c3_166, %c0_167, %c0_168], %147 {strides = array<i32>} : memref<16x2x256xf32, #tpu.memory_space<vmem>>, vector<1x2x256xf32>,
    %148 = vector.extract_strided_slice %113 {offsets = [0, 4, 0], sizes = [2, 1, 256], strides = [1, 1, 1]} : vector<2x16x256xf32> to vector<2x1x256xf32>
    %149 = vector.shape_cast %148 : vector<2x1x256xf32> to vector<2x256xf32>
    %150 = vector.extract_strided_slice %115 {offsets = [0, 11, 0], sizes = [2, 1, 256], strides = [1, 1, 1]} : vector<2x16x256xf32> to vector<2x1x256xf32>
    %151 = vector.shape_cast %150 : vector<2x1x256xf32> to vector<2x256xf32>
    %152 = arith.addf %149, %151 : vector<2x256xf32>
    %c4_169 = arith.constant 4 : index
    %c0_170 = arith.constant 0 : index
    %c0_171 = arith.constant 0 : index
    %153 = vector.load %arg30[%c4_169, %c0_170, %c0_171] : memref<16x2x256xf32, #tpu.memory_space<vmem>>, vector<1x2x256xf32>
    %154 = vector.shape_cast %153 : vector<1x2x256xf32> to vector<2x256xf32>
    %155 = vector.shape_cast %152 : vector<2x256xf32> to vector<1x2x256xf32>
    tpu.vector_store %arg30[%c4_169, %c0_170, %c0_171], %155 {strides = array<i32>} : memref<16x2x256xf32, #tpu.memory_space<vmem>>, vector<1x2x256xf32>,
    %156 = vector.extract_strided_slice %113 {offsets = [0, 5, 0], sizes = [2, 1, 256], strides = [1, 1, 1]} : vector<2x16x256xf32> to vector<2x1x256xf32>
    %157 = vector.shape_cast %156 : vector<2x1x256xf32> to vector<2x256xf32>
    %158 = vector.extract_strided_slice %115 {offsets = [0, 10, 0], sizes = [2, 1, 256], strides = [1, 1, 1]} : vector<2x16x256xf32> to vector<2x1x256xf32>
    %159 = vector.shape_cast %158 : vector<2x1x256xf32> to vector<2x256xf32>
    %160 = arith.addf %157, %159 : vector<2x256xf32>
    %c5_172 = arith.constant 5 : index
    %c0_173 = arith.constant 0 : index
    %c0_174 = arith.constant 0 : index
    %161 = vector.load %arg30[%c5_172, %c0_173, %c0_174] : memref<16x2x256xf32, #tpu.memory_space<vmem>>, vector<1x2x256xf32>
    %162 = vector.shape_cast %161 : vector<1x2x256xf32> to vector<2x256xf32>
    %163 = vector.shape_cast %160 : vector<2x256xf32> to vector<1x2x256xf32>
    tpu.vector_store %arg30[%c5_172, %c0_173, %c0_174], %163 {strides = array<i32>} : memref<16x2x256xf32, #tpu.memory_space<vmem>>, vector<1x2x256xf32>,
    %164 = vector.extract_strided_slice %113 {offsets = [0, 6, 0], sizes = [2, 1, 256], strides = [1, 1, 1]} : vector<2x16x256xf32> to vector<2x1x256xf32>
    %165 = vector.shape_cast %164 : vector<2x1x256xf32> to vector<2x256xf32>
    %166 = vector.extract_strided_slice %115 {offsets = [0, 9, 0], sizes = [2, 1, 256], strides = [1, 1, 1]} : vector<2x16x256xf32> to vector<2x1x256xf32>
    %167 = vector.shape_cast %166 : vector<2x1x256xf32> to vector<2x256xf32>
    %168 = arith.addf %165, %167 : vector<2x256xf32>
    %c6_175 = arith.constant 6 : index
    %c0_176 = arith.constant 0 : index
    %c0_177 = arith.constant 0 : index
    %169 = vector.load %arg30[%c6_175, %c0_176, %c0_177] : memref<16x2x256xf32, #tpu.memory_space<vmem>>, vector<1x2x256xf32>
    %170 = vector.shape_cast %169 : vector<1x2x256xf32> to vector<2x256xf32>
    %171 = vector.shape_cast %168 : vector<2x256xf32> to vector<1x2x256xf32>
    tpu.vector_store %arg30[%c6_175, %c0_176, %c0_177], %171 {strides = array<i32>} : memref<16x2x256xf32, #tpu.memory_space<vmem>>, vector<1x2x256xf32>,
    %172 = vector.extract_strided_slice %113 {offsets = [0, 7, 0], sizes = [2, 1, 256], strides = [1, 1, 1]} : vector<2x16x256xf32> to vector<2x1x256xf32>
    %173 = vector.shape_cast %172 : vector<2x1x256xf32> to vector<2x256xf32>
    %174 = vector.extract_strided_slice %115 {offsets = [0, 8, 0], sizes = [2, 1, 256], strides = [1, 1, 1]} : vector<2x16x256xf32> to vector<2x1x256xf32>
    %175 = vector.shape_cast %174 : vector<2x1x256xf32> to vector<2x256xf32>
    %176 = arith.addf %173, %175 : vector<2x256xf32>
    %c7 = arith.constant 7 : index
    %c0_178 = arith.constant 0 : index
    %c0_179 = arith.constant 0 : index
    %177 = vector.load %arg30[%c7, %c0_178, %c0_179] : memref<16x2x256xf32, #tpu.memory_space<vmem>>, vector<1x2x256xf32>
    %178 = vector.shape_cast %177 : vector<1x2x256xf32> to vector<2x256xf32>
    %179 = vector.shape_cast %176 : vector<2x256xf32> to vector<1x2x256xf32>
    tpu.vector_store %arg30[%c7, %c0_178, %c0_179], %179 {strides = array<i32>} : memref<16x2x256xf32, #tpu.memory_space<vmem>>, vector<1x2x256xf32>,
    %180 = vector.extract_strided_slice %113 {offsets = [0, 8, 0], sizes = [2, 1, 256], strides = [1, 1, 1]} : vector<2x16x256xf32> to vector<2x1x256xf32>
    %181 = vector.shape_cast %180 : vector<2x1x256xf32> to vector<2x256xf32>
    %182 = vector.extract_strided_slice %115 {offsets = [0, 7, 0], sizes = [2, 1, 256], strides = [1, 1, 1]} : vector<2x16x256xf32> to vector<2x1x256xf32>
    %183 = vector.shape_cast %182 : vector<2x1x256xf32> to vector<2x256xf32>
    %184 = arith.addf %181, %183 : vector<2x256xf32>
    %c8 = arith.constant 8 : index
    %c0_180 = arith.constant 0 : index
    %c0_181 = arith.constant 0 : index
    %185 = vector.load %arg30[%c8, %c0_180, %c0_181] : memref<16x2x256xf32, #tpu.memory_space<vmem>>, vector<1x2x256xf32>
    %186 = vector.shape_cast %185 : vector<1x2x256xf32> to vector<2x256xf32>
    %187 = vector.shape_cast %184 : vector<2x256xf32> to vector<1x2x256xf32>
    tpu.vector_store %arg30[%c8, %c0_180, %c0_181], %187 {strides = array<i32>} : memref<16x2x256xf32, #tpu.memory_space<vmem>>, vector<1x2x256xf32>,
    %188 = vector.extract_strided_slice %113 {offsets = [0, 9, 0], sizes = [2, 1, 256], strides = [1, 1, 1]} : vector<2x16x256xf32> to vector<2x1x256xf32>
    %189 = vector.shape_cast %188 : vector<2x1x256xf32> to vector<2x256xf32>
    %190 = vector.extract_strided_slice %115 {offsets = [0, 6, 0], sizes = [2, 1, 256], strides = [1, 1, 1]} : vector<2x16x256xf32> to vector<2x1x256xf32>
    %191 = vector.shape_cast %190 : vector<2x1x256xf32> to vector<2x256xf32>
    %192 = arith.addf %189, %191 : vector<2x256xf32>
    %c9 = arith.constant 9 : index
    %c0_182 = arith.constant 0 : index
    %c0_183 = arith.constant 0 : index
    %193 = vector.load %arg30[%c9, %c0_182, %c0_183] : memref<16x2x256xf32, #tpu.memory_space<vmem>>, vector<1x2x256xf32>
    %194 = vector.shape_cast %193 : vector<1x2x256xf32> to vector<2x256xf32>
    %195 = vector.shape_cast %192 : vector<2x256xf32> to vector<1x2x256xf32>
    tpu.vector_store %arg30[%c9, %c0_182, %c0_183], %195 {strides = array<i32>} : memref<16x2x256xf32, #tpu.memory_space<vmem>>, vector<1x2x256xf32>,
    %196 = vector.extract_strided_slice %113 {offsets = [0, 10, 0], sizes = [2, 1, 256], strides = [1, 1, 1]} : vector<2x16x256xf32> to vector<2x1x256xf32>
    %197 = vector.shape_cast %196 : vector<2x1x256xf32> to vector<2x256xf32>
    %198 = vector.extract_strided_slice %115 {offsets = [0, 5, 0], sizes = [2, 1, 256], strides = [1, 1, 1]} : vector<2x16x256xf32> to vector<2x1x256xf32>
    %199 = vector.shape_cast %198 : vector<2x1x256xf32> to vector<2x256xf32>
    %200 = arith.addf %197, %199 : vector<2x256xf32>
    %c10 = arith.constant 10 : index
    %c0_184 = arith.constant 0 : index
    %c0_185 = arith.constant 0 : index
    %201 = vector.load %arg30[%c10, %c0_184, %c0_185] : memref<16x2x256xf32, #tpu.memory_space<vmem>>, vector<1x2x256xf32>
    %202 = vector.shape_cast %201 : vector<1x2x256xf32> to vector<2x256xf32>
    %203 = vector.shape_cast %200 : vector<2x256xf32> to vector<1x2x256xf32>
    tpu.vector_store %arg30[%c10, %c0_184, %c0_185], %203 {strides = array<i32>} : memref<16x2x256xf32, #tpu.memory_space<vmem>>, vector<1x2x256xf32>,
    %204 = vector.extract_strided_slice %113 {offsets = [0, 11, 0], sizes = [2, 1, 256], strides = [1, 1, 1]} : vector<2x16x256xf32> to vector<2x1x256xf32>
    %205 = vector.shape_cast %204 : vector<2x1x256xf32> to vector<2x256xf32>
    %206 = vector.extract_strided_slice %115 {offsets = [0, 4, 0], sizes = [2, 1, 256], strides = [1, 1, 1]} : vector<2x16x256xf32> to vector<2x1x256xf32>
    %207 = vector.shape_cast %206 : vector<2x1x256xf32> to vector<2x256xf32>
    %208 = arith.addf %205, %207 : vector<2x256xf32>
    %c11 = arith.constant 11 : index
    %c0_186 = arith.constant 0 : index
    %c0_187 = arith.constant 0 : index
    %209 = vector.load %arg30[%c11, %c0_186, %c0_187] : memref<16x2x256xf32, #tpu.memory_space<vmem>>, vector<1x2x256xf32>
    %210 = vector.shape_cast %209 : vector<1x2x256xf32> to vector<2x256xf32>
    %211 = vector.shape_cast %208 : vector<2x256xf32> to vector<1x2x256xf32>
    tpu.vector_store %arg30[%c11, %c0_186, %c0_187], %211 {strides = array<i32>} : memref<16x2x256xf32, #tpu.memory_space<vmem>>, vector<1x2x256xf32>,
    %212 = vector.extract_strided_slice %113 {offsets = [0, 12, 0], sizes = [2, 1, 256], strides = [1, 1, 1]} : vector<2x16x256xf32> to vector<2x1x256xf32>
    %213 = vector.shape_cast %212 : vector<2x1x256xf32> to vector<2x256xf32>
    %214 = vector.extract_strided_slice %115 {offsets = [0, 3, 0], sizes = [2, 1, 256], strides = [1, 1, 1]} : vector<2x16x256xf32> to vector<2x1x256xf32>
    %215 = vector.shape_cast %214 : vector<2x1x256xf32> to vector<2x256xf32>
    %216 = arith.addf %213, %215 : vector<2x256xf32>
    %c12 = arith.constant 12 : index
    %c0_188 = arith.constant 0 : index
    %c0_189 = arith.constant 0 : index
    %217 = vector.load %arg30[%c12, %c0_188, %c0_189] : memref<16x2x256xf32, #tpu.memory_space<vmem>>, vector<1x2x256xf32>
    %218 = vector.shape_cast %217 : vector<1x2x256xf32> to vector<2x256xf32>
    %219 = vector.shape_cast %216 : vector<2x256xf32> to vector<1x2x256xf32>
    tpu.vector_store %arg30[%c12, %c0_188, %c0_189], %219 {strides = array<i32>} : memref<16x2x256xf32, #tpu.memory_space<vmem>>, vector<1x2x256xf32>,
    %220 = vector.extract_strided_slice %113 {offsets = [0, 13, 0], sizes = [2, 1, 256], strides = [1, 1, 1]} : vector<2x16x256xf32> to vector<2x1x256xf32>
    %221 = vector.shape_cast %220 : vector<2x1x256xf32> to vector<2x256xf32>
    %222 = vector.extract_strided_slice %115 {offsets = [0, 2, 0], sizes = [2, 1, 256], strides = [1, 1, 1]} : vector<2x16x256xf32> to vector<2x1x256xf32>
    %223 = vector.shape_cast %222 : vector<2x1x256xf32> to vector<2x256xf32>
    %224 = arith.addf %221, %223 : vector<2x256xf32>
    %c13 = arith.constant 13 : index
    %c0_190 = arith.constant 0 : index
    %c0_191 = arith.constant 0 : index
    %225 = vector.load %arg30[%c13, %c0_190, %c0_191] : memref<16x2x256xf32, #tpu.memory_space<vmem>>, vector<1x2x256xf32>
    %226 = vector.shape_cast %225 : vector<1x2x256xf32> to vector<2x256xf32>
    %227 = vector.shape_cast %224 : vector<2x256xf32> to vector<1x2x256xf32>
    tpu.vector_store %arg30[%c13, %c0_190, %c0_191], %227 {strides = array<i32>} : memref<16x2x256xf32, #tpu.memory_space<vmem>>, vector<1x2x256xf32>,
    %228 = vector.extract_strided_slice %113 {offsets = [0, 14, 0], sizes = [2, 1, 256], strides = [1, 1, 1]} : vector<2x16x256xf32> to vector<2x1x256xf32>
    %229 = vector.shape_cast %228 : vector<2x1x256xf32> to vector<2x256xf32>
    %230 = vector.extract_strided_slice %115 {offsets = [0, 1, 0], sizes = [2, 1, 256], strides = [1, 1, 1]} : vector<2x16x256xf32> to vector<2x1x256xf32>
    %231 = vector.shape_cast %230 : vector<2x1x256xf32> to vector<2x256xf32>
    %232 = arith.addf %229, %231 : vector<2x256xf32>
    %c14 = arith.constant 14 : index
    %c0_192 = arith.constant 0 : index
    %c0_193 = arith.constant 0 : index
    %233 = vector.load %arg30[%c14, %c0_192, %c0_193] : memref<16x2x256xf32, #tpu.memory_space<vmem>>, vector<1x2x256xf32>
    %234 = vector.shape_cast %233 : vector<1x2x256xf32> to vector<2x256xf32>
    %235 = vector.shape_cast %232 : vector<2x256xf32> to vector<1x2x256xf32>
    tpu.vector_store %arg30[%c14, %c0_192, %c0_193], %235 {strides = array<i32>} : memref<16x2x256xf32, #tpu.memory_space<vmem>>, vector<1x2x256xf32>,
    %236 = vector.extract_strided_slice %113 {offsets = [0, 15, 0], sizes = [2, 1, 256], strides = [1, 1, 1]} : vector<2x16x256xf32> to vector<2x1x256xf32>
    %237 = vector.shape_cast %236 : vector<2x1x256xf32> to vector<2x256xf32>
    %238 = vector.extract_strided_slice %115 {offsets = [0, 0, 0], sizes = [2, 1, 256], strides = [1, 1, 1]} : vector<2x16x256xf32> to vector<2x1x256xf32>
    %239 = vector.shape_cast %238 : vector<2x1x256xf32> to vector<2x256xf32>
    %240 = arith.addf %237, %239 : vector<2x256xf32>
    %c15 = arith.constant 15 : index
    %c0_194 = arith.constant 0 : index
    %c0_195 = arith.constant 0 : index
    %241 = vector.load %arg30[%c15, %c0_194, %c0_195] : memref<16x2x256xf32, #tpu.memory_space<vmem>>, vector<1x2x256xf32>
    %242 = vector.shape_cast %241 : vector<1x2x256xf32> to vector<2x256xf32>
    %243 = vector.shape_cast %240 : vector<2x256xf32> to vector<1x2x256xf32>
    tpu.vector_store %arg30[%c15, %c0_194, %c0_195], %243 {strides = array<i32>} : memref<16x2x256xf32, #tpu.memory_space<vmem>>, vector<1x2x256xf32>,
    %cst_196 = arith.constant 0.000000e+00 : f32
    %244 = vector.broadcast %cst_196 : f32 to vector<2x64xf32>
    %cst_197 = arith.constant 0.000000e+00 : f32
    %245 = vector.broadcast %cst_197 : f32 to vector<2x64xf32>
    %c0_198 = arith.constant 0 : index
    %c0_199 = arith.constant 0 : index
    %c0_200 = arith.constant 0 : index
    %246 = vector.load %arg30[%c0_198, %c0_199, %c0_200] : memref<16x2x256xf32, #tpu.memory_space<vmem>>, vector<1x2x256xf32>
    %247 = vector.shape_cast %246 : vector<1x2x256xf32> to vector<2x256xf32>
    %c0_201 = arith.constant 0 : index
    %c0_202 = arith.constant 0 : index
    %248 = vector.load %arg13[%c0_201, %c0_202] : memref<64x256xf32, #tpu.memory_space<vmem>>, vector<64x256xf32>
    %cst_203 = arith.constant dense<0.000000e+00> : vector<2x256xf32>
    %249 = tpu.matmul %244, %248, %cst_203 {dimension_numbers = #tpu.dot_dimension_numbers<[1], [0], [0], [1], [0, 0, 1, 1], [], []>} : vector<2x64xf32>, vector<64x256xf32>, vector<2x256xf32> -> vector<2x256xf32>
    %250 = arith.addf %247, %249 : vector<2x256xf32>
    %251 = vector.extract_strided_slice %250 {offsets = [0, 0], sizes = [2, 192], strides = [1, 1]} : vector<2x256xf32> to vector<2x192xf32>
    %252 = arith.negf %251 : vector<2x192xf32>
    %253 = math.exp %252 : vector<2x192xf32>
    %cst_204 = arith.constant 1.000000e+00 : f32
    %254 = vector.broadcast %cst_204 : f32 to vector<2x192xf32>
    %255 = arith.addf %254, %253 : vector<2x192xf32>
    %256 = arith.divf %254, %255 : vector<2x192xf32>
    %257 = vector.extract_strided_slice %250 {offsets = [0, 192], sizes = [2, 64], strides = [1, 1]} : vector<2x256xf32> to vector<2x64xf32>
    %258 = math.tanh %257 : vector<2x64xf32>
    %259 = vector.extract_strided_slice %256 {offsets = [0, 64], sizes = [2, 64], strides = [1, 1]} : vector<2x192xf32> to vector<2x64xf32>
    %260 = arith.mulf %259, %245 : vector<2x64xf32>
    %261 = vector.extract_strided_slice %256 {offsets = [0, 0], sizes = [2, 64], strides = [1, 1]} : vector<2x192xf32> to vector<2x64xf32>
    %262 = arith.mulf %261, %258 : vector<2x64xf32>
    %263 = arith.addf %260, %262 : vector<2x64xf32>
    %264 = vector.extract_strided_slice %256 {offsets = [0, 128], sizes = [2, 64], strides = [1, 1]} : vector<2x192xf32> to vector<2x64xf32>
    %265 = math.tanh %263 : vector<2x64xf32>
    %266 = arith.mulf %264, %265 : vector<2x64xf32>
    %267 = vector.extract_strided_slice %266 {offsets = [0, 0], sizes = [2, 32], strides = [1, 1]} : vector<2x64xf32> to vector<2x32xf32>
    %268 = vector.shape_cast %267 : vector<2x32xf32> to vector<2x1x32xf32>
    %c0_205 = arith.constant 0 : index
    %c0_206 = arith.constant 0 : index
    %c0_207 = arith.constant 0 : index
    %269 = vector.load %arg31[%c0_205, %c0_206, %c0_207] : memref<2x16x32xf32, #tpu.memory_space<vmem>>, vector<2x1x32xf32>
    tpu.vector_store %arg31[%c0_205, %c0_206, %c0_207], %268 {strides = array<i32>} : memref<2x16x32xf32, #tpu.memory_space<vmem>>, vector<2x1x32xf32>,
    %270 = vector.extract_strided_slice %266 {offsets = [0, 32], sizes = [2, 32], strides = [1, 1]} : vector<2x64xf32> to vector<2x32xf32>
    %271 = vector.shape_cast %270 : vector<2x32xf32> to vector<2x1x32xf32>
    %c0_208 = arith.constant 0 : index
    %c15_209 = arith.constant 15 : index
    %c0_210 = arith.constant 0 : index
    %272 = vector.load %arg32[%c0_208, %c15_209, %c0_210] : memref<2x16x32xf32, #tpu.memory_space<vmem>>, vector<2x1x32xf32>
    tpu.vector_store %arg32[%c0_208, %c15_209, %c0_210], %271 {strides = array<i32>} : memref<2x16x32xf32, #tpu.memory_space<vmem>>, vector<2x1x32xf32>,
    %273 = vector.extract_strided_slice %266 {offsets = [0, 32], sizes = [2, 32], strides = [1, 1]} : vector<2x64xf32> to vector<2x32xf32>
    %c1_211 = arith.constant 1 : index
    %c0_212 = arith.constant 0 : index
    %c0_213 = arith.constant 0 : index
    %274 = vector.load %arg30[%c1_211, %c0_212, %c0_213] : memref<16x2x256xf32, #tpu.memory_space<vmem>>, vector<1x2x256xf32>
    %275 = vector.shape_cast %274 : vector<1x2x256xf32> to vector<2x256xf32>
    %c0_214 = arith.constant 0 : index
    %c0_215 = arith.constant 0 : index
    %276 = vector.load %arg13[%c0_214, %c0_215] : memref<64x256xf32, #tpu.memory_space<vmem>>, vector<64x256xf32>
    %cst_216 = arith.constant dense<0.000000e+00> : vector<2x256xf32>
    %277 = tpu.matmul %266, %276, %cst_216 {dimension_numbers = #tpu.dot_dimension_numbers<[1], [0], [0], [1], [0, 0, 1, 1], [], []>} : vector<2x64xf32>, vector<64x256xf32>, vector<2x256xf32> -> vector<2x256xf32>
    %278 = arith.addf %275, %277 : vector<2x256xf32>
    %279 = vector.extract_strided_slice %278 {offsets = [0, 0], sizes = [2, 192], strides = [1, 1]} : vector<2x256xf32> to vector<2x192xf32>
    %280 = arith.negf %279 : vector<2x192xf32>
    %281 = math.exp %280 : vector<2x192xf32>
    %cst_217 = arith.constant 1.000000e+00 : f32
    %282 = vector.broadcast %cst_217 : f32 to vector<2x192xf32>
    %283 = arith.addf %282, %281 : vector<2x192xf32>
    %284 = arith.divf %282, %283 : vector<2x192xf32>
    %285 = vector.extract_strided_slice %278 {offsets = [0, 192], sizes = [2, 64], strides = [1, 1]} : vector<2x256xf32> to vector<2x64xf32>
    %286 = math.tanh %285 : vector<2x64xf32>
    %287 = vector.extract_strided_slice %284 {offsets = [0, 64], sizes = [2, 64], strides = [1, 1]} : vector<2x192xf32> to vector<2x64xf32>
    %288 = arith.mulf %287, %263 : vector<2x64xf32>
    %289 = vector.extract_strided_slice %284 {offsets = [0, 0], sizes = [2, 64], strides = [1, 1]} : vector<2x192xf32> to vector<2x64xf32>
    %290 = arith.mulf %289, %286 : vector<2x64xf32>
    %291 = arith.addf %288, %290 : vector<2x64xf32>
    %292 = vector.extract_strided_slice %284 {offsets = [0, 128], sizes = [2, 64], strides = [1, 1]} : vector<2x192xf32> to vector<2x64xf32>
    %293 = math.tanh %291 : vector<2x64xf32>
    %294 = arith.mulf %292, %293 : vector<2x64xf32>
    %295 = vector.extract_strided_slice %294 {offsets = [0, 0], sizes = [2, 32], strides = [1, 1]} : vector<2x64xf32> to vector<2x32xf32>
    %296 = vector.shape_cast %295 : vector<2x32xf32> to vector<2x1x32xf32>
    %c0_218 = arith.constant 0 : index
    %c1_219 = arith.constant 1 : index
    %c0_220 = arith.constant 0 : index
    %297 = vector.load %arg31[%c0_218, %c1_219, %c0_220] : memref<2x16x32xf32, #tpu.memory_space<vmem>>, vector<2x1x32xf32>
    tpu.vector_store %arg31[%c0_218, %c1_219, %c0_220], %296 {strides = array<i32>} : memref<2x16x32xf32, #tpu.memory_space<vmem>>, vector<2x1x32xf32>,
    %298 = vector.extract_strided_slice %294 {offsets = [0, 32], sizes = [2, 32], strides = [1, 1]} : vector<2x64xf32> to vector<2x32xf32>
    %299 = vector.shape_cast %298 : vector<2x32xf32> to vector<2x1x32xf32>
    %c0_221 = arith.constant 0 : index
    %c14_222 = arith.constant 14 : index
    %c0_223 = arith.constant 0 : index
    %300 = vector.load %arg32[%c0_221, %c14_222, %c0_223] : memref<2x16x32xf32, #tpu.memory_space<vmem>>, vector<2x1x32xf32>
    tpu.vector_store %arg32[%c0_221, %c14_222, %c0_223], %299 {strides = array<i32>} : memref<2x16x32xf32, #tpu.memory_space<vmem>>, vector<2x1x32xf32>,
    %c2_224 = arith.constant 2 : index
    %c0_225 = arith.constant 0 : index
    %c0_226 = arith.constant 0 : index
    %301 = vector.load %arg30[%c2_224, %c0_225, %c0_226] : memref<16x2x256xf32, #tpu.memory_space<vmem>>, vector<1x2x256xf32>
    %302 = vector.shape_cast %301 : vector<1x2x256xf32> to vector<2x256xf32>
    %c0_227 = arith.constant 0 : index
    %c0_228 = arith.constant 0 : index
    %303 = vector.load %arg13[%c0_227, %c0_228] : memref<64x256xf32, #tpu.memory_space<vmem>>, vector<64x256xf32>
    %cst_229 = arith.constant dense<0.000000e+00> : vector<2x256xf32>
    %304 = tpu.matmul %294, %303, %cst_229 {dimension_numbers = #tpu.dot_dimension_numbers<[1], [0], [0], [1], [0, 0, 1, 1], [], []>} : vector<2x64xf32>, vector<64x256xf32>, vector<2x256xf32> -> vector<2x256xf32>
    %305 = arith.addf %302, %304 : vector<2x256xf32>
    %306 = vector.extract_strided_slice %305 {offsets = [0, 0], sizes = [2, 192], strides = [1, 1]} : vector<2x256xf32> to vector<2x192xf32>
    %307 = arith.negf %306 : vector<2x192xf32>
    %308 = math.exp %307 : vector<2x192xf32>
    %cst_230 = arith.constant 1.000000e+00 : f32
    %309 = vector.broadcast %cst_230 : f32 to vector<2x192xf32>
    %310 = arith.addf %309, %308 : vector<2x192xf32>
    %311 = arith.divf %309, %310 : vector<2x192xf32>
    %312 = vector.extract_strided_slice %305 {offsets = [0, 192], sizes = [2, 64], strides = [1, 1]} : vector<2x256xf32> to vector<2x64xf32>
    %313 = math.tanh %312 : vector<2x64xf32>
    %314 = vector.extract_strided_slice %311 {offsets = [0, 64], sizes = [2, 64], strides = [1, 1]} : vector<2x192xf32> to vector<2x64xf32>
    %315 = arith.mulf %314, %291 : vector<2x64xf32>
    %316 = vector.extract_strided_slice %311 {offsets = [0, 0], sizes = [2, 64], strides = [1, 1]} : vector<2x192xf32> to vector<2x64xf32>
    %317 = arith.mulf %316, %313 : vector<2x64xf32>
    %318 = arith.addf %315, %317 : vector<2x64xf32>
    %319 = vector.extract_strided_slice %311 {offsets = [0, 128], sizes = [2, 64], strides = [1, 1]} : vector<2x192xf32> to vector<2x64xf32>
    %320 = math.tanh %318 : vector<2x64xf32>
    %321 = arith.mulf %319, %320 : vector<2x64xf32>
    %322 = vector.extract_strided_slice %321 {offsets = [0, 0], sizes = [2, 32], strides = [1, 1]} : vector<2x64xf32> to vector<2x32xf32>
    %323 = vector.shape_cast %322 : vector<2x32xf32> to vector<2x1x32xf32>
    %c0_231 = arith.constant 0 : index
    %c2_232 = arith.constant 2 : index
    %c0_233 = arith.constant 0 : index
    %324 = vector.load %arg31[%c0_231, %c2_232, %c0_233] : memref<2x16x32xf32, #tpu.memory_space<vmem>>, vector<2x1x32xf32>
    tpu.vector_store %arg31[%c0_231, %c2_232, %c0_233], %323 {strides = array<i32>} : memref<2x16x32xf32, #tpu.memory_space<vmem>>, vector<2x1x32xf32>,
    %325 = vector.extract_strided_slice %321 {offsets = [0, 32], sizes = [2, 32], strides = [1, 1]} : vector<2x64xf32> to vector<2x32xf32>
    %326 = vector.shape_cast %325 : vector<2x32xf32> to vector<2x1x32xf32>
    %c0_234 = arith.constant 0 : index
    %c13_235 = arith.constant 13 : index
    %c0_236 = arith.constant 0 : index
    %327 = vector.load %arg32[%c0_234, %c13_235, %c0_236] : memref<2x16x32xf32, #tpu.memory_space<vmem>>, vector<2x1x32xf32>
    tpu.vector_store %arg32[%c0_234, %c13_235, %c0_236], %326 {strides = array<i32>} : memref<2x16x32xf32, #tpu.memory_space<vmem>>, vector<2x1x32xf32>,
    %c3_237 = arith.constant 3 : index
    %c0_238 = arith.constant 0 : index
    %c0_239 = arith.constant 0 : index
    %328 = vector.load %arg30[%c3_237, %c0_238, %c0_239] : memref<16x2x256xf32, #tpu.memory_space<vmem>>, vector<1x2x256xf32>
    %329 = vector.shape_cast %328 : vector<1x2x256xf32> to vector<2x256xf32>
    %c0_240 = arith.constant 0 : index
    %c0_241 = arith.constant 0 : index
    %330 = vector.load %arg13[%c0_240, %c0_241] : memref<64x256xf32, #tpu.memory_space<vmem>>, vector<64x256xf32>
    %cst_242 = arith.constant dense<0.000000e+00> : vector<2x256xf32>
    %331 = tpu.matmul %321, %330, %cst_242 {dimension_numbers = #tpu.dot_dimension_numbers<[1], [0], [0], [1], [0, 0, 1, 1], [], []>} : vector<2x64xf32>, vector<64x256xf32>, vector<2x256xf32> -> vector<2x256xf32>
    %332 = arith.addf %329, %331 : vector<2x256xf32>
    %333 = vector.extract_strided_slice %332 {offsets = [0, 0], sizes = [2, 192], strides = [1, 1]} : vector<2x256xf32> to vector<2x192xf32>
    %334 = arith.negf %333 : vector<2x192xf32>
    %335 = math.exp %334 : vector<2x192xf32>
    %cst_243 = arith.constant 1.000000e+00 : f32
    %336 = vector.broadcast %cst_243 : f32 to vector<2x192xf32>
    %337 = arith.addf %336, %335 : vector<2x192xf32>
    %338 = arith.divf %336, %337 : vector<2x192xf32>
    %339 = vector.extract_strided_slice %332 {offsets = [0, 192], sizes = [2, 64], strides = [1, 1]} : vector<2x256xf32> to vector<2x64xf32>
    %340 = math.tanh %339 : vector<2x64xf32>
    %341 = vector.extract_strided_slice %338 {offsets = [0, 64], sizes = [2, 64], strides = [1, 1]} : vector<2x192xf32> to vector<2x64xf32>
    %342 = arith.mulf %341, %318 : vector<2x64xf32>
    %343 = vector.extract_strided_slice %338 {offsets = [0, 0], sizes = [2, 64], strides = [1, 1]} : vector<2x192xf32> to vector<2x64xf32>
    %344 = arith.mulf %343, %340 : vector<2x64xf32>
    %345 = arith.addf %342, %344 : vector<2x64xf32>
    %346 = vector.extract_strided_slice %338 {offsets = [0, 128], sizes = [2, 64], strides = [1, 1]} : vector<2x192xf32> to vector<2x64xf32>
    %347 = math.tanh %345 : vector<2x64xf32>
    %348 = arith.mulf %346, %347 : vector<2x64xf32>
    %349 = vector.extract_strided_slice %348 {offsets = [0, 0], sizes = [2, 32], strides = [1, 1]} : vector<2x64xf32> to vector<2x32xf32>
    %350 = vector.shape_cast %349 : vector<2x32xf32> to vector<2x1x32xf32>
    %c0_244 = arith.constant 0 : index
    %c3_245 = arith.constant 3 : index
    %c0_246 = arith.constant 0 : index
    %351 = vector.load %arg31[%c0_244, %c3_245, %c0_246] : memref<2x16x32xf32, #tpu.memory_space<vmem>>, vector<2x1x32xf32>
    tpu.vector_store %arg31[%c0_244, %c3_245, %c0_246], %350 {strides = array<i32>} : memref<2x16x32xf32, #tpu.memory_space<vmem>>, vector<2x1x32xf32>,
    %352 = vector.extract_strided_slice %348 {offsets = [0, 32], sizes = [2, 32], strides = [1, 1]} : vector<2x64xf32> to vector<2x32xf32>
    %353 = vector.shape_cast %352 : vector<2x32xf32> to vector<2x1x32xf32>
    %c0_247 = arith.constant 0 : index
    %c12_248 = arith.constant 12 : index
    %c0_249 = arith.constant 0 : index
    %354 = vector.load %arg32[%c0_247, %c12_248, %c0_249] : memref<2x16x32xf32, #tpu.memory_space<vmem>>, vector<2x1x32xf32>
    tpu.vector_store %arg32[%c0_247, %c12_248, %c0_249], %353 {strides = array<i32>} : memref<2x16x32xf32, #tpu.memory_space<vmem>>, vector<2x1x32xf32>,
    %c4_250 = arith.constant 4 : index
    %c0_251 = arith.constant 0 : index
    %c0_252 = arith.constant 0 : index
    %355 = vector.load %arg30[%c4_250, %c0_251, %c0_252] : memref<16x2x256xf32, #tpu.memory_space<vmem>>, vector<1x2x256xf32>
    %356 = vector.shape_cast %355 : vector<1x2x256xf32> to vector<2x256xf32>
    %c0_253 = arith.constant 0 : index
    %c0_254 = arith.constant 0 : index
    %357 = vector.load %arg13[%c0_253, %c0_254] : memref<64x256xf32, #tpu.memory_space<vmem>>, vector<64x256xf32>
    %cst_255 = arith.constant dense<0.000000e+00> : vector<2x256xf32>
    %358 = tpu.matmul %348, %357, %cst_255 {dimension_numbers = #tpu.dot_dimension_numbers<[1], [0], [0], [1], [0, 0, 1, 1], [], []>} : vector<2x64xf32>, vector<64x256xf32>, vector<2x256xf32> -> vector<2x256xf32>
    %359 = arith.addf %356, %358 : vector<2x256xf32>
    %360 = vector.extract_strided_slice %359 {offsets = [0, 0], sizes = [2, 192], strides = [1, 1]} : vector<2x256xf32> to vector<2x192xf32>
    %361 = arith.negf %360 : vector<2x192xf32>
    %362 = math.exp %361 : vector<2x192xf32>
    %cst_256 = arith.constant 1.000000e+00 : f32
    %363 = vector.broadcast %cst_256 : f32 to vector<2x192xf32>
    %364 = arith.addf %363, %362 : vector<2x192xf32>
    %365 = arith.divf %363, %364 : vector<2x192xf32>
    %366 = vector.extract_strided_slice %359 {offsets = [0, 192], sizes = [2, 64], strides = [1, 1]} : vector<2x256xf32> to vector<2x64xf32>
    %367 = math.tanh %366 : vector<2x64xf32>
    %368 = vector.extract_strided_slice %365 {offsets = [0, 64], sizes = [2, 64], strides = [1, 1]} : vector<2x192xf32> to vector<2x64xf32>
    %369 = arith.mulf %368, %345 : vector<2x64xf32>
    %370 = vector.extract_strided_slice %365 {offsets = [0, 0], sizes = [2, 64], strides = [1, 1]} : vector<2x192xf32> to vector<2x64xf32>
    %371 = arith.mulf %370, %367 : vector<2x64xf32>
    %372 = arith.addf %369, %371 : vector<2x64xf32>
    %373 = vector.extract_strided_slice %365 {offsets = [0, 128], sizes = [2, 64], strides = [1, 1]} : vector<2x192xf32> to vector<2x64xf32>
    %374 = math.tanh %372 : vector<2x64xf32>
    %375 = arith.mulf %373, %374 : vector<2x64xf32>
    %376 = vector.extract_strided_slice %375 {offsets = [0, 0], sizes = [2, 32], strides = [1, 1]} : vector<2x64xf32> to vector<2x32xf32>
    %377 = vector.shape_cast %376 : vector<2x32xf32> to vector<2x1x32xf32>
    %c0_257 = arith.constant 0 : index
    %c4_258 = arith.constant 4 : index
    %c0_259 = arith.constant 0 : index
    %378 = vector.load %arg31[%c0_257, %c4_258, %c0_259] : memref<2x16x32xf32, #tpu.memory_space<vmem>>, vector<2x1x32xf32>
    tpu.vector_store %arg31[%c0_257, %c4_258, %c0_259], %377 {strides = array<i32>} : memref<2x16x32xf32, #tpu.memory_space<vmem>>, vector<2x1x32xf32>,
    %379 = vector.extract_strided_slice %375 {offsets = [0, 32], sizes = [2, 32], strides = [1, 1]} : vector<2x64xf32> to vector<2x32xf32>
    %380 = vector.shape_cast %379 : vector<2x32xf32> to vector<2x1x32xf32>
    %c0_260 = arith.constant 0 : index
    %c11_261 = arith.constant 11 : index
    %c0_262 = arith.constant 0 : index
    %381 = vector.load %arg32[%c0_260, %c11_261, %c0_262] : memref<2x16x32xf32, #tpu.memory_space<vmem>>, vector<2x1x32xf32>
    tpu.vector_store %arg32[%c0_260, %c11_261, %c0_262], %380 {strides = array<i32>} : memref<2x16x32xf32, #tpu.memory_space<vmem>>, vector<2x1x32xf32>,
    %c5_263 = arith.constant 5 : index
    %c0_264 = arith.constant 0 : index
    %c0_265 = arith.constant 0 : index
    %382 = vector.load %arg30[%c5_263, %c0_264, %c0_265] : memref<16x2x256xf32, #tpu.memory_space<vmem>>, vector<1x2x256xf32>
    %383 = vector.shape_cast %382 : vector<1x2x256xf32> to vector<2x256xf32>
    %c0_266 = arith.constant 0 : index
    %c0_267 = arith.constant 0 : index
    %384 = vector.load %arg13[%c0_266, %c0_267] : memref<64x256xf32, #tpu.memory_space<vmem>>, vector<64x256xf32>
    %cst_268 = arith.constant dense<0.000000e+00> : vector<2x256xf32>
    %385 = tpu.matmul %375, %384, %cst_268 {dimension_numbers = #tpu.dot_dimension_numbers<[1], [0], [0], [1], [0, 0, 1, 1], [], []>} : vector<2x64xf32>, vector<64x256xf32>, vector<2x256xf32> -> vector<2x256xf32>
    %386 = arith.addf %383, %385 : vector<2x256xf32>
    %387 = vector.extract_strided_slice %386 {offsets = [0, 0], sizes = [2, 192], strides = [1, 1]} : vector<2x256xf32> to vector<2x192xf32>
    %388 = arith.negf %387 : vector<2x192xf32>
    %389 = math.exp %388 : vector<2x192xf32>
    %cst_269 = arith.constant 1.000000e+00 : f32
    %390 = vector.broadcast %cst_269 : f32 to vector<2x192xf32>
    %391 = arith.addf %390, %389 : vector<2x192xf32>
    %392 = arith.divf %390, %391 : vector<2x192xf32>
    %393 = vector.extract_strided_slice %386 {offsets = [0, 192], sizes = [2, 64], strides = [1, 1]} : vector<2x256xf32> to vector<2x64xf32>
    %394 = math.tanh %393 : vector<2x64xf32>
    %395 = vector.extract_strided_slice %392 {offsets = [0, 64], sizes = [2, 64], strides = [1, 1]} : vector<2x192xf32> to vector<2x64xf32>
    %396 = arith.mulf %395, %372 : vector<2x64xf32>
    %397 = vector.extract_strided_slice %392 {offsets = [0, 0], sizes = [2, 64], strides = [1, 1]} : vector<2x192xf32> to vector<2x64xf32>
    %398 = arith.mulf %397, %394 : vector<2x64xf32>
    %399 = arith.addf %396, %398 : vector<2x64xf32>
    %400 = vector.extract_strided_slice %392 {offsets = [0, 128], sizes = [2, 64], strides = [1, 1]} : vector<2x192xf32> to vector<2x64xf32>
    %401 = math.tanh %399 : vector<2x64xf32>
    %402 = arith.mulf %400, %401 : vector<2x64xf32>
    %403 = vector.extract_strided_slice %402 {offsets = [0, 0], sizes = [2, 32], strides = [1, 1]} : vector<2x64xf32> to vector<2x32xf32>
    %404 = vector.shape_cast %403 : vector<2x32xf32> to vector<2x1x32xf32>
    %c0_270 = arith.constant 0 : index
    %c5_271 = arith.constant 5 : index
    %c0_272 = arith.constant 0 : index
    %405 = vector.load %arg31[%c0_270, %c5_271, %c0_272] : memref<2x16x32xf32, #tpu.memory_space<vmem>>, vector<2x1x32xf32>
    tpu.vector_store %arg31[%c0_270, %c5_271, %c0_272], %404 {strides = array<i32>} : memref<2x16x32xf32, #tpu.memory_space<vmem>>, vector<2x1x32xf32>,
    %406 = vector.extract_strided_slice %402 {offsets = [0, 32], sizes = [2, 32], strides = [1, 1]} : vector<2x64xf32> to vector<2x32xf32>
    %407 = vector.shape_cast %406 : vector<2x32xf32> to vector<2x1x32xf32>
    %c0_273 = arith.constant 0 : index
    %c10_274 = arith.constant 10 : index
    %c0_275 = arith.constant 0 : index
    %408 = vector.load %arg32[%c0_273, %c10_274, %c0_275] : memref<2x16x32xf32, #tpu.memory_space<vmem>>, vector<2x1x32xf32>
    tpu.vector_store %arg32[%c0_273, %c10_274, %c0_275], %407 {strides = array<i32>} : memref<2x16x32xf32, #tpu.memory_space<vmem>>, vector<2x1x32xf32>,
    %c6_276 = arith.constant 6 : index
    %c0_277 = arith.constant 0 : index
    %c0_278 = arith.constant 0 : index
    %409 = vector.load %arg30[%c6_276, %c0_277, %c0_278] : memref<16x2x256xf32, #tpu.memory_space<vmem>>, vector<1x2x256xf32>
    %410 = vector.shape_cast %409 : vector<1x2x256xf32> to vector<2x256xf32>
    %c0_279 = arith.constant 0 : index
    %c0_280 = arith.constant 0 : index
    %411 = vector.load %arg13[%c0_279, %c0_280] : memref<64x256xf32, #tpu.memory_space<vmem>>, vector<64x256xf32>
    %cst_281 = arith.constant dense<0.000000e+00> : vector<2x256xf32>
    %412 = tpu.matmul %402, %411, %cst_281 {dimension_numbers = #tpu.dot_dimension_numbers<[1], [0], [0], [1], [0, 0, 1, 1], [], []>} : vector<2x64xf32>, vector<64x256xf32>, vector<2x256xf32> -> vector<2x256xf32>
    %413 = arith.addf %410, %412 : vector<2x256xf32>
    %414 = vector.extract_strided_slice %413 {offsets = [0, 0], sizes = [2, 192], strides = [1, 1]} : vector<2x256xf32> to vector<2x192xf32>
    %415 = arith.negf %414 : vector<2x192xf32>
    %416 = math.exp %415 : vector<2x192xf32>
    %cst_282 = arith.constant 1.000000e+00 : f32
    %417 = vector.broadcast %cst_282 : f32 to vector<2x192xf32>
    %418 = arith.addf %417, %416 : vector<2x192xf32>
    %419 = arith.divf %417, %418 : vector<2x192xf32>
    %420 = vector.extract_strided_slice %413 {offsets = [0, 192], sizes = [2, 64], strides = [1, 1]} : vector<2x256xf32> to vector<2x64xf32>
    %421 = math.tanh %420 : vector<2x64xf32>
    %422 = vector.extract_strided_slice %419 {offsets = [0, 64], sizes = [2, 64], strides = [1, 1]} : vector<2x192xf32> to vector<2x64xf32>
    %423 = arith.mulf %422, %399 : vector<2x64xf32>
    %424 = vector.extract_strided_slice %419 {offsets = [0, 0], sizes = [2, 64], strides = [1, 1]} : vector<2x192xf32> to vector<2x64xf32>
    %425 = arith.mulf %424, %421 : vector<2x64xf32>
    %426 = arith.addf %423, %425 : vector<2x64xf32>
    %427 = vector.extract_strided_slice %419 {offsets = [0, 128], sizes = [2, 64], strides = [1, 1]} : vector<2x192xf32> to vector<2x64xf32>
    %428 = math.tanh %426 : vector<2x64xf32>
    %429 = arith.mulf %427, %428 : vector<2x64xf32>
    %430 = vector.extract_strided_slice %429 {offsets = [0, 0], sizes = [2, 32], strides = [1, 1]} : vector<2x64xf32> to vector<2x32xf32>
    %431 = vector.shape_cast %430 : vector<2x32xf32> to vector<2x1x32xf32>
    %c0_283 = arith.constant 0 : index
    %c6_284 = arith.constant 6 : index
    %c0_285 = arith.constant 0 : index
    %432 = vector.load %arg31[%c0_283, %c6_284, %c0_285] : memref<2x16x32xf32, #tpu.memory_space<vmem>>, vector<2x1x32xf32>
    tpu.vector_store %arg31[%c0_283, %c6_284, %c0_285], %431 {strides = array<i32>} : memref<2x16x32xf32, #tpu.memory_space<vmem>>, vector<2x1x32xf32>,
    %433 = vector.extract_strided_slice %429 {offsets = [0, 32], sizes = [2, 32], strides = [1, 1]} : vector<2x64xf32> to vector<2x32xf32>
    %434 = vector.shape_cast %433 : vector<2x32xf32> to vector<2x1x32xf32>
    %c0_286 = arith.constant 0 : index
    %c9_287 = arith.constant 9 : index
    %c0_288 = arith.constant 0 : index
    %435 = vector.load %arg32[%c0_286, %c9_287, %c0_288] : memref<2x16x32xf32, #tpu.memory_space<vmem>>, vector<2x1x32xf32>
    tpu.vector_store %arg32[%c0_286, %c9_287, %c0_288], %434 {strides = array<i32>} : memref<2x16x32xf32, #tpu.memory_space<vmem>>, vector<2x1x32xf32>,
    %c7_289 = arith.constant 7 : index
    %c0_290 = arith.constant 0 : index
    %c0_291 = arith.constant 0 : index
    %436 = vector.load %arg30[%c7_289, %c0_290, %c0_291] : memref<16x2x256xf32, #tpu.memory_space<vmem>>, vector<1x2x256xf32>
    %437 = vector.shape_cast %436 : vector<1x2x256xf32> to vector<2x256xf32>
    %c0_292 = arith.constant 0 : index
    %c0_293 = arith.constant 0 : index
    %438 = vector.load %arg13[%c0_292, %c0_293] : memref<64x256xf32, #tpu.memory_space<vmem>>, vector<64x256xf32>
    %cst_294 = arith.constant dense<0.000000e+00> : vector<2x256xf32>
    %439 = tpu.matmul %429, %438, %cst_294 {dimension_numbers = #tpu.dot_dimension_numbers<[1], [0], [0], [1], [0, 0, 1, 1], [], []>} : vector<2x64xf32>, vector<64x256xf32>, vector<2x256xf32> -> vector<2x256xf32>
    %440 = arith.addf %437, %439 : vector<2x256xf32>
    %441 = vector.extract_strided_slice %440 {offsets = [0, 0], sizes = [2, 192], strides = [1, 1]} : vector<2x256xf32> to vector<2x192xf32>
    %442 = arith.negf %441 : vector<2x192xf32>
    %443 = math.exp %442 : vector<2x192xf32>
    %cst_295 = arith.constant 1.000000e+00 : f32
    %444 = vector.broadcast %cst_295 : f32 to vector<2x192xf32>
    %445 = arith.addf %444, %443 : vector<2x192xf32>
    %446 = arith.divf %444, %445 : vector<2x192xf32>
    %447 = vector.extract_strided_slice %440 {offsets = [0, 192], sizes = [2, 64], strides = [1, 1]} : vector<2x256xf32> to vector<2x64xf32>
    %448 = math.tanh %447 : vector<2x64xf32>
    %449 = vector.extract_strided_slice %446 {offsets = [0, 64], sizes = [2, 64], strides = [1, 1]} : vector<2x192xf32> to vector<2x64xf32>
    %450 = arith.mulf %449, %426 : vector<2x64xf32>
    %451 = vector.extract_strided_slice %446 {offsets = [0, 0], sizes = [2, 64], strides = [1, 1]} : vector<2x192xf32> to vector<2x64xf32>
    %452 = arith.mulf %451, %448 : vector<2x64xf32>
    %453 = arith.addf %450, %452 : vector<2x64xf32>
    %454 = vector.extract_strided_slice %446 {offsets = [0, 128], sizes = [2, 64], strides = [1, 1]} : vector<2x192xf32> to vector<2x64xf32>
    %455 = math.tanh %453 : vector<2x64xf32>
    %456 = arith.mulf %454, %455 : vector<2x64xf32>
    %457 = vector.extract_strided_slice %456 {offsets = [0, 0], sizes = [2, 32], strides = [1, 1]} : vector<2x64xf32> to vector<2x32xf32>
    %458 = vector.shape_cast %457 : vector<2x32xf32> to vector<2x1x32xf32>
    %c0_296 = arith.constant 0 : index
    %c7_297 = arith.constant 7 : index
    %c0_298 = arith.constant 0 : index
    %459 = vector.load %arg31[%c0_296, %c7_297, %c0_298] : memref<2x16x32xf32, #tpu.memory_space<vmem>>, vector<2x1x32xf32>
    tpu.vector_store %arg31[%c0_296, %c7_297, %c0_298], %458 {strides = array<i32>} : memref<2x16x32xf32, #tpu.memory_space<vmem>>, vector<2x1x32xf32>,
    %460 = vector.extract_strided_slice %456 {offsets = [0, 32], sizes = [2, 32], strides = [1, 1]} : vector<2x64xf32> to vector<2x32xf32>
    %461 = vector.shape_cast %460 : vector<2x32xf32> to vector<2x1x32xf32>
    %c0_299 = arith.constant 0 : index
    %c8_300 = arith.constant 8 : index
    %c0_301 = arith.constant 0 : index
    %462 = vector.load %arg32[%c0_299, %c8_300, %c0_301] : memref<2x16x32xf32, #tpu.memory_space<vmem>>, vector<2x1x32xf32>
    tpu.vector_store %arg32[%c0_299, %c8_300, %c0_301], %461 {strides = array<i32>} : memref<2x16x32xf32, #tpu.memory_space<vmem>>, vector<2x1x32xf32>,
    %c8_302 = arith.constant 8 : index
    %c0_303 = arith.constant 0 : index
    %c0_304 = arith.constant 0 : index
    %463 = vector.load %arg30[%c8_302, %c0_303, %c0_304] : memref<16x2x256xf32, #tpu.memory_space<vmem>>, vector<1x2x256xf32>
    %464 = vector.shape_cast %463 : vector<1x2x256xf32> to vector<2x256xf32>
    %c0_305 = arith.constant 0 : index
    %c0_306 = arith.constant 0 : index
    %465 = vector.load %arg13[%c0_305, %c0_306] : memref<64x256xf32, #tpu.memory_space<vmem>>, vector<64x256xf32>
    %cst_307 = arith.constant dense<0.000000e+00> : vector<2x256xf32>
    %466 = tpu.matmul %456, %465, %cst_307 {dimension_numbers = #tpu.dot_dimension_numbers<[1], [0], [0], [1], [0, 0, 1, 1], [], []>} : vector<2x64xf32>, vector<64x256xf32>, vector<2x256xf32> -> vector<2x256xf32>
    %467 = arith.addf %464, %466 : vector<2x256xf32>
    %468 = vector.extract_strided_slice %467 {offsets = [0, 0], sizes = [2, 192], strides = [1, 1]} : vector<2x256xf32> to vector<2x192xf32>
    %469 = arith.negf %468 : vector<2x192xf32>
    %470 = math.exp %469 : vector<2x192xf32>
    %cst_308 = arith.constant 1.000000e+00 : f32
    %471 = vector.broadcast %cst_308 : f32 to vector<2x192xf32>
    %472 = arith.addf %471, %470 : vector<2x192xf32>
    %473 = arith.divf %471, %472 : vector<2x192xf32>
    %474 = vector.extract_strided_slice %467 {offsets = [0, 192], sizes = [2, 64], strides = [1, 1]} : vector<2x256xf32> to vector<2x64xf32>
    %475 = math.tanh %474 : vector<2x64xf32>
    %476 = vector.extract_strided_slice %473 {offsets = [0, 64], sizes = [2, 64], strides = [1, 1]} : vector<2x192xf32> to vector<2x64xf32>
    %477 = arith.mulf %476, %453 : vector<2x64xf32>
    %478 = vector.extract_strided_slice %473 {offsets = [0, 0], sizes = [2, 64], strides = [1, 1]} : vector<2x192xf32> to vector<2x64xf32>
    %479 = arith.mulf %478, %475 : vector<2x64xf32>
    %480 = arith.addf %477, %479 : vector<2x64xf32>
    %481 = vector.extract_strided_slice %473 {offsets = [0, 128], sizes = [2, 64], strides = [1, 1]} : vector<2x192xf32> to vector<2x64xf32>
    %482 = math.tanh %480 : vector<2x64xf32>
    %483 = arith.mulf %481, %482 : vector<2x64xf32>
    %484 = vector.extract_strided_slice %483 {offsets = [0, 0], sizes = [2, 32], strides = [1, 1]} : vector<2x64xf32> to vector<2x32xf32>
    %485 = vector.shape_cast %484 : vector<2x32xf32> to vector<2x1x32xf32>
    %c0_309 = arith.constant 0 : index
    %c8_310 = arith.constant 8 : index
    %c0_311 = arith.constant 0 : index
    %486 = vector.load %arg31[%c0_309, %c8_310, %c0_311] : memref<2x16x32xf32, #tpu.memory_space<vmem>>, vector<2x1x32xf32>
    tpu.vector_store %arg31[%c0_309, %c8_310, %c0_311], %485 {strides = array<i32>} : memref<2x16x32xf32, #tpu.memory_space<vmem>>, vector<2x1x32xf32>,
    %487 = vector.extract_strided_slice %483 {offsets = [0, 32], sizes = [2, 32], strides = [1, 1]} : vector<2x64xf32> to vector<2x32xf32>
    %488 = vector.shape_cast %487 : vector<2x32xf32> to vector<2x1x32xf32>
    %c0_312 = arith.constant 0 : index
    %c7_313 = arith.constant 7 : index
    %c0_314 = arith.constant 0 : index
    %489 = vector.load %arg32[%c0_312, %c7_313, %c0_314] : memref<2x16x32xf32, #tpu.memory_space<vmem>>, vector<2x1x32xf32>
    tpu.vector_store %arg32[%c0_312, %c7_313, %c0_314], %488 {strides = array<i32>} : memref<2x16x32xf32, #tpu.memory_space<vmem>>, vector<2x1x32xf32>,
    %c9_315 = arith.constant 9 : index
    %c0_316 = arith.constant 0 : index
    %c0_317 = arith.constant 0 : index
    %490 = vector.load %arg30[%c9_315, %c0_316, %c0_317] : memref<16x2x256xf32, #tpu.memory_space<vmem>>, vector<1x2x256xf32>
    %491 = vector.shape_cast %490 : vector<1x2x256xf32> to vector<2x256xf32>
    %c0_318 = arith.constant 0 : index
    %c0_319 = arith.constant 0 : index
    %492 = vector.load %arg13[%c0_318, %c0_319] : memref<64x256xf32, #tpu.memory_space<vmem>>, vector<64x256xf32>
    %cst_320 = arith.constant dense<0.000000e+00> : vector<2x256xf32>
    %493 = tpu.matmul %483, %492, %cst_320 {dimension_numbers = #tpu.dot_dimension_numbers<[1], [0], [0], [1], [0, 0, 1, 1], [], []>} : vector<2x64xf32>, vector<64x256xf32>, vector<2x256xf32> -> vector<2x256xf32>
    %494 = arith.addf %491, %493 : vector<2x256xf32>
    %495 = vector.extract_strided_slice %494 {offsets = [0, 0], sizes = [2, 192], strides = [1, 1]} : vector<2x256xf32> to vector<2x192xf32>
    %496 = arith.negf %495 : vector<2x192xf32>
    %497 = math.exp %496 : vector<2x192xf32>
    %cst_321 = arith.constant 1.000000e+00 : f32
    %498 = vector.broadcast %cst_321 : f32 to vector<2x192xf32>
    %499 = arith.addf %498, %497 : vector<2x192xf32>
    %500 = arith.divf %498, %499 : vector<2x192xf32>
    %501 = vector.extract_strided_slice %494 {offsets = [0, 192], sizes = [2, 64], strides = [1, 1]} : vector<2x256xf32> to vector<2x64xf32>
    %502 = math.tanh %501 : vector<2x64xf32>
    %503 = vector.extract_strided_slice %500 {offsets = [0, 64], sizes = [2, 64], strides = [1, 1]} : vector<2x192xf32> to vector<2x64xf32>
    %504 = arith.mulf %503, %480 : vector<2x64xf32>
    %505 = vector.extract_strided_slice %500 {offsets = [0, 0], sizes = [2, 64], strides = [1, 1]} : vector<2x192xf32> to vector<2x64xf32>
    %506 = arith.mulf %505, %502 : vector<2x64xf32>
    %507 = arith.addf %504, %506 : vector<2x64xf32>
    %508 = vector.extract_strided_slice %500 {offsets = [0, 128], sizes = [2, 64], strides = [1, 1]} : vector<2x192xf32> to vector<2x64xf32>
    %509 = math.tanh %507 : vector<2x64xf32>
    %510 = arith.mulf %508, %509 : vector<2x64xf32>
    %511 = vector.extract_strided_slice %510 {offsets = [0, 0], sizes = [2, 32], strides = [1, 1]} : vector<2x64xf32> to vector<2x32xf32>
    %512 = vector.shape_cast %511 : vector<2x32xf32> to vector<2x1x32xf32>
    %c0_322 = arith.constant 0 : index
    %c9_323 = arith.constant 9 : index
    %c0_324 = arith.constant 0 : index
    %513 = vector.load %arg31[%c0_322, %c9_323, %c0_324] : memref<2x16x32xf32, #tpu.memory_space<vmem>>, vector<2x1x32xf32>
    tpu.vector_store %arg31[%c0_322, %c9_323, %c0_324], %512 {strides = array<i32>} : memref<2x16x32xf32, #tpu.memory_space<vmem>>, vector<2x1x32xf32>,
    %514 = vector.extract_strided_slice %510 {offsets = [0, 32], sizes = [2, 32], strides = [1, 1]} : vector<2x64xf32> to vector<2x32xf32>
    %515 = vector.shape_cast %514 : vector<2x32xf32> to vector<2x1x32xf32>
    %c0_325 = arith.constant 0 : index
    %c6_326 = arith.constant 6 : index
    %c0_327 = arith.constant 0 : index
    %516 = vector.load %arg32[%c0_325, %c6_326, %c0_327] : memref<2x16x32xf32, #tpu.memory_space<vmem>>, vector<2x1x32xf32>
    tpu.vector_store %arg32[%c0_325, %c6_326, %c0_327], %515 {strides = array<i32>} : memref<2x16x32xf32, #tpu.memory_space<vmem>>, vector<2x1x32xf32>,
    %c10_328 = arith.constant 10 : index
    %c0_329 = arith.constant 0 : index
    %c0_330 = arith.constant 0 : index
    %517 = vector.load %arg30[%c10_328, %c0_329, %c0_330] : memref<16x2x256xf32, #tpu.memory_space<vmem>>, vector<1x2x256xf32>
    %518 = vector.shape_cast %517 : vector<1x2x256xf32> to vector<2x256xf32>
    %c0_331 = arith.constant 0 : index
    %c0_332 = arith.constant 0 : index
    %519 = vector.load %arg13[%c0_331, %c0_332] : memref<64x256xf32, #tpu.memory_space<vmem>>, vector<64x256xf32>
    %cst_333 = arith.constant dense<0.000000e+00> : vector<2x256xf32>
    %520 = tpu.matmul %510, %519, %cst_333 {dimension_numbers = #tpu.dot_dimension_numbers<[1], [0], [0], [1], [0, 0, 1, 1], [], []>} : vector<2x64xf32>, vector<64x256xf32>, vector<2x256xf32> -> vector<2x256xf32>
    %521 = arith.addf %518, %520 : vector<2x256xf32>
    %522 = vector.extract_strided_slice %521 {offsets = [0, 0], sizes = [2, 192], strides = [1, 1]} : vector<2x256xf32> to vector<2x192xf32>
    %523 = arith.negf %522 : vector<2x192xf32>
    %524 = math.exp %523 : vector<2x192xf32>
    %cst_334 = arith.constant 1.000000e+00 : f32
    %525 = vector.broadcast %cst_334 : f32 to vector<2x192xf32>
    %526 = arith.addf %525, %524 : vector<2x192xf32>
    %527 = arith.divf %525, %526 : vector<2x192xf32>
    %528 = vector.extract_strided_slice %521 {offsets = [0, 192], sizes = [2, 64], strides = [1, 1]} : vector<2x256xf32> to vector<2x64xf32>
    %529 = math.tanh %528 : vector<2x64xf32>
    %530 = vector.extract_strided_slice %527 {offsets = [0, 64], sizes = [2, 64], strides = [1, 1]} : vector<2x192xf32> to vector<2x64xf32>
    %531 = arith.mulf %530, %507 : vector<2x64xf32>
    %532 = vector.extract_strided_slice %527 {offsets = [0, 0], sizes = [2, 64], strides = [1, 1]} : vector<2x192xf32> to vector<2x64xf32>
    %533 = arith.mulf %532, %529 : vector<2x64xf32>
    %534 = arith.addf %531, %533 : vector<2x64xf32>
    %535 = vector.extract_strided_slice %527 {offsets = [0, 128], sizes = [2, 64], strides = [1, 1]} : vector<2x192xf32> to vector<2x64xf32>
    %536 = math.tanh %534 : vector<2x64xf32>
    %537 = arith.mulf %535, %536 : vector<2x64xf32>
    %538 = vector.extract_strided_slice %537 {offsets = [0, 0], sizes = [2, 32], strides = [1, 1]} : vector<2x64xf32> to vector<2x32xf32>
    %539 = vector.shape_cast %538 : vector<2x32xf32> to vector<2x1x32xf32>
    %c0_335 = arith.constant 0 : index
    %c10_336 = arith.constant 10 : index
    %c0_337 = arith.constant 0 : index
    %540 = vector.load %arg31[%c0_335, %c10_336, %c0_337] : memref<2x16x32xf32, #tpu.memory_space<vmem>>, vector<2x1x32xf32>
    tpu.vector_store %arg31[%c0_335, %c10_336, %c0_337], %539 {strides = array<i32>} : memref<2x16x32xf32, #tpu.memory_space<vmem>>, vector<2x1x32xf32>,
    %541 = vector.extract_strided_slice %537 {offsets = [0, 32], sizes = [2, 32], strides = [1, 1]} : vector<2x64xf32> to vector<2x32xf32>
    %542 = vector.shape_cast %541 : vector<2x32xf32> to vector<2x1x32xf32>
    %c0_338 = arith.constant 0 : index
    %c5_339 = arith.constant 5 : index
    %c0_340 = arith.constant 0 : index
    %543 = vector.load %arg32[%c0_338, %c5_339, %c0_340] : memref<2x16x32xf32, #tpu.memory_space<vmem>>, vector<2x1x32xf32>
    tpu.vector_store %arg32[%c0_338, %c5_339, %c0_340], %542 {strides = array<i32>} : memref<2x16x32xf32, #tpu.memory_space<vmem>>, vector<2x1x32xf32>,
    %c11_341 = arith.constant 11 : index
    %c0_342 = arith.constant 0 : index
    %c0_343 = arith.constant 0 : index
    %544 = vector.load %arg30[%c11_341, %c0_342, %c0_343] : memref<16x2x256xf32, #tpu.memory_space<vmem>>, vector<1x2x256xf32>
    %545 = vector.shape_cast %544 : vector<1x2x256xf32> to vector<2x256xf32>
    %c0_344 = arith.constant 0 : index
    %c0_345 = arith.constant 0 : index
    %546 = vector.load %arg13[%c0_344, %c0_345] : memref<64x256xf32, #tpu.memory_space<vmem>>, vector<64x256xf32>
    %cst_346 = arith.constant dense<0.000000e+00> : vector<2x256xf32>
    %547 = tpu.matmul %537, %546, %cst_346 {dimension_numbers = #tpu.dot_dimension_numbers<[1], [0], [0], [1], [0, 0, 1, 1], [], []>} : vector<2x64xf32>, vector<64x256xf32>, vector<2x256xf32> -> vector<2x256xf32>
    %548 = arith.addf %545, %547 : vector<2x256xf32>
    %549 = vector.extract_strided_slice %548 {offsets = [0, 0], sizes = [2, 192], strides = [1, 1]} : vector<2x256xf32> to vector<2x192xf32>
    %550 = arith.negf %549 : vector<2x192xf32>
    %551 = math.exp %550 : vector<2x192xf32>
    %cst_347 = arith.constant 1.000000e+00 : f32
    %552 = vector.broadcast %cst_347 : f32 to vector<2x192xf32>
    %553 = arith.addf %552, %551 : vector<2x192xf32>
    %554 = arith.divf %552, %553 : vector<2x192xf32>
    %555 = vector.extract_strided_slice %548 {offsets = [0, 192], sizes = [2, 64], strides = [1, 1]} : vector<2x256xf32> to vector<2x64xf32>
    %556 = math.tanh %555 : vector<2x64xf32>
    %557 = vector.extract_strided_slice %554 {offsets = [0, 64], sizes = [2, 64], strides = [1, 1]} : vector<2x192xf32> to vector<2x64xf32>
    %558 = arith.mulf %557, %534 : vector<2x64xf32>
    %559 = vector.extract_strided_slice %554 {offsets = [0, 0], sizes = [2, 64], strides = [1, 1]} : vector<2x192xf32> to vector<2x64xf32>
    %560 = arith.mulf %559, %556 : vector<2x64xf32>
    %561 = arith.addf %558, %560 : vector<2x64xf32>
    %562 = vector.extract_strided_slice %554 {offsets = [0, 128], sizes = [2, 64], strides = [1, 1]} : vector<2x192xf32> to vector<2x64xf32>
    %563 = math.tanh %561 : vector<2x64xf32>
    %564 = arith.mulf %562, %563 : vector<2x64xf32>
    %565 = vector.extract_strided_slice %564 {offsets = [0, 0], sizes = [2, 32], strides = [1, 1]} : vector<2x64xf32> to vector<2x32xf32>
    %566 = vector.shape_cast %565 : vector<2x32xf32> to vector<2x1x32xf32>
    %c0_348 = arith.constant 0 : index
    %c11_349 = arith.constant 11 : index
    %c0_350 = arith.constant 0 : index
    %567 = vector.load %arg31[%c0_348, %c11_349, %c0_350] : memref<2x16x32xf32, #tpu.memory_space<vmem>>, vector<2x1x32xf32>
    tpu.vector_store %arg31[%c0_348, %c11_349, %c0_350], %566 {strides = array<i32>} : memref<2x16x32xf32, #tpu.memory_space<vmem>>, vector<2x1x32xf32>,
    %568 = vector.extract_strided_slice %564 {offsets = [0, 32], sizes = [2, 32], strides = [1, 1]} : vector<2x64xf32> to vector<2x32xf32>
    %569 = vector.shape_cast %568 : vector<2x32xf32> to vector<2x1x32xf32>
    %c0_351 = arith.constant 0 : index
    %c4_352 = arith.constant 4 : index
    %c0_353 = arith.constant 0 : index
    %570 = vector.load %arg32[%c0_351, %c4_352, %c0_353] : memref<2x16x32xf32, #tpu.memory_space<vmem>>, vector<2x1x32xf32>
    tpu.vector_store %arg32[%c0_351, %c4_352, %c0_353], %569 {strides = array<i32>} : memref<2x16x32xf32, #tpu.memory_space<vmem>>, vector<2x1x32xf32>,
    %c12_354 = arith.constant 12 : index
    %c0_355 = arith.constant 0 : index
    %c0_356 = arith.constant 0 : index
    %571 = vector.load %arg30[%c12_354, %c0_355, %c0_356] : memref<16x2x256xf32, #tpu.memory_space<vmem>>, vector<1x2x256xf32>
    %572 = vector.shape_cast %571 : vector<1x2x256xf32> to vector<2x256xf32>
    %c0_357 = arith.constant 0 : index
    %c0_358 = arith.constant 0 : index
    %573 = vector.load %arg13[%c0_357, %c0_358] : memref<64x256xf32, #tpu.memory_space<vmem>>, vector<64x256xf32>
    %cst_359 = arith.constant dense<0.000000e+00> : vector<2x256xf32>
    %574 = tpu.matmul %564, %573, %cst_359 {dimension_numbers = #tpu.dot_dimension_numbers<[1], [0], [0], [1], [0, 0, 1, 1], [], []>} : vector<2x64xf32>, vector<64x256xf32>, vector<2x256xf32> -> vector<2x256xf32>
    %575 = arith.addf %572, %574 : vector<2x256xf32>
    %576 = vector.extract_strided_slice %575 {offsets = [0, 0], sizes = [2, 192], strides = [1, 1]} : vector<2x256xf32> to vector<2x192xf32>
    %577 = arith.negf %576 : vector<2x192xf32>
    %578 = math.exp %577 : vector<2x192xf32>
    %cst_360 = arith.constant 1.000000e+00 : f32
    %579 = vector.broadcast %cst_360 : f32 to vector<2x192xf32>
    %580 = arith.addf %579, %578 : vector<2x192xf32>
    %581 = arith.divf %579, %580 : vector<2x192xf32>
    %582 = vector.extract_strided_slice %575 {offsets = [0, 192], sizes = [2, 64], strides = [1, 1]} : vector<2x256xf32> to vector<2x64xf32>
    %583 = math.tanh %582 : vector<2x64xf32>
    %584 = vector.extract_strided_slice %581 {offsets = [0, 64], sizes = [2, 64], strides = [1, 1]} : vector<2x192xf32> to vector<2x64xf32>
    %585 = arith.mulf %584, %561 : vector<2x64xf32>
    %586 = vector.extract_strided_slice %581 {offsets = [0, 0], sizes = [2, 64], strides = [1, 1]} : vector<2x192xf32> to vector<2x64xf32>
    %587 = arith.mulf %586, %583 : vector<2x64xf32>
    %588 = arith.addf %585, %587 : vector<2x64xf32>
    %589 = vector.extract_strided_slice %581 {offsets = [0, 128], sizes = [2, 64], strides = [1, 1]} : vector<2x192xf32> to vector<2x64xf32>
    %590 = math.tanh %588 : vector<2x64xf32>
    %591 = arith.mulf %589, %590 : vector<2x64xf32>
    %592 = vector.extract_strided_slice %591 {offsets = [0, 0], sizes = [2, 32], strides = [1, 1]} : vector<2x64xf32> to vector<2x32xf32>
    %593 = vector.shape_cast %592 : vector<2x32xf32> to vector<2x1x32xf32>
    %c0_361 = arith.constant 0 : index
    %c12_362 = arith.constant 12 : index
    %c0_363 = arith.constant 0 : index
    %594 = vector.load %arg31[%c0_361, %c12_362, %c0_363] : memref<2x16x32xf32, #tpu.memory_space<vmem>>, vector<2x1x32xf32>
    tpu.vector_store %arg31[%c0_361, %c12_362, %c0_363], %593 {strides = array<i32>} : memref<2x16x32xf32, #tpu.memory_space<vmem>>, vector<2x1x32xf32>,
    %595 = vector.extract_strided_slice %591 {offsets = [0, 32], sizes = [2, 32], strides = [1, 1]} : vector<2x64xf32> to vector<2x32xf32>
    %596 = vector.shape_cast %595 : vector<2x32xf32> to vector<2x1x32xf32>
    %c0_364 = arith.constant 0 : index
    %c3_365 = arith.constant 3 : index
    %c0_366 = arith.constant 0 : index
    %597 = vector.load %arg32[%c0_364, %c3_365, %c0_366] : memref<2x16x32xf32, #tpu.memory_space<vmem>>, vector<2x1x32xf32>
    tpu.vector_store %arg32[%c0_364, %c3_365, %c0_366], %596 {strides = array<i32>} : memref<2x16x32xf32, #tpu.memory_space<vmem>>, vector<2x1x32xf32>,
    %c13_367 = arith.constant 13 : index
    %c0_368 = arith.constant 0 : index
    %c0_369 = arith.constant 0 : index
    %598 = vector.load %arg30[%c13_367, %c0_368, %c0_369] : memref<16x2x256xf32, #tpu.memory_space<vmem>>, vector<1x2x256xf32>
    %599 = vector.shape_cast %598 : vector<1x2x256xf32> to vector<2x256xf32>
    %c0_370 = arith.constant 0 : index
    %c0_371 = arith.constant 0 : index
    %600 = vector.load %arg13[%c0_370, %c0_371] : memref<64x256xf32, #tpu.memory_space<vmem>>, vector<64x256xf32>
    %cst_372 = arith.constant dense<0.000000e+00> : vector<2x256xf32>
    %601 = tpu.matmul %591, %600, %cst_372 {dimension_numbers = #tpu.dot_dimension_numbers<[1], [0], [0], [1], [0, 0, 1, 1], [], []>} : vector<2x64xf32>, vector<64x256xf32>, vector<2x256xf32> -> vector<2x256xf32>
    %602 = arith.addf %599, %601 : vector<2x256xf32>
    %603 = vector.extract_strided_slice %602 {offsets = [0, 0], sizes = [2, 192], strides = [1, 1]} : vector<2x256xf32> to vector<2x192xf32>
    %604 = arith.negf %603 : vector<2x192xf32>
    %605 = math.exp %604 : vector<2x192xf32>
    %cst_373 = arith.constant 1.000000e+00 : f32
    %606 = vector.broadcast %cst_373 : f32 to vector<2x192xf32>
    %607 = arith.addf %606, %605 : vector<2x192xf32>
    %608 = arith.divf %606, %607 : vector<2x192xf32>
    %609 = vector.extract_strided_slice %602 {offsets = [0, 192], sizes = [2, 64], strides = [1, 1]} : vector<2x256xf32> to vector<2x64xf32>
    %610 = math.tanh %609 : vector<2x64xf32>
    %611 = vector.extract_strided_slice %608 {offsets = [0, 64], sizes = [2, 64], strides = [1, 1]} : vector<2x192xf32> to vector<2x64xf32>
    %612 = arith.mulf %611, %588 : vector<2x64xf32>
    %613 = vector.extract_strided_slice %608 {offsets = [0, 0], sizes = [2, 64], strides = [1, 1]} : vector<2x192xf32> to vector<2x64xf32>
    %614 = arith.mulf %613, %610 : vector<2x64xf32>
    %615 = arith.addf %612, %614 : vector<2x64xf32>
    %616 = vector.extract_strided_slice %608 {offsets = [0, 128], sizes = [2, 64], strides = [1, 1]} : vector<2x192xf32> to vector<2x64xf32>
    %617 = math.tanh %615 : vector<2x64xf32>
    %618 = arith.mulf %616, %617 : vector<2x64xf32>
    %619 = vector.extract_strided_slice %618 {offsets = [0, 0], sizes = [2, 32], strides = [1, 1]} : vector<2x64xf32> to vector<2x32xf32>
    %620 = vector.shape_cast %619 : vector<2x32xf32> to vector<2x1x32xf32>
    %c0_374 = arith.constant 0 : index
    %c13_375 = arith.constant 13 : index
    %c0_376 = arith.constant 0 : index
    %621 = vector.load %arg31[%c0_374, %c13_375, %c0_376] : memref<2x16x32xf32, #tpu.memory_space<vmem>>, vector<2x1x32xf32>
    tpu.vector_store %arg31[%c0_374, %c13_375, %c0_376], %620 {strides = array<i32>} : memref<2x16x32xf32, #tpu.memory_space<vmem>>, vector<2x1x32xf32>,
    %622 = vector.extract_strided_slice %618 {offsets = [0, 32], sizes = [2, 32], strides = [1, 1]} : vector<2x64xf32> to vector<2x32xf32>
    %623 = vector.shape_cast %622 : vector<2x32xf32> to vector<2x1x32xf32>
    %c0_377 = arith.constant 0 : index
    %c2_378 = arith.constant 2 : index
    %c0_379 = arith.constant 0 : index
    %624 = vector.load %arg32[%c0_377, %c2_378, %c0_379] : memref<2x16x32xf32, #tpu.memory_space<vmem>>, vector<2x1x32xf32>
    tpu.vector_store %arg32[%c0_377, %c2_378, %c0_379], %623 {strides = array<i32>} : memref<2x16x32xf32, #tpu.memory_space<vmem>>, vector<2x1x32xf32>,
    %c14_380 = arith.constant 14 : index
    %c0_381 = arith.constant 0 : index
    %c0_382 = arith.constant 0 : index
    %625 = vector.load %arg30[%c14_380, %c0_381, %c0_382] : memref<16x2x256xf32, #tpu.memory_space<vmem>>, vector<1x2x256xf32>
    %626 = vector.shape_cast %625 : vector<1x2x256xf32> to vector<2x256xf32>
    %c0_383 = arith.constant 0 : index
    %c0_384 = arith.constant 0 : index
    %627 = vector.load %arg13[%c0_383, %c0_384] : memref<64x256xf32, #tpu.memory_space<vmem>>, vector<64x256xf32>
    %cst_385 = arith.constant dense<0.000000e+00> : vector<2x256xf32>
    %628 = tpu.matmul %618, %627, %cst_385 {dimension_numbers = #tpu.dot_dimension_numbers<[1], [0], [0], [1], [0, 0, 1, 1], [], []>} : vector<2x64xf32>, vector<64x256xf32>, vector<2x256xf32> -> vector<2x256xf32>
    %629 = arith.addf %626, %628 : vector<2x256xf32>
    %630 = vector.extract_strided_slice %629 {offsets = [0, 0], sizes = [2, 192], strides = [1, 1]} : vector<2x256xf32> to vector<2x192xf32>
    %631 = arith.negf %630 : vector<2x192xf32>
    %632 = math.exp %631 : vector<2x192xf32>
    %cst_386 = arith.constant 1.000000e+00 : f32
    %633 = vector.broadcast %cst_386 : f32 to vector<2x192xf32>
    %634 = arith.addf %633, %632 : vector<2x192xf32>
    %635 = arith.divf %633, %634 : vector<2x192xf32>
    %636 = vector.extract_strided_slice %629 {offsets = [0, 192], sizes = [2, 64], strides = [1, 1]} : vector<2x256xf32> to vector<2x64xf32>
    %637 = math.tanh %636 : vector<2x64xf32>
    %638 = vector.extract_strided_slice %635 {offsets = [0, 64], sizes = [2, 64], strides = [1, 1]} : vector<2x192xf32> to vector<2x64xf32>
    %639 = arith.mulf %638, %615 : vector<2x64xf32>
    %640 = vector.extract_strided_slice %635 {offsets = [0, 0], sizes = [2, 64], strides = [1, 1]} : vector<2x192xf32> to vector<2x64xf32>
    %641 = arith.mulf %640, %637 : vector<2x64xf32>
    %642 = arith.addf %639, %641 : vector<2x64xf32>
    %643 = vector.extract_strided_slice %635 {offsets = [0, 128], sizes = [2, 64], strides = [1, 1]} : vector<2x192xf32> to vector<2x64xf32>
    %644 = math.tanh %642 : vector<2x64xf32>
    %645 = arith.mulf %643, %644 : vector<2x64xf32>
    %646 = vector.extract_strided_slice %645 {offsets = [0, 0], sizes = [2, 32], strides = [1, 1]} : vector<2x64xf32> to vector<2x32xf32>
    %647 = vector.shape_cast %646 : vector<2x32xf32> to vector<2x1x32xf32>
    %c0_387 = arith.constant 0 : index
    %c14_388 = arith.constant 14 : index
    %c0_389 = arith.constant 0 : index
    %648 = vector.load %arg31[%c0_387, %c14_388, %c0_389] : memref<2x16x32xf32, #tpu.memory_space<vmem>>, vector<2x1x32xf32>
    tpu.vector_store %arg31[%c0_387, %c14_388, %c0_389], %647 {strides = array<i32>} : memref<2x16x32xf32, #tpu.memory_space<vmem>>, vector<2x1x32xf32>,
    %649 = vector.extract_strided_slice %645 {offsets = [0, 32], sizes = [2, 32], strides = [1, 1]} : vector<2x64xf32> to vector<2x32xf32>
    %650 = vector.shape_cast %649 : vector<2x32xf32> to vector<2x1x32xf32>
    %c0_390 = arith.constant 0 : index
    %c1_391 = arith.constant 1 : index
    %c0_392 = arith.constant 0 : index
    %651 = vector.load %arg32[%c0_390, %c1_391, %c0_392] : memref<2x16x32xf32, #tpu.memory_space<vmem>>, vector<2x1x32xf32>
    tpu.vector_store %arg32[%c0_390, %c1_391, %c0_392], %650 {strides = array<i32>} : memref<2x16x32xf32, #tpu.memory_space<vmem>>, vector<2x1x32xf32>,
    %c15_393 = arith.constant 15 : index
    %c0_394 = arith.constant 0 : index
    %c0_395 = arith.constant 0 : index
    %652 = vector.load %arg30[%c15_393, %c0_394, %c0_395] : memref<16x2x256xf32, #tpu.memory_space<vmem>>, vector<1x2x256xf32>
    %653 = vector.shape_cast %652 : vector<1x2x256xf32> to vector<2x256xf32>
    %c0_396 = arith.constant 0 : index
    %c0_397 = arith.constant 0 : index
    %654 = vector.load %arg13[%c0_396, %c0_397] : memref<64x256xf32, #tpu.memory_space<vmem>>, vector<64x256xf32>
    %cst_398 = arith.constant dense<0.000000e+00> : vector<2x256xf32>
    %655 = tpu.matmul %645, %654, %cst_398 {dimension_numbers = #tpu.dot_dimension_numbers<[1], [0], [0], [1], [0, 0, 1, 1], [], []>} : vector<2x64xf32>, vector<64x256xf32>, vector<2x256xf32> -> vector<2x256xf32>
    %656 = arith.addf %653, %655 : vector<2x256xf32>
    %657 = vector.extract_strided_slice %656 {offsets = [0, 0], sizes = [2, 192], strides = [1, 1]} : vector<2x256xf32> to vector<2x192xf32>
    %658 = arith.negf %657 : vector<2x192xf32>
    %659 = math.exp %658 : vector<2x192xf32>
    %cst_399 = arith.constant 1.000000e+00 : f32
    %660 = vector.broadcast %cst_399 : f32 to vector<2x192xf32>
    %661 = arith.addf %660, %659 : vector<2x192xf32>
    %662 = arith.divf %660, %661 : vector<2x192xf32>
    %663 = vector.extract_strided_slice %656 {offsets = [0, 192], sizes = [2, 64], strides = [1, 1]} : vector<2x256xf32> to vector<2x64xf32>
    %664 = math.tanh %663 : vector<2x64xf32>
    %665 = vector.extract_strided_slice %662 {offsets = [0, 64], sizes = [2, 64], strides = [1, 1]} : vector<2x192xf32> to vector<2x64xf32>
    %666 = arith.mulf %665, %642 : vector<2x64xf32>
    %667 = vector.extract_strided_slice %662 {offsets = [0, 0], sizes = [2, 64], strides = [1, 1]} : vector<2x192xf32> to vector<2x64xf32>
    %668 = arith.mulf %667, %664 : vector<2x64xf32>
    %669 = arith.addf %666, %668 : vector<2x64xf32>
    %670 = vector.extract_strided_slice %662 {offsets = [0, 128], sizes = [2, 64], strides = [1, 1]} : vector<2x192xf32> to vector<2x64xf32>
    %671 = math.tanh %669 : vector<2x64xf32>
    %672 = arith.mulf %670, %671 : vector<2x64xf32>
    %673 = vector.extract_strided_slice %672 {offsets = [0, 0], sizes = [2, 32], strides = [1, 1]} : vector<2x64xf32> to vector<2x32xf32>
    %674 = vector.shape_cast %673 : vector<2x32xf32> to vector<2x1x32xf32>
    %c0_400 = arith.constant 0 : index
    %c15_401 = arith.constant 15 : index
    %c0_402 = arith.constant 0 : index
    %675 = vector.load %arg31[%c0_400, %c15_401, %c0_402] : memref<2x16x32xf32, #tpu.memory_space<vmem>>, vector<2x1x32xf32>
    tpu.vector_store %arg31[%c0_400, %c15_401, %c0_402], %674 {strides = array<i32>} : memref<2x16x32xf32, #tpu.memory_space<vmem>>, vector<2x1x32xf32>,
    %676 = vector.extract_strided_slice %672 {offsets = [0, 32], sizes = [2, 32], strides = [1, 1]} : vector<2x64xf32> to vector<2x32xf32>
    %677 = vector.shape_cast %676 : vector<2x32xf32> to vector<2x1x32xf32>
    %c0_403 = arith.constant 0 : index
    %c0_404 = arith.constant 0 : index
    %c0_405 = arith.constant 0 : index
    %678 = vector.load %arg32[%c0_403, %c0_404, %c0_405] : memref<2x16x32xf32, #tpu.memory_space<vmem>>, vector<2x1x32xf32>
    tpu.vector_store %arg32[%c0_403, %c0_404, %c0_405], %677 {strides = array<i32>} : memref<2x16x32xf32, #tpu.memory_space<vmem>>, vector<2x1x32xf32>,
    %679 = vector.extract_strided_slice %672 {offsets = [0, 0], sizes = [2, 32], strides = [1, 1]} : vector<2x64xf32> to vector<2x32xf32>
    %c0_406 = arith.constant 0 : index
    %c0_407 = arith.constant 0 : index
    %c0_408 = arith.constant 0 : index
    %680 = vector.load %arg31[%c0_406, %c0_407, %c0_408] : memref<2x16x32xf32, #tpu.memory_space<vmem>>, vector<2x16x32xf32>
    %c0_409 = arith.constant 0 : index
    %c0_410 = arith.constant 0 : index
    %681 = vector.load %arg14[%c0_409, %c0_410] : memref<32x128xf32, #tpu.memory_space<vmem>>, vector<32x128xf32>
    "tpu.trace_start"() <{level = 10 : i32, message = "blh,hg->blg"}> : () -> ()
    %cst_411 = arith.constant dense<0.000000e+00> : vector<2x16x128xf32>
    %682 = tpu.matmul %680, %681, %cst_411 {dimension_numbers = #tpu.dot_dimension_numbers<[2], [0], [0, 1], [1], [0, 0, 0, 1, 1, 1], [], []>} : vector<2x16x32xf32>, vector<32x128xf32>, vector<2x16x128xf32> -> vector<2x16x128xf32>
    "tpu.trace_stop"() : () -> ()
    %c0_412 = arith.constant 0 : index
    %c0_413 = arith.constant 0 : index
    %c0_414 = arith.constant 0 : index
    %683 = vector.load %arg32[%c0_412, %c0_413, %c0_414] : memref<2x16x32xf32, #tpu.memory_space<vmem>>, vector<2x16x32xf32>
    %c0_415 = arith.constant 0 : index
    %c0_416 = arith.constant 0 : index
    %684 = vector.load %arg15[%c0_415, %c0_416] : memref<32x128xf32, #tpu.memory_space<vmem>>, vector<32x128xf32>
    "tpu.trace_start"() <{level = 10 : i32, message = "blh,hg->blg"}> : () -> ()
    %cst_417 = arith.constant dense<0.000000e+00> : vector<2x16x128xf32>
    %685 = tpu.matmul %683, %684, %cst_417 {dimension_numbers = #tpu.dot_dimension_numbers<[2], [0], [0, 1], [1], [0, 0, 0, 1, 1, 1], [], []>} : vector<2x16x32xf32>, vector<32x128xf32>, vector<2x16x128xf32> -> vector<2x16x128xf32>
    "tpu.trace_stop"() : () -> ()
    %686 = arith.addf %682, %685 : vector<2x16x128xf32>
    %c0_418 = arith.constant 0 : index
    %c0_419 = arith.constant 0 : index
    %c0_420 = arith.constant 0 : index
    %687 = vector.load %arg16[%c0_418, %c0_419, %c0_420] : memref<1x1x128xf32, #tpu.memory_space<vmem>>, vector<1x1x128xf32>
    %688 = vector.broadcast %687 : vector<1x1x128xf32> to vector<2x16x128xf32>
    %689 = arith.addf %686, %688 : vector<2x16x128xf32>
    %690 = vector.extract_strided_slice %689 {offsets = [0, 0, 0], sizes = [2, 1, 128], strides = [1, 1, 1]} : vector<2x16x128xf32> to vector<2x1x128xf32>
    %691 = vector.shape_cast %690 : vector<2x1x128xf32> to vector<2x128xf32>
    %c0_421 = arith.constant 0 : index
    %c0_422 = arith.constant 0 : index
    %c0_423 = arith.constant 0 : index
    %692 = vector.load %arg33[%c0_421, %c0_422, %c0_423] : memref<16x2x128xf32, #tpu.memory_space<vmem>>, vector<1x2x128xf32>
    %693 = vector.shape_cast %692 : vector<1x2x128xf32> to vector<2x128xf32>
    %694 = vector.shape_cast %691 : vector<2x128xf32> to vector<1x2x128xf32>
    tpu.vector_store %arg33[%c0_421, %c0_422, %c0_423], %694 {strides = array<i32>} : memref<16x2x128xf32, #tpu.memory_space<vmem>>, vector<1x2x128xf32>,
    %695 = vector.extract_strided_slice %689 {offsets = [0, 1, 0], sizes = [2, 1, 128], strides = [1, 1, 1]} : vector<2x16x128xf32> to vector<2x1x128xf32>
    %696 = vector.shape_cast %695 : vector<2x1x128xf32> to vector<2x128xf32>
    %c1_424 = arith.constant 1 : index
    %c0_425 = arith.constant 0 : index
    %c0_426 = arith.constant 0 : index
    %697 = vector.load %arg33[%c1_424, %c0_425, %c0_426] : memref<16x2x128xf32, #tpu.memory_space<vmem>>, vector<1x2x128xf32>
    %698 = vector.shape_cast %697 : vector<1x2x128xf32> to vector<2x128xf32>
    %699 = vector.shape_cast %696 : vector<2x128xf32> to vector<1x2x128xf32>
    tpu.vector_store %arg33[%c1_424, %c0_425, %c0_426], %699 {strides = array<i32>} : memref<16x2x128xf32, #tpu.memory_space<vmem>>, vector<1x2x128xf32>,
    %700 = vector.extract_strided_slice %689 {offsets = [0, 2, 0], sizes = [2, 1, 128], strides = [1, 1, 1]} : vector<2x16x128xf32> to vector<2x1x128xf32>
    %701 = vector.shape_cast %700 : vector<2x1x128xf32> to vector<2x128xf32>
    %c2_427 = arith.constant 2 : index
    %c0_428 = arith.constant 0 : index
    %c0_429 = arith.constant 0 : index
    %702 = vector.load %arg33[%c2_427, %c0_428, %c0_429] : memref<16x2x128xf32, #tpu.memory_space<vmem>>, vector<1x2x128xf32>
    %703 = vector.shape_cast %702 : vector<1x2x128xf32> to vector<2x128xf32>
    %704 = vector.shape_cast %701 : vector<2x128xf32> to vector<1x2x128xf32>
    tpu.vector_store %arg33[%c2_427, %c0_428, %c0_429], %704 {strides = array<i32>} : memref<16x2x128xf32, #tpu.memory_space<vmem>>, vector<1x2x128xf32>,
    %705 = vector.extract_strided_slice %689 {offsets = [0, 3, 0], sizes = [2, 1, 128], strides = [1, 1, 1]} : vector<2x16x128xf32> to vector<2x1x128xf32>
    %706 = vector.shape_cast %705 : vector<2x1x128xf32> to vector<2x128xf32>
    %c3_430 = arith.constant 3 : index
    %c0_431 = arith.constant 0 : index
    %c0_432 = arith.constant 0 : index
    %707 = vector.load %arg33[%c3_430, %c0_431, %c0_432] : memref<16x2x128xf32, #tpu.memory_space<vmem>>, vector<1x2x128xf32>
    %708 = vector.shape_cast %707 : vector<1x2x128xf32> to vector<2x128xf32>
    %709 = vector.shape_cast %706 : vector<2x128xf32> to vector<1x2x128xf32>
    tpu.vector_store %arg33[%c3_430, %c0_431, %c0_432], %709 {strides = array<i32>} : memref<16x2x128xf32, #tpu.memory_space<vmem>>, vector<1x2x128xf32>,
    %710 = vector.extract_strided_slice %689 {offsets = [0, 4, 0], sizes = [2, 1, 128], strides = [1, 1, 1]} : vector<2x16x128xf32> to vector<2x1x128xf32>
    %711 = vector.shape_cast %710 : vector<2x1x128xf32> to vector<2x128xf32>
    %c4_433 = arith.constant 4 : index
    %c0_434 = arith.constant 0 : index
    %c0_435 = arith.constant 0 : index
    %712 = vector.load %arg33[%c4_433, %c0_434, %c0_435] : memref<16x2x128xf32, #tpu.memory_space<vmem>>, vector<1x2x128xf32>
    %713 = vector.shape_cast %712 : vector<1x2x128xf32> to vector<2x128xf32>
    %714 = vector.shape_cast %711 : vector<2x128xf32> to vector<1x2x128xf32>
    tpu.vector_store %arg33[%c4_433, %c0_434, %c0_435], %714 {strides = array<i32>} : memref<16x2x128xf32, #tpu.memory_space<vmem>>, vector<1x2x128xf32>,
    %715 = vector.extract_strided_slice %689 {offsets = [0, 5, 0], sizes = [2, 1, 128], strides = [1, 1, 1]} : vector<2x16x128xf32> to vector<2x1x128xf32>
    %716 = vector.shape_cast %715 : vector<2x1x128xf32> to vector<2x128xf32>
    %c5_436 = arith.constant 5 : index
    %c0_437 = arith.constant 0 : index
    %c0_438 = arith.constant 0 : index
    %717 = vector.load %arg33[%c5_436, %c0_437, %c0_438] : memref<16x2x128xf32, #tpu.memory_space<vmem>>, vector<1x2x128xf32>
    %718 = vector.shape_cast %717 : vector<1x2x128xf32> to vector<2x128xf32>
    %719 = vector.shape_cast %716 : vector<2x128xf32> to vector<1x2x128xf32>
    tpu.vector_store %arg33[%c5_436, %c0_437, %c0_438], %719 {strides = array<i32>} : memref<16x2x128xf32, #tpu.memory_space<vmem>>, vector<1x2x128xf32>,
    %720 = vector.extract_strided_slice %689 {offsets = [0, 6, 0], sizes = [2, 1, 128], strides = [1, 1, 1]} : vector<2x16x128xf32> to vector<2x1x128xf32>
    %721 = vector.shape_cast %720 : vector<2x1x128xf32> to vector<2x128xf32>
    %c6_439 = arith.constant 6 : index
    %c0_440 = arith.constant 0 : index
    %c0_441 = arith.constant 0 : index
    %722 = vector.load %arg33[%c6_439, %c0_440, %c0_441] : memref<16x2x128xf32, #tpu.memory_space<vmem>>, vector<1x2x128xf32>
    %723 = vector.shape_cast %722 : vector<1x2x128xf32> to vector<2x128xf32>
    %724 = vector.shape_cast %721 : vector<2x128xf32> to vector<1x2x128xf32>
    tpu.vector_store %arg33[%c6_439, %c0_440, %c0_441], %724 {strides = array<i32>} : memref<16x2x128xf32, #tpu.memory_space<vmem>>, vector<1x2x128xf32>,
    %725 = vector.extract_strided_slice %689 {offsets = [0, 7, 0], sizes = [2, 1, 128], strides = [1, 1, 1]} : vector<2x16x128xf32> to vector<2x1x128xf32>
    %726 = vector.shape_cast %725 : vector<2x1x128xf32> to vector<2x128xf32>
    %c7_442 = arith.constant 7 : index
    %c0_443 = arith.constant 0 : index
    %c0_444 = arith.constant 0 : index
    %727 = vector.load %arg33[%c7_442, %c0_443, %c0_444] : memref<16x2x128xf32, #tpu.memory_space<vmem>>, vector<1x2x128xf32>
    %728 = vector.shape_cast %727 : vector<1x2x128xf32> to vector<2x128xf32>
    %729 = vector.shape_cast %726 : vector<2x128xf32> to vector<1x2x128xf32>
    tpu.vector_store %arg33[%c7_442, %c0_443, %c0_444], %729 {strides = array<i32>} : memref<16x2x128xf32, #tpu.memory_space<vmem>>, vector<1x2x128xf32>,
    %730 = vector.extract_strided_slice %689 {offsets = [0, 8, 0], sizes = [2, 1, 128], strides = [1, 1, 1]} : vector<2x16x128xf32> to vector<2x1x128xf32>
    %731 = vector.shape_cast %730 : vector<2x1x128xf32> to vector<2x128xf32>
    %c8_445 = arith.constant 8 : index
    %c0_446 = arith.constant 0 : index
    %c0_447 = arith.constant 0 : index
    %732 = vector.load %arg33[%c8_445, %c0_446, %c0_447] : memref<16x2x128xf32, #tpu.memory_space<vmem>>, vector<1x2x128xf32>
    %733 = vector.shape_cast %732 : vector<1x2x128xf32> to vector<2x128xf32>
    %734 = vector.shape_cast %731 : vector<2x128xf32> to vector<1x2x128xf32>
    tpu.vector_store %arg33[%c8_445, %c0_446, %c0_447], %734 {strides = array<i32>} : memref<16x2x128xf32, #tpu.memory_space<vmem>>, vector<1x2x128xf32>,
    %735 = vector.extract_strided_slice %689 {offsets = [0, 9, 0], sizes = [2, 1, 128], strides = [1, 1, 1]} : vector<2x16x128xf32> to vector<2x1x128xf32>
    %736 = vector.shape_cast %735 : vector<2x1x128xf32> to vector<2x128xf32>
    %c9_448 = arith.constant 9 : index
    %c0_449 = arith.constant 0 : index
    %c0_450 = arith.constant 0 : index
    %737 = vector.load %arg33[%c9_448, %c0_449, %c0_450] : memref<16x2x128xf32, #tpu.memory_space<vmem>>, vector<1x2x128xf32>
    %738 = vector.shape_cast %737 : vector<1x2x128xf32> to vector<2x128xf32>
    %739 = vector.shape_cast %736 : vector<2x128xf32> to vector<1x2x128xf32>
    tpu.vector_store %arg33[%c9_448, %c0_449, %c0_450], %739 {strides = array<i32>} : memref<16x2x128xf32, #tpu.memory_space<vmem>>, vector<1x2x128xf32>,
    %740 = vector.extract_strided_slice %689 {offsets = [0, 10, 0], sizes = [2, 1, 128], strides = [1, 1, 1]} : vector<2x16x128xf32> to vector<2x1x128xf32>
    %741 = vector.shape_cast %740 : vector<2x1x128xf32> to vector<2x128xf32>
    %c10_451 = arith.constant 10 : index
    %c0_452 = arith.constant 0 : index
    %c0_453 = arith.constant 0 : index
    %742 = vector.load %arg33[%c10_451, %c0_452, %c0_453] : memref<16x2x128xf32, #tpu.memory_space<vmem>>, vector<1x2x128xf32>
    %743 = vector.shape_cast %742 : vector<1x2x128xf32> to vector<2x128xf32>
    %744 = vector.shape_cast %741 : vector<2x128xf32> to vector<1x2x128xf32>
    tpu.vector_store %arg33[%c10_451, %c0_452, %c0_453], %744 {strides = array<i32>} : memref<16x2x128xf32, #tpu.memory_space<vmem>>, vector<1x2x128xf32>,
    %745 = vector.extract_strided_slice %689 {offsets = [0, 11, 0], sizes = [2, 1, 128], strides = [1, 1, 1]} : vector<2x16x128xf32> to vector<2x1x128xf32>
    %746 = vector.shape_cast %745 : vector<2x1x128xf32> to vector<2x128xf32>
    %c11_454 = arith.constant 11 : index
    %c0_455 = arith.constant 0 : index
    %c0_456 = arith.constant 0 : index
    %747 = vector.load %arg33[%c11_454, %c0_455, %c0_456] : memref<16x2x128xf32, #tpu.memory_space<vmem>>, vector<1x2x128xf32>
    %748 = vector.shape_cast %747 : vector<1x2x128xf32> to vector<2x128xf32>
    %749 = vector.shape_cast %746 : vector<2x128xf32> to vector<1x2x128xf32>
    tpu.vector_store %arg33[%c11_454, %c0_455, %c0_456], %749 {strides = array<i32>} : memref<16x2x128xf32, #tpu.memory_space<vmem>>, vector<1x2x128xf32>,
    %750 = vector.extract_strided_slice %689 {offsets = [0, 12, 0], sizes = [2, 1, 128], strides = [1, 1, 1]} : vector<2x16x128xf32> to vector<2x1x128xf32>
    %751 = vector.shape_cast %750 : vector<2x1x128xf32> to vector<2x128xf32>
    %c12_457 = arith.constant 12 : index
    %c0_458 = arith.constant 0 : index
    %c0_459 = arith.constant 0 : index
    %752 = vector.load %arg33[%c12_457, %c0_458, %c0_459] : memref<16x2x128xf32, #tpu.memory_space<vmem>>, vector<1x2x128xf32>
    %753 = vector.shape_cast %752 : vector<1x2x128xf32> to vector<2x128xf32>
    %754 = vector.shape_cast %751 : vector<2x128xf32> to vector<1x2x128xf32>
    tpu.vector_store %arg33[%c12_457, %c0_458, %c0_459], %754 {strides = array<i32>} : memref<16x2x128xf32, #tpu.memory_space<vmem>>, vector<1x2x128xf32>,
    %755 = vector.extract_strided_slice %689 {offsets = [0, 13, 0], sizes = [2, 1, 128], strides = [1, 1, 1]} : vector<2x16x128xf32> to vector<2x1x128xf32>
    %756 = vector.shape_cast %755 : vector<2x1x128xf32> to vector<2x128xf32>
    %c13_460 = arith.constant 13 : index
    %c0_461 = arith.constant 0 : index
    %c0_462 = arith.constant 0 : index
    %757 = vector.load %arg33[%c13_460, %c0_461, %c0_462] : memref<16x2x128xf32, #tpu.memory_space<vmem>>, vector<1x2x128xf32>
    %758 = vector.shape_cast %757 : vector<1x2x128xf32> to vector<2x128xf32>
    %759 = vector.shape_cast %756 : vector<2x128xf32> to vector<1x2x128xf32>
    tpu.vector_store %arg33[%c13_460, %c0_461, %c0_462], %759 {strides = array<i32>} : memref<16x2x128xf32, #tpu.memory_space<vmem>>, vector<1x2x128xf32>,
    %760 = vector.extract_strided_slice %689 {offsets = [0, 14, 0], sizes = [2, 1, 128], strides = [1, 1, 1]} : vector<2x16x128xf32> to vector<2x1x128xf32>
    %761 = vector.shape_cast %760 : vector<2x1x128xf32> to vector<2x128xf32>
    %c14_463 = arith.constant 14 : index
    %c0_464 = arith.constant 0 : index
    %c0_465 = arith.constant 0 : index
    %762 = vector.load %arg33[%c14_463, %c0_464, %c0_465] : memref<16x2x128xf32, #tpu.memory_space<vmem>>, vector<1x2x128xf32>
    %763 = vector.shape_cast %762 : vector<1x2x128xf32> to vector<2x128xf32>
    %764 = vector.shape_cast %761 : vector<2x128xf32> to vector<1x2x128xf32>
    tpu.vector_store %arg33[%c14_463, %c0_464, %c0_465], %764 {strides = array<i32>} : memref<16x2x128xf32, #tpu.memory_space<vmem>>, vector<1x2x128xf32>,
    %765 = vector.extract_strided_slice %689 {offsets = [0, 15, 0], sizes = [2, 1, 128], strides = [1, 1, 1]} : vector<2x16x128xf32> to vector<2x1x128xf32>
    %766 = vector.shape_cast %765 : vector<2x1x128xf32> to vector<2x128xf32>
    %c15_466 = arith.constant 15 : index
    %c0_467 = arith.constant 0 : index
    %c0_468 = arith.constant 0 : index
    %767 = vector.load %arg33[%c15_466, %c0_467, %c0_468] : memref<16x2x128xf32, #tpu.memory_space<vmem>>, vector<1x2x128xf32>
    %768 = vector.shape_cast %767 : vector<1x2x128xf32> to vector<2x128xf32>
    %769 = vector.shape_cast %766 : vector<2x128xf32> to vector<1x2x128xf32>
    tpu.vector_store %arg33[%c15_466, %c0_467, %c0_468], %769 {strides = array<i32>} : memref<16x2x128xf32, #tpu.memory_space<vmem>>, vector<1x2x128xf32>,
    %770 = tpu.concatenate %679, %273 in 1 : vector<2x32xf32>, vector<2x32xf32> -> vector<2x64xf32>
    %c0_469 = arith.constant 0 : index
    %c0_470 = arith.constant 0 : index
    %771 = vector.load %arg18[%c0_469, %c0_470] : memref<64x128xf32, #tpu.memory_space<vmem>>, vector<64x128xf32>
    %cst_471 = arith.constant dense<0.000000e+00> : vector<2x128xf32>
    %772 = tpu.matmul %770, %771, %cst_471 {dimension_numbers = #tpu.dot_dimension_numbers<[1], [0], [0], [1], [0, 0, 1, 1], [], []>} : vector<2x64xf32>, vector<64x128xf32>, vector<2x128xf32> -> vector<2x128xf32>
    %c0_472 = arith.constant 0 : index
    %c0_473 = arith.constant 0 : index
    %773 = vector.load %arg19[%c0_472, %c0_473] : memref<1x128xf32, #tpu.memory_space<vmem>>, vector<1x128xf32>
    %774 = vector.broadcast %773 : vector<1x128xf32> to vector<2x128xf32>
    %775 = arith.addf %772, %774 : vector<2x128xf32>
    %776 = vector.extract_strided_slice %775 {offsets = [0, 0], sizes = [2, 96], strides = [1, 1]} : vector<2x128xf32> to vector<2x96xf32>
    %777 = arith.negf %776 : vector<2x96xf32>
    %778 = math.exp %777 : vector<2x96xf32>
    %cst_474 = arith.constant 1.000000e+00 : f32
    %779 = vector.broadcast %cst_474 : f32 to vector<2x96xf32>
    %780 = arith.addf %779, %778 : vector<2x96xf32>
    %781 = arith.divf %779, %780 : vector<2x96xf32>
    %782 = vector.extract_strided_slice %775 {offsets = [0, 96], sizes = [2, 32], strides = [1, 1]} : vector<2x128xf32> to vector<2x32xf32>
    %783 = math.tanh %782 : vector<2x32xf32>
    %784 = vector.extract_strided_slice %781 {offsets = [0, 0], sizes = [2, 32], strides = [1, 1]} : vector<2x96xf32> to vector<2x32xf32>
    %785 = arith.mulf %784, %783 : vector<2x32xf32>
    %786 = vector.extract_strided_slice %781 {offsets = [0, 64], sizes = [2, 32], strides = [1, 1]} : vector<2x96xf32> to vector<2x32xf32>
    %787 = math.tanh %785 : vector<2x32xf32>
    %788 = arith.mulf %786, %787 : vector<2x32xf32>
    %cst_475 = arith.constant 0.000000e+00 : f32
    %789 = vector.broadcast %cst_475 : f32 to vector<2x32xf32>
    %cst_476 = arith.constant 0.000000e+00 : f32
    %790 = vector.broadcast %cst_476 : f32 to vector<2x32xf32>
    %c0_477 = arith.constant 0 : index
    %c0_478 = arith.constant 0 : index
    %c0_479 = arith.constant 0 : index
    %791 = vector.load %arg33[%c0_477, %c0_478, %c0_479] : memref<16x2x128xf32, #tpu.memory_space<vmem>>, vector<1x2x128xf32>
    %792 = vector.shape_cast %791 : vector<1x2x128xf32> to vector<2x128xf32>
    %c0_480 = arith.constant 0 : index
    %c0_481 = arith.constant 0 : index
    %793 = vector.load %arg17[%c0_480, %c0_481] : memref<32x128xf32, #tpu.memory_space<vmem>>, vector<32x128xf32>
    %cst_482 = arith.constant dense<0.000000e+00> : vector<2x128xf32>
    %794 = tpu.matmul %789, %793, %cst_482 {dimension_numbers = #tpu.dot_dimension_numbers<[1], [0], [0], [1], [0, 0, 1, 1], [], []>} : vector<2x32xf32>, vector<32x128xf32>, vector<2x128xf32> -> vector<2x128xf32>
    %795 = arith.addf %792, %794 : vector<2x128xf32>
    %796 = vector.extract_strided_slice %795 {offsets = [0, 0], sizes = [2, 96], strides = [1, 1]} : vector<2x128xf32> to vector<2x96xf32>
    %797 = arith.negf %796 : vector<2x96xf32>
    %798 = math.exp %797 : vector<2x96xf32>
    %cst_483 = arith.constant 1.000000e+00 : f32
    %799 = vector.broadcast %cst_483 : f32 to vector<2x96xf32>
    %800 = arith.addf %799, %798 : vector<2x96xf32>
    %801 = arith.divf %799, %800 : vector<2x96xf32>
    %802 = vector.extract_strided_slice %795 {offsets = [0, 96], sizes = [2, 32], strides = [1, 1]} : vector<2x128xf32> to vector<2x32xf32>
    %803 = math.tanh %802 : vector<2x32xf32>
    %804 = vector.extract_strided_slice %801 {offsets = [0, 32], sizes = [2, 32], strides = [1, 1]} : vector<2x96xf32> to vector<2x32xf32>
    %805 = arith.mulf %804, %790 : vector<2x32xf32>
    %806 = vector.extract_strided_slice %801 {offsets = [0, 0], sizes = [2, 32], strides = [1, 1]} : vector<2x96xf32> to vector<2x32xf32>
    %807 = arith.mulf %806, %803 : vector<2x32xf32>
    %808 = arith.addf %805, %807 : vector<2x32xf32>
    %809 = vector.extract_strided_slice %801 {offsets = [0, 64], sizes = [2, 32], strides = [1, 1]} : vector<2x96xf32> to vector<2x32xf32>
    %810 = math.tanh %808 : vector<2x32xf32>
    %811 = arith.mulf %809, %810 : vector<2x32xf32>
    %c1_484 = arith.constant 1 : index
    %c0_485 = arith.constant 0 : index
    %c0_486 = arith.constant 0 : index
    %812 = vector.load %arg33[%c1_484, %c0_485, %c0_486] : memref<16x2x128xf32, #tpu.memory_space<vmem>>, vector<1x2x128xf32>
    %813 = vector.shape_cast %812 : vector<1x2x128xf32> to vector<2x128xf32>
    %c0_487 = arith.constant 0 : index
    %c0_488 = arith.constant 0 : index
    %814 = vector.load %arg17[%c0_487, %c0_488] : memref<32x128xf32, #tpu.memory_space<vmem>>, vector<32x128xf32>
    %cst_489 = arith.constant dense<0.000000e+00> : vector<2x128xf32>
    %815 = tpu.matmul %811, %814, %cst_489 {dimension_numbers = #tpu.dot_dimension_numbers<[1], [0], [0], [1], [0, 0, 1, 1], [], []>} : vector<2x32xf32>, vector<32x128xf32>, vector<2x128xf32> -> vector<2x128xf32>
    %816 = arith.addf %813, %815 : vector<2x128xf32>
    %817 = vector.extract_strided_slice %816 {offsets = [0, 0], sizes = [2, 96], strides = [1, 1]} : vector<2x128xf32> to vector<2x96xf32>
    %818 = arith.negf %817 : vector<2x96xf32>
    %819 = math.exp %818 : vector<2x96xf32>
    %cst_490 = arith.constant 1.000000e+00 : f32
    %820 = vector.broadcast %cst_490 : f32 to vector<2x96xf32>
    %821 = arith.addf %820, %819 : vector<2x96xf32>
    %822 = arith.divf %820, %821 : vector<2x96xf32>
    %823 = vector.extract_strided_slice %816 {offsets = [0, 96], sizes = [2, 32], strides = [1, 1]} : vector<2x128xf32> to vector<2x32xf32>
    %824 = math.tanh %823 : vector<2x32xf32>
    %825 = vector.extract_strided_slice %822 {offsets = [0, 32], sizes = [2, 32], strides = [1, 1]} : vector<2x96xf32> to vector<2x32xf32>
    %826 = arith.mulf %825, %808 : vector<2x32xf32>
    %827 = vector.extract_strided_slice %822 {offsets = [0, 0], sizes = [2, 32], strides = [1, 1]} : vector<2x96xf32> to vector<2x32xf32>
    %828 = arith.mulf %827, %824 : vector<2x32xf32>
    %829 = arith.addf %826, %828 : vector<2x32xf32>
    %830 = vector.extract_strided_slice %822 {offsets = [0, 64], sizes = [2, 32], strides = [1, 1]} : vector<2x96xf32> to vector<2x32xf32>
    %831 = math.tanh %829 : vector<2x32xf32>
    %832 = arith.mulf %830, %831 : vector<2x32xf32>
    %c2_491 = arith.constant 2 : index
    %c0_492 = arith.constant 0 : index
    %c0_493 = arith.constant 0 : index
    %833 = vector.load %arg33[%c2_491, %c0_492, %c0_493] : memref<16x2x128xf32, #tpu.memory_space<vmem>>, vector<1x2x128xf32>
    %834 = vector.shape_cast %833 : vector<1x2x128xf32> to vector<2x128xf32>
    %c0_494 = arith.constant 0 : index
    %c0_495 = arith.constant 0 : index
    %835 = vector.load %arg17[%c0_494, %c0_495] : memref<32x128xf32, #tpu.memory_space<vmem>>, vector<32x128xf32>
    %cst_496 = arith.constant dense<0.000000e+00> : vector<2x128xf32>
    %836 = tpu.matmul %832, %835, %cst_496 {dimension_numbers = #tpu.dot_dimension_numbers<[1], [0], [0], [1], [0, 0, 1, 1], [], []>} : vector<2x32xf32>, vector<32x128xf32>, vector<2x128xf32> -> vector<2x128xf32>
    %837 = arith.addf %834, %836 : vector<2x128xf32>
    %838 = vector.extract_strided_slice %837 {offsets = [0, 0], sizes = [2, 96], strides = [1, 1]} : vector<2x128xf32> to vector<2x96xf32>
    %839 = arith.negf %838 : vector<2x96xf32>
    %840 = math.exp %839 : vector<2x96xf32>
    %cst_497 = arith.constant 1.000000e+00 : f32
    %841 = vector.broadcast %cst_497 : f32 to vector<2x96xf32>
    %842 = arith.addf %841, %840 : vector<2x96xf32>
    %843 = arith.divf %841, %842 : vector<2x96xf32>
    %844 = vector.extract_strided_slice %837 {offsets = [0, 96], sizes = [2, 32], strides = [1, 1]} : vector<2x128xf32> to vector<2x32xf32>
    %845 = math.tanh %844 : vector<2x32xf32>
    %846 = vector.extract_strided_slice %843 {offsets = [0, 32], sizes = [2, 32], strides = [1, 1]} : vector<2x96xf32> to vector<2x32xf32>
    %847 = arith.mulf %846, %829 : vector<2x32xf32>
    %848 = vector.extract_strided_slice %843 {offsets = [0, 0], sizes = [2, 32], strides = [1, 1]} : vector<2x96xf32> to vector<2x32xf32>
    %849 = arith.mulf %848, %845 : vector<2x32xf32>
    %850 = arith.addf %847, %849 : vector<2x32xf32>
    %851 = vector.extract_strided_slice %843 {offsets = [0, 64], sizes = [2, 32], strides = [1, 1]} : vector<2x96xf32> to vector<2x32xf32>
    %852 = math.tanh %850 : vector<2x32xf32>
    %853 = arith.mulf %851, %852 : vector<2x32xf32>
    %c3_498 = arith.constant 3 : index
    %c0_499 = arith.constant 0 : index
    %c0_500 = arith.constant 0 : index
    %854 = vector.load %arg33[%c3_498, %c0_499, %c0_500] : memref<16x2x128xf32, #tpu.memory_space<vmem>>, vector<1x2x128xf32>
    %855 = vector.shape_cast %854 : vector<1x2x128xf32> to vector<2x128xf32>
    %c0_501 = arith.constant 0 : index
    %c0_502 = arith.constant 0 : index
    %856 = vector.load %arg17[%c0_501, %c0_502] : memref<32x128xf32, #tpu.memory_space<vmem>>, vector<32x128xf32>
    %cst_503 = arith.constant dense<0.000000e+00> : vector<2x128xf32>
    %857 = tpu.matmul %853, %856, %cst_503 {dimension_numbers = #tpu.dot_dimension_numbers<[1], [0], [0], [1], [0, 0, 1, 1], [], []>} : vector<2x32xf32>, vector<32x128xf32>, vector<2x128xf32> -> vector<2x128xf32>
    %858 = arith.addf %855, %857 : vector<2x128xf32>
    %859 = vector.extract_strided_slice %858 {offsets = [0, 0], sizes = [2, 96], strides = [1, 1]} : vector<2x128xf32> to vector<2x96xf32>
    %860 = arith.negf %859 : vector<2x96xf32>
    %861 = math.exp %860 : vector<2x96xf32>
    %cst_504 = arith.constant 1.000000e+00 : f32
    %862 = vector.broadcast %cst_504 : f32 to vector<2x96xf32>
    %863 = arith.addf %862, %861 : vector<2x96xf32>
    %864 = arith.divf %862, %863 : vector<2x96xf32>
    %865 = vector.extract_strided_slice %858 {offsets = [0, 96], sizes = [2, 32], strides = [1, 1]} : vector<2x128xf32> to vector<2x32xf32>
    %866 = math.tanh %865 : vector<2x32xf32>
    %867 = vector.extract_strided_slice %864 {offsets = [0, 32], sizes = [2, 32], strides = [1, 1]} : vector<2x96xf32> to vector<2x32xf32>
    %868 = arith.mulf %867, %850 : vector<2x32xf32>
    %869 = vector.extract_strided_slice %864 {offsets = [0, 0], sizes = [2, 32], strides = [1, 1]} : vector<2x96xf32> to vector<2x32xf32>
    %870 = arith.mulf %869, %866 : vector<2x32xf32>
    %871 = arith.addf %868, %870 : vector<2x32xf32>
    %872 = vector.extract_strided_slice %864 {offsets = [0, 64], sizes = [2, 32], strides = [1, 1]} : vector<2x96xf32> to vector<2x32xf32>
    %873 = math.tanh %871 : vector<2x32xf32>
    %874 = arith.mulf %872, %873 : vector<2x32xf32>
    %c4_505 = arith.constant 4 : index
    %c0_506 = arith.constant 0 : index
    %c0_507 = arith.constant 0 : index
    %875 = vector.load %arg33[%c4_505, %c0_506, %c0_507] : memref<16x2x128xf32, #tpu.memory_space<vmem>>, vector<1x2x128xf32>
    %876 = vector.shape_cast %875 : vector<1x2x128xf32> to vector<2x128xf32>
    %c0_508 = arith.constant 0 : index
    %c0_509 = arith.constant 0 : index
    %877 = vector.load %arg17[%c0_508, %c0_509] : memref<32x128xf32, #tpu.memory_space<vmem>>, vector<32x128xf32>
    %cst_510 = arith.constant dense<0.000000e+00> : vector<2x128xf32>
    %878 = tpu.matmul %874, %877, %cst_510 {dimension_numbers = #tpu.dot_dimension_numbers<[1], [0], [0], [1], [0, 0, 1, 1], [], []>} : vector<2x32xf32>, vector<32x128xf32>, vector<2x128xf32> -> vector<2x128xf32>
    %879 = arith.addf %876, %878 : vector<2x128xf32>
    %880 = vector.extract_strided_slice %879 {offsets = [0, 0], sizes = [2, 96], strides = [1, 1]} : vector<2x128xf32> to vector<2x96xf32>
    %881 = arith.negf %880 : vector<2x96xf32>
    %882 = math.exp %881 : vector<2x96xf32>
    %cst_511 = arith.constant 1.000000e+00 : f32
    %883 = vector.broadcast %cst_511 : f32 to vector<2x96xf32>
    %884 = arith.addf %883, %882 : vector<2x96xf32>
    %885 = arith.divf %883, %884 : vector<2x96xf32>
    %886 = vector.extract_strided_slice %879 {offsets = [0, 96], sizes = [2, 32], strides = [1, 1]} : vector<2x128xf32> to vector<2x32xf32>
    %887 = math.tanh %886 : vector<2x32xf32>
    %888 = vector.extract_strided_slice %885 {offsets = [0, 32], sizes = [2, 32], strides = [1, 1]} : vector<2x96xf32> to vector<2x32xf32>
    %889 = arith.mulf %888, %871 : vector<2x32xf32>
    %890 = vector.extract_strided_slice %885 {offsets = [0, 0], sizes = [2, 32], strides = [1, 1]} : vector<2x96xf32> to vector<2x32xf32>
    %891 = arith.mulf %890, %887 : vector<2x32xf32>
    %892 = arith.addf %889, %891 : vector<2x32xf32>
    %893 = vector.extract_strided_slice %885 {offsets = [0, 64], sizes = [2, 32], strides = [1, 1]} : vector<2x96xf32> to vector<2x32xf32>
    %894 = math.tanh %892 : vector<2x32xf32>
    %895 = arith.mulf %893, %894 : vector<2x32xf32>
    %c5_512 = arith.constant 5 : index
    %c0_513 = arith.constant 0 : index
    %c0_514 = arith.constant 0 : index
    %896 = vector.load %arg33[%c5_512, %c0_513, %c0_514] : memref<16x2x128xf32, #tpu.memory_space<vmem>>, vector<1x2x128xf32>
    %897 = vector.shape_cast %896 : vector<1x2x128xf32> to vector<2x128xf32>
    %c0_515 = arith.constant 0 : index
    %c0_516 = arith.constant 0 : index
    %898 = vector.load %arg17[%c0_515, %c0_516] : memref<32x128xf32, #tpu.memory_space<vmem>>, vector<32x128xf32>
    %cst_517 = arith.constant dense<0.000000e+00> : vector<2x128xf32>
    %899 = tpu.matmul %895, %898, %cst_517 {dimension_numbers = #tpu.dot_dimension_numbers<[1], [0], [0], [1], [0, 0, 1, 1], [], []>} : vector<2x32xf32>, vector<32x128xf32>, vector<2x128xf32> -> vector<2x128xf32>
    %900 = arith.addf %897, %899 : vector<2x128xf32>
    %901 = vector.extract_strided_slice %900 {offsets = [0, 0], sizes = [2, 96], strides = [1, 1]} : vector<2x128xf32> to vector<2x96xf32>
    %902 = arith.negf %901 : vector<2x96xf32>
    %903 = math.exp %902 : vector<2x96xf32>
    %cst_518 = arith.constant 1.000000e+00 : f32
    %904 = vector.broadcast %cst_518 : f32 to vector<2x96xf32>
    %905 = arith.addf %904, %903 : vector<2x96xf32>
    %906 = arith.divf %904, %905 : vector<2x96xf32>
    %907 = vector.extract_strided_slice %900 {offsets = [0, 96], sizes = [2, 32], strides = [1, 1]} : vector<2x128xf32> to vector<2x32xf32>
    %908 = math.tanh %907 : vector<2x32xf32>
    %909 = vector.extract_strided_slice %906 {offsets = [0, 32], sizes = [2, 32], strides = [1, 1]} : vector<2x96xf32> to vector<2x32xf32>
    %910 = arith.mulf %909, %892 : vector<2x32xf32>
    %911 = vector.extract_strided_slice %906 {offsets = [0, 0], sizes = [2, 32], strides = [1, 1]} : vector<2x96xf32> to vector<2x32xf32>
    %912 = arith.mulf %911, %908 : vector<2x32xf32>
    %913 = arith.addf %910, %912 : vector<2x32xf32>
    %914 = vector.extract_strided_slice %906 {offsets = [0, 64], sizes = [2, 32], strides = [1, 1]} : vector<2x96xf32> to vector<2x32xf32>
    %915 = math.tanh %913 : vector<2x32xf32>
    %916 = arith.mulf %914, %915 : vector<2x32xf32>
    %c6_519 = arith.constant 6 : index
    %c0_520 = arith.constant 0 : index
    %c0_521 = arith.constant 0 : index
    %917 = vector.load %arg33[%c6_519, %c0_520, %c0_521] : memref<16x2x128xf32, #tpu.memory_space<vmem>>, vector<1x2x128xf32>
    %918 = vector.shape_cast %917 : vector<1x2x128xf32> to vector<2x128xf32>
    %c0_522 = arith.constant 0 : index
    %c0_523 = arith.constant 0 : index
    %919 = vector.load %arg17[%c0_522, %c0_523] : memref<32x128xf32, #tpu.memory_space<vmem>>, vector<32x128xf32>
    %cst_524 = arith.constant dense<0.000000e+00> : vector<2x128xf32>
    %920 = tpu.matmul %916, %919, %cst_524 {dimension_numbers = #tpu.dot_dimension_numbers<[1], [0], [0], [1], [0, 0, 1, 1], [], []>} : vector<2x32xf32>, vector<32x128xf32>, vector<2x128xf32> -> vector<2x128xf32>
    %921 = arith.addf %918, %920 : vector<2x128xf32>
    %922 = vector.extract_strided_slice %921 {offsets = [0, 0], sizes = [2, 96], strides = [1, 1]} : vector<2x128xf32> to vector<2x96xf32>
    %923 = arith.negf %922 : vector<2x96xf32>
    %924 = math.exp %923 : vector<2x96xf32>
    %cst_525 = arith.constant 1.000000e+00 : f32
    %925 = vector.broadcast %cst_525 : f32 to vector<2x96xf32>
    %926 = arith.addf %925, %924 : vector<2x96xf32>
    %927 = arith.divf %925, %926 : vector<2x96xf32>
    %928 = vector.extract_strided_slice %921 {offsets = [0, 96], sizes = [2, 32], strides = [1, 1]} : vector<2x128xf32> to vector<2x32xf32>
    %929 = math.tanh %928 : vector<2x32xf32>
    %930 = vector.extract_strided_slice %927 {offsets = [0, 32], sizes = [2, 32], strides = [1, 1]} : vector<2x96xf32> to vector<2x32xf32>
    %931 = arith.mulf %930, %913 : vector<2x32xf32>
    %932 = vector.extract_strided_slice %927 {offsets = [0, 0], sizes = [2, 32], strides = [1, 1]} : vector<2x96xf32> to vector<2x32xf32>
    %933 = arith.mulf %932, %929 : vector<2x32xf32>
    %934 = arith.addf %931, %933 : vector<2x32xf32>
    %935 = vector.extract_strided_slice %927 {offsets = [0, 64], sizes = [2, 32], strides = [1, 1]} : vector<2x96xf32> to vector<2x32xf32>
    %936 = math.tanh %934 : vector<2x32xf32>
    %937 = arith.mulf %935, %936 : vector<2x32xf32>
    %c7_526 = arith.constant 7 : index
    %c0_527 = arith.constant 0 : index
    %c0_528 = arith.constant 0 : index
    %938 = vector.load %arg33[%c7_526, %c0_527, %c0_528] : memref<16x2x128xf32, #tpu.memory_space<vmem>>, vector<1x2x128xf32>
    %939 = vector.shape_cast %938 : vector<1x2x128xf32> to vector<2x128xf32>
    %c0_529 = arith.constant 0 : index
    %c0_530 = arith.constant 0 : index
    %940 = vector.load %arg17[%c0_529, %c0_530] : memref<32x128xf32, #tpu.memory_space<vmem>>, vector<32x128xf32>
    %cst_531 = arith.constant dense<0.000000e+00> : vector<2x128xf32>
    %941 = tpu.matmul %937, %940, %cst_531 {dimension_numbers = #tpu.dot_dimension_numbers<[1], [0], [0], [1], [0, 0, 1, 1], [], []>} : vector<2x32xf32>, vector<32x128xf32>, vector<2x128xf32> -> vector<2x128xf32>
    %942 = arith.addf %939, %941 : vector<2x128xf32>
    %943 = vector.extract_strided_slice %942 {offsets = [0, 0], sizes = [2, 96], strides = [1, 1]} : vector<2x128xf32> to vector<2x96xf32>
    %944 = arith.negf %943 : vector<2x96xf32>
    %945 = math.exp %944 : vector<2x96xf32>
    %cst_532 = arith.constant 1.000000e+00 : f32
    %946 = vector.broadcast %cst_532 : f32 to vector<2x96xf32>
    %947 = arith.addf %946, %945 : vector<2x96xf32>
    %948 = arith.divf %946, %947 : vector<2x96xf32>
    %949 = vector.extract_strided_slice %942 {offsets = [0, 96], sizes = [2, 32], strides = [1, 1]} : vector<2x128xf32> to vector<2x32xf32>
    %950 = math.tanh %949 : vector<2x32xf32>
    %951 = vector.extract_strided_slice %948 {offsets = [0, 32], sizes = [2, 32], strides = [1, 1]} : vector<2x96xf32> to vector<2x32xf32>
    %952 = arith.mulf %951, %934 : vector<2x32xf32>
    %953 = vector.extract_strided_slice %948 {offsets = [0, 0], sizes = [2, 32], strides = [1, 1]} : vector<2x96xf32> to vector<2x32xf32>
    %954 = arith.mulf %953, %950 : vector<2x32xf32>
    %955 = arith.addf %952, %954 : vector<2x32xf32>
    %956 = vector.extract_strided_slice %948 {offsets = [0, 64], sizes = [2, 32], strides = [1, 1]} : vector<2x96xf32> to vector<2x32xf32>
    %957 = math.tanh %955 : vector<2x32xf32>
    %958 = arith.mulf %956, %957 : vector<2x32xf32>
    %c8_533 = arith.constant 8 : index
    %c0_534 = arith.constant 0 : index
    %c0_535 = arith.constant 0 : index
    %959 = vector.load %arg33[%c8_533, %c0_534, %c0_535] : memref<16x2x128xf32, #tpu.memory_space<vmem>>, vector<1x2x128xf32>
    %960 = vector.shape_cast %959 : vector<1x2x128xf32> to vector<2x128xf32>
    %c0_536 = arith.constant 0 : index
    %c0_537 = arith.constant 0 : index
    %961 = vector.load %arg17[%c0_536, %c0_537] : memref<32x128xf32, #tpu.memory_space<vmem>>, vector<32x128xf32>
    %cst_538 = arith.constant dense<0.000000e+00> : vector<2x128xf32>
    %962 = tpu.matmul %958, %961, %cst_538 {dimension_numbers = #tpu.dot_dimension_numbers<[1], [0], [0], [1], [0, 0, 1, 1], [], []>} : vector<2x32xf32>, vector<32x128xf32>, vector<2x128xf32> -> vector<2x128xf32>
    %963 = arith.addf %960, %962 : vector<2x128xf32>
    %964 = vector.extract_strided_slice %963 {offsets = [0, 0], sizes = [2, 96], strides = [1, 1]} : vector<2x128xf32> to vector<2x96xf32>
    %965 = arith.negf %964 : vector<2x96xf32>
    %966 = math.exp %965 : vector<2x96xf32>
    %cst_539 = arith.constant 1.000000e+00 : f32
    %967 = vector.broadcast %cst_539 : f32 to vector<2x96xf32>
    %968 = arith.addf %967, %966 : vector<2x96xf32>
    %969 = arith.divf %967, %968 : vector<2x96xf32>
    %970 = vector.extract_strided_slice %963 {offsets = [0, 96], sizes = [2, 32], strides = [1, 1]} : vector<2x128xf32> to vector<2x32xf32>
    %971 = math.tanh %970 : vector<2x32xf32>
    %972 = vector.extract_strided_slice %969 {offsets = [0, 32], sizes = [2, 32], strides = [1, 1]} : vector<2x96xf32> to vector<2x32xf32>
    %973 = arith.mulf %972, %955 : vector<2x32xf32>
    %974 = vector.extract_strided_slice %969 {offsets = [0, 0], sizes = [2, 32], strides = [1, 1]} : vector<2x96xf32> to vector<2x32xf32>
    %975 = arith.mulf %974, %971 : vector<2x32xf32>
    %976 = arith.addf %973, %975 : vector<2x32xf32>
    %977 = vector.extract_strided_slice %969 {offsets = [0, 64], sizes = [2, 32], strides = [1, 1]} : vector<2x96xf32> to vector<2x32xf32>
    %978 = math.tanh %976 : vector<2x32xf32>
    %979 = arith.mulf %977, %978 : vector<2x32xf32>
    %c9_540 = arith.constant 9 : index
    %c0_541 = arith.constant 0 : index
    %c0_542 = arith.constant 0 : index
    %980 = vector.load %arg33[%c9_540, %c0_541, %c0_542] : memref<16x2x128xf32, #tpu.memory_space<vmem>>, vector<1x2x128xf32>
    %981 = vector.shape_cast %980 : vector<1x2x128xf32> to vector<2x128xf32>
    %c0_543 = arith.constant 0 : index
    %c0_544 = arith.constant 0 : index
    %982 = vector.load %arg17[%c0_543, %c0_544] : memref<32x128xf32, #tpu.memory_space<vmem>>, vector<32x128xf32>
    %cst_545 = arith.constant dense<0.000000e+00> : vector<2x128xf32>
    %983 = tpu.matmul %979, %982, %cst_545 {dimension_numbers = #tpu.dot_dimension_numbers<[1], [0], [0], [1], [0, 0, 1, 1], [], []>} : vector<2x32xf32>, vector<32x128xf32>, vector<2x128xf32> -> vector<2x128xf32>
    %984 = arith.addf %981, %983 : vector<2x128xf32>
    %985 = vector.extract_strided_slice %984 {offsets = [0, 0], sizes = [2, 96], strides = [1, 1]} : vector<2x128xf32> to vector<2x96xf32>
    %986 = arith.negf %985 : vector<2x96xf32>
    %987 = math.exp %986 : vector<2x96xf32>
    %cst_546 = arith.constant 1.000000e+00 : f32
    %988 = vector.broadcast %cst_546 : f32 to vector<2x96xf32>
    %989 = arith.addf %988, %987 : vector<2x96xf32>
    %990 = arith.divf %988, %989 : vector<2x96xf32>
    %991 = vector.extract_strided_slice %984 {offsets = [0, 96], sizes = [2, 32], strides = [1, 1]} : vector<2x128xf32> to vector<2x32xf32>
    %992 = math.tanh %991 : vector<2x32xf32>
    %993 = vector.extract_strided_slice %990 {offsets = [0, 32], sizes = [2, 32], strides = [1, 1]} : vector<2x96xf32> to vector<2x32xf32>
    %994 = arith.mulf %993, %976 : vector<2x32xf32>
    %995 = vector.extract_strided_slice %990 {offsets = [0, 0], sizes = [2, 32], strides = [1, 1]} : vector<2x96xf32> to vector<2x32xf32>
    %996 = arith.mulf %995, %992 : vector<2x32xf32>
    %997 = arith.addf %994, %996 : vector<2x32xf32>
    %998 = vector.extract_strided_slice %990 {offsets = [0, 64], sizes = [2, 32], strides = [1, 1]} : vector<2x96xf32> to vector<2x32xf32>
    %999 = math.tanh %997 : vector<2x32xf32>
    %1000 = arith.mulf %998, %999 : vector<2x32xf32>
    %c10_547 = arith.constant 10 : index
    %c0_548 = arith.constant 0 : index
    %c0_549 = arith.constant 0 : index
    %1001 = vector.load %arg33[%c10_547, %c0_548, %c0_549] : memref<16x2x128xf32, #tpu.memory_space<vmem>>, vector<1x2x128xf32>
    %1002 = vector.shape_cast %1001 : vector<1x2x128xf32> to vector<2x128xf32>
    %c0_550 = arith.constant 0 : index
    %c0_551 = arith.constant 0 : index
    %1003 = vector.load %arg17[%c0_550, %c0_551] : memref<32x128xf32, #tpu.memory_space<vmem>>, vector<32x128xf32>
    %cst_552 = arith.constant dense<0.000000e+00> : vector<2x128xf32>
    %1004 = tpu.matmul %1000, %1003, %cst_552 {dimension_numbers = #tpu.dot_dimension_numbers<[1], [0], [0], [1], [0, 0, 1, 1], [], []>} : vector<2x32xf32>, vector<32x128xf32>, vector<2x128xf32> -> vector<2x128xf32>
    %1005 = arith.addf %1002, %1004 : vector<2x128xf32>
    %1006 = vector.extract_strided_slice %1005 {offsets = [0, 0], sizes = [2, 96], strides = [1, 1]} : vector<2x128xf32> to vector<2x96xf32>
    %1007 = arith.negf %1006 : vector<2x96xf32>
    %1008 = math.exp %1007 : vector<2x96xf32>
    %cst_553 = arith.constant 1.000000e+00 : f32
    %1009 = vector.broadcast %cst_553 : f32 to vector<2x96xf32>
    %1010 = arith.addf %1009, %1008 : vector<2x96xf32>
    %1011 = arith.divf %1009, %1010 : vector<2x96xf32>
    %1012 = vector.extract_strided_slice %1005 {offsets = [0, 96], sizes = [2, 32], strides = [1, 1]} : vector<2x128xf32> to vector<2x32xf32>
    %1013 = math.tanh %1012 : vector<2x32xf32>
    %1014 = vector.extract_strided_slice %1011 {offsets = [0, 32], sizes = [2, 32], strides = [1, 1]} : vector<2x96xf32> to vector<2x32xf32>
    %1015 = arith.mulf %1014, %997 : vector<2x32xf32>
    %1016 = vector.extract_strided_slice %1011 {offsets = [0, 0], sizes = [2, 32], strides = [1, 1]} : vector<2x96xf32> to vector<2x32xf32>
    %1017 = arith.mulf %1016, %1013 : vector<2x32xf32>
    %1018 = arith.addf %1015, %1017 : vector<2x32xf32>
    %1019 = vector.extract_strided_slice %1011 {offsets = [0, 64], sizes = [2, 32], strides = [1, 1]} : vector<2x96xf32> to vector<2x32xf32>
    %1020 = math.tanh %1018 : vector<2x32xf32>
    %1021 = arith.mulf %1019, %1020 : vector<2x32xf32>
    %c11_554 = arith.constant 11 : index
    %c0_555 = arith.constant 0 : index
    %c0_556 = arith.constant 0 : index
    %1022 = vector.load %arg33[%c11_554, %c0_555, %c0_556] : memref<16x2x128xf32, #tpu.memory_space<vmem>>, vector<1x2x128xf32>
    %1023 = vector.shape_cast %1022 : vector<1x2x128xf32> to vector<2x128xf32>
    %c0_557 = arith.constant 0 : index
    %c0_558 = arith.constant 0 : index
    %1024 = vector.load %arg17[%c0_557, %c0_558] : memref<32x128xf32, #tpu.memory_space<vmem>>, vector<32x128xf32>
    %cst_559 = arith.constant dense<0.000000e+00> : vector<2x128xf32>
    %1025 = tpu.matmul %1021, %1024, %cst_559 {dimension_numbers = #tpu.dot_dimension_numbers<[1], [0], [0], [1], [0, 0, 1, 1], [], []>} : vector<2x32xf32>, vector<32x128xf32>, vector<2x128xf32> -> vector<2x128xf32>
    %1026 = arith.addf %1023, %1025 : vector<2x128xf32>
    %1027 = vector.extract_strided_slice %1026 {offsets = [0, 0], sizes = [2, 96], strides = [1, 1]} : vector<2x128xf32> to vector<2x96xf32>
    %1028 = arith.negf %1027 : vector<2x96xf32>
    %1029 = math.exp %1028 : vector<2x96xf32>
    %cst_560 = arith.constant 1.000000e+00 : f32
    %1030 = vector.broadcast %cst_560 : f32 to vector<2x96xf32>
    %1031 = arith.addf %1030, %1029 : vector<2x96xf32>
    %1032 = arith.divf %1030, %1031 : vector<2x96xf32>
    %1033 = vector.extract_strided_slice %1026 {offsets = [0, 96], sizes = [2, 32], strides = [1, 1]} : vector<2x128xf32> to vector<2x32xf32>
    %1034 = math.tanh %1033 : vector<2x32xf32>
    %1035 = vector.extract_strided_slice %1032 {offsets = [0, 32], sizes = [2, 32], strides = [1, 1]} : vector<2x96xf32> to vector<2x32xf32>
    %1036 = arith.mulf %1035, %1018 : vector<2x32xf32>
    %1037 = vector.extract_strided_slice %1032 {offsets = [0, 0], sizes = [2, 32], strides = [1, 1]} : vector<2x96xf32> to vector<2x32xf32>
    %1038 = arith.mulf %1037, %1034 : vector<2x32xf32>
    %1039 = arith.addf %1036, %1038 : vector<2x32xf32>
    %1040 = vector.extract_strided_slice %1032 {offsets = [0, 64], sizes = [2, 32], strides = [1, 1]} : vector<2x96xf32> to vector<2x32xf32>
    %1041 = math.tanh %1039 : vector<2x32xf32>
    %1042 = arith.mulf %1040, %1041 : vector<2x32xf32>
    %c12_561 = arith.constant 12 : index
    %c0_562 = arith.constant 0 : index
    %c0_563 = arith.constant 0 : index
    %1043 = vector.load %arg33[%c12_561, %c0_562, %c0_563] : memref<16x2x128xf32, #tpu.memory_space<vmem>>, vector<1x2x128xf32>
    %1044 = vector.shape_cast %1043 : vector<1x2x128xf32> to vector<2x128xf32>
    %c0_564 = arith.constant 0 : index
    %c0_565 = arith.constant 0 : index
    %1045 = vector.load %arg17[%c0_564, %c0_565] : memref<32x128xf32, #tpu.memory_space<vmem>>, vector<32x128xf32>
    %cst_566 = arith.constant dense<0.000000e+00> : vector<2x128xf32>
    %1046 = tpu.matmul %1042, %1045, %cst_566 {dimension_numbers = #tpu.dot_dimension_numbers<[1], [0], [0], [1], [0, 0, 1, 1], [], []>} : vector<2x32xf32>, vector<32x128xf32>, vector<2x128xf32> -> vector<2x128xf32>
    %1047 = arith.addf %1044, %1046 : vector<2x128xf32>
    %1048 = vector.extract_strided_slice %1047 {offsets = [0, 0], sizes = [2, 96], strides = [1, 1]} : vector<2x128xf32> to vector<2x96xf32>
    %1049 = arith.negf %1048 : vector<2x96xf32>
    %1050 = math.exp %1049 : vector<2x96xf32>
    %cst_567 = arith.constant 1.000000e+00 : f32
    %1051 = vector.broadcast %cst_567 : f32 to vector<2x96xf32>
    %1052 = arith.addf %1051, %1050 : vector<2x96xf32>
    %1053 = arith.divf %1051, %1052 : vector<2x96xf32>
    %1054 = vector.extract_strided_slice %1047 {offsets = [0, 96], sizes = [2, 32], strides = [1, 1]} : vector<2x128xf32> to vector<2x32xf32>
    %1055 = math.tanh %1054 : vector<2x32xf32>
    %1056 = vector.extract_strided_slice %1053 {offsets = [0, 32], sizes = [2, 32], strides = [1, 1]} : vector<2x96xf32> to vector<2x32xf32>
    %1057 = arith.mulf %1056, %1039 : vector<2x32xf32>
    %1058 = vector.extract_strided_slice %1053 {offsets = [0, 0], sizes = [2, 32], strides = [1, 1]} : vector<2x96xf32> to vector<2x32xf32>
    %1059 = arith.mulf %1058, %1055 : vector<2x32xf32>
    %1060 = arith.addf %1057, %1059 : vector<2x32xf32>
    %1061 = vector.extract_strided_slice %1053 {offsets = [0, 64], sizes = [2, 32], strides = [1, 1]} : vector<2x96xf32> to vector<2x32xf32>
    %1062 = math.tanh %1060 : vector<2x32xf32>
    %1063 = arith.mulf %1061, %1062 : vector<2x32xf32>
    %c13_568 = arith.constant 13 : index
    %c0_569 = arith.constant 0 : index
    %c0_570 = arith.constant 0 : index
    %1064 = vector.load %arg33[%c13_568, %c0_569, %c0_570] : memref<16x2x128xf32, #tpu.memory_space<vmem>>, vector<1x2x128xf32>
    %1065 = vector.shape_cast %1064 : vector<1x2x128xf32> to vector<2x128xf32>
    %c0_571 = arith.constant 0 : index
    %c0_572 = arith.constant 0 : index
    %1066 = vector.load %arg17[%c0_571, %c0_572] : memref<32x128xf32, #tpu.memory_space<vmem>>, vector<32x128xf32>
    %cst_573 = arith.constant dense<0.000000e+00> : vector<2x128xf32>
    %1067 = tpu.matmul %1063, %1066, %cst_573 {dimension_numbers = #tpu.dot_dimension_numbers<[1], [0], [0], [1], [0, 0, 1, 1], [], []>} : vector<2x32xf32>, vector<32x128xf32>, vector<2x128xf32> -> vector<2x128xf32>
    %1068 = arith.addf %1065, %1067 : vector<2x128xf32>
    %1069 = vector.extract_strided_slice %1068 {offsets = [0, 0], sizes = [2, 96], strides = [1, 1]} : vector<2x128xf32> to vector<2x96xf32>
    %1070 = arith.negf %1069 : vector<2x96xf32>
    %1071 = math.exp %1070 : vector<2x96xf32>
    %cst_574 = arith.constant 1.000000e+00 : f32
    %1072 = vector.broadcast %cst_574 : f32 to vector<2x96xf32>
    %1073 = arith.addf %1072, %1071 : vector<2x96xf32>
    %1074 = arith.divf %1072, %1073 : vector<2x96xf32>
    %1075 = vector.extract_strided_slice %1068 {offsets = [0, 96], sizes = [2, 32], strides = [1, 1]} : vector<2x128xf32> to vector<2x32xf32>
    %1076 = math.tanh %1075 : vector<2x32xf32>
    %1077 = vector.extract_strided_slice %1074 {offsets = [0, 32], sizes = [2, 32], strides = [1, 1]} : vector<2x96xf32> to vector<2x32xf32>
    %1078 = arith.mulf %1077, %1060 : vector<2x32xf32>
    %1079 = vector.extract_strided_slice %1074 {offsets = [0, 0], sizes = [2, 32], strides = [1, 1]} : vector<2x96xf32> to vector<2x32xf32>
    %1080 = arith.mulf %1079, %1076 : vector<2x32xf32>
    %1081 = arith.addf %1078, %1080 : vector<2x32xf32>
    %1082 = vector.extract_strided_slice %1074 {offsets = [0, 64], sizes = [2, 32], strides = [1, 1]} : vector<2x96xf32> to vector<2x32xf32>
    %1083 = math.tanh %1081 : vector<2x32xf32>
    %1084 = arith.mulf %1082, %1083 : vector<2x32xf32>
    %c14_575 = arith.constant 14 : index
    %c0_576 = arith.constant 0 : index
    %c0_577 = arith.constant 0 : index
    %1085 = vector.load %arg33[%c14_575, %c0_576, %c0_577] : memref<16x2x128xf32, #tpu.memory_space<vmem>>, vector<1x2x128xf32>
    %1086 = vector.shape_cast %1085 : vector<1x2x128xf32> to vector<2x128xf32>
    %c0_578 = arith.constant 0 : index
    %c0_579 = arith.constant 0 : index
    %1087 = vector.load %arg17[%c0_578, %c0_579] : memref<32x128xf32, #tpu.memory_space<vmem>>, vector<32x128xf32>
    %cst_580 = arith.constant dense<0.000000e+00> : vector<2x128xf32>
    %1088 = tpu.matmul %1084, %1087, %cst_580 {dimension_numbers = #tpu.dot_dimension_numbers<[1], [0], [0], [1], [0, 0, 1, 1], [], []>} : vector<2x32xf32>, vector<32x128xf32>, vector<2x128xf32> -> vector<2x128xf32>
    %1089 = arith.addf %1086, %1088 : vector<2x128xf32>
    %1090 = vector.extract_strided_slice %1089 {offsets = [0, 0], sizes = [2, 96], strides = [1, 1]} : vector<2x128xf32> to vector<2x96xf32>
    %1091 = arith.negf %1090 : vector<2x96xf32>
    %1092 = math.exp %1091 : vector<2x96xf32>
    %cst_581 = arith.constant 1.000000e+00 : f32
    %1093 = vector.broadcast %cst_581 : f32 to vector<2x96xf32>
    %1094 = arith.addf %1093, %1092 : vector<2x96xf32>
    %1095 = arith.divf %1093, %1094 : vector<2x96xf32>
    %1096 = vector.extract_strided_slice %1089 {offsets = [0, 96], sizes = [2, 32], strides = [1, 1]} : vector<2x128xf32> to vector<2x32xf32>
    %1097 = math.tanh %1096 : vector<2x32xf32>
    %1098 = vector.extract_strided_slice %1095 {offsets = [0, 32], sizes = [2, 32], strides = [1, 1]} : vector<2x96xf32> to vector<2x32xf32>
    %1099 = arith.mulf %1098, %1081 : vector<2x32xf32>
    %1100 = vector.extract_strided_slice %1095 {offsets = [0, 0], sizes = [2, 32], strides = [1, 1]} : vector<2x96xf32> to vector<2x32xf32>
    %1101 = arith.mulf %1100, %1097 : vector<2x32xf32>
    %1102 = arith.addf %1099, %1101 : vector<2x32xf32>
    %1103 = vector.extract_strided_slice %1095 {offsets = [0, 64], sizes = [2, 32], strides = [1, 1]} : vector<2x96xf32> to vector<2x32xf32>
    %1104 = math.tanh %1102 : vector<2x32xf32>
    %1105 = arith.mulf %1103, %1104 : vector<2x32xf32>
    %c15_582 = arith.constant 15 : index
    %c0_583 = arith.constant 0 : index
    %c0_584 = arith.constant 0 : index
    %1106 = vector.load %arg33[%c15_582, %c0_583, %c0_584] : memref<16x2x128xf32, #tpu.memory_space<vmem>>, vector<1x2x128xf32>
    %1107 = vector.shape_cast %1106 : vector<1x2x128xf32> to vector<2x128xf32>
    %c0_585 = arith.constant 0 : index
    %c0_586 = arith.constant 0 : index
    %1108 = vector.load %arg17[%c0_585, %c0_586] : memref<32x128xf32, #tpu.memory_space<vmem>>, vector<32x128xf32>
    %cst_587 = arith.constant dense<0.000000e+00> : vector<2x128xf32>
    %1109 = tpu.matmul %1105, %1108, %cst_587 {dimension_numbers = #tpu.dot_dimension_numbers<[1], [0], [0], [1], [0, 0, 1, 1], [], []>} : vector<2x32xf32>, vector<32x128xf32>, vector<2x128xf32> -> vector<2x128xf32>
    %1110 = arith.addf %1107, %1109 : vector<2x128xf32>
    %1111 = vector.extract_strided_slice %1110 {offsets = [0, 0], sizes = [2, 96], strides = [1, 1]} : vector<2x128xf32> to vector<2x96xf32>
    %1112 = arith.negf %1111 : vector<2x96xf32>
    %1113 = math.exp %1112 : vector<2x96xf32>
    %cst_588 = arith.constant 1.000000e+00 : f32
    %1114 = vector.broadcast %cst_588 : f32 to vector<2x96xf32>
    %1115 = arith.addf %1114, %1113 : vector<2x96xf32>
    %1116 = arith.divf %1114, %1115 : vector<2x96xf32>
    %1117 = vector.extract_strided_slice %1110 {offsets = [0, 96], sizes = [2, 32], strides = [1, 1]} : vector<2x128xf32> to vector<2x32xf32>
    %1118 = math.tanh %1117 : vector<2x32xf32>
    %1119 = vector.extract_strided_slice %1116 {offsets = [0, 32], sizes = [2, 32], strides = [1, 1]} : vector<2x96xf32> to vector<2x32xf32>
    %1120 = arith.mulf %1119, %1102 : vector<2x32xf32>
    %1121 = vector.extract_strided_slice %1116 {offsets = [0, 0], sizes = [2, 32], strides = [1, 1]} : vector<2x96xf32> to vector<2x32xf32>
    %1122 = arith.mulf %1121, %1118 : vector<2x32xf32>
    %1123 = arith.addf %1120, %1122 : vector<2x32xf32>
    %1124 = vector.extract_strided_slice %1116 {offsets = [0, 64], sizes = [2, 32], strides = [1, 1]} : vector<2x96xf32> to vector<2x32xf32>
    %1125 = math.tanh %1123 : vector<2x32xf32>
    %1126 = arith.mulf %1124, %1125 : vector<2x32xf32>
    %1127 = tpu.concatenate %1126, %788 in 1 : vector<2x32xf32>, vector<2x32xf32> -> vector<2x64xf32>
    %c0_589 = arith.constant 0 : index
    %c0_590 = arith.constant 0 : index
    %1128 = vector.load %arg20[%c0_589, %c0_590] : memref<64x32xf32, #tpu.memory_space<vmem>>, vector<64x32xf32>
    %cst_591 = arith.constant dense<0.000000e+00> : vector<2x32xf32>
    %1129 = tpu.matmul %1127, %1128, %cst_591 {dimension_numbers = #tpu.dot_dimension_numbers<[1], [0], [0], [1], [0, 0, 1, 1], [], []>} : vector<2x64xf32>, vector<64x32xf32>, vector<2x32xf32> -> vector<2x32xf32>
    %c0_592 = arith.constant 0 : index
    %c0_593 = arith.constant 0 : index
    %1130 = vector.load %arg21[%c0_592, %c0_593] : memref<1x32xf32, #tpu.memory_space<vmem>>, vector<1x32xf32>
    %1131 = vector.broadcast %1130 : vector<1x32xf32> to vector<2x32xf32>
    %1132 = arith.addf %1129, %1131 : vector<2x32xf32>
    %cst_594 = arith.constant 0.000000e+00 : f32
    %1133 = vector.broadcast %cst_594 : f32 to vector<2x32xf32>
    %1134 = arith.maximumf %1132, %1133 : vector<2x32xf32>
    %cst_595 = arith.constant dense<0.000000e+00> : vector<2xf32>
    %1135 = vector.multi_reduction <add>, %1134, %cst_595 [1] : vector<2x32xf32> to vector<2xf32>
    %1136 = vector.shape_cast %1135 : vector<2xf32> to vector<2x1xf32>
    %cst_596 = arith.constant 3.200000e+01 : f32
    %1137 = vector.broadcast %cst_596 : f32 to vector<2x1xf32>
    %1138 = arith.divf %1136, %1137 : vector<2x1xf32>
    %1139 = vector.broadcast %1138 : vector<2x1xf32> to vector<2x32xf32>
    %1140 = arith.subf %1134, %1139 : vector<2x32xf32>
    %1141 = arith.mulf %1140, %1140 : vector<2x32xf32>
    %cst_597 = arith.constant dense<0.000000e+00> : vector<2xf32>
    %1142 = vector.multi_reduction <add>, %1141, %cst_597 [1] : vector<2x32xf32> to vector<2xf32>
    %1143 = vector.shape_cast %1142 : vector<2xf32> to vector<2x1xf32>
    %cst_598 = arith.constant 3.200000e+01 : f32
    %1144 = vector.broadcast %cst_598 : f32 to vector<2x1xf32>
    %1145 = arith.divf %1143, %1144 : vector<2x1xf32>
    %1146 = vector.broadcast %1138 : vector<2x1xf32> to vector<2x32xf32>
    %1147 = arith.subf %1134, %1146 : vector<2x32xf32>
    %cst_599 = arith.constant 9.99999974E-6 : f32
    %1148 = vector.broadcast %cst_599 : f32 to vector<2x1xf32>
    %1149 = arith.addf %1145, %1148 : vector<2x1xf32>
    %1150 = math.rsqrt %1149 : vector<2x1xf32>
    %1151 = vector.broadcast %1150 : vector<2x1xf32> to vector<2x32xf32>
    %1152 = arith.mulf %1147, %1151 : vector<2x32xf32>
    %c0_600 = arith.constant 0 : index
    %c0_601 = arith.constant 0 : index
    %1153 = vector.load %arg22[%c0_600, %c0_601] : memref<1x32xf32, #tpu.memory_space<vmem>>, vector<1x32xf32>
    %1154 = vector.broadcast %1153 : vector<1x32xf32> to vector<2x32xf32>
    %1155 = arith.mulf %1152, %1154 : vector<2x32xf32>
    %c0_602 = arith.constant 0 : index
    %c0_603 = arith.constant 0 : index
    %1156 = vector.load %arg23[%c0_602, %c0_603] : memref<1x32xf32, #tpu.memory_space<vmem>>, vector<1x32xf32>
    %1157 = vector.broadcast %1156 : vector<1x32xf32> to vector<2x32xf32>
    %1158 = arith.addf %1155, %1157 : vector<2x32xf32>
    %c0_604 = arith.constant 0 : index
    %c0_605 = arith.constant 0 : index
    %1159 = vector.load %arg24[%c0_604, %c0_605] : memref<32x3xf32, #tpu.memory_space<vmem>>, vector<32x3xf32>
    %cst_606 = arith.constant dense<0.000000e+00> : vector<2x3xf32>
    %1160 = tpu.matmul %1158, %1159, %cst_606 {dimension_numbers = #tpu.dot_dimension_numbers<[1], [0], [0], [1], [0, 0, 1, 1], [], []>} : vector<2x32xf32>, vector<32x3xf32>, vector<2x3xf32> -> vector<2x3xf32>
    %c0_607 = arith.constant 0 : index
    %c0_608 = arith.constant 0 : index
    %1161 = vector.load %arg25[%c0_607, %c0_608] : memref<1x3xf32, #tpu.memory_space<vmem>>, vector<1x3xf32>
    %1162 = vector.broadcast %1161 : vector<1x3xf32> to vector<2x3xf32>
    %1163 = arith.addf %1160, %1162 : vector<2x3xf32>
    %c0_609 = arith.constant 0 : index
    %c0_610 = arith.constant 0 : index
    %1164 = vector.load %arg26[%c0_609, %c0_610] : memref<2x3xf32, #tpu.memory_space<vmem>>, vector<2x3xf32>
    tpu.vector_store %arg26[%c0_609, %c0_610], %1163 {strides = array<i32>} : memref<2x3xf32, #tpu.memory_space<vmem>>, vector<2x3xf32>,
    return
  }
}

</mosaic_0001>

<llo_original>
// kernel: cnn_lstm_forward.1
$region0: #{cnn_lstm_forward.1}
  #allocation0 [shape = 'u32[]', space=smem, size = 0x4, offset = 0x4, fixed_abs, tag = 'smem constant byte address 0x4 - core index']
  #allocation1 [shape = 'u32[72,128]{1,0:T(1,128)}', space=vmem, size = 0x9000, scoped, tag = 'internal scratch']
  #allocation2 [shape = 'f32[2,18,4]{2,1,0:T(8,128)}', space=vmem, size = 0x6000, scoped, tag = 'scratch operand']
  #allocation3 [shape = 'f32[2,20,8]{2,1,0:T(8,128)}', space=vmem, size = 0x6000, scoped, tag = 'scratch operand']
  #allocation4 [shape = 'f32[2,22,16]{2,1,0:T(8,128)}', space=vmem, size = 0x6000, scoped, tag = 'scratch operand']
  #allocation5 [shape = 'f32[16,2,256]{2,1,0:T(2,128)}', space=vmem, size = 0x8000, scoped, tag = 'scratch operand']
  #allocation6 [shape = 'f32[2,16,32]{2,1,0:T(8,128)}', space=vmem, size = 0x4000, scoped, tag = 'scratch operand']
  #allocation7 [shape = 'f32[2,16,32]{2,1,0:T(8,128)}', space=vmem, size = 0x4000, scoped, tag = 'scratch operand']
  #allocation8 [shape = 'f32[16,2,128]{2,1,0:T(2,128)}', space=vmem, size = 0x4000, scoped, tag = 'scratch operand']
  %s0 = inlined_call_operand.vmem [shape: f32[2,16,4], index: 0, kind: input, shape index: {}]
  %s1 = inlined_call_operand.vmem [shape: f32[3,4,8], index: 1, kind: input, shape index: {}]
  %s2 = inlined_call_operand.vmem [shape: f32[1,1,8], index: 2, kind: input, shape index: {}]
  %s3 = inlined_call_operand.vmem [shape: f32[1,1,8], index: 3, kind: input, shape index: {}]
  %s4 = inlined_call_operand.vmem [shape: f32[5,8,16], index: 4, kind: input, shape index: {}]
  %s5 = inlined_call_operand.vmem [shape: f32[1,1,16], index: 5, kind: input, shape index: {}]
  %s6 = inlined_call_operand.vmem [shape: f32[1,1,16], index: 6, kind: input, shape index: {}]
  %s7 = inlined_call_operand.vmem [shape: f32[7,16,32], index: 7, kind: input, shape index: {}]
  %s8 = inlined_call_operand.vmem [shape: f32[1,1,32], index: 8, kind: input, shape index: {}]
  %s9 = inlined_call_operand.vmem [shape: f32[1,1,32], index: 9, kind: input, shape index: {}]
  %s10 = inlined_call_operand.vmem [shape: f32[32,256], index: 10, kind: input, shape index: {}]
  %s11 = inlined_call_operand.vmem [shape: f32[32,256], index: 11, kind: input, shape index: {}]
  %s12 = inlined_call_operand.vmem [shape: f32[1,1,256], index: 12, kind: input, shape index: {}]
  %s13 = inlined_call_operand.vmem [shape: f32[64,256], index: 13, kind: input, shape index: {}]
  %s14 = inlined_call_operand.vmem [shape: f32[32,128], index: 14, kind: input, shape index: {}]
  %s15 = inlined_call_operand.vmem [shape: f32[32,128], index: 15, kind: input, shape index: {}]
  %s16 = inlined_call_operand.vmem [shape: f32[1,1,128], index: 16, kind: input, shape index: {}]
  %s17 = inlined_call_operand.vmem [shape: f32[32,128], index: 17, kind: input, shape index: {}]
  %s18 = inlined_call_operand.vmem [shape: f32[64,128], index: 18, kind: input, shape index: {}]
  %s19 = inlined_call_operand.vmem [shape: f32[1,128], index: 19, kind: input, shape index: {}]
  %s20 = inlined_call_operand.vmem [shape: f32[64,32], index: 20, kind: input, shape index: {}]
  %s21 = inlined_call_operand.vmem [shape: f32[1,32], index: 21, kind: input, shape index: {}]
  %s22 = inlined_call_operand.vmem [shape: f32[1,32], index: 22, kind: input, shape index: {}]
  %s23 = inlined_call_operand.vmem [shape: f32[1,32], index: 23, kind: input, shape index: {}]
  %s24 = inlined_call_operand.vmem [shape: f32[32,3], index: 24, kind: input, shape index: {}]
  %s25 = inlined_call_operand.vmem [shape: f32[1,3], index: 25, kind: input, shape index: {}]
  %s26 = inlined_call_operand.hbm [shape: f32[2,3], index: 26, kind: output, shape index: {}]
  %s27 = sld [smem:[#allocation0]]
  $region114: #{cnn_lstm_forward.1} parent=0
    _
  %s29 = ssub.s32 1, %s27
  %s30 = scalar_select 0, %s29, %s27
  $region1: #{cnn_lstm_forward.1} parent=0
    #allocation9 [shape = 'u8[1024]{0}', space=vmem, size = 0x400, scoped, tag = 'output window, operand 0, single buffered']
    #allocation10 [shape = 's32[1]{0}', space=sflag, size = 0x4, scoped, tag = 'scoped memory for cnn_lstm_forward.1']
    %31 = vsyncpa [#allocation10], 0
    // Predicated region
    $region2: #{cnn_lstm_forward.1} parent=1 // pred_check
      _
    $region3: #{cnn_lstm_forward.1} parent=1 // pred_check_branch
      %33 = sbr.rel (0) target = $region5
    $region4: #{cnn_lstm_forward.1} parent=1 // pred_region
      _
    $region5: #{cnn_lstm_forward.1} parent=1 // pred_fallthru
      _
    // Predicated region
    $region6: #{cnn_lstm_forward.1} parent=1 // pred_check
      _
    $region7: #{cnn_lstm_forward.1} parent=1 // pred_check_branch
      %35 = sbr.rel (0) target = $region9
    $region8: #{cnn_lstm_forward.1} parent=1 // pred_region
      _
    $region9: #{cnn_lstm_forward.1} parent=1 // pred_fallthru
      _
    // Predicated region
    $region10: #{cnn_lstm_forward.1} parent=1 // pred_check
      _
    $region11: #{cnn_lstm_forward.1} parent=1 // pred_check_branch
      %37 = sbr.rel (0) target = $region13
    $region12: #{cnn_lstm_forward.1} parent=1 // pred_region
      _
    $region13: #{cnn_lstm_forward.1} parent=1 // pred_fallthru
      _
    // Predicated region
    $region14: #{cnn_lstm_forward.1} parent=1 // pred_check
      _
    $region15: #{cnn_lstm_forward.1} parent=1 // pred_check_branch
      %39 = sbr.rel (0) target = $region17
    $region16: #{cnn_lstm_forward.1} parent=1 // pred_region
      _
    $region17: #{cnn_lstm_forward.1} parent=1 // pred_fallthru
      _
    // Predicated region
    $region18: #{cnn_lstm_forward.1} parent=1 // pred_check
      _
    $region19: #{cnn_lstm_forward.1} parent=1 // pred_check_branch
      %41 = sbr.rel (0) target = $region21
    $region20: #{cnn_lstm_forward.1} parent=1 // pred_region
      _
    $region21: #{cnn_lstm_forward.1} parent=1 // pred_fallthru
      _
    // Predicated region
    $region22: #{cnn_lstm_forward.1} parent=1 // pred_check
      _
    $region23: #{cnn_lstm_forward.1} parent=1 // pred_check_branch
      %43 = sbr.rel (0) target = $region25
    $region24: #{cnn_lstm_forward.1} parent=1 // pred_region
      _
    $region25: #{cnn_lstm_forward.1} parent=1 // pred_fallthru
      _
    // Predicated region
    $region26: #{cnn_lstm_forward.1} parent=1 // pred_check
      _
    $region27: #{cnn_lstm_forward.1} parent=1 // pred_check_branch
      %45 = sbr.rel (0) target = $region29
    $region28: #{cnn_lstm_forward.1} parent=1 // pred_region
      _
    $region29: #{cnn_lstm_forward.1} parent=1 // pred_fallthru
      _
    // Predicated region
    $region30: #{cnn_lstm_forward.1} parent=1 // pred_check
      _
    $region31: #{cnn_lstm_forward.1} parent=1 // pred_check_branch
      %47 = sbr.rel (0) target = $region33
    $region32: #{cnn_lstm_forward.1} parent=1 // pred_region
      _
    $region33: #{cnn_lstm_forward.1} parent=1 // pred_fallthru
      _
    // Predicated region
    $region34: #{cnn_lstm_forward.1} parent=1 // pred_check
      _
    $region35: #{cnn_lstm_forward.1} parent=1 // pred_check_branch
      %49 = sbr.rel (0) target = $region37
    $region36: #{cnn_lstm_forward.1} parent=1 // pred_region
      _
    $region37: #{cnn_lstm_forward.1} parent=1 // pred_fallthru
      _
    // Predicated region
    $region38: #{cnn_lstm_forward.1} parent=1 // pred_check
      _
    $region39: #{cnn_lstm_forward.1} parent=1 // pred_check_branch
      %51 = sbr.rel (0) target = $region41
    $region40: #{cnn_lstm_forward.1} parent=1 // pred_region
      _
    $region41: #{cnn_lstm_forward.1} parent=1 // pred_fallthru
      _
    // Predicated region
    $region42: #{cnn_lstm_forward.1} parent=1 // pred_check
      _
    $region43: #{cnn_lstm_forward.1} parent=1 // pred_check_branch
      %53 = sbr.rel (0) target = $region45
    $region44: #{cnn_lstm_forward.1} parent=1 // pred_region
      _
    $region45: #{cnn_lstm_forward.1} parent=1 // pred_fallthru
      _
    // Predicated region
    $region46: #{cnn_lstm_forward.1} parent=1 // pred_check
      _
    $region47: #{cnn_lstm_forward.1} parent=1 // pred_check_branch
      %55 = sbr.rel (0) target = $region49
    $region48: #{cnn_lstm_forward.1} parent=1 // pred_region
      _
    $region49: #{cnn_lstm_forward.1} parent=1 // pred_fallthru
      _
    // Predicated region
    $region50: #{cnn_lstm_forward.1} parent=1 // pred_check
      _
    $region51: #{cnn_lstm_forward.1} parent=1 // pred_check_branch
      %57 = sbr.rel (0) target = $region53
    $region52: #{cnn_lstm_forward.1} parent=1 // pred_region
      _
    $region53: #{cnn_lstm_forward.1} parent=1 // pred_fallthru
      _
    // Predicated region
    $region54: #{cnn_lstm_forward.1} parent=1 // pred_check
      _
    $region55: #{cnn_lstm_forward.1} parent=1 // pred_check_branch
      %59 = sbr.rel (0) target = $region57
    $region56: #{cnn_lstm_forward.1} parent=1 // pred_region
      _
    $region57: #{cnn_lstm_forward.1} parent=1 // pred_fallthru
      _
    // Predicated region
    $region58: #{cnn_lstm_forward.1} parent=1 // pred_check
      _
    $region59: #{cnn_lstm_forward.1} parent=1 // pred_check_branch
      %61 = sbr.rel (0) target = $region61
    $region60: #{cnn_lstm_forward.1} parent=1 // pred_region
      _
    $region61: #{cnn_lstm_forward.1} parent=1 // pred_fallthru
      _
    // Predicated region
    $region62: #{cnn_lstm_forward.1} parent=1 // pred_check
      _
    $region63: #{cnn_lstm_forward.1} parent=1 // pred_check_branch
      %63 = sbr.rel (0) target = $region65
    $region64: #{cnn_lstm_forward.1} parent=1 // pred_region
      _
    $region65: #{cnn_lstm_forward.1} parent=1 // pred_fallthru
      _
    // Predicated region
    $region66: #{cnn_lstm_forward.1} parent=1 // pred_check
      _
    $region67: #{cnn_lstm_forward.1} parent=1 // pred_check_branch
      %65 = sbr.rel (0) target = $region69
    $region68: #{cnn_lstm_forward.1} parent=1 // pred_region
      _
    $region69: #{cnn_lstm_forward.1} parent=1 // pred_fallthru
      _
    // Predicated region
    $region70: #{cnn_lstm_forward.1} parent=1 // pred_check
      _
    $region71: #{cnn_lstm_forward.1} parent=1 // pred_check_branch
      %67 = sbr.rel (0) target = $region73
    $region72: #{cnn_lstm_forward.1} parent=1 // pred_region
      _
    $region73: #{cnn_lstm_forward.1} parent=1 // pred_fallthru
      _
    // Predicated region
    $region74: #{cnn_lstm_forward.1} parent=1 // pred_check
      _
    $region75: #{cnn_lstm_forward.1} parent=1 // pred_check_branch
      %69 = sbr.rel (0) target = $region77
    $region76: #{cnn_lstm_forward.1} parent=1 // pred_region
      _
    $region77: #{cnn_lstm_forward.1} parent=1 // pred_fallthru
      _
    // Predicated region
    $region78: #{cnn_lstm_forward.1} parent=1 // pred_check
      _
    $region79: #{cnn_lstm_forward.1} parent=1 // pred_check_branch
      %71 = sbr.rel (0) target = $region81
    $region80: #{cnn_lstm_forward.1} parent=1 // pred_region
      _
    $region81: #{cnn_lstm_forward.1} parent=1 // pred_fallthru
      _
    // Predicated region
    $region82: #{cnn_lstm_forward.1} parent=1 // pred_check
      _
    $region83: #{cnn_lstm_forward.1} parent=1 // pred_check_branch
      %73 = sbr.rel (0) target = $region85
    $region84: #{cnn_lstm_forward.1} parent=1 // pred_region
      _
    $region85: #{cnn_lstm_forward.1} parent=1 // pred_fallthru
      _
    // Predicated region
    $region86: #{cnn_lstm_forward.1} parent=1 // pred_check
      _
    $region87: #{cnn_lstm_forward.1} parent=1 // pred_check_branch
      %75 = sbr.rel (0) target = $region89
    $region88: #{cnn_lstm_forward.1} parent=1 // pred_region
      _
    $region89: #{cnn_lstm_forward.1} parent=1 // pred_fallthru
      _
    // Predicated region
    $region90: #{cnn_lstm_forward.1} parent=1 // pred_check
      _
    $region91: #{cnn_lstm_forward.1} parent=1 // pred_check_branch
      %77 = sbr.rel (0) target = $region93
    $region92: #{cnn_lstm_forward.1} parent=1 // pred_region
      _
    $region93: #{cnn_lstm_forward.1} parent=1 // pred_fallthru
      _
    // Predicated region
    $region94: #{cnn_lstm_forward.1} parent=1 // pred_check
      _
    $region95: #{cnn_lstm_forward.1} parent=1 // pred_check_branch
      %79 = sbr.rel (0) target = $region97
    $region96: #{cnn_lstm_forward.1} parent=1 // pred_region
      _
    $region97: #{cnn_lstm_forward.1} parent=1 // pred_fallthru
      _
    // Predicated region
    $region98: #{cnn_lstm_forward.1} parent=1 // pred_check
      _
    $region99: #{cnn_lstm_forward.1} parent=1 // pred_check_branch
      %81 = sbr.rel (0) target = $region101
    $region100: #{cnn_lstm_forward.1} parent=1 // pred_region
      _
    $region101: #{cnn_lstm_forward.1} parent=1 // pred_fallthru
      _
    // Predicated region
    $region102: #{cnn_lstm_forward.1} parent=1 // pred_check
      _
    $region103: #{cnn_lstm_forward.1} parent=1 // pred_check_branch
      %83 = sbr.rel (0) target = $region105
    $region104: #{cnn_lstm_forward.1} parent=1 // pred_region
      _
    $region105: #{cnn_lstm_forward.1} parent=1 // pred_fallthru
      _
    %v84 = vld [vmem:[%s0] sm:$0xff]
    %v85 = vld [vmem:[%s0 + $0x8] sm:$0xff]
    %v86 = vld [vmem:[%s0 + $0x10] sm:$0xff]
    %v87 = vld [vmem:[%s0 + $0x18] sm:$0xff]
    %vm88 = vcmask 24576
    %89 = vst.msk [vmem:[#allocation2] sm:$0x1] %vm88, 0.0
    %90 = vst.msk [vmem:[#allocation2 + $0x18] sm:$0x1] %vm88, 0.0
    %91 = vst.msk [vmem:[#allocation2 + $0x11] sm:$0x1] %vm88, 0.0
    %92 = vst.msk [vmem:[#allocation2 + $0x29] sm:$0x1] %vm88, 0.0
    %vm93 = vcmask 31744
    %94 = vst.msk [vmem:[#allocation2 + $0x1] sm:$0xff] %vm93, %v84
    %95 = vst.msk [vmem:[#allocation2 + $0x9] sm:$0xff] %vm93, %v85
    %96 = vst.msk [vmem:[#allocation2 + $0x19] sm:$0xff] %vm93, %v86
    %97 = vst.msk [vmem:[#allocation2 + $0x21] sm:$0xff] %vm93, %v87
    %v98 = vld [vmem:[#allocation2] sm:$0xff]
    %v99 = vld [vmem:[#allocation2 + $0x8] sm:$0xff]
    %v100 = vld [vmem:[#allocation2 + $0x18] sm:$0xff]
    %v101 = vld [vmem:[#allocation2 + $0x20] sm:$0xff]
    %v102 = vld [vmem:[%s1] sm:$0xf]
    %v103 = vld [vmem:[#allocation2 + $0x1] sm:$0xff]
    %v104 = vld [vmem:[#allocation2 + $0x9] sm:$0xff]
    %v105 = vld [vmem:[#allocation2 + $0x19] sm:$0xff]
    %v106 = vld [vmem:[#allocation2 + $0x21] sm:$0xff]
    %s107 = scalar_lea.vmem %s1, 4
    %v108 = vld [vmem:[%s107] sm:$0xf]
    %v110 = vsel %vm93, %v103, 0
    %v113 = vsel %vm93, %v104, 0
    %v116 = vsel %vm93, %v105, 0
    %v119 = vsel %vm93, %v106, 0
    %vm121 = vcmask 1043456
    %v123 = vsel %vm121, %v108, 0
    %125 = vmatpush.msra.mxu0 0.0
    %126 = vmatpush.msra.mxu0 0.0
    %127 = vmatpush.msra.mxu0 0.0
    %128 = vmatpush.msra.mxu0 0.0
    %129 = vmatpush.msra.mxu0 0.0
    %130 = vmatpush.msra.mxu0 0.0
    %131 = vmatpush.msra.mxu0 0.0
    %132 = vmatpush.msra.mxu0 0.0
    %133 = vmatpush.msra.mxu0 0.0
    %134 = vmatpush.msra.mxu0 0.0
    %135 = vmatpush.msra.mxu0 0.0
    %136 = vmatpush.msra.mxu0 0.0
    %137 = vmatpush.msra.mxu0 0.0
    %138 = vmatpush.msra.mxu0 0.0
    %139 = vmatpush.msra.mxu0 0.0
    %140 = vmatpush.msra.mxu0 %v123
    %141 = vmatmul.f32.gmra.mxu0 %v110
    %v142 = vpop.f32.mrf.mxu0
    %v143 = vadd.f32 0.0, %v142
    %144 = vmatmul.f32.gmra.mxu0 %v113
    %v145 = vpop.f32.mrf.mxu0
    %v146 = vadd.f32 0.0, %v145
    %147 = vmatmul.f32.gmra.mxu0 %v116
    %v148 = vpop.f32.mrf.mxu0
    %v149 = vadd.f32 0.0, %v148
    %150 = vmatmul.f32.gmra.mxu0 %v119
    %v151 = vpop.f32.mrf.mxu0
    %v152 = vadd.f32 0.0, %v151
    %153 = vdwg.mxu0
    %v155 = vsel %vm93, %v98, 0
    %v158 = vsel %vm93, %v99, 0
    %v161 = vsel %vm93, %v100, 0
    %v164 = vsel %vm93, %v101, 0
    %v167 = vsel %vm121, %v102, 0
    %169 = vmatpush.msra.mxu0 0.0
    %170 = vmatpush.msra.mxu0 0.0
    %171 = vmatpush.msra.mxu0 0.0
    %172 = vmatpush.msra.mxu0 0.0
    %173 = vmatpush.msra.mxu0 0.0
    %174 = vmatpush.msra.mxu0 0.0
    %175 = vmatpush.msra.mxu0 0.0
    %176 = vmatpush.msra.mxu0 0.0
    %177 = vmatpush.msra.mxu0 0.0
    %178 = vmatpush.msra.mxu0 0.0
    %179 = vmatpush.msra.mxu0 0.0
    %180 = vmatpush.msra.mxu0 0.0
    %181 = vmatpush.msra.mxu0 0.0
    %182 = vmatpush.msra.mxu0 0.0
    %183 = vmatpush.msra.mxu0 0.0
    %184 = vmatpush.msra.mxu0 %v167
    %185 = vmatmul.f32.gmra.mxu0 %v155
    %v186 = vpop.f32.mrf.mxu0
    %v187 = vadd.f32 %v143, %v186
    %188 = vmatmul.f32.gmra.mxu0 %v158
    %v189 = vpop.f32.mrf.mxu0
    %v190 = vadd.f32 %v146, %v189
    %191 = vmatmul.f32.gmra.mxu0 %v161
    %v192 = vpop.f32.mrf.mxu0
    %v193 = vadd.f32 %v149, %v192
    %194 = vmatmul.f32.gmra.mxu0 %v164
    %v195 = vpop.f32.mrf.mxu0
    %v196 = vadd.f32 %v152, %v195
    %197 = vdwg.mxu0
    %v198 = vld [vmem:[#allocation2 + $0x2] sm:$0xff]
    %v199 = vld [vmem:[#allocation2 + $0xa] sm:$0xff]
    %v200 = vld [vmem:[#allocation2 + $0x1a] sm:$0xff]
    %v201 = vld [vmem:[#allocation2 + $0x22] sm:$0xff]
    %s202 = scalar_lea.vmem %s1, 8
    %v203 = vld [vmem:[%s202] sm:$0xf]
    %v205 = vsel %vm93, %v198, 0
    %v208 = vsel %vm93, %v199, 0
    %v211 = vsel %vm93, %v200, 0
    %v214 = vsel %vm93, %v201, 0
    %v217 = vsel %vm121, %v203, 0
    %219 = vmatpush.msra.mxu0 0.0
    %220 = vmatpush.msra.mxu0 0.0
    %221 = vmatpush.msra.mxu0 0.0
    %222 = vmatpush.msra.mxu0 0.0
    %223 = vmatpush.msra.mxu0 0.0
    %224 = vmatpush.msra.mxu0 0.0
    %225 = vmatpush.msra.mxu0 0.0
    %226 = vmatpush.msra.mxu0 0.0
    %227 = vmatpush.msra.mxu0 0.0
    %228 = vmatpush.msra.mxu0 0.0
    %229 = vmatpush.msra.mxu0 0.0
    %230 = vmatpush.msra.mxu0 0.0
    %231 = vmatpush.msra.mxu0 0.0
    %232 = vmatpush.msra.mxu0 0.0
    %233 = vmatpush.msra.mxu0 0.0
    %234 = vmatpush.msra.mxu0 %v217
    %235 = vmatmul.f32.gmra.mxu0 %v205
    %v236 = vpop.f32.mrf.mxu0
    %v237 = vadd.f32 0.0, %v236
    %238 = vmatmul.f32.gmra.mxu0 %v208
    %v239 = vpop.f32.mrf.mxu0
    %v240 = vadd.f32 0.0, %v239
    %241 = vmatmul.f32.gmra.mxu0 %v211
    %v242 = vpop.f32.mrf.mxu0
    %v243 = vadd.f32 0.0, %v242
    %244 = vmatmul.f32.gmra.mxu0 %v214
    %v245 = vpop.f32.mrf.mxu0
    %v246 = vadd.f32 0.0, %v245
    %247 = vdwg.mxu0
    %v248 = vadd.f32 %v187, %v237
    %v249 = vadd.f32 %v190, %v240
    %v250 = vadd.f32 %v193, %v243
    %v251 = vadd.f32 %v196, %v246
    %v252 = vld [vmem:[%s2] sm:$0x1]
    %v254 = vperm.slane %v252, 0
    %v256 = vmul.f32 %v248, %v254
    %v257 = vmul.f32 %v249, %v254
    %v258 = vmul.f32 %v250, %v254
    %v259 = vmul.f32 %v251, %v254
    %v260 = vld [vmem:[%s3] sm:$0x1]
    %v262 = vperm.slane %v260, 0
    %v264 = vadd.f32 %v256, %v262
    %v265 = vadd.f32 %v257, %v262
    %v266 = vadd.f32 %v258, %v262
    %v267 = vadd.f32 %v259, %v262
    %v268 = vmax.f32 %v264, 0.0
    %v269 = vmax.f32 %v265, 0.0
    %v270 = vmax.f32 %v266, 0.0
    %v271 = vmax.f32 %v267, 0.0
    %vm272 = vcmask 58368
    %273 = vst.msk [vmem:[#allocation3] sm:$0x3] %vm272, 0.0
    %274 = vst.msk [vmem:[#allocation3 + $0x18] sm:$0x3] %vm272, 0.0
    %275 = vst.msk [vmem:[#allocation3 + $0x12] sm:$0x3] %vm272, 0.0
    %276 = vst.msk [vmem:[#allocation3 + $0x2a] sm:$0x3] %vm272, 0.0
    %vm277 = vcmask 64512
    %278 = vst.msk [vmem:[#allocation3 + $0x2] sm:$0xff] %vm277, %v268
    %279 = vst.msk [vmem:[#allocation3 + $0xa] sm:$0xff] %vm277, %v269
    %280 = vst.msk [vmem:[#allocation3 + $0x1a] sm:$0xff] %vm277, %v270
    %281 = vst.msk [vmem:[#allocation3 + $0x22] sm:$0xff] %vm277, %v271
    %v282 = vld [vmem:[#allocation3] sm:$0xff]
    %v283 = vld [vmem:[#allocation3 + $0x8] sm:$0xff]
    %v284 = vld [vmem:[#allocation3 + $0x18] sm:$0xff]
    %v285 = vld [vmem:[#allocation3 + $0x20] sm:$0xff]
    %v286 = vld [vmem:[%s4] sm:$0xff]
    %v287 = vld [vmem:[#allocation3 + $0x1] sm:$0xff]
    %v288 = vld [vmem:[#allocation3 + $0x9] sm:$0xff]
    %v289 = vld [vmem:[#allocation3 + $0x19] sm:$0xff]
    %v290 = vld [vmem:[#allocation3 + $0x21] sm:$0xff]
    %s291 = scalar_lea.vmem %s4, 8
    %v292 = vld [vmem:[%s291] sm:$0xff]
    %v294 = vsel %vm277, %v287, 0
    %v297 = vsel %vm277, %v288, 0
    %v300 = vsel %vm277, %v289, 0
    %v303 = vsel %vm277, %v290, 0
    %305 = vmatpush.msra.mxu0 0.0
    %306 = vmatpush.msra.mxu0 0.0
    %307 = vmatpush.msra.mxu0 0.0
    %308 = vmatpush.msra.mxu0 0.0
    %309 = vmatpush.msra.mxu0 0.0
    %310 = vmatpush.msra.mxu0 0.0
    %311 = vmatpush.msra.mxu0 0.0
    %312 = vmatpush.msra.mxu0 0.0
    %313 = vmatpush.msra.mxu0 0.0
    %314 = vmatpush.msra.mxu0 0.0
    %315 = vmatpush.msra.mxu0 0.0
    %316 = vmatpush.msra.mxu0 0.0
    %317 = vmatpush.msra.mxu0 0.0
    %318 = vmatpush.msra.mxu0 0.0
    %319 = vmatpush.msra.mxu0 0.0
    %320 = vmatpush.msra.mxu0 %v292
    %321 = vmatmul.f32.gmra.mxu0 %v294
    %v322 = vpop.f32.mrf.mxu0
    %v323 = vadd.f32 0.0, %v322
    %324 = vmatmul.f32.gmra.mxu0 %v297
    %v325 = vpop.f32.mrf.mxu0
    %v326 = vadd.f32 0.0, %v325
    %327 = vmatmul.f32.gmra.mxu0 %v300
    %v328 = vpop.f32.mrf.mxu0
    %v329 = vadd.f32 0.0, %v328
    %330 = vmatmul.f32.gmra.mxu0 %v303
    %v331 = vpop.f32.mrf.mxu0
    %v332 = vadd.f32 0.0, %v331
    %333 = vdwg.mxu0
    %v335 = vsel %vm277, %v282, 0
    %v338 = vsel %vm277, %v283, 0
    %v341 = vsel %vm277, %v284, 0
    %v344 = vsel %vm277, %v285, 0
    %346 = vmatpush.msra.mxu0 0.0
    %347 = vmatpush.msra.mxu0 0.0
    %348 = vmatpush.msra.mxu0 0.0
    %349 = vmatpush.msra.mxu0 0.0
    %350 = vmatpush.msra.mxu0 0.0
    %351 = vmatpush.msra.mxu0 0.0
    %352 = vmatpush.msra.mxu0 0.0
    %353 = vmatpush.msra.mxu0 0.0
    %354 = vmatpush.msra.mxu0 0.0
    %355 = vmatpush.msra.mxu0 0.0
    %356 = vmatpush.msra.mxu0 0.0
    %357 = vmatpush.msra.mxu0 0.0
    %358 = vmatpush.msra.mxu0 0.0
    %359 = vmatpush.msra.mxu0 0.0
    %360 = vmatpush.msra.mxu0 0.0
    %361 = vmatpush.msra.mxu0 %v286
    %362 = vmatmul.f32.gmra.mxu0 %v335
    %v363 = vpop.f32.mrf.mxu0
    %v364 = vadd.f32 %v323, %v363
    %365 = vmatmul.f32.gmra.mxu0 %v338
    %v366 = vpop.f32.mrf.mxu0
    %v367 = vadd.f32 %v326, %v366
    %368 = vmatmul.f32.gmra.mxu0 %v341
    %v369 = vpop.f32.mrf.mxu0
    %v370 = vadd.f32 %v329, %v369
    %371 = vmatmul.f32.gmra.mxu0 %v344
    %v372 = vpop.f32.mrf.mxu0
    %v373 = vadd.f32 %v332, %v372
    %374 = vdwg.mxu0
    %v375 = vld [vmem:[#allocation3 + $0x2] sm:$0xff]
    %v376 = vld [vmem:[#allocation3 + $0xa] sm:$0xff]
    %v377 = vld [vmem:[#allocation3 + $0x1a] sm:$0xff]
    %v378 = vld [vmem:[#allocation3 + $0x22] sm:$0xff]
    %s379 = scalar_lea.vmem %s4, 16
    %v380 = vld [vmem:[%s379] sm:$0xff]
    %v382 = vsel %vm277, %v375, 0
    %v385 = vsel %vm277, %v376, 0
    %v388 = vsel %vm277, %v377, 0
    %v391 = vsel %vm277, %v378, 0
    %393 = vmatpush.msra.mxu0 0.0
    %394 = vmatpush.msra.mxu0 0.0
    %395 = vmatpush.msra.mxu0 0.0
    %396 = vmatpush.msra.mxu0 0.0
    %397 = vmatpush.msra.mxu0 0.0
    %398 = vmatpush.msra.mxu0 0.0
    %399 = vmatpush.msra.mxu0 0.0
    %400 = vmatpush.msra.mxu0 0.0
    %401 = vmatpush.msra.mxu0 0.0
    %402 = vmatpush.msra.mxu0 0.0
    %403 = vmatpush.msra.mxu0 0.0
    %404 = vmatpush.msra.mxu0 0.0
    %405 = vmatpush.msra.mxu0 0.0
    %406 = vmatpush.msra.mxu0 0.0
    %407 = vmatpush.msra.mxu0 0.0
    %408 = vmatpush.msra.mxu0 %v380
    %409 = vmatmul.f32.gmra.mxu0 %v382
    %v410 = vpop.f32.mrf.mxu0
    %v411 = vadd.f32 0.0, %v410
    %412 = vmatmul.f32.gmra.mxu0 %v385
    %v413 = vpop.f32.mrf.mxu0
    %v414 = vadd.f32 0.0, %v413
    %415 = vmatmul.f32.gmra.mxu0 %v388
    %v416 = vpop.f32.mrf.mxu0
    %v417 = vadd.f32 0.0, %v416
    %418 = vmatmul.f32.gmra.mxu0 %v391
    %v419 = vpop.f32.mrf.mxu0
    %v420 = vadd.f32 0.0, %v419
    %421 = vdwg.mxu0
    %v422 = vadd.f32 %v364, %v411
    %v423 = vadd.f32 %v367, %v414
    %v424 = vadd.f32 %v370, %v417
    %v425 = vadd.f32 %v373, %v420
    %v426 = vld [vmem:[#allocation3 + $0x3] sm:$0xff]
    %v427 = vld [vmem:[#allocation3 + $0xb] sm:$0xff]
    %v428 = vld [vmem:[#allocation3 + $0x1b] sm:$0xff]
    %v429 = vld [vmem:[#allocation3 + $0x23] sm:$0xff]
    %s430 = scalar_lea.vmem %s4, 24
    %v431 = vld [vmem:[%s430] sm:$0xff]
    %v433 = vsel %vm277, %v426, 0
    %v436 = vsel %vm277, %v427, 0
    %v439 = vsel %vm277, %v428, 0
    %v442 = vsel %vm277, %v429, 0
    %444 = vmatpush.msra.mxu0 0.0
    %445 = vmatpush.msra.mxu0 0.0
    %446 = vmatpush.msra.mxu0 0.0
    %447 = vmatpush.msra.mxu0 0.0
    %448 = vmatpush.msra.mxu0 0.0
    %449 = vmatpush.msra.mxu0 0.0
    %450 = vmatpush.msra.mxu0 0.0
    %451 = vmatpush.msra.mxu0 0.0
    %452 = vmatpush.msra.mxu0 0.0
    %453 = vmatpush.msra.mxu0 0.0
    %454 = vmatpush.msra.mxu0 0.0
    %455 = vmatpush.msra.mxu0 0.0
    %456 = vmatpush.msra.mxu0 0.0
    %457 = vmatpush.msra.mxu0 0.0
    %458 = vmatpush.msra.mxu0 0.0
    %459 = vmatpush.msra.mxu0 %v431
    %460 = vmatmul.f32.gmra.mxu0 %v433
    %v461 = vpop.f32.mrf.mxu0
    %v462 = vadd.f32 0.0, %v461
    %463 = vmatmul.f32.gmra.mxu0 %v436
    %v464 = vpop.f32.mrf.mxu0
    %v465 = vadd.f32 0.0, %v464
    %466 = vmatmul.f32.gmra.mxu0 %v439
    %v467 = vpop.f32.mrf.mxu0
    %v468 = vadd.f32 0.0, %v467
    %469 = vmatmul.f32.gmra.mxu0 %v442
    %v470 = vpop.f32.mrf.mxu0
    %v471 = vadd.f32 0.0, %v470
    %472 = vdwg.mxu0
    %v473 = vadd.f32 %v422, %v462
    %v474 = vadd.f32 %v423, %v465
    %v475 = vadd.f32 %v424, %v468
    %v476 = vadd.f32 %v425, %v471
    %v477 = vld [vmem:[#allocation3 + $0x4] sm:$0xff]
    %v478 = vld [vmem:[#allocation3 + $0xc] sm:$0xff]
    %v479 = vld [vmem:[#allocation3 + $0x1c] sm:$0xff]
    %v480 = vld [vmem:[#allocation3 + $0x24] sm:$0xff]
    %s481 = scalar_lea.vmem %s4, 32
    %v482 = vld [vmem:[%s481] sm:$0xff]
    %v484 = vsel %vm277, %v477, 0
    %v487 = vsel %vm277, %v478, 0
    %v490 = vsel %vm277, %v479, 0
    %v493 = vsel %vm277, %v480, 0
    %495 = vmatpush.msra.mxu0 0.0
    %496 = vmatpush.msra.mxu0 0.0
    %497 = vmatpush.msra.mxu0 0.0
    %498 = vmatpush.msra.mxu0 0.0
    %499 = vmatpush.msra.mxu0 0.0
    %500 = vmatpush.msra.mxu0 0.0
    %501 = vmatpush.msra.mxu0 0.0
    %502 = vmatpush.msra.mxu0 0.0
    %503 = vmatpush.msra.mxu0 0.0
    %504 = vmatpush.msra.mxu0 0.0
    %505 = vmatpush.msra.mxu0 0.0
    %506 = vmatpush.msra.mxu0 0.0
    %507 = vmatpush.msra.mxu0 0.0
    %508 = vmatpush.msra.mxu0 0.0
    %509 = vmatpush.msra.mxu0 0.0
    %510 = vmatpush.msra.mxu0 %v482
    %511 = vmatmul.f32.gmra.mxu0 %v484
    %v512 = vpop.f32.mrf.mxu0
    %v513 = vadd.f32 0.0, %v512
    %514 = vmatmul.f32.gmra.mxu0 %v487
    %v515 = vpop.f32.mrf.mxu0
    %v516 = vadd.f32 0.0, %v515
    %517 = vmatmul.f32.gmra.mxu0 %v490
    %v518 = vpop.f32.mrf.mxu0
    %v519 = vadd.f32 0.0, %v518
    %520 = vmatmul.f32.gmra.mxu0 %v493
    %v521 = vpop.f32.mrf.mxu0
    %v522 = vadd.f32 0.0, %v521
    %523 = vdwg.mxu0
    %v524 = vadd.f32 %v473, %v513
    %v525 = vadd.f32 %v474, %v516
    %v526 = vadd.f32 %v475, %v519
    %v527 = vadd.f32 %v476, %v522
    %v528 = vld [vmem:[%s5] sm:$0x1]
    %v530 = vperm.slane %v528, 0
    %v532 = vmul.f32 %v524, %v530
    %v533 = vmul.f32 %v525, %v530
    %v534 = vmul.f32 %v526, %v530
    %v535 = vmul.f32 %v527, %v530
    %v536 = vld [vmem:[%s6] sm:$0x1]
    %v538 = vperm.slane %v536, 0
    %v540 = vadd.f32 %v532, %v538
    %v541 = vadd.f32 %v533, %v538
    %v542 = vadd.f32 %v534, %v538
    %v543 = vadd.f32 %v535, %v538
    %v544 = vmax.f32 %v540, 0.0
    %v545 = vmax.f32 %v541, 0.0
    %v546 = vmax.f32 %v542, 0.0
    %v547 = vmax.f32 %v543, 0.0
    %vm548 = vcmask 124928
    %549 = vst.msk [vmem:[#allocation4] sm:$0x7] %vm548, 0.0
    %550 = vst.msk [vmem:[#allocation4 + $0x18] sm:$0x7] %vm548, 0.0
    %551 = vst.msk [vmem:[#allocation4 + $0x13] sm:$0x7] %vm548, 0.0
    %552 = vst.msk [vmem:[#allocation4 + $0x2b] sm:$0x7] %vm548, 0.0
    %vm553 = vcmask 130048
    %554 = vst.msk [vmem:[#allocation4 + $0x3] sm:$0xff] %vm553, %v544
    %555 = vst.msk [vmem:[#allocation4 + $0xb] sm:$0xff] %vm553, %v545
    %556 = vst.msk [vmem:[#allocation4 + $0x1b] sm:$0xff] %vm553, %v546
    %557 = vst.msk [vmem:[#allocation4 + $0x23] sm:$0xff] %vm553, %v547
    %v558 = vld [vmem:[#allocation4] sm:$0xff]
    %v559 = vld [vmem:[#allocation4 + $0x8] sm:$0xff]
    %v560 = vld [vmem:[#allocation4 + $0x18] sm:$0xff]
    %v561 = vld [vmem:[#allocation4 + $0x20] sm:$0xff]
    %v562 = vld [vmem:[%s7] sm:$0xff]
    %v563 = vld [vmem:[%s7 + $0x8] sm:$0xff]
    %v564 = vld [vmem:[#allocation4 + $0x1] sm:$0xff]
    %v565 = vld [vmem:[#allocation4 + $0x9] sm:$0xff]
    %v566 = vld [vmem:[#allocation4 + $0x19] sm:$0xff]
    %v567 = vld [vmem:[#allocation4 + $0x21] sm:$0xff]
    %s568 = scalar_lea.vmem %s7, 16
    %v569 = vld [vmem:[%s568] sm:$0xff]
    %v570 = vld [vmem:[%s568 + $0x8] sm:$0xff]
    %v572 = vsel %vm553, %v564, 0
    %v575 = vsel %vm553, %v565, 0
    %v578 = vsel %vm553, %v566, 0
    %v581 = vsel %vm553, %v567, 0
    %583 = vmatpush.msra.mxu0 0.0
    %584 = vmatpush.msra.mxu0 0.0
    %585 = vmatpush.msra.mxu0 0.0
    %586 = vmatpush.msra.mxu0 0.0
    %587 = vmatpush.msra.mxu0 0.0
    %588 = vmatpush.msra.mxu0 0.0
    %589 = vmatpush.msra.mxu0 0.0
    %590 = vmatpush.msra.mxu0 0.0
    %591 = vmatpush.msra.mxu0 0.0
    %592 = vmatpush.msra.mxu0 0.0
    %593 = vmatpush.msra.mxu0 0.0
    %594 = vmatpush.msra.mxu0 0.0
    %595 = vmatpush.msra.mxu0 0.0
    %596 = vmatpush.msra.mxu0 0.0
    %597 = vmatpush.msra.mxu0 %v570
    %598 = vmatpush.msra.mxu0 %v569
    %599 = vmatmul.f32.gmra.mxu0 %v572
    %v600 = vpop.f32.mrf.mxu0
    %v601 = vadd.f32 0.0, %v600
    %602 = vmatmul.f32.gmra.mxu0 %v575
    %v603 = vpop.f32.mrf.mxu0
    %v604 = vadd.f32 0.0, %v603
    %605 = vmatmul.f32.gmra.mxu0 %v578
    %v606 = vpop.f32.mrf.mxu0
    %v607 = vadd.f32 0.0, %v606
    %608 = vmatmul.f32.gmra.mxu0 %v581
    %v609 = vpop.f32.mrf.mxu0
    %v610 = vadd.f32 0.0, %v609
    %611 = vdwg.mxu0
    %v613 = vsel %vm553, %v558, 0
    %v616 = vsel %vm553, %v559, 0
    %v619 = vsel %vm553, %v560, 0
    %v622 = vsel %vm553, %v561, 0
    %624 = vmatpush.msra.mxu0 0.0
    %625 = vmatpush.msra.mxu0 0.0
    %626 = vmatpush.msra.mxu0 0.0
    %627 = vmatpush.msra.mxu0 0.0
    %628 = vmatpush.msra.mxu0 0.0
    %629 = vmatpush.msra.mxu0 0.0
    %630 = vmatpush.msra.mxu0 0.0
    %631 = vmatpush.msra.mxu0 0.0
    %632 = vmatpush.msra.mxu0 0.0
    %633 = vmatpush.msra.mxu0 0.0
    %634 = vmatpush.msra.mxu0 0.0
    %635 = vmatpush.msra.mxu0 0.0
    %636 = vmatpush.msra.mxu0 0.0
    %637 = vmatpush.msra.mxu0 0.0
    %638 = vmatpush.msra.mxu0 %v563
    %639 = vmatpush.msra.mxu0 %v562
    %640 = vmatmul.f32.gmra.mxu0 %v613
    %v641 = vpop.f32.mrf.mxu0
    %v642 = vadd.f32 %v601, %v641
    %643 = vmatmul.f32.gmra.mxu0 %v616
    %v644 = vpop.f32.mrf.mxu0
    %v645 = vadd.f32 %v604, %v644
    %646 = vmatmul.f32.gmra.mxu0 %v619
    %v647 = vpop.f32.mrf.mxu0
    %v648 = vadd.f32 %v607, %v647
    %649 = vmatmul.f32.gmra.mxu0 %v622
    %v650 = vpop.f32.mrf.mxu0
    %v651 = vadd.f32 %v610, %v650
    %652 = vdwg.mxu0
    %v653 = vld [vmem:[#allocation4 + $0x2] sm:$0xff]
    %v654 = vld [vmem:[#allocation4 + $0xa] sm:$0xff]
    %v655 = vld [vmem:[#allocation4 + $0x1a] sm:$0xff]
    %v656 = vld [vmem:[#allocation4 + $0x22] sm:$0xff]
    %s657 = scalar_lea.vmem %s7, 32
    %v658 = vld [vmem:[%s657] sm:$0xff]
    %v659 = vld [vmem:[%s657 + $0x8] sm:$0xff]
    %v661 = vsel %vm553, %v653, 0
    %v664 = vsel %vm553, %v654, 0
    %v667 = vsel %vm553, %v655, 0
    %v670 = vsel %vm553, %v656, 0
    %672 = vmatpush.msra.mxu0 0.0
    %673 = vmatpush.msra.mxu0 0.0
    %674 = vmatpush.msra.mxu0 0.0
    %675 = vmatpush.msra.mxu0 0.0
    %676 = vmatpush.msra.mxu0 0.0
    %677 = vmatpush.msra.mxu0 0.0
    %678 = vmatpush.msra.mxu0 0.0
    %679 = vmatpush.msra.mxu0 0.0
    %680 = vmatpush.msra.mxu0 0.0
    %681 = vmatpush.msra.mxu0 0.0
    %682 = vmatpush.msra.mxu0 0.0
    %683 = vmatpush.msra.mxu0 0.0
    %684 = vmatpush.msra.mxu0 0.0
    %685 = vmatpush.msra.mxu0 0.0
    %686 = vmatpush.msra.mxu0 %v659
    %687 = vmatpush.msra.mxu0 %v658
    %688 = vmatmul.f32.gmra.mxu0 %v661
    %v689 = vpop.f32.mrf.mxu0
    %v690 = vadd.f32 0.0, %v689
    %691 = vmatmul.f32.gmra.mxu0 %v664
    %v692 = vpop.f32.mrf.mxu0
    %v693 = vadd.f32 0.0, %v692
    %694 = vmatmul.f32.gmra.mxu0 %v667
    %v695 = vpop.f32.mrf.mxu0
    %v696 = vadd.f32 0.0, %v695
    %697 = vmatmul.f32.gmra.mxu0 %v670
    %v698 = vpop.f32.mrf.mxu0
    %v699 = vadd.f32 0.0, %v698
    %700 = vdwg.mxu0
    %v701 = vadd.f32 %v642, %v690
    %v702 = vadd.f32 %v645, %v693
    %v703 = vadd.f32 %v648, %v696
    %v704 = vadd.f32 %v651, %v699
    %v705 = vld [vmem:[#allocation4 + $0x3] sm:$0xff]
    %v706 = vld [vmem:[#allocation4 + $0xb] sm:$0xff]
    %v707 = vld [vmem:[#allocation4 + $0x1b] sm:$0xff]
    %v708 = vld [vmem:[#allocation4 + $0x23] sm:$0xff]
    %s709 = scalar_lea.vmem %s7, 48
    %v710 = vld [vmem:[%s709] sm:$0xff]
    %v711 = vld [vmem:[%s709 + $0x8] sm:$0xff]
    %v713 = vsel %vm553, %v705, 0
    %v716 = vsel %vm553, %v706, 0
    %v719 = vsel %vm553, %v707, 0
    %v722 = vsel %vm553, %v708, 0
    %724 = vmatpush.msra.mxu0 0.0
    %725 = vmatpush.msra.mxu0 0.0
    %726 = vmatpush.msra.mxu0 0.0
    %727 = vmatpush.msra.mxu0 0.0
    %728 = vmatpush.msra.mxu0 0.0
    %729 = vmatpush.msra.mxu0 0.0
    %730 = vmatpush.msra.mxu0 0.0
    %731 = vmatpush.msra.mxu0 0.0
    %732 = vmatpush.msra.mxu0 0.0
    %733 = vmatpush.msra.mxu0 0.0
    %734 = vmatpush.msra.mxu0 0.0
    %735 = vmatpush.msra.mxu0 0.0
    %736 = vmatpush.msra.mxu0 0.0
    %737 = vmatpush.msra.mxu0 0.0
    %738 = vmatpush.msra.mxu0 %v711
    %739 = vmatpush.msra.mxu0 %v710
    %740 = vmatmul.f32.gmra.mxu0 %v713
    %v741 = vpop.f32.mrf.mxu0
    %v742 = vadd.f32 0.0, %v741
    %743 = vmatmul.f32.gmra.mxu0 %v716
    %v744 = vpop.f32.mrf.mxu0
    %v745 = vadd.f32 0.0, %v744
    %746 = vmatmul.f32.gmra.mxu0 %v719
    %v747 = vpop.f32.mrf.mxu0
    %v748 = vadd.f32 0.0, %v747
    %749 = vmatmul.f32.gmra.mxu0 %v722
    %v750 = vpop.f32.mrf.mxu0
    %v751 = vadd.f32 0.0, %v750
    %752 = vdwg.mxu0
    %v753 = vadd.f32 %v701, %v742
    %v754 = vadd.f32 %v702, %v745
    %v755 = vadd.f32 %v703, %v748
    %v756 = vadd.f32 %v704, %v751
    %v757 = vld [vmem:[#allocation4 + $0x4] sm:$0xff]
    %v758 = vld [vmem:[#allocation4 + $0xc] sm:$0xff]
    %v759 = vld [vmem:[#allocation4 + $0x1c] sm:$0xff]
    %v760 = vld [vmem:[#allocation4 + $0x24] sm:$0xff]
    %s761 = scalar_lea.vmem %s7, 64
    %v762 = vld [vmem:[%s761] sm:$0xff]
    %v763 = vld [vmem:[%s761 + $0x8] sm:$0xff]
    %v765 = vsel %vm553, %v757, 0
    %v768 = vsel %vm553, %v758, 0
    %v771 = vsel %vm553, %v759, 0
    %v774 = vsel %vm553, %v760, 0
    %776 = vmatpush.msra.mxu0 0.0
    %777 = vmatpush.msra.mxu0 0.0
    %778 = vmatpush.msra.mxu0 0.0
    %779 = vmatpush.msra.mxu0 0.0
    %780 = vmatpush.msra.mxu0 0.0
    %781 = vmatpush.msra.mxu0 0.0
    %782 = vmatpush.msra.mxu0 0.0
    %783 = vmatpush.msra.mxu0 0.0
    %784 = vmatpush.msra.mxu0 0.0
    %785 = vmatpush.msra.mxu0 0.0
    %786 = vmatpush.msra.mxu0 0.0
    %787 = vmatpush.msra.mxu0 0.0
    %788 = vmatpush.msra.mxu0 0.0
    %789 = vmatpush.msra.mxu0 0.0
    %790 = vmatpush.msra.mxu0 %v763
    %791 = vmatpush.msra.mxu0 %v762
    %792 = vmatmul.f32.gmra.mxu0 %v765
    %v793 = vpop.f32.mrf.mxu0
    %v794 = vadd.f32 0.0, %v793
    %795 = vmatmul.f32.gmra.mxu0 %v768
    %v796 = vpop.f32.mrf.mxu0
    %v797 = vadd.f32 0.0, %v796
    %798 = vmatmul.f32.gmra.mxu0 %v771
    %v799 = vpop.f32.mrf.mxu0
    %v800 = vadd.f32 0.0, %v799
    %801 = vmatmul.f32.gmra.mxu0 %v774
    %v802 = vpop.f32.mrf.mxu0
    %v803 = vadd.f32 0.0, %v802
    %804 = vdwg.mxu0
    %v805 = vadd.f32 %v753, %v794
    %v806 = vadd.f32 %v754, %v797
    %v807 = vadd.f32 %v755, %v800
    %v808 = vadd.f32 %v756, %v803
    %v809 = vld [vmem:[#allocation4 + $0x5] sm:$0xff]
    %v810 = vld [vmem:[#allocation4 + $0xd] sm:$0xff]
    %v811 = vld [vmem:[#allocation4 + $0x1d] sm:$0xff]
    %v812 = vld [vmem:[#allocation4 + $0x25] sm:$0xff]
    %s813 = scalar_lea.vmem %s7, 80
    %v814 = vld [vmem:[%s813] sm:$0xff]
    %v815 = vld [vmem:[%s813 + $0x8] sm:$0xff]
    %v817 = vsel %vm553, %v809, 0
    %v820 = vsel %vm553, %v810, 0
    %v823 = vsel %vm553, %v811, 0
    %v826 = vsel %vm553, %v812, 0
    %828 = vmatpush.msra.mxu0 0.0
    %829 = vmatpush.msra.mxu0 0.0
    %830 = vmatpush.msra.mxu0 0.0
    %831 = vmatpush.msra.mxu0 0.0
    %832 = vmatpush.msra.mxu0 0.0
    %833 = vmatpush.msra.mxu0 0.0
    %834 = vmatpush.msra.mxu0 0.0
    %835 = vmatpush.msra.mxu0 0.0
    %836 = vmatpush.msra.mxu0 0.0
    %837 = vmatpush.msra.mxu0 0.0
    %838 = vmatpush.msra.mxu0 0.0
    %839 = vmatpush.msra.mxu0 0.0
    %840 = vmatpush.msra.mxu0 0.0
    %841 = vmatpush.msra.mxu0 0.0
    %842 = vmatpush.msra.mxu0 %v815
    %843 = vmatpush.msra.mxu0 %v814
    %844 = vmatmul.f32.gmra.mxu0 %v817
    %v845 = vpop.f32.mrf.mxu0
    %v846 = vadd.f32 0.0, %v845
    %847 = vmatmul.f32.gmra.mxu0 %v820
    %v848 = vpop.f32.mrf.mxu0
    %v849 = vadd.f32 0.0, %v848
    %850 = vmatmul.f32.gmra.mxu0 %v823
    %v851 = vpop.f32.mrf.mxu0
    %v852 = vadd.f32 0.0, %v851
    %853 = vmatmul.f32.gmra.mxu0 %v826
    %v854 = vpop.f32.mrf.mxu0
    %v855 = vadd.f32 0.0, %v854
    %856 = vdwg.mxu0
    %v857 = vadd.f32 %v805, %v846
    %v858 = vadd.f32 %v806, %v849
    %v859 = vadd.f32 %v807, %v852
    %v860 = vadd.f32 %v808, %v855
    %v861 = vld [vmem:[#allocation4 + $0x6] sm:$0xff]
    %v862 = vld [vmem:[#allocation4 + $0xe] sm:$0xff]
    %v863 = vld [vmem:[#allocation4 + $0x1e] sm:$0xff]
    %v864 = vld [vmem:[#allocation4 + $0x26] sm:$0xff]
    %s865 = scalar_lea.vmem %s7, 96
    %v866 = vld [vmem:[%s865] sm:$0xff]
    %v867 = vld [vmem:[%s865 + $0x8] sm:$0xff]
    %v869 = vsel %vm553, %v861, 0
    %v872 = vsel %vm553, %v862, 0
    %v875 = vsel %vm553, %v863, 0
    %v878 = vsel %vm553, %v864, 0
    %880 = vmatpush.msra.mxu0 0.0
    %881 = vmatpush.msra.mxu0 0.0
    %882 = vmatpush.msra.mxu0 0.0
    %883 = vmatpush.msra.mxu0 0.0
    %884 = vmatpush.msra.mxu0 0.0
    %885 = vmatpush.msra.mxu0 0.0
    %886 = vmatpush.msra.mxu0 0.0
    %887 = vmatpush.msra.mxu0 0.0
    %888 = vmatpush.msra.mxu0 0.0
    %889 = vmatpush.msra.mxu0 0.0
    %890 = vmatpush.msra.mxu0 0.0
    %891 = vmatpush.msra.mxu0 0.0
    %892 = vmatpush.msra.mxu0 0.0
    %893 = vmatpush.msra.mxu0 0.0
    %894 = vmatpush.msra.mxu0 %v867
    %895 = vmatpush.msra.mxu0 %v866
    %896 = vmatmul.f32.gmra.mxu0 %v869
    %v897 = vpop.f32.mrf.mxu0
    %v898 = vadd.f32 0.0, %v897
    %899 = vmatmul.f32.gmra.mxu0 %v872
    %v900 = vpop.f32.mrf.mxu0
    %v901 = vadd.f32 0.0, %v900
    %902 = vmatmul.f32.gmra.mxu0 %v875
    %v903 = vpop.f32.mrf.mxu0
    %v904 = vadd.f32 0.0, %v903
    %905 = vmatmul.f32.gmra.mxu0 %v878
    %v906 = vpop.f32.mrf.mxu0
    %v907 = vadd.f32 0.0, %v906
    %908 = vdwg.mxu0
    %v909 = vadd.f32 %v857, %v898
    %v910 = vadd.f32 %v858, %v901
    %v911 = vadd.f32 %v859, %v904
    %v912 = vadd.f32 %v860, %v907
    %v913 = vld [vmem:[%s8] sm:$0x1]
    %v915 = vperm.slane %v913, 0
    %v917 = vmul.f32 %v909, %v915
    %v918 = vmul.f32 %v910, %v915
    %v919 = vmul.f32 %v911, %v915
    %v920 = vmul.f32 %v912, %v915
    %v921 = vld [vmem:[%s9] sm:$0x1]
    %v923 = vperm.slane %v921, 0
    %v925 = vadd.f32 %v917, %v923
    %v926 = vadd.f32 %v918, %v923
    %v927 = vadd.f32 %v919, %v923
    %v928 = vadd.f32 %v920, %v923
    %v929 = vmax.f32 %v925, 0.0
    %v930 = vmax.f32 %v926, 0.0
    %v931 = vmax.f32 %v927, 0.0
    %v932 = vmax.f32 %v928, 0.0
    %v933 = vld [vmem:[%s10] sm:$0xff]
    %v934 = vld [vmem:[%s10 + $0x8] sm:$0xff]
    %v935 = vld [vmem:[%s10 + $0x10] sm:$0xff]
    %v936 = vld [vmem:[%s10 + $0x18] sm:$0xff]
    %v937 = vld [vmem:[%s10 + $0x20] sm:$0xff]
    %v938 = vld [vmem:[%s10 + $0x28] sm:$0xff]
    %v939 = vld [vmem:[%s10 + $0x30] sm:$0xff]
    %v940 = vld [vmem:[%s10 + $0x38] sm:$0xff]
    %v941 = vld [vmem:[%s12] sm:$0x3]
    %v943 = vperm.slane %v941, 0
    %v944 = vperm.slane %v941, 1
    %vm947 = vcmask 261120
    %v949 = vsel %vm947, %v929, 0
    %v952 = vsel %vm947, %v930, 0
    %v955 = vsel %vm947, %v931, 0
    %v958 = vsel %vm947, %v932, 0
    %960 = vmatpush.msra.mxu0 0.0
    %961 = vmatpush.msra.mxu0 0.0
    %962 = vmatpush.msra.mxu0 0.0
    %963 = vmatpush.msra.mxu0 0.0
    %964 = vmatpush.msra.mxu0 0.0
    %965 = vmatpush.msra.mxu0 0.0
    %966 = vmatpush.msra.mxu0 0.0
    %967 = vmatpush.msra.mxu0 0.0
    %968 = vmatpush.msra.mxu0 0.0
    %969 = vmatpush.msra.mxu0 0.0
    %970 = vmatpush.msra.mxu0 0.0
    %971 = vmatpush.msra.mxu0 0.0
    %972 = vmatpush.msra.mxu0 %v939
    %973 = vmatpush.msra.mxu0 %v937
    %974 = vmatpush.msra.mxu0 %v935
    %975 = vmatpush.msra.mxu0 %v933
    %976 = vmatmul.f32.gmra.mxu0 %v949
    %v977 = vpop.f32.mrf.mxu0
    %v978 = vadd.f32 %v943, %v977
    %979 = vmatmul.f32.gmra.mxu0 %v952
    %v980 = vpop.f32.mrf.mxu0
    %v981 = vadd.f32 %v943, %v980
    %982 = vmatmul.f32.gmra.mxu0 %v955
    %v983 = vpop.f32.mrf.mxu0
    %v984 = vadd.f32 %v943, %v983
    %985 = vmatmul.f32.gmra.mxu0 %v958
    %v986 = vpop.f32.mrf.mxu0
    %v987 = vadd.f32 %v943, %v986
    %988 = vdwg.mxu0
    %989 = vmatpush.msra.mxu0 0.0
    %990 = vmatpush.msra.mxu0 0.0
    %991 = vmatpush.msra.mxu0 0.0
    %992 = vmatpush.msra.mxu0 0.0
    %993 = vmatpush.msra.mxu0 0.0
    %994 = vmatpush.msra.mxu0 0.0
    %995 = vmatpush.msra.mxu0 0.0
    %996 = vmatpush.msra.mxu0 0.0
    %997 = vmatpush.msra.mxu0 0.0
    %998 = vmatpush.msra.mxu0 0.0
    %999 = vmatpush.msra.mxu0 0.0
    %1000 = vmatpush.msra.mxu0 0.0
    %1001 = vmatpush.msra.mxu0 %v940
    %1002 = vmatpush.msra.mxu0 %v938
    %1003 = vmatpush.msra.mxu0 %v936
    %1004 = vmatpush.msra.mxu0 %v934
    %1005 = vmatmul.f32.gmra.mxu0 %v949
    %v1006 = vpop.f32.mrf.mxu0
    %v1007 = vadd.f32 %v944, %v1006
    %1008 = vmatmul.f32.gmra.mxu0 %v952
    %v1009 = vpop.f32.mrf.mxu0
    %v1010 = vadd.f32 %v944, %v1009
    %1011 = vmatmul.f32.gmra.mxu0 %v955
    %v1012 = vpop.f32.mrf.mxu0
    %v1013 = vadd.f32 %v944, %v1012
    %1014 = vmatmul.f32.gmra.mxu0 %v958
    %v1015 = vpop.f32.mrf.mxu0
    %v1016 = vadd.f32 %v944, %v1015
    %1017 = vdwg.mxu0
    %v1018 = vld [vmem:[%s11] sm:$0xff]
    %v1019 = vld [vmem:[%s11 + $0x8] sm:$0xff]
    %v1020 = vld [vmem:[%s11 + $0x10] sm:$0xff]
    %v1021 = vld [vmem:[%s11 + $0x18] sm:$0xff]
    %v1022 = vld [vmem:[%s11 + $0x20] sm:$0xff]
    %v1023 = vld [vmem:[%s11 + $0x28] sm:$0xff]
    %v1024 = vld [vmem:[%s11 + $0x30] sm:$0xff]
    %v1025 = vld [vmem:[%s11 + $0x38] sm:$0xff]
    %1026 = vmatpush.msra.mxu0 0.0
    %1027 = vmatpush.msra.mxu0 0.0
    %1028 = vmatpush.msra.mxu0 0.0
    %1029 = vmatpush.msra.mxu0 0.0
    %1030 = vmatpush.msra.mxu0 0.0
    %1031 = vmatpush.msra.mxu0 0.0
    %1032 = vmatpush.msra.mxu0 0.0
    %1033 = vmatpush.msra.mxu0 0.0
    %1034 = vmatpush.msra.mxu0 0.0
    %1035 = vmatpush.msra.mxu0 0.0
    %1036 = vmatpush.msra.mxu0 0.0
    %1037 = vmatpush.msra.mxu0 0.0
    %1038 = vmatpush.msra.mxu0 %v1024
    %1039 = vmatpush.msra.mxu0 %v1022
    %1040 = vmatpush.msra.mxu0 %v1020
    %1041 = vmatpush.msra.mxu0 %v1018
    %1042 = vmatmul.f32.gmra.mxu0 %v949
    %v1043 = vpop.f32.mrf.mxu0
    %v1044 = vadd.f32 0.0, %v1043
    %1045 = vmatmul.f32.gmra.mxu0 %v952
    %v1046 = vpop.f32.mrf.mxu0
    %v1047 = vadd.f32 0.0, %v1046
    %1048 = vmatmul.f32.gmra.mxu0 %v955
    %v1049 = vpop.f32.mrf.mxu0
    %v1050 = vadd.f32 0.0, %v1049
    %1051 = vmatmul.f32.gmra.mxu0 %v958
    %v1052 = vpop.f32.mrf.mxu0
    %v1053 = vadd.f32 0.0, %v1052
    %1054 = vdwg.mxu0
    %1055 = vmatpush.msra.mxu0 0.0
    %1056 = vmatpush.msra.mxu0 0.0
    %1057 = vmatpush.msra.mxu0 0.0
    %1058 = vmatpush.msra.mxu0 0.0
    %1059 = vmatpush.msra.mxu0 0.0
    %1060 = vmatpush.msra.mxu0 0.0
    %1061 = vmatpush.msra.mxu0 0.0
    %1062 = vmatpush.msra.mxu0 0.0
    %1063 = vmatpush.msra.mxu0 0.0
    %1064 = vmatpush.msra.mxu0 0.0
    %1065 = vmatpush.msra.mxu0 0.0
    %1066 = vmatpush.msra.mxu0 0.0
    %1067 = vmatpush.msra.mxu0 %v1025
    %1068 = vmatpush.msra.mxu0 %v1023
    %1069 = vmatpush.msra.mxu0 %v1021
    %1070 = vmatpush.msra.mxu0 %v1019
    %1071 = vmatmul.f32.gmra.mxu0 %v949
    %v1072 = vpop.f32.mrf.mxu0
    %v1073 = vadd.f32 0.0, %v1072
    %1074 = vmatmul.f32.gmra.mxu0 %v952
    %v1075 = vpop.f32.mrf.mxu0
    %v1076 = vadd.f32 0.0, %v1075
    %1077 = vmatmul.f32.gmra.mxu0 %v955
    %v1078 = vpop.f32.mrf.mxu0
    %v1079 = vadd.f32 0.0, %v1078
    %1080 = vmatmul.f32.gmra.mxu0 %v958
    %v1081 = vpop.f32.mrf.mxu0
    %v1082 = vadd.f32 0.0, %v1081
    %1083 = vdwg.mxu0
    %v1088 = vrot.slane %v1047, 7
    %v1089 = vrot.slane %v1076, 7
    %v1090 = vrot.slane %v1053, 7
    %v1091 = vrot.slane %v1082, 7
    %v1096 = vadd.f32 %v978, %v1088
    %v1097 = vadd.f32 %v1007, %v1089
    %v1098 = vadd.f32 %v984, %v1090
    %v1099 = vadd.f32 %v1013, %v1091
    %v1104 = vrot.slane %v1097, 6
    %v1105 = vrot.slane %v1099, 6
    %vm1106 = vcmask 1041408
    %v1107 = vsel %vm1106, %v1096, %v1104
    %v1108 = vsel %vm1106, %v1098, %v1105
    %vm1109 = vcmask 1042434
    %vm1110 = vcmask 1044484
    %v1111 = vsel %vm1110, %v1107, %v1107
    %vm1112 = vcmask 1046534
    %v1113 = vsel %vm1112, %v1107, %v1111
    %v1114 = vrot.slane %v1108, 7
    %vm1115 = vcmask 1041409
    %v1116 = vsel %vm1115, %v1114, %v1113
    %vm1117 = vcmask 1043459
    %v1118 = vsel %vm1117, %v1114, %v1116
    %vm1119 = vcmask 1045509
    %v1120 = vsel %vm1119, %v1114, %v1118
    %vm1121 = vcmask 1047559
    %v1122 = vsel %vm1121, %v1114, %v1120
    %1124 = vst [vmem:[#allocation5] sm:$0xf] %v1122
    %v1125 = vrot.slane %v1047, 5
    %v1126 = vrot.slane %v1076, 5
    %v1127 = vrot.slane %v1053, 5
    %v1128 = vrot.slane %v1082, 5
    %v1133 = vadd.f32 %v978, %v1125
    %v1134 = vadd.f32 %v1007, %v1126
    %v1135 = vadd.f32 %v984, %v1127
    %v1136 = vadd.f32 %v1013, %v1128
    %v1141 = vrot.slane %v1134, 6
    %v1142 = vrot.slane %v1136, 6
    %v1143 = vsel %vm1106, %v1133, %v1141
    %v1144 = vsel %vm1106, %v1135, %v1142
    %v1145 = vrot.slane %v1143, 1
    %v1146 = vsel %vm1110, %v1145, %v1145
    %v1147 = vsel %vm1112, %v1145, %v1146
    %v1148 = vsel %vm1115, %v1144, %v1147
    %v1149 = vsel %vm1117, %v1144, %v1148
    %v1150 = vsel %vm1119, %v1144, %v1149
    %v1151 = vsel %vm1121, %v1144, %v1150
    %s1153 = scalar_lea.vmem [#allocation5], 4
    %1154 = vst [vmem:[%s1153] sm:$0xf] %v1151
    %v1155 = vrot.slane %v1047, 3
    %v1156 = vrot.slane %v1076, 3
    %v1157 = vrot.slane %v1053, 3
    %v1158 = vrot.slane %v1082, 3
    %v1163 = vadd.f32 %v978, %v1155
    %v1164 = vadd.f32 %v1007, %v1156
    %v1165 = vadd.f32 %v984, %v1157
    %v1166 = vadd.f32 %v1013, %v1158
    %1171 = vst.sshfl [vmem:[#allocation1] sm:$0xff pattern:$0x73625140] %v1163
    %1172 = vst.sshfl [vmem:[#allocation1 + $0x8] sm:$0xff pattern:$0x73625140] %v1164
    %s1173 = scalar_lea.vmem [#allocation1], 1
    %v1174 = vld [vmem:[%s1173] ss:$4 sm:$0xff]
    %1175 = vst.sshfl [vmem:[#allocation1 + $0x20] sm:$0xff pattern:$0x73625140] %v1165
    %1176 = vst.sshfl [vmem:[#allocation1 + $0x28] sm:$0xff pattern:$0x73625140] %v1166
    %s1177 = scalar_lea.vmem [#allocation1], 33
    %v1178 = vld [vmem:[%s1177] ss:$4 sm:$0xff]
    %v1179 = vsel %vm1110, %v1174, %v1174
    %v1180 = vsel %vm1112, %v1174, %v1179
    %v1181 = vrot.slane %v1178, 7
    %v1182 = vsel %vm1115, %v1181, %v1180
    %v1183 = vsel %vm1117, %v1181, %v1182
    %v1184 = vsel %vm1119, %v1181, %v1183
    %v1185 = vsel %vm1121, %v1181, %v1184
    %s1187 = scalar_lea.vmem [#allocation5], 8
    %1188 = vst [vmem:[%s1187] sm:$0xf] %v1185
    %v1189 = vrot.slane %v1047, 1
    %v1190 = vrot.slane %v1076, 1
    %v1191 = vrot.slane %v1053, 1
    %v1192 = vrot.slane %v1082, 1
    %v1197 = vadd.f32 %v978, %v1189
    %v1198 = vadd.f32 %v1007, %v1190
    %v1199 = vadd.f32 %v984, %v1191
    %v1200 = vadd.f32 %v1013, %v1192
    %1205 = vst.sshfl [vmem:[#allocation1] sm:$0xff pattern:$0x73625140] %v1197
    %1206 = vst.sshfl [vmem:[#allocation1 + $0x8] sm:$0xff pattern:$0x73625140] %v1198
    %s1207 = scalar_lea.vmem [#allocation1], 1
    %v1208 = vld [vmem:[%s1207] ss:$4 sm:$0xff]
    %1209 = vst.sshfl [vmem:[#allocation1 + $0x20] sm:$0xff pattern:$0x73625140] %v1199
    %1210 = vst.sshfl [vmem:[#allocation1 + $0x28] sm:$0xff pattern:$0x73625140] %v1200
    %s1211 = scalar_lea.vmem [#allocation1], 33
    %v1212 = vld [vmem:[%s1211] ss:$4 sm:$0xff]
    %v1213 = vrot.slane %v1208, 1
    %v1214 = vsel %vm1110, %v1213, %v1213
    %v1215 = vsel %vm1112, %v1213, %v1214
    %v1216 = vsel %vm1115, %v1212, %v1215
    %v1217 = vsel %vm1117, %v1212, %v1216
    %v1218 = vsel %vm1119, %v1212, %v1217
    %v1219 = vsel %vm1121, %v1212, %v1218
    %s1221 = scalar_lea.vmem [#allocation5], 12
    %1222 = vst [vmem:[%s1221] sm:$0xf] %v1219
    %1223 = vst.sshfl [vmem:[#allocation1] sm:$0xff pattern:$0x73625140] %v1096
    %1224 = vst.sshfl [vmem:[#allocation1 + $0x8] sm:$0xff pattern:$0x73625140] %v1097
    %s1225 = scalar_lea.vmem [#allocation1], 2
    %v1226 = vld [vmem:[%s1225] ss:$4 sm:$0xff]
    %1227 = vst.sshfl [vmem:[#allocation1 + $0x20] sm:$0xff pattern:$0x73625140] %v1098
    %1228 = vst.sshfl [vmem:[#allocation1 + $0x28] sm:$0xff pattern:$0x73625140] %v1099
    %s1229 = scalar_lea.vmem [#allocation1], 34
    %v1230 = vld [vmem:[%s1229] ss:$4 sm:$0xff]
    %v1231 = vsel %vm1110, %v1226, %v1226
    %v1232 = vsel %vm1112, %v1226, %v1231
    %v1233 = vrot.slane %v1230, 7
    %v1234 = vsel %vm1115, %v1233, %v1232
    %v1235 = vsel %vm1117, %v1233, %v1234
    %v1236 = vsel %vm1119, %v1233, %v1235
    %v1237 = vsel %vm1121, %v1233, %v1236
    %s1239 = scalar_lea.vmem [#allocation5], 16
    %1240 = vst [vmem:[%s1239] sm:$0xf] %v1237
    %1241 = vst.sshfl [vmem:[#allocation1] sm:$0xff pattern:$0x73625140] %v1133
    %1242 = vst.sshfl [vmem:[#allocation1 + $0x8] sm:$0xff pattern:$0x73625140] %v1134
    %s1243 = scalar_lea.vmem [#allocation1], 2
    %v1244 = vld [vmem:[%s1243] ss:$4 sm:$0xff]
    %1245 = vst.sshfl [vmem:[#allocation1 + $0x20] sm:$0xff pattern:$0x73625140] %v1135
    %1246 = vst.sshfl [vmem:[#allocation1 + $0x28] sm:$0xff pattern:$0x73625140] %v1136
    %s1247 = scalar_lea.vmem [#allocation1], 34
    %v1248 = vld [vmem:[%s1247] ss:$4 sm:$0xff]
    %v1249 = vrot.slane %v1244, 1
    %v1250 = vsel %vm1110, %v1249, %v1249
    %v1251 = vsel %vm1112, %v1249, %v1250
    %v1252 = vsel %vm1115, %v1248, %v1251
    %v1253 = vsel %vm1117, %v1248, %v1252
    %v1254 = vsel %vm1119, %v1248, %v1253
    %v1255 = vsel %vm1121, %v1248, %v1254
    %s1257 = scalar_lea.vmem [#allocation5], 20
    %1258 = vst [vmem:[%s1257] sm:$0xf] %v1255
    %1259 = vst.sshfl [vmem:[#allocation1] sm:$0xff pattern:$0x73625140] %v1163
    %1260 = vst.sshfl [vmem:[#allocation1 + $0x8] sm:$0xff pattern:$0x73625140] %v1164
    %s1261 = scalar_lea.vmem [#allocation1], 3
    %v1262 = vld [vmem:[%s1261] ss:$4 sm:$0xff]
    %1263 = vst.sshfl [vmem:[#allocation1 + $0x20] sm:$0xff pattern:$0x73625140] %v1165
    %1264 = vst.sshfl [vmem:[#allocation1 + $0x28] sm:$0xff pattern:$0x73625140] %v1166
    %s1265 = scalar_lea.vmem [#allocation1], 35
    %v1266 = vld [vmem:[%s1265] ss:$4 sm:$0xff]
    %v1267 = vsel %vm1110, %v1262, %v1262
    %v1268 = vsel %vm1112, %v1262, %v1267
    %v1269 = vrot.slane %v1266, 7
    %v1270 = vsel %vm1115, %v1269, %v1268
    %v1271 = vsel %vm1117, %v1269, %v1270
    %v1272 = vsel %vm1119, %v1269, %v1271
    %v1273 = vsel %vm1121, %v1269, %v1272
    %s1275 = scalar_lea.vmem [#allocation5], 24
    %1276 = vst [vmem:[%s1275] sm:$0xf] %v1273
    %1277 = vst.sshfl [vmem:[#allocation1] sm:$0xff pattern:$0x73625140] %v1197
    %1278 = vst.sshfl [vmem:[#allocation1 + $0x8] sm:$0xff pattern:$0x73625140] %v1198
    %s1279 = scalar_lea.vmem [#allocation1], 3
    %v1280 = vld [vmem:[%s1279] ss:$4 sm:$0xff]
    %1281 = vst.sshfl [vmem:[#allocation1 + $0x20] sm:$0xff pattern:$0x73625140] %v1199
    %1282 = vst.sshfl [vmem:[#allocation1 + $0x28] sm:$0xff pattern:$0x73625140] %v1200
    %s1283 = scalar_lea.vmem [#allocation1], 35
    %v1284 = vld [vmem:[%s1283] ss:$4 sm:$0xff]
    %v1285 = vrot.slane %v1280, 1
    %v1286 = vsel %vm1110, %v1285, %v1285
    %v1287 = vsel %vm1112, %v1285, %v1286
    %v1288 = vsel %vm1115, %v1284, %v1287
    %v1289 = vsel %vm1117, %v1284, %v1288
    %v1290 = vsel %vm1119, %v1284, %v1289
    %v1291 = vsel %vm1121, %v1284, %v1290
    %s1293 = scalar_lea.vmem [#allocation5], 28
    %1294 = vst [vmem:[%s1293] sm:$0xf] %v1291
    %v1299 = vrot.slane %v1044, 7
    %v1300 = vrot.slane %v1073, 7
    %v1301 = vrot.slane %v1050, 7
    %v1302 = vrot.slane %v1079, 7
    %v1307 = vadd.f32 %v981, %v1299
    %v1308 = vadd.f32 %v1010, %v1300
    %v1309 = vadd.f32 %v987, %v1301
    %v1310 = vadd.f32 %v1016, %v1302
    %v1315 = vrot.slane %v1308, 6
    %v1316 = vrot.slane %v1310, 6
    %v1317 = vsel %vm1106, %v1307, %v1315
    %v1318 = vsel %vm1106, %v1309, %v1316
    %v1319 = vsel %vm1110, %v1317, %v1317
    %v1320 = vsel %vm1112, %v1317, %v1319
    %v1321 = vrot.slane %v1318, 7
    %v1322 = vsel %vm1115, %v1321, %v1320
    %v1323 = vsel %vm1117, %v1321, %v1322
    %v1324 = vsel %vm1119, %v1321, %v1323
    %v1325 = vsel %vm1121, %v1321, %v1324
    %s1327 = scalar_lea.vmem [#allocation5], 32
    %1328 = vst [vmem:[%s1327] sm:$0xf] %v1325
    %v1329 = vrot.slane %v1044, 5
    %v1330 = vrot.slane %v1073, 5
    %v1331 = vrot.slane %v1050, 5
    %v1332 = vrot.slane %v1079, 5
    %v1337 = vadd.f32 %v981, %v1329
    %v1338 = vadd.f32 %v1010, %v1330
    %v1339 = vadd.f32 %v987, %v1331
    %v1340 = vadd.f32 %v1016, %v1332
    %v1345 = vrot.slane %v1338, 6
    %v1346 = vrot.slane %v1340, 6
    %v1347 = vsel %vm1106, %v1337, %v1345
    %v1348 = vsel %vm1106, %v1339, %v1346
    %v1349 = vrot.slane %v1347, 1
    %v1350 = vsel %vm1110, %v1349, %v1349
    %v1351 = vsel %vm1112, %v1349, %v1350
    %v1352 = vsel %vm1115, %v1348, %v1351
    %v1353 = vsel %vm1117, %v1348, %v1352
    %v1354 = vsel %vm1119, %v1348, %v1353
    %v1355 = vsel %vm1121, %v1348, %v1354
    %s1357 = scalar_lea.vmem [#allocation5], 36
    %1358 = vst [vmem:[%s1357] sm:$0xf] %v1355
    %v1359 = vrot.slane %v1044, 3
    %v1360 = vrot.slane %v1073, 3
    %v1361 = vrot.slane %v1050, 3
    %v1362 = vrot.slane %v1079, 3
    %v1367 = vadd.f32 %v981, %v1359
    %v1368 = vadd.f32 %v1010, %v1360
    %v1369 = vadd.f32 %v987, %v1361
    %v1370 = vadd.f32 %v1016, %v1362
    %1375 = vst.sshfl [vmem:[#allocation1] sm:$0xff pattern:$0x73625140] %v1367
    %1376 = vst.sshfl [vmem:[#allocation1 + $0x8] sm:$0xff pattern:$0x73625140] %v1368
    %s1377 = scalar_lea.vmem [#allocation1], 1
    %v1378 = vld [vmem:[%s1377] ss:$4 sm:$0xff]
    %1379 = vst.sshfl [vmem:[#allocation1 + $0x20] sm:$0xff pattern:$0x73625140] %v1369
    %1380 = vst.sshfl [vmem:[#allocation1 + $0x28] sm:$0xff pattern:$0x73625140] %v1370
    %s1381 = scalar_lea.vmem [#allocation1], 33
    %v1382 = vld [vmem:[%s1381] ss:$4 sm:$0xff]
    %v1383 = vsel %vm1110, %v1378, %v1378
    %v1384 = vsel %vm1112, %v1378, %v1383
    %v1385 = vrot.slane %v1382, 7
    %v1386 = vsel %vm1115, %v1385, %v1384
    %v1387 = vsel %vm1117, %v1385, %v1386
    %v1388 = vsel %vm1119, %v1385, %v1387
    %v1389 = vsel %vm1121, %v1385, %v1388
    %s1391 = scalar_lea.vmem [#allocation5], 40
    %1392 = vst [vmem:[%s1391] sm:$0xf] %v1389
    %v1393 = vrot.slane %v1044, 1
    %v1394 = vrot.slane %v1073, 1
    %v1395 = vrot.slane %v1050, 1
    %v1396 = vrot.slane %v1079, 1
    %v1401 = vadd.f32 %v981, %v1393
    %v1402 = vadd.f32 %v1010, %v1394
    %v1403 = vadd.f32 %v987, %v1395
    %v1404 = vadd.f32 %v1016, %v1396
    %1409 = vst.sshfl [vmem:[#allocation1] sm:$0xff pattern:$0x73625140] %v1401
    %1410 = vst.sshfl [vmem:[#allocation1 + $0x8] sm:$0xff pattern:$0x73625140] %v1402
    %s1411 = scalar_lea.vmem [#allocation1], 1
    %v1412 = vld [vmem:[%s1411] ss:$4 sm:$0xff]
    %1413 = vst.sshfl [vmem:[#allocation1 + $0x20] sm:$0xff pattern:$0x73625140] %v1403
    %1414 = vst.sshfl [vmem:[#allocation1 + $0x28] sm:$0xff pattern:$0x73625140] %v1404
    %s1415 = scalar_lea.vmem [#allocation1], 33
    %v1416 = vld [vmem:[%s1415] ss:$4 sm:$0xff]
    %v1417 = vrot.slane %v1412, 1
    %v1418 = vsel %vm1110, %v1417, %v1417
    %v1419 = vsel %vm1112, %v1417, %v1418
    %v1420 = vsel %vm1115, %v1416, %v1419
    %v1421 = vsel %vm1117, %v1416, %v1420
    %v1422 = vsel %vm1119, %v1416, %v1421
    %v1423 = vsel %vm1121, %v1416, %v1422
    %s1425 = scalar_lea.vmem [#allocation5], 44
    %1426 = vst [vmem:[%s1425] sm:$0xf] %v1423
    %1427 = vst.sshfl [vmem:[#allocation1] sm:$0xff pattern:$0x73625140] %v1307
    %1428 = vst.sshfl [vmem:[#allocation1 + $0x8] sm:$0xff pattern:$0x73625140] %v1308
    %s1429 = scalar_lea.vmem [#allocation1], 2
    %v1430 = vld [vmem:[%s1429] ss:$4 sm:$0xff]
    %1431 = vst.sshfl [vmem:[#allocation1 + $0x20] sm:$0xff pattern:$0x73625140] %v1309
    %1432 = vst.sshfl [vmem:[#allocation1 + $0x28] sm:$0xff pattern:$0x73625140] %v1310
    %s1433 = scalar_lea.vmem [#allocation1], 34
    %v1434 = vld [vmem:[%s1433] ss:$4 sm:$0xff]
    %v1435 = vsel %vm1110, %v1430, %v1430
    %v1436 = vsel %vm1112, %v1430, %v1435
    %v1437 = vrot.slane %v1434, 7
    %v1438 = vsel %vm1115, %v1437, %v1436
    %v1439 = vsel %vm1117, %v1437, %v1438
    %v1440 = vsel %vm1119, %v1437, %v1439
    %v1441 = vsel %vm1121, %v1437, %v1440
    %s1443 = scalar_lea.vmem [#allocation5], 48
    %1444 = vst [vmem:[%s1443] sm:$0xf] %v1441
    %1445 = vst.sshfl [vmem:[#allocation1] sm:$0xff pattern:$0x73625140] %v1337
    %1446 = vst.sshfl [vmem:[#allocation1 + $0x8] sm:$0xff pattern:$0x73625140] %v1338
    %s1447 = scalar_lea.vmem [#allocation1], 2
    %v1448 = vld [vmem:[%s1447] ss:$4 sm:$0xff]
    %1449 = vst.sshfl [vmem:[#allocation1 + $0x20] sm:$0xff pattern:$0x73625140] %v1339
    %1450 = vst.sshfl [vmem:[#allocation1 + $0x28] sm:$0xff pattern:$0x73625140] %v1340
    %s1451 = scalar_lea.vmem [#allocation1], 34
    %v1452 = vld [vmem:[%s1451] ss:$4 sm:$0xff]
    %v1453 = vrot.slane %v1448, 1
    %v1454 = vsel %vm1110, %v1453, %v1453
    %v1455 = vsel %vm1112, %v1453, %v1454
    %v1456 = vsel %vm1115, %v1452, %v1455
    %v1457 = vsel %vm1117, %v1452, %v1456
    %v1458 = vsel %vm1119, %v1452, %v1457
    %v1459 = vsel %vm1121, %v1452, %v1458
    %s1461 = scalar_lea.vmem [#allocation5], 52
    %1462 = vst [vmem:[%s1461] sm:$0xf] %v1459
    %1463 = vst.sshfl [vmem:[#allocation1] sm:$0xff pattern:$0x73625140] %v1367
    %1464 = vst.sshfl [vmem:[#allocation1 + $0x8] sm:$0xff pattern:$0x73625140] %v1368
    %s1465 = scalar_lea.vmem [#allocation1], 3
    %v1466 = vld [vmem:[%s1465] ss:$4 sm:$0xff]
    %1467 = vst.sshfl [vmem:[#allocation1 + $0x20] sm:$0xff pattern:$0x73625140] %v1369
    %1468 = vst.sshfl [vmem:[#allocation1 + $0x28] sm:$0xff pattern:$0x73625140] %v1370
    %s1469 = scalar_lea.vmem [#allocation1], 35
    %v1470 = vld [vmem:[%s1469] ss:$4 sm:$0xff]
    %v1471 = vsel %vm1110, %v1466, %v1466
    %v1472 = vsel %vm1112, %v1466, %v1471
    %v1473 = vrot.slane %v1470, 7
    %v1474 = vsel %vm1115, %v1473, %v1472
    %v1475 = vsel %vm1117, %v1473, %v1474
    %v1476 = vsel %vm1119, %v1473, %v1475
    %v1477 = vsel %vm1121, %v1473, %v1476
    %s1479 = scalar_lea.vmem [#allocation5], 56
    %1480 = vst [vmem:[%s1479] sm:$0xf] %v1477
    %1481 = vst.sshfl [vmem:[#allocation1] sm:$0xff pattern:$0x73625140] %v1401
    %1482 = vst.sshfl [vmem:[#allocation1 + $0x8] sm:$0xff pattern:$0x73625140] %v1402
    %s1483 = scalar_lea.vmem [#allocation1], 3
    %v1484 = vld [vmem:[%s1483] ss:$4 sm:$0xff]
    %1485 = vst.sshfl [vmem:[#allocation1 + $0x20] sm:$0xff pattern:$0x73625140] %v1403
    %1486 = vst.sshfl [vmem:[#allocation1 + $0x28] sm:$0xff pattern:$0x73625140] %v1404
    %s1487 = scalar_lea.vmem [#allocation1], 35
    %v1488 = vld [vmem:[%s1487] ss:$4 sm:$0xff]
    %v1489 = vrot.slane %v1484, 1
    %v1490 = vsel %vm1110, %v1489, %v1489
    %v1491 = vsel %vm1112, %v1489, %v1490
    %v1492 = vsel %vm1115, %v1488, %v1491
    %v1493 = vsel %vm1117, %v1488, %v1492
    %v1494 = vsel %vm1119, %v1488, %v1493
    %v1495 = vsel %vm1121, %v1488, %v1494
    %s1497 = scalar_lea.vmem [#allocation5], 60
    %1498 = vst [vmem:[%s1497] sm:$0xf] %v1495
    %v1499 = vld [vmem:[#allocation5] sm:$0xf]
    %v1500 = vld [vmem:[%s13] sm:$0xff]
    %v1501 = vld [vmem:[%s13 + $0x8] sm:$0xff]
    %v1502 = vld [vmem:[%s13 + $0x10] sm:$0xff]
    %v1503 = vld [vmem:[%s13 + $0x18] sm:$0xff]
    %v1504 = vld [vmem:[%s13 + $0x20] sm:$0xff]
    %v1505 = vld [vmem:[%s13 + $0x28] sm:$0xff]
    %v1506 = vld [vmem:[%s13 + $0x30] sm:$0xff]
    %v1507 = vld [vmem:[%s13 + $0x38] sm:$0xff]
    %v1508 = vld [vmem:[%s13 + $0x40] sm:$0xff]
    %v1509 = vld [vmem:[%s13 + $0x48] sm:$0xff]
    %v1510 = vld [vmem:[%s13 + $0x50] sm:$0xff]
    %v1511 = vld [vmem:[%s13 + $0x58] sm:$0xff]
    %v1512 = vld [vmem:[%s13 + $0x60] sm:$0xff]
    %v1513 = vld [vmem:[%s13 + $0x68] sm:$0xff]
    %v1514 = vld [vmem:[%s13 + $0x70] sm:$0xff]
    %v1515 = vld [vmem:[%s13 + $0x78] sm:$0xff]
    %vm1516 = vcmask 523264
    %v1518 = vsel %vm1516, 0.0, 0
    %1520 = vmatpush.msra.mxu0 0.0
    %1521 = vmatpush.msra.mxu0 0.0
    %1522 = vmatpush.msra.mxu0 0.0
    %1523 = vmatpush.msra.mxu0 0.0
    %1524 = vmatpush.msra.mxu0 0.0
    %1525 = vmatpush.msra.mxu0 0.0
    %1526 = vmatpush.msra.mxu0 0.0
    %1527 = vmatpush.msra.mxu0 0.0
    %1528 = vmatpush.msra.mxu0 %v1514
    %1529 = vmatpush.msra.mxu0 %v1512
    %1530 = vmatpush.msra.mxu0 %v1510
    %1531 = vmatpush.msra.mxu0 %v1508
    %1532 = vmatpush.msra.mxu0 %v1506
    %1533 = vmatpush.msra.mxu0 %v1504
    %1534 = vmatpush.msra.mxu0 %v1502
    %1535 = vmatpush.msra.mxu0 %v1500
    %1536 = vmatmul.f32.gmra.mxu0 %v1518
    %v1537 = vpop.f32.mrf.mxu0
    %v1538 = vadd.f32 0.0, %v1537
    %1539 = vdwg.mxu0
    %1540 = vmatpush.msra.mxu0 0.0
    %1541 = vmatpush.msra.mxu0 0.0
    %1542 = vmatpush.msra.mxu0 0.0
    %1543 = vmatpush.msra.mxu0 0.0
    %1544 = vmatpush.msra.mxu0 0.0
    %1545 = vmatpush.msra.mxu0 0.0
    %1546 = vmatpush.msra.mxu0 0.0
    %1547 = vmatpush.msra.mxu0 0.0
    %1548 = vmatpush.msra.mxu0 %v1515
    %1549 = vmatpush.msra.mxu0 %v1513
    %1550 = vmatpush.msra.mxu0 %v1511
    %1551 = vmatpush.msra.mxu0 %v1509
    %1552 = vmatpush.msra.mxu0 %v1507
    %1553 = vmatpush.msra.mxu0 %v1505
    %1554 = vmatpush.msra.mxu0 %v1503
    %1555 = vmatpush.msra.mxu0 %v1501
    %1556 = vmatmul.f32.gmra.mxu0 %v1518
    %v1557 = vpop.f32.mrf.mxu0
    %v1558 = vadd.f32 0.0, %v1557
    %1559 = vdwg.mxu0
    %v1562 = vrot.slane %v1558, 6
    %v1563 = vsel %vm1106, %v1538, %v1562
    %v1565 = vadd.f32 %v1499, %v1563
    %v1566 = vxor.u32 %v1565, 2147483648
    %v1567 = vmul.f32 %v1566, 1.442695
    %v1568 = vpow.pop %v1567
    %v1569 = vadd.f32 %v1568, 1.0
    %v1570 = vrcp.pop %v1569
    %v1571 = vmul.f32 %v1569, %v1570
    %v1572 = vsub.f32 1.0, %v1571
    %v1573 = vmul.f32 %v1570, %v1572
    %v1574 = vadd.f32 %v1570, %v1573
    %vm1575 = vweird.f32 %v1569
    %vm1576 = vweird.f32 %v1570
    %vm1577 = vmor %vm1575, %vm1576
    %v1578 = vsel %vm1577, %v1570, %v1574
    %v1579 = vand.u32 2147483647, %v1569
    %vm1580 = vcmp.eq.f32.partialorder %v1579, 8.507059e+37
    %v1581 = vand.u32 %v1569, 2147483648
    %v1582 = vor.u32 1.1754944e-38, %v1581
    %v1583 = vsel %vm1580, %v1582, %v1578
    %v1584 = vmul.f32 1.0, %v1583
    %1586 = vrot.lane.b32.xlu0 %v1565, 64
    %v1587 = vpop.permute.xlu0 %1586
    %v1588 = vrot.slane %v1587, 2
    %v1590 = vtanh.pop %v1588
    %v1591 = vmul.f32 %v1584, 0.0
    %v1592 = vmul.f32 %v1584, %v1590
    %1594 = vrot.lane.b32.xlu0 %v1592, 64
    %v1595 = vpop.permute.xlu0 %1594
    %v1597 = vadd.f32 %v1591, %v1595
    %v1598 = vtanh.pop %v1597
    %v1600 = vrot.slane %v1584, 2
    %1603 = vrot.lane.b32.xlu0 %v1598, 64
    %v1604 = vpop.permute.xlu0 %1603
    %v1606 = vmul.f32 %v1600, %v1604
    %v1608 = vrot.slane %v1606, 1
    %v1609 = vrot.slane %v1606, 2
    %v1610 = vrot.slane %v1606, 3
    %vm1611 = vcmask 1040384
    %v1612 = vsel %vm1611, %v1606, %v1608
    %v1613 = vsel %vm1109, %v1609, %v1610
    %v1614 = vsel %vm1106, %v1612, %v1613
    %v1615 = vsel %vm1115, %v1606, %v1608
    %v1616 = vsel %vm1117, %v1609, %v1610
    %vm1617 = vcmask 1042433
    %v1618 = vsel %vm1617, %v1615, %v1616
    %v1619 = vrot.slane %v1618, 1
    %vm1622 = vcmask 253952
    %1623 = vst.msk [vmem:[#allocation6] sm:$0x1] %vm1622, %v1614
    %1624 = vst.msk [vmem:[#allocation6 + $0x10] sm:$0x1] %vm1622, %v1619
    %v1625 = vperm.slane %v1614, 0
    %v1626 = vperm.slane %v1619, 0
    %1627 = vrot.lane.b32.xlu0 %v1625, 96
    %v1628 = vpop.permute.xlu0 %1627
    %1629 = vrot.lane.b32.xlu0 %v1626, 96
    %v1630 = vpop.permute.xlu0 %1629
    %1633 = vst.msk [vmem:[#allocation7 + $0xf] sm:$0x1] %vm1622, %v1628
    %1634 = vst.msk [vmem:[#allocation7 + $0x1f] sm:$0x1] %vm1622, %v1630
    %v1635 = vld [vmem:[%s1153] sm:$0xf]
    %v1636 = vld [vmem:[%s13] sm:$0xff]
    %v1637 = vld [vmem:[%s13 + $0x8] sm:$0xff]
    %v1638 = vld [vmem:[%s13 + $0x10] sm:$0xff]
    %v1639 = vld [vmem:[%s13 + $0x18] sm:$0xff]
    %v1640 = vld [vmem:[%s13 + $0x20] sm:$0xff]
    %v1641 = vld [vmem:[%s13 + $0x28] sm:$0xff]
    %v1642 = vld [vmem:[%s13 + $0x30] sm:$0xff]
    %v1643 = vld [vmem:[%s13 + $0x38] sm:$0xff]
    %v1644 = vld [vmem:[%s13 + $0x40] sm:$0xff]
    %v1645 = vld [vmem:[%s13 + $0x48] sm:$0xff]
    %v1646 = vld [vmem:[%s13 + $0x50] sm:$0xff]
    %v1647 = vld [vmem:[%s13 + $0x58] sm:$0xff]
    %v1648 = vld [vmem:[%s13 + $0x60] sm:$0xff]
    %v1649 = vld [vmem:[%s13 + $0x68] sm:$0xff]
    %v1650 = vld [vmem:[%s13 + $0x70] sm:$0xff]
    %v1651 = vld [vmem:[%s13 + $0x78] sm:$0xff]
    %v1652 = vsel %vm1516, %v1606, 0
    %1654 = vmatpush.msra.mxu0 0.0
    %1655 = vmatpush.msra.mxu0 0.0
    %1656 = vmatpush.msra.mxu0 0.0
    %1657 = vmatpush.msra.mxu0 0.0
    %1658 = vmatpush.msra.mxu0 0.0
    %1659 = vmatpush.msra.mxu0 0.0
    %1660 = vmatpush.msra.mxu0 0.0
    %1661 = vmatpush.msra.mxu0 0.0
    %1662 = vmatpush.msra.mxu0 %v1650
    %1663 = vmatpush.msra.mxu0 %v1648
    %1664 = vmatpush.msra.mxu0 %v1646
    %1665 = vmatpush.msra.mxu0 %v1644
    %1666 = vmatpush.msra.mxu0 %v1642
    %1667 = vmatpush.msra.mxu0 %v1640
    %1668 = vmatpush.msra.mxu0 %v1638
    %1669 = vmatpush.msra.mxu0 %v1636
    %1670 = vmatmul.f32.gmra.mxu0 %v1652
    %v1671 = vpop.f32.mrf.mxu0
    %v1672 = vadd.f32 0.0, %v1671
    %1673 = vdwg.mxu0
    %1674 = vmatpush.msra.mxu0 0.0
    %1675 = vmatpush.msra.mxu0 0.0
    %1676 = vmatpush.msra.mxu0 0.0
    %1677 = vmatpush.msra.mxu0 0.0
    %1678 = vmatpush.msra.mxu0 0.0
    %1679 = vmatpush.msra.mxu0 0.0
    %1680 = vmatpush.msra.mxu0 0.0
    %1681 = vmatpush.msra.mxu0 0.0
    %1682 = vmatpush.msra.mxu0 %v1651
    %1683 = vmatpush.msra.mxu0 %v1649
    %1684 = vmatpush.msra.mxu0 %v1647
    %1685 = vmatpush.msra.mxu0 %v1645
    %1686 = vmatpush.msra.mxu0 %v1643
    %1687 = vmatpush.msra.mxu0 %v1641
    %1688 = vmatpush.msra.mxu0 %v1639
    %1689 = vmatpush.msra.mxu0 %v1637
    %1690 = vmatmul.f32.gmra.mxu0 %v1652
    %v1691 = vpop.f32.mrf.mxu0
    %v1692 = vadd.f32 0.0, %v1691
    %1693 = vdwg.mxu0
    %v1696 = vrot.slane %v1692, 6
    %v1697 = vsel %vm1106, %v1672, %v1696
    %v1699 = vadd.f32 %v1635, %v1697
    %v1700 = vxor.u32 %v1699, 2147483648
    %v1701 = vmul.f32 %v1700, 1.442695
    %v1702 = vpow.pop %v1701
    %v1703 = vadd.f32 %v1702, 1.0
    %v1704 = vrcp.pop %v1703
    %v1705 = vmul.f32 %v1703, %v1704
    %v1706 = vsub.f32 1.0, %v1705
    %v1707 = vmul.f32 %v1704, %v1706
    %v1708 = vadd.f32 %v1704, %v1707
    %vm1709 = vweird.f32 %v1703
    %vm1710 = vweird.f32 %v1704
    %vm1711 = vmor %vm1709, %vm1710
    %v1712 = vsel %vm1711, %v1704, %v1708
    %v1713 = vand.u32 2147483647, %v1703
    %vm1714 = vcmp.eq.f32.partialorder %v1713, 8.507059e+37
    %v1715 = vand.u32 %v1703, 2147483648
    %v1716 = vor.u32 1.1754944e-38, %v1715
    %v1717 = vsel %vm1714, %v1716, %v1712
    %v1718 = vmul.f32 1.0, %v1717
    %1720 = vrot.lane.b32.xlu0 %v1699, 64
    %v1721 = vpop.permute.xlu0 %1720
    %v1722 = vrot.slane %v1721, 2
    %v1724 = vtanh.pop %v1722
    %v1725 = vmul.f32 %v1718, %v1597
    %v1726 = vmul.f32 %v1718, %v1724
    %1728 = vrot.lane.b32.xlu0 %v1726, 64
    %v1729 = vpop.permute.xlu0 %1728
    %v1731 = vadd.f32 %v1725, %v1729
    %v1732 = vtanh.pop %v1731
    %v1734 = vrot.slane %v1718, 2
    %1737 = vrot.lane.b32.xlu0 %v1732, 64
    %v1738 = vpop.permute.xlu0 %1737
    %v1740 = vmul.f32 %v1734, %v1738
    %v1742 = vrot.slane %v1740, 1
    %v1743 = vrot.slane %v1740, 2
    %v1744 = vrot.slane %v1740, 3
    %v1745 = vsel %vm1611, %v1740, %v1742
    %v1746 = vsel %vm1109, %v1743, %v1744
    %v1747 = vsel %vm1106, %v1745, %v1746
    %v1748 = vsel %vm1115, %v1740, %v1742
    %v1749 = vsel %vm1117, %v1743, %v1744
    %v1750 = vsel %vm1617, %v1748, %v1749
    %v1751 = vrot.slane %v1750, 1
    %1754 = vst.msk [vmem:[#allocation6 + $0x1] sm:$0x1] %vm1622, %v1747
    %1755 = vst.msk [vmem:[#allocation6 + $0x11] sm:$0x1] %vm1622, %v1751
    %v1756 = vperm.slane %v1747, 0
    %v1757 = vperm.slane %v1751, 0
    %1758 = vrot.lane.b32.xlu0 %v1756, 96
    %v1759 = vpop.permute.xlu0 %1758
    %1760 = vrot.lane.b32.xlu0 %v1757, 96
    %v1761 = vpop.permute.xlu0 %1760
    %1764 = vst.msk [vmem:[#allocation7 + $0xe] sm:$0x1] %vm1622, %v1759
    %1765 = vst.msk [vmem:[#allocation7 + $0x1e] sm:$0x1] %vm1622, %v1761
    %v1766 = vld [vmem:[%s1187] sm:$0xf]
    %v1767 = vld [vmem:[%s13] sm:$0xff]
    %v1768 = vld [vmem:[%s13 + $0x8] sm:$0xff]
    %v1769 = vld [vmem:[%s13 + $0x10] sm:$0xff]
    %v1770 = vld [vmem:[%s13 + $0x18] sm:$0xff]
    %v1771 = vld [vmem:[%s13 + $0x20] sm:$0xff]
    %v1772 = vld [vmem:[%s13 + $0x28] sm:$0xff]
    %v1773 = vld [vmem:[%s13 + $0x30] sm:$0xff]
    %v1774 = vld [vmem:[%s13 + $0x38] sm:$0xff]
    %v1775 = vld [vmem:[%s13 + $0x40] sm:$0xff]
    %v1776 = vld [vmem:[%s13 + $0x48] sm:$0xff]
    %v1777 = vld [vmem:[%s13 + $0x50] sm:$0xff]
    %v1778 = vld [vmem:[%s13 + $0x58] sm:$0xff]
    %v1779 = vld [vmem:[%s13 + $0x60] sm:$0xff]
    %v1780 = vld [vmem:[%s13 + $0x68] sm:$0xff]
    %v1781 = vld [vmem:[%s13 + $0x70] sm:$0xff]
    %v1782 = vld [vmem:[%s13 + $0x78] sm:$0xff]
    %v1783 = vsel %vm1516, %v1740, 0
    %1785 = vmatpush.msra.mxu0 0.0
    %1786 = vmatpush.msra.mxu0 0.0
    %1787 = vmatpush.msra.mxu0 0.0
    %1788 = vmatpush.msra.mxu0 0.0
    %1789 = vmatpush.msra.mxu0 0.0
    %1790 = vmatpush.msra.mxu0 0.0
    %1791 = vmatpush.msra.mxu0 0.0
    %1792 = vmatpush.msra.mxu0 0.0
    %1793 = vmatpush.msra.mxu0 %v1781
    %1794 = vmatpush.msra.mxu0 %v1779
    %1795 = vmatpush.msra.mxu0 %v1777
    %1796 = vmatpush.msra.mxu0 %v1775
    %1797 = vmatpush.msra.mxu0 %v1773
    %1798 = vmatpush.msra.mxu0 %v1771
    %1799 = vmatpush.msra.mxu0 %v1769
    %1800 = vmatpush.msra.mxu0 %v1767
    %1801 = vmatmul.f32.gmra.mxu0 %v1783
    %v1802 = vpop.f32.mrf.mxu0
    %v1803 = vadd.f32 0.0, %v1802
    %1804 = vdwg.mxu0
    %1805 = vmatpush.msra.mxu0 0.0
    %1806 = vmatpush.msra.mxu0 0.0
    %1807 = vmatpush.msra.mxu0 0.0
    %1808 = vmatpush.msra.mxu0 0.0
    %1809 = vmatpush.msra.mxu0 0.0
    %1810 = vmatpush.msra.mxu0 0.0
    %1811 = vmatpush.msra.mxu0 0.0
    %1812 = vmatpush.msra.mxu0 0.0
    %1813 = vmatpush.msra.mxu0 %v1782
    %1814 = vmatpush.msra.mxu0 %v1780
    %1815 = vmatpush.msra.mxu0 %v1778
    %1816 = vmatpush.msra.mxu0 %v1776
    %1817 = vmatpush.msra.mxu0 %v1774
    %1818 = vmatpush.msra.mxu0 %v1772
    %1819 = vmatpush.msra.mxu0 %v1770
    %1820 = vmatpush.msra.mxu0 %v1768
    %1821 = vmatmul.f32.gmra.mxu0 %v1783
    %v1822 = vpop.f32.mrf.mxu0
    %v1823 = vadd.f32 0.0, %v1822
    %1824 = vdwg.mxu0
    %v1827 = vrot.slane %v1823, 6
    %v1828 = vsel %vm1106, %v1803, %v1827
    %v1830 = vadd.f32 %v1766, %v1828
    %v1831 = vxor.u32 %v1830, 2147483648
    %v1832 = vmul.f32 %v1831, 1.442695
    %v1833 = vpow.pop %v1832
    %v1834 = vadd.f32 %v1833, 1.0
    %v1835 = vrcp.pop %v1834
    %v1836 = vmul.f32 %v1834, %v1835
    %v1837 = vsub.f32 1.0, %v1836
    %v1838 = vmul.f32 %v1835, %v1837
    %v1839 = vadd.f32 %v1835, %v1838
    %vm1840 = vweird.f32 %v1834
    %vm1841 = vweird.f32 %v1835
    %vm1842 = vmor %vm1840, %vm1841
    %v1843 = vsel %vm1842, %v1835, %v1839
    %v1844 = vand.u32 2147483647, %v1834
    %vm1845 = vcmp.eq.f32.partialorder %v1844, 8.507059e+37
    %v1846 = vand.u32 %v1834, 2147483648
    %v1847 = vor.u32 1.1754944e-38, %v1846
    %v1848 = vsel %vm1845, %v1847, %v1843
    %v1849 = vmul.f32 1.0, %v1848
    %1851 = vrot.lane.b32.xlu0 %v1830, 64
    %v1852 = vpop.permute.xlu0 %1851
    %v1853 = vrot.slane %v1852, 2
    %v1855 = vtanh.pop %v1853
    %v1856 = vmul.f32 %v1849, %v1731
    %v1857 = vmul.f32 %v1849, %v1855
    %1859 = vrot.lane.b32.xlu0 %v1857, 64
    %v1860 = vpop.permute.xlu0 %1859
    %v1862 = vadd.f32 %v1856, %v1860
    %v1863 = vtanh.pop %v1862
    %v1865 = vrot.slane %v1849, 2
    %1868 = vrot.lane.b32.xlu0 %v1863, 64
    %v1869 = vpop.permute.xlu0 %1868
    %v1871 = vmul.f32 %v1865, %v1869
    %v1873 = vrot.slane %v1871, 1
    %v1874 = vrot.slane %v1871, 2
    %v1875 = vrot.slane %v1871, 3
    %v1876 = vsel %vm1611, %v1871, %v1873
    %v1877 = vsel %vm1109, %v1874, %v1875
    %v1878 = vsel %vm1106, %v1876, %v1877
    %v1879 = vsel %vm1115, %v1871, %v1873
    %v1880 = vsel %vm1117, %v1874, %v1875
    %v1881 = vsel %vm1617, %v1879, %v1880
    %v1882 = vrot.slane %v1881, 1
    %1885 = vst.msk [vmem:[#allocation6 + $0x2] sm:$0x1] %vm1622, %v1878
    %1886 = vst.msk [vmem:[#allocation6 + $0x12] sm:$0x1] %vm1622, %v1882
    %v1887 = vperm.slane %v1878, 0
    %v1888 = vperm.slane %v1882, 0
    %1889 = vrot.lane.b32.xlu0 %v1887, 96
    %v1890 = vpop.permute.xlu0 %1889
    %1891 = vrot.lane.b32.xlu0 %v1888, 96
    %v1892 = vpop.permute.xlu0 %1891
    %1895 = vst.msk [vmem:[#allocation7 + $0xd] sm:$0x1] %vm1622, %v1890
    %1896 = vst.msk [vmem:[#allocation7 + $0x1d] sm:$0x1] %vm1622, %v1892
    %v1897 = vld [vmem:[%s1221] sm:$0xf]
    %v1898 = vld [vmem:[%s13] sm:$0xff]
    %v1899 = vld [vmem:[%s13 + $0x8] sm:$0xff]
    %v1900 = vld [vmem:[%s13 + $0x10] sm:$0xff]
    %v1901 = vld [vmem:[%s13 + $0x18] sm:$0xff]
    %v1902 = vld [vmem:[%s13 + $0x20] sm:$0xff]
    %v1903 = vld [vmem:[%s13 + $0x28] sm:$0xff]
    %v1904 = vld [vmem:[%s13 + $0x30] sm:$0xff]
    %v1905 = vld [vmem:[%s13 + $0x38] sm:$0xff]
    %v1906 = vld [vmem:[%s13 + $0x40] sm:$0xff]
    %v1907 = vld [vmem:[%s13 + $0x48] sm:$0xff]
    %v1908 = vld [vmem:[%s13 + $0x50] sm:$0xff]
    %v1909 = vld [vmem:[%s13 + $0x58] sm:$0xff]
    %v1910 = vld [vmem:[%s13 + $0x60] sm:$0xff]
    %v1911 = vld [vmem:[%s13 + $0x68] sm:$0xff]
    %v1912 = vld [vmem:[%s13 + $0x70] sm:$0xff]
    %v1913 = vld [vmem:[%s13 + $0x78] sm:$0xff]
    %v1914 = vsel %vm1516, %v1871, 0
    %1916 = vmatpush.msra.mxu0 0.0
    %1917 = vmatpush.msra.mxu0 0.0
    %1918 = vmatpush.msra.mxu0 0.0
    %1919 = vmatpush.msra.mxu0 0.0
    %1920 = vmatpush.msra.mxu0 0.0
    %1921 = vmatpush.msra.mxu0 0.0
    %1922 = vmatpush.msra.mxu0 0.0
    %1923 = vmatpush.msra.mxu0 0.0
    %1924 = vmatpush.msra.mxu0 %v1912
    %1925 = vmatpush.msra.mxu0 %v1910
    %1926 = vmatpush.msra.mxu0 %v1908
    %1927 = vmatpush.msra.mxu0 %v1906
    %1928 = vmatpush.msra.mxu0 %v1904
    %1929 = vmatpush.msra.mxu0 %v1902
    %1930 = vmatpush.msra.mxu0 %v1900
    %1931 = vmatpush.msra.mxu0 %v1898
    %1932 = vmatmul.f32.gmra.mxu0 %v1914
    %v1933 = vpop.f32.mrf.mxu0
    %v1934 = vadd.f32 0.0, %v1933
    %1935 = vdwg.mxu0
    %1936 = vmatpush.msra.mxu0 0.0
    %1937 = vmatpush.msra.mxu0 0.0
    %1938 = vmatpush.msra.mxu0 0.0
    %1939 = vmatpush.msra.mxu0 0.0
    %1940 = vmatpush.msra.mxu0 0.0
    %1941 = vmatpush.msra.mxu0 0.0
    %1942 = vmatpush.msra.mxu0 0.0
    %1943 = vmatpush.msra.mxu0 0.0
    %1944 = vmatpush.msra.mxu0 %v1913
    %1945 = vmatpush.msra.mxu0 %v1911
    %1946 = vmatpush.msra.mxu0 %v1909
    %1947 = vmatpush.msra.mxu0 %v1907
    %1948 = vmatpush.msra.mxu0 %v1905
    %1949 = vmatpush.msra.mxu0 %v1903
    %1950 = vmatpush.msra.mxu0 %v1901
    %1951 = vmatpush.msra.mxu0 %v1899
    %1952 = vmatmul.f32.gmra.mxu0 %v1914
    %v1953 = vpop.f32.mrf.mxu0
    %v1954 = vadd.f32 0.0, %v1953
    %1955 = vdwg.mxu0
    %v1958 = vrot.slane %v1954, 6
    %v1959 = vsel %vm1106, %v1934, %v1958
    %v1961 = vadd.f32 %v1897, %v1959
    %v1962 = vxor.u32 %v1961, 2147483648
    %v1963 = vmul.f32 %v1962, 1.442695
    %v1964 = vpow.pop %v1963
    %v1965 = vadd.f32 %v1964, 1.0
    %v1966 = vrcp.pop %v1965
    %v1967 = vmul.f32 %v1965, %v1966
    %v1968 = vsub.f32 1.0, %v1967
    %v1969 = vmul.f32 %v1966, %v1968
    %v1970 = vadd.f32 %v1966, %v1969
    %vm1971 = vweird.f32 %v1965
    %vm1972 = vweird.f32 %v1966
    %vm1973 = vmor %vm1971, %vm1972
    %v1974 = vsel %vm1973, %v1966, %v1970
    %v1975 = vand.u32 2147483647, %v1965
    %vm1976 = vcmp.eq.f32.partialorder %v1975, 8.507059e+37
    %v1977 = vand.u32 %v1965, 2147483648
    %v1978 = vor.u32 1.1754944e-38, %v1977
    %v1979 = vsel %vm1976, %v1978, %v1974
    %v1980 = vmul.f32 1.0, %v1979
    %1982 = vrot.lane.b32.xlu0 %v1961, 64
    %v1983 = vpop.permute.xlu0 %1982
    %v1984 = vrot.slane %v1983, 2
    %v1986 = vtanh.pop %v1984
    %v1987 = vmul.f32 %v1980, %v1862
    %v1988 = vmul.f32 %v1980, %v1986
    %1990 = vrot.lane.b32.xlu0 %v1988, 64
    %v1991 = vpop.permute.xlu0 %1990
    %v1993 = vadd.f32 %v1987, %v1991
    %v1994 = vtanh.pop %v1993
    %v1996 = vrot.slane %v1980, 2
    %1999 = vrot.lane.b32.xlu0 %v1994, 64
    %v2000 = vpop.permute.xlu0 %1999
    %v2002 = vmul.f32 %v1996, %v2000
    %v2004 = vrot.slane %v2002, 1
    %v2005 = vrot.slane %v2002, 2
    %v2006 = vrot.slane %v2002, 3
    %v2007 = vsel %vm1611, %v2002, %v2004
    %v2008 = vsel %vm1109, %v2005, %v2006
    %v2009 = vsel %vm1106, %v2007, %v2008
    %v2010 = vsel %vm1115, %v2002, %v2004
    %v2011 = vsel %vm1117, %v2005, %v2006
    %v2012 = vsel %vm1617, %v2010, %v2011
    %v2013 = vrot.slane %v2012, 1
    %2016 = vst.msk [vmem:[#allocation6 + $0x3] sm:$0x1] %vm1622, %v2009
    %2017 = vst.msk [vmem:[#allocation6 + $0x13] sm:$0x1] %vm1622, %v2013
    %v2018 = vperm.slane %v2009, 0
    %v2019 = vperm.slane %v2013, 0
    %2020 = vrot.lane.b32.xlu0 %v2018, 96
    %v2021 = vpop.permute.xlu0 %2020
    %2022 = vrot.lane.b32.xlu0 %v2019, 96
    %v2023 = vpop.permute.xlu0 %2022
    %2026 = vst.msk [vmem:[#allocation7 + $0xc] sm:$0x1] %vm1622, %v2021
    %2027 = vst.msk [vmem:[#allocation7 + $0x1c] sm:$0x1] %vm1622, %v2023
    %v2028 = vld [vmem:[%s1239] sm:$0xf]
    %v2029 = vld [vmem:[%s13] sm:$0xff]
    %v2030 = vld [vmem:[%s13 + $0x8] sm:$0xff]
    %v2031 = vld [vmem:[%s13 + $0x10] sm:$0xff]
    %v2032 = vld [vmem:[%s13 + $0x18] sm:$0xff]
    %v2033 = vld [vmem:[%s13 + $0x20] sm:$0xff]
    %v2034 = vld [vmem:[%s13 + $0x28] sm:$0xff]
    %v2035 = vld [vmem:[%s13 + $0x30] sm:$0xff]
    %v2036 = vld [vmem:[%s13 + $0x38] sm:$0xff]
    %v2037 = vld [vmem:[%s13 + $0x40] sm:$0xff]
    %v2038 = vld [vmem:[%s13 + $0x48] sm:$0xff]
    %v2039 = vld [vmem:[%s13 + $0x50] sm:$0xff]
    %v2040 = vld [vmem:[%s13 + $0x58] sm:$0xff]
    %v2041 = vld [vmem:[%s13 + $0x60] sm:$0xff]
    %v2042 = vld [vmem:[%s13 + $0x68] sm:$0xff]
    %v2043 = vld [vmem:[%s13 + $0x70] sm:$0xff]
    %v2044 = vld [vmem:[%s13 + $0x78] sm:$0xff]
    %v2045 = vsel %vm1516, %v2002, 0
    %2047 = vmatpush.msra.mxu0 0.0
    %2048 = vmatpush.msra.mxu0 0.0
    %2049 = vmatpush.msra.mxu0 0.0
    %2050 = vmatpush.msra.mxu0 0.0
    %2051 = vmatpush.msra.mxu0 0.0
    %2052 = vmatpush.msra.mxu0 0.0
    %2053 = vmatpush.msra.mxu0 0.0
    %2054 = vmatpush.msra.mxu0 0.0
    %2055 = vmatpush.msra.mxu0 %v2043
    %2056 = vmatpush.msra.mxu0 %v2041
    %2057 = vmatpush.msra.mxu0 %v2039
    %2058 = vmatpush.msra.mxu0 %v2037
    %2059 = vmatpush.msra.mxu0 %v2035
    %2060 = vmatpush.msra.mxu0 %v2033
    %2061 = vmatpush.msra.mxu0 %v2031
    %2062 = vmatpush.msra.mxu0 %v2029
    %2063 = vmatmul.f32.gmra.mxu0 %v2045
    %v2064 = vpop.f32.mrf.mxu0
    %v2065 = vadd.f32 0.0, %v2064
    %2066 = vdwg.mxu0
    %2067 = vmatpush.msra.mxu0 0.0
    %2068 = vmatpush.msra.mxu0 0.0
    %2069 = vmatpush.msra.mxu0 0.0
    %2070 = vmatpush.msra.mxu0 0.0
    %2071 = vmatpush.msra.mxu0 0.0
    %2072 = vmatpush.msra.mxu0 0.0
    %2073 = vmatpush.msra.mxu0 0.0
    %2074 = vmatpush.msra.mxu0 0.0
    %2075 = vmatpush.msra.mxu0 %v2044
    %2076 = vmatpush.msra.mxu0 %v2042
    %2077 = vmatpush.msra.mxu0 %v2040
    %2078 = vmatpush.msra.mxu0 %v2038
    %2079 = vmatpush.msra.mxu0 %v2036
    %2080 = vmatpush.msra.mxu0 %v2034
    %2081 = vmatpush.msra.mxu0 %v2032
    %2082 = vmatpush.msra.mxu0 %v2030
    %2083 = vmatmul.f32.gmra.mxu0 %v2045
    %v2084 = vpop.f32.mrf.mxu0
    %v2085 = vadd.f32 0.0, %v2084
    %2086 = vdwg.mxu0
    %v2089 = vrot.slane %v2085, 6
    %v2090 = vsel %vm1106, %v2065, %v2089
    %v2092 = vadd.f32 %v2028, %v2090
    %v2093 = vxor.u32 %v2092, 2147483648
    %v2094 = vmul.f32 %v2093, 1.442695
    %v2095 = vpow.pop %v2094
    %v2096 = vadd.f32 %v2095, 1.0
    %v2097 = vrcp.pop %v2096
    %v2098 = vmul.f32 %v2096, %v2097
    %v2099 = vsub.f32 1.0, %v2098
    %v2100 = vmul.f32 %v2097, %v2099
    %v2101 = vadd.f32 %v2097, %v2100
    %vm2102 = vweird.f32 %v2096
    %vm2103 = vweird.f32 %v2097
    %vm2104 = vmor %vm2102, %vm2103
    %v2105 = vsel %vm2104, %v2097, %v2101
    %v2106 = vand.u32 2147483647, %v2096
    %vm2107 = vcmp.eq.f32.partialorder %v2106, 8.507059e+37
    %v2108 = vand.u32 %v2096, 2147483648
    %v2109 = vor.u32 1.1754944e-38, %v2108
    %v2110 = vsel %vm2107, %v2109, %v2105
    %v2111 = vmul.f32 1.0, %v2110
    %2113 = vrot.lane.b32.xlu0 %v2092, 64
    %v2114 = vpop.permute.xlu0 %2113
    %v2115 = vrot.slane %v2114, 2
    %v2117 = vtanh.pop %v2115
    %v2118 = vmul.f32 %v2111, %v1993
    %v2119 = vmul.f32 %v2111, %v2117
    %2121 = vrot.lane.b32.xlu0 %v2119, 64
    %v2122 = vpop.permute.xlu0 %2121
    %v2124 = vadd.f32 %v2118, %v2122
    %v2125 = vtanh.pop %v2124
    %v2127 = vrot.slane %v2111, 2
    %2130 = vrot.lane.b32.xlu0 %v2125, 64
    %v2131 = vpop.permute.xlu0 %2130
    %v2133 = vmul.f32 %v2127, %v2131
    %v2135 = vrot.slane %v2133, 1
    %v2136 = vrot.slane %v2133, 2
    %v2137 = vrot.slane %v2133, 3
    %v2138 = vsel %vm1611, %v2133, %v2135
    %v2139 = vsel %vm1109, %v2136, %v2137
    %v2140 = vsel %vm1106, %v2138, %v2139
    %v2141 = vsel %vm1115, %v2133, %v2135
    %v2142 = vsel %vm1117, %v2136, %v2137
    %v2143 = vsel %vm1617, %v2141, %v2142
    %v2144 = vrot.slane %v2143, 1
    %2147 = vst.msk [vmem:[#allocation6 + $0x4] sm:$0x1] %vm1622, %v2140
    %2148 = vst.msk [vmem:[#allocation6 + $0x14] sm:$0x1] %vm1622, %v2144
    %v2149 = vperm.slane %v2140, 0
    %v2150 = vperm.slane %v2144, 0
    %2151 = vrot.lane.b32.xlu0 %v2149, 96
    %v2152 = vpop.permute.xlu0 %2151
    %2153 = vrot.lane.b32.xlu0 %v2150, 96
    %v2154 = vpop.permute.xlu0 %2153
    %2157 = vst.msk [vmem:[#allocation7 + $0xb] sm:$0x1] %vm1622, %v2152
    %2158 = vst.msk [vmem:[#allocation7 + $0x1b] sm:$0x1] %vm1622, %v2154
    %v2159 = vld [vmem:[%s1257] sm:$0xf]
    %v2160 = vld [vmem:[%s13] sm:$0xff]
    %v2161 = vld [vmem:[%s13 + $0x8] sm:$0xff]
    %v2162 = vld [vmem:[%s13 + $0x10] sm:$0xff]
    %v2163 = vld [vmem:[%s13 + $0x18] sm:$0xff]
    %v2164 = vld [vmem:[%s13 + $0x20] sm:$0xff]
    %v2165 = vld [vmem:[%s13 + $0x28] sm:$0xff]
    %v2166 = vld [vmem:[%s13 + $0x30] sm:$0xff]
    %v2167 = vld [vmem:[%s13 + $0x38] sm:$0xff]
    %v2168 = vld [vmem:[%s13 + $0x40] sm:$0xff]
    %v2169 = vld [vmem:[%s13 + $0x48] sm:$0xff]
    %v2170 = vld [vmem:[%s13 + $0x50] sm:$0xff]
    %v2171 = vld [vmem:[%s13 + $0x58] sm:$0xff]
    %v2172 = vld [vmem:[%s13 + $0x60] sm:$0xff]
    %v2173 = vld [vmem:[%s13 + $0x68] sm:$0xff]
    %v2174 = vld [vmem:[%s13 + $0x70] sm:$0xff]
    %v2175 = vld [vmem:[%s13 + $0x78] sm:$0xff]
    %v2176 = vsel %vm1516, %v2133, 0
    %2178 = vmatpush.msra.mxu0 0.0
    %2179 = vmatpush.msra.mxu0 0.0
    %2180 = vmatpush.msra.mxu0 0.0
    %2181 = vmatpush.msra.mxu0 0.0
    %2182 = vmatpush.msra.mxu0 0.0
    %2183 = vmatpush.msra.mxu0 0.0
    %2184 = vmatpush.msra.mxu0 0.0
    %2185 = vmatpush.msra.mxu0 0.0
    %2186 = vmatpush.msra.mxu0 %v2174
    %2187 = vmatpush.msra.mxu0 %v2172
    %2188 = vmatpush.msra.mxu0 %v2170
    %2189 = vmatpush.msra.mxu0 %v2168
    %2190 = vmatpush.msra.mxu0 %v2166
    %2191 = vmatpush.msra.mxu0 %v2164
    %2192 = vmatpush.msra.mxu0 %v2162
    %2193 = vmatpush.msra.mxu0 %v2160
    %2194 = vmatmul.f32.gmra.mxu0 %v2176
    %v2195 = vpop.f32.mrf.mxu0
    %v2196 = vadd.f32 0.0, %v2195
    %2197 = vdwg.mxu0
    %2198 = vmatpush.msra.mxu0 0.0
    %2199 = vmatpush.msra.mxu0 0.0
    %2200 = vmatpush.msra.mxu0 0.0
    %2201 = vmatpush.msra.mxu0 0.0
    %2202 = vmatpush.msra.mxu0 0.0
    %2203 = vmatpush.msra.mxu0 0.0
    %2204 = vmatpush.msra.mxu0 0.0
    %2205 = vmatpush.msra.mxu0 0.0
    %2206 = vmatpush.msra.mxu0 %v2175
    %2207 = vmatpush.msra.mxu0 %v2173
    %2208 = vmatpush.msra.mxu0 %v2171
    %2209 = vmatpush.msra.mxu0 %v2169
    %2210 = vmatpush.msra.mxu0 %v2167
    %2211 = vmatpush.msra.mxu0 %v2165
    %2212 = vmatpush.msra.mxu0 %v2163
    %2213 = vmatpush.msra.mxu0 %v2161
    %2214 = vmatmul.f32.gmra.mxu0 %v2176
    %v2215 = vpop.f32.mrf.mxu0
    %v2216 = vadd.f32 0.0, %v2215
    %2217 = vdwg.mxu0
    %v2220 = vrot.slane %v2216, 6
    %v2221 = vsel %vm1106, %v2196, %v2220
    %v2223 = vadd.f32 %v2159, %v2221
    %v2224 = vxor.u32 %v2223, 2147483648
    %v2225 = vmul.f32 %v2224, 1.442695
    %v2226 = vpow.pop %v2225
    %v2227 = vadd.f32 %v2226, 1.0
    %v2228 = vrcp.pop %v2227
    %v2229 = vmul.f32 %v2227, %v2228
    %v2230 = vsub.f32 1.0, %v2229
    %v2231 = vmul.f32 %v2228, %v2230
    %v2232 = vadd.f32 %v2228, %v2231
    %vm2233 = vweird.f32 %v2227
    %vm2234 = vweird.f32 %v2228
    %vm2235 = vmor %vm2233, %vm2234
    %v2236 = vsel %vm2235, %v2228, %v2232
    %v2237 = vand.u32 2147483647, %v2227
    %vm2238 = vcmp.eq.f32.partialorder %v2237, 8.507059e+37
    %v2239 = vand.u32 %v2227, 2147483648
    %v2240 = vor.u32 1.1754944e-38, %v2239
    %v2241 = vsel %vm2238, %v2240, %v2236
    %v2242 = vmul.f32 1.0, %v2241
    %2244 = vrot.lane.b32.xlu0 %v2223, 64
    %v2245 = vpop.permute.xlu0 %2244
    %v2246 = vrot.slane %v2245, 2
    %v2248 = vtanh.pop %v2246
    %v2249 = vmul.f32 %v2242, %v2124
    %v2250 = vmul.f32 %v2242, %v2248
    %2252 = vrot.lane.b32.xlu0 %v2250, 64
    %v2253 = vpop.permute.xlu0 %2252
    %v2255 = vadd.f32 %v2249, %v2253
    %v2256 = vtanh.pop %v2255
    %v2258 = vrot.slane %v2242, 2
    %2261 = vrot.lane.b32.xlu0 %v2256, 64
    %v2262 = vpop.permute.xlu0 %2261
    %v2264 = vmul.f32 %v2258, %v2262
    %v2266 = vrot.slane %v2264, 1
    %v2267 = vrot.slane %v2264, 2
    %v2268 = vrot.slane %v2264, 3
    %v2269 = vsel %vm1611, %v2264, %v2266
    %v2270 = vsel %vm1109, %v2267, %v2268
    %v2271 = vsel %vm1106, %v2269, %v2270
    %v2272 = vsel %vm1115, %v2264, %v2266
    %v2273 = vsel %vm1117, %v2267, %v2268
    %v2274 = vsel %vm1617, %v2272, %v2273
    %v2275 = vrot.slane %v2274, 1
    %2278 = vst.msk [vmem:[#allocation6 + $0x5] sm:$0x1] %vm1622, %v2271
    %2279 = vst.msk [vmem:[#allocation6 + $0x15] sm:$0x1] %vm1622, %v2275
    %v2280 = vperm.slane %v2271, 0
    %v2281 = vperm.slane %v2275, 0
    %2282 = vrot.lane.b32.xlu0 %v2280, 96
    %v2283 = vpop.permute.xlu0 %2282
    %2284 = vrot.lane.b32.xlu0 %v2281, 96
    %v2285 = vpop.permute.xlu0 %2284
    %2288 = vst.msk [vmem:[#allocation7 + $0xa] sm:$0x1] %vm1622, %v2283
    %2289 = vst.msk [vmem:[#allocation7 + $0x1a] sm:$0x1] %vm1622, %v2285
    %v2290 = vld [vmem:[%s1275] sm:$0xf]
    %v2291 = vld [vmem:[%s13] sm:$0xff]
    %v2292 = vld [vmem:[%s13 + $0x8] sm:$0xff]
    %v2293 = vld [vmem:[%s13 + $0x10] sm:$0xff]
    %v2294 = vld [vmem:[%s13 + $0x18] sm:$0xff]
    %v2295 = vld [vmem:[%s13 + $0x20] sm:$0xff]
    %v2296 = vld [vmem:[%s13 + $0x28] sm:$0xff]
    %v2297 = vld [vmem:[%s13 + $0x30] sm:$0xff]
    %v2298 = vld [vmem:[%s13 + $0x38] sm:$0xff]
    %v2299 = vld [vmem:[%s13 + $0x40] sm:$0xff]
    %v2300 = vld [vmem:[%s13 + $0x48] sm:$0xff]
    %v2301 = vld [vmem:[%s13 + $0x50] sm:$0xff]
    %v2302 = vld [vmem:[%s13 + $0x58] sm:$0xff]
    %v2303 = vld [vmem:[%s13 + $0x60] sm:$0xff]
    %v2304 = vld [vmem:[%s13 + $0x68] sm:$0xff]
    %v2305 = vld [vmem:[%s13 + $0x70] sm:$0xff]
    %v2306 = vld [vmem:[%s13 + $0x78] sm:$0xff]
    %v2307 = vsel %vm1516, %v2264, 0
    %2309 = vmatpush.msra.mxu0 0.0
    %2310 = vmatpush.msra.mxu0 0.0
    %2311 = vmatpush.msra.mxu0 0.0
    %2312 = vmatpush.msra.mxu0 0.0
    %2313 = vmatpush.msra.mxu0 0.0
    %2314 = vmatpush.msra.mxu0 0.0
    %2315 = vmatpush.msra.mxu0 0.0
    %2316 = vmatpush.msra.mxu0 0.0
    %2317 = vmatpush.msra.mxu0 %v2305
    %2318 = vmatpush.msra.mxu0 %v2303
    %2319 = vmatpush.msra.mxu0 %v2301
    %2320 = vmatpush.msra.mxu0 %v2299
    %2321 = vmatpush.msra.mxu0 %v2297
    %2322 = vmatpush.msra.mxu0 %v2295
    %2323 = vmatpush.msra.mxu0 %v2293
    %2324 = vmatpush.msra.mxu0 %v2291
    %2325 = vmatmul.f32.gmra.mxu0 %v2307
    %v2326 = vpop.f32.mrf.mxu0
    %v2327 = vadd.f32 0.0, %v2326
    %2328 = vdwg.mxu0
    %2329 = vmatpush.msra.mxu0 0.0
    %2330 = vmatpush.msra.mxu0 0.0
    %2331 = vmatpush.msra.mxu0 0.0
    %2332 = vmatpush.msra.mxu0 0.0
    %2333 = vmatpush.msra.mxu0 0.0
    %2334 = vmatpush.msra.mxu0 0.0
    %2335 = vmatpush.msra.mxu0 0.0
    %2336 = vmatpush.msra.mxu0 0.0
    %2337 = vmatpush.msra.mxu0 %v2306
    %2338 = vmatpush.msra.mxu0 %v2304
    %2339 = vmatpush.msra.mxu0 %v2302
    %2340 = vmatpush.msra.mxu0 %v2300
    %2341 = vmatpush.msra.mxu0 %v2298
    %2342 = vmatpush.msra.mxu0 %v2296
    %2343 = vmatpush.msra.mxu0 %v2294
    %2344 = vmatpush.msra.mxu0 %v2292
    %2345 = vmatmul.f32.gmra.mxu0 %v2307
    %v2346 = vpop.f32.mrf.mxu0
    %v2347 = vadd.f32 0.0, %v2346
    %2348 = vdwg.mxu0
    %v2351 = vrot.slane %v2347, 6
    %v2352 = vsel %vm1106, %v2327, %v2351
    %v2354 = vadd.f32 %v2290, %v2352
    %v2355 = vxor.u32 %v2354, 2147483648
    %v2356 = vmul.f32 %v2355, 1.442695
    %v2357 = vpow.pop %v2356
    %v2358 = vadd.f32 %v2357, 1.0
    %v2359 = vrcp.pop %v2358
    %v2360 = vmul.f32 %v2358, %v2359
    %v2361 = vsub.f32 1.0, %v2360
    %v2362 = vmul.f32 %v2359, %v2361
    %v2363 = vadd.f32 %v2359, %v2362
    %vm2364 = vweird.f32 %v2358
    %vm2365 = vweird.f32 %v2359
    %vm2366 = vmor %vm2364, %vm2365
    %v2367 = vsel %vm2366, %v2359, %v2363
    %v2368 = vand.u32 2147483647, %v2358
    %vm2369 = vcmp.eq.f32.partialorder %v2368, 8.507059e+37
    %v2370 = vand.u32 %v2358, 2147483648
    %v2371 = vor.u32 1.1754944e-38, %v2370
    %v2372 = vsel %vm2369, %v2371, %v2367
    %v2373 = vmul.f32 1.0, %v2372
    %2375 = vrot.lane.b32.xlu0 %v2354, 64
    %v2376 = vpop.permute.xlu0 %2375
    %v2377 = vrot.slane %v2376, 2
    %v2379 = vtanh.pop %v2377
    %v2380 = vmul.f32 %v2373, %v2255
    %v2381 = vmul.f32 %v2373, %v2379
    %2383 = vrot.lane.b32.xlu0 %v2381, 64
    %v2384 = vpop.permute.xlu0 %2383
    %v2386 = vadd.f32 %v2380, %v2384
    %v2387 = vtanh.pop %v2386
    %v2389 = vrot.slane %v2373, 2
    %2392 = vrot.lane.b32.xlu0 %v2387, 64
    %v2393 = vpop.permute.xlu0 %2392
    %v2395 = vmul.f32 %v2389, %v2393
    %v2397 = vrot.slane %v2395, 1
    %v2398 = vrot.slane %v2395, 2
    %v2399 = vrot.slane %v2395, 3
    %v2400 = vsel %vm1611, %v2395, %v2397
    %v2401 = vsel %vm1109, %v2398, %v2399
    %v2402 = vsel %vm1106, %v2400, %v2401
    %v2403 = vsel %vm1115, %v2395, %v2397
    %v2404 = vsel %vm1117, %v2398, %v2399
    %v2405 = vsel %vm1617, %v2403, %v2404
    %v2406 = vrot.slane %v2405, 1
    %2409 = vst.msk [vmem:[#allocation6 + $0x6] sm:$0x1] %vm1622, %v2402
    %2410 = vst.msk [vmem:[#allocation6 + $0x16] sm:$0x1] %vm1622, %v2406
    %v2411 = vperm.slane %v2402, 0
    %v2412 = vperm.slane %v2406, 0
    %2413 = vrot.lane.b32.xlu0 %v2411, 96
    %v2414 = vpop.permute.xlu0 %2413
    %2415 = vrot.lane.b32.xlu0 %v2412, 96
    %v2416 = vpop.permute.xlu0 %2415
    %2419 = vst.msk [vmem:[#allocation7 + $0x9] sm:$0x1] %vm1622, %v2414
    %2420 = vst.msk [vmem:[#allocation7 + $0x19] sm:$0x1] %vm1622, %v2416
    %v2421 = vld [vmem:[%s1293] sm:$0xf]
    %v2422 = vld [vmem:[%s13] sm:$0xff]
    %v2423 = vld [vmem:[%s13 + $0x8] sm:$0xff]
    %v2424 = vld [vmem:[%s13 + $0x10] sm:$0xff]
    %v2425 = vld [vmem:[%s13 + $0x18] sm:$0xff]
    %v2426 = vld [vmem:[%s13 + $0x20] sm:$0xff]
    %v2427 = vld [vmem:[%s13 + $0x28] sm:$0xff]
    %v2428 = vld [vmem:[%s13 + $0x30] sm:$0xff]
    %v2429 = vld [vmem:[%s13 + $0x38] sm:$0xff]
    %v2430 = vld [vmem:[%s13 + $0x40] sm:$0xff]
    %v2431 = vld [vmem:[%s13 + $0x48] sm:$0xff]
    %v2432 = vld [vmem:[%s13 + $0x50] sm:$0xff]
    %v2433 = vld [vmem:[%s13 + $0x58] sm:$0xff]
    %v2434 = vld [vmem:[%s13 + $0x60] sm:$0xff]
    %v2435 = vld [vmem:[%s13 + $0x68] sm:$0xff]
    %v2436 = vld [vmem:[%s13 + $0x70] sm:$0xff]
    %v2437 = vld [vmem:[%s13 + $0x78] sm:$0xff]
    %v2438 = vsel %vm1516, %v2395, 0
    %2440 = vmatpush.msra.mxu0 0.0
    %2441 = vmatpush.msra.mxu0 0.0
    %2442 = vmatpush.msra.mxu0 0.0
    %2443 = vmatpush.msra.mxu0 0.0
    %2444 = vmatpush.msra.mxu0 0.0
    %2445 = vmatpush.msra.mxu0 0.0
    %2446 = vmatpush.msra.mxu0 0.0
    %2447 = vmatpush.msra.mxu0 0.0
    %2448 = vmatpush.msra.mxu0 %v2436
    %2449 = vmatpush.msra.mxu0 %v2434
    %2450 = vmatpush.msra.mxu0 %v2432
    %2451 = vmatpush.msra.mxu0 %v2430
    %2452 = vmatpush.msra.mxu0 %v2428
    %2453 = vmatpush.msra.mxu0 %v2426
    %2454 = vmatpush.msra.mxu0 %v2424
    %2455 = vmatpush.msra.mxu0 %v2422
    %2456 = vmatmul.f32.gmra.mxu0 %v2438
    %v2457 = vpop.f32.mrf.mxu0
    %v2458 = vadd.f32 0.0, %v2457
    %2459 = vdwg.mxu0
    %2460 = vmatpush.msra.mxu0 0.0
    %2461 = vmatpush.msra.mxu0 0.0
    %2462 = vmatpush.msra.mxu0 0.0
    %2463 = vmatpush.msra.mxu0 0.0
    %2464 = vmatpush.msra.mxu0 0.0
    %2465 = vmatpush.msra.mxu0 0.0
    %2466 = vmatpush.msra.mxu0 0.0
    %2467 = vmatpush.msra.mxu0 0.0
    %2468 = vmatpush.msra.mxu0 %v2437
    %2469 = vmatpush.msra.mxu0 %v2435
    %2470 = vmatpush.msra.mxu0 %v2433
    %2471 = vmatpush.msra.mxu0 %v2431
    %2472 = vmatpush.msra.mxu0 %v2429
    %2473 = vmatpush.msra.mxu0 %v2427
    %2474 = vmatpush.msra.mxu0 %v2425
    %2475 = vmatpush.msra.mxu0 %v2423
    %2476 = vmatmul.f32.gmra.mxu0 %v2438
    %v2477 = vpop.f32.mrf.mxu0
    %v2478 = vadd.f32 0.0, %v2477
    %2479 = vdwg.mxu0
    %v2482 = vrot.slane %v2478, 6
    %v2483 = vsel %vm1106, %v2458, %v2482
    %v2485 = vadd.f32 %v2421, %v2483
    %v2486 = vxor.u32 %v2485, 2147483648
    %v2487 = vmul.f32 %v2486, 1.442695
    %v2488 = vpow.pop %v2487
    %v2489 = vadd.f32 %v2488, 1.0
    %v2490 = vrcp.pop %v2489
    %v2491 = vmul.f32 %v2489, %v2490
    %v2492 = vsub.f32 1.0, %v2491
    %v2493 = vmul.f32 %v2490, %v2492
    %v2494 = vadd.f32 %v2490, %v2493
    %vm2495 = vweird.f32 %v2489
    %vm2496 = vweird.f32 %v2490
    %vm2497 = vmor %vm2495, %vm2496
    %v2498 = vsel %vm2497, %v2490, %v2494
    %v2499 = vand.u32 2147483647, %v2489
    %vm2500 = vcmp.eq.f32.partialorder %v2499, 8.507059e+37
    %v2501 = vand.u32 %v2489, 2147483648
    %v2502 = vor.u32 1.1754944e-38, %v2501
    %v2503 = vsel %vm2500, %v2502, %v2498
    %v2504 = vmul.f32 1.0, %v2503
    %2506 = vrot.lane.b32.xlu0 %v2485, 64
    %v2507 = vpop.permute.xlu0 %2506
    %v2508 = vrot.slane %v2507, 2
    %v2510 = vtanh.pop %v2508
    %v2511 = vmul.f32 %v2504, %v2386
    %v2512 = vmul.f32 %v2504, %v2510
    %2514 = vrot.lane.b32.xlu0 %v2512, 64
    %v2515 = vpop.permute.xlu0 %2514
    %v2517 = vadd.f32 %v2511, %v2515
    %v2518 = vtanh.pop %v2517
    %v2520 = vrot.slane %v2504, 2
    %2523 = vrot.lane.b32.xlu0 %v2518, 64
    %v2524 = vpop.permute.xlu0 %2523
    %v2526 = vmul.f32 %v2520, %v2524
    %v2528 = vrot.slane %v2526, 1
    %v2529 = vrot.slane %v2526, 2
    %v2530 = vrot.slane %v2526, 3
    %v2531 = vsel %vm1611, %v2526, %v2528
    %v2532 = vsel %vm1109, %v2529, %v2530
    %v2533 = vsel %vm1106, %v2531, %v2532
    %v2534 = vsel %vm1115, %v2526, %v2528
    %v2535 = vsel %vm1117, %v2529, %v2530
    %v2536 = vsel %vm1617, %v2534, %v2535
    %v2537 = vrot.slane %v2536, 1
    %2540 = vst.msk [vmem:[#allocation6 + $0x7] sm:$0x1] %vm1622, %v2533
    %2541 = vst.msk [vmem:[#allocation6 + $0x17] sm:$0x1] %vm1622, %v2537
    %v2542 = vperm.slane %v2533, 0
    %v2543 = vperm.slane %v2537, 0
    %2544 = vrot.lane.b32.xlu0 %v2542, 96
    %v2545 = vpop.permute.xlu0 %2544
    %2546 = vrot.lane.b32.xlu0 %v2543, 96
    %v2547 = vpop.permute.xlu0 %2546
    %2550 = vst.msk [vmem:[#allocation7 + $0x8] sm:$0x1] %vm1622, %v2545
    %2551 = vst.msk [vmem:[#allocation7 + $0x18] sm:$0x1] %vm1622, %v2547
    %v2552 = vld [vmem:[%s1327] sm:$0xf]
    %v2553 = vld [vmem:[%s13] sm:$0xff]
    %v2554 = vld [vmem:[%s13 + $0x8] sm:$0xff]
    %v2555 = vld [vmem:[%s13 + $0x10] sm:$0xff]
    %v2556 = vld [vmem:[%s13 + $0x18] sm:$0xff]
    %v2557 = vld [vmem:[%s13 + $0x20] sm:$0xff]
    %v2558 = vld [vmem:[%s13 + $0x28] sm:$0xff]
    %v2559 = vld [vmem:[%s13 + $0x30] sm:$0xff]
    %v2560 = vld [vmem:[%s13 + $0x38] sm:$0xff]
    %v2561 = vld [vmem:[%s13 + $0x40] sm:$0xff]
    %v2562 = vld [vmem:[%s13 + $0x48] sm:$0xff]
    %v2563 = vld [vmem:[%s13 + $0x50] sm:$0xff]
    %v2564 = vld [vmem:[%s13 + $0x58] sm:$0xff]
    %v2565 = vld [vmem:[%s13 + $0x60] sm:$0xff]
    %v2566 = vld [vmem:[%s13 + $0x68] sm:$0xff]
    %v2567 = vld [vmem:[%s13 + $0x70] sm:$0xff]
    %v2568 = vld [vmem:[%s13 + $0x78] sm:$0xff]
    %v2569 = vsel %vm1516, %v2526, 0
    %2571 = vmatpush.msra.mxu0 0.0
    %2572 = vmatpush.msra.mxu0 0.0
    %2573 = vmatpush.msra.mxu0 0.0
    %2574 = vmatpush.msra.mxu0 0.0
    %2575 = vmatpush.msra.mxu0 0.0
    %2576 = vmatpush.msra.mxu0 0.0
    %2577 = vmatpush.msra.mxu0 0.0
    %2578 = vmatpush.msra.mxu0 0.0
    %2579 = vmatpush.msra.mxu0 %v2567
    %2580 = vmatpush.msra.mxu0 %v2565
    %2581 = vmatpush.msra.mxu0 %v2563
    %2582 = vmatpush.msra.mxu0 %v2561
    %2583 = vmatpush.msra.mxu0 %v2559
    %2584 = vmatpush.msra.mxu0 %v2557
    %2585 = vmatpush.msra.mxu0 %v2555
    %2586 = vmatpush.msra.mxu0 %v2553
    %2587 = vmatmul.f32.gmra.mxu0 %v2569
    %v2588 = vpop.f32.mrf.mxu0
    %v2589 = vadd.f32 0.0, %v2588
    %2590 = vdwg.mxu0
    %2591 = vmatpush.msra.mxu0 0.0
    %2592 = vmatpush.msra.mxu0 0.0
    %2593 = vmatpush.msra.mxu0 0.0
    %2594 = vmatpush.msra.mxu0 0.0
    %2595 = vmatpush.msra.mxu0 0.0
    %2596 = vmatpush.msra.mxu0 0.0
    %2597 = vmatpush.msra.mxu0 0.0
    %2598 = vmatpush.msra.mxu0 0.0
    %2599 = vmatpush.msra.mxu0 %v2568
    %2600 = vmatpush.msra.mxu0 %v2566
    %2601 = vmatpush.msra.mxu0 %v2564
    %2602 = vmatpush.msra.mxu0 %v2562
    %2603 = vmatpush.msra.mxu0 %v2560
    %2604 = vmatpush.msra.mxu0 %v2558
    %2605 = vmatpush.msra.mxu0 %v2556
    %2606 = vmatpush.msra.mxu0 %v2554
    %2607 = vmatmul.f32.gmra.mxu0 %v2569
    %v2608 = vpop.f32.mrf.mxu0
    %v2609 = vadd.f32 0.0, %v2608
    %2610 = vdwg.mxu0
    %v2613 = vrot.slane %v2609, 6
    %v2614 = vsel %vm1106, %v2589, %v2613
    %v2616 = vadd.f32 %v2552, %v2614
    %v2617 = vxor.u32 %v2616, 2147483648
    %v2618 = vmul.f32 %v2617, 1.442695
    %v2619 = vpow.pop %v2618
    %v2620 = vadd.f32 %v2619, 1.0
    %v2621 = vrcp.pop %v2620
    %v2622 = vmul.f32 %v2620, %v2621
    %v2623 = vsub.f32 1.0, %v2622
    %v2624 = vmul.f32 %v2621, %v2623
    %v2625 = vadd.f32 %v2621, %v2624
    %vm2626 = vweird.f32 %v2620
    %vm2627 = vweird.f32 %v2621
    %vm2628 = vmor %vm2626, %vm2627
    %v2629 = vsel %vm2628, %v2621, %v2625
    %v2630 = vand.u32 2147483647, %v2620
    %vm2631 = vcmp.eq.f32.partialorder %v2630, 8.507059e+37
    %v2632 = vand.u32 %v2620, 2147483648
    %v2633 = vor.u32 1.1754944e-38, %v2632
    %v2634 = vsel %vm2631, %v2633, %v2629
    %v2635 = vmul.f32 1.0, %v2634
    %2637 = vrot.lane.b32.xlu0 %v2616, 64
    %v2638 = vpop.permute.xlu0 %2637
    %v2639 = vrot.slane %v2638, 2
    %v2641 = vtanh.pop %v2639
    %v2642 = vmul.f32 %v2635, %v2517
    %v2643 = vmul.f32 %v2635, %v2641
    %2645 = vrot.lane.b32.xlu0 %v2643, 64
    %v2646 = vpop.permute.xlu0 %2645
    %v2648 = vadd.f32 %v2642, %v2646
    %v2649 = vtanh.pop %v2648
    %v2651 = vrot.slane %v2635, 2
    %2654 = vrot.lane.b32.xlu0 %v2649, 64
    %v2655 = vpop.permute.xlu0 %2654
    %v2657 = vmul.f32 %v2651, %v2655
    %v2659 = vrot.slane %v2657, 1
    %v2660 = vrot.slane %v2657, 2
    %v2661 = vrot.slane %v2657, 3
    %v2662 = vsel %vm1611, %v2657, %v2659
    %v2663 = vsel %vm1109, %v2660, %v2661
    %v2664 = vsel %vm1106, %v2662, %v2663
    %v2665 = vsel %vm1115, %v2657, %v2659
    %v2666 = vsel %vm1117, %v2660, %v2661
    %v2667 = vsel %vm1617, %v2665, %v2666
    %v2668 = vrot.slane %v2667, 1
    %2671 = vst.msk [vmem:[#allocation6 + $0x8] sm:$0x1] %vm1622, %v2664
    %2672 = vst.msk [vmem:[#allocation6 + $0x18] sm:$0x1] %vm1622, %v2668
    %v2673 = vperm.slane %v2664, 0
    %v2674 = vperm.slane %v2668, 0
    %2675 = vrot.lane.b32.xlu0 %v2673, 96
    %v2676 = vpop.permute.xlu0 %2675
    %2677 = vrot.lane.b32.xlu0 %v2674, 96
    %v2678 = vpop.permute.xlu0 %2677
    %2681 = vst.msk [vmem:[#allocation7 + $0x7] sm:$0x1] %vm1622, %v2676
    %2682 = vst.msk [vmem:[#allocation7 + $0x17] sm:$0x1] %vm1622, %v2678
    %v2683 = vld [vmem:[%s1357] sm:$0xf]
    %v2684 = vld [vmem:[%s13] sm:$0xff]
    %v2685 = vld [vmem:[%s13 + $0x8] sm:$0xff]
    %v2686 = vld [vmem:[%s13 + $0x10] sm:$0xff]
    %v2687 = vld [vmem:[%s13 + $0x18] sm:$0xff]
    %v2688 = vld [vmem:[%s13 + $0x20] sm:$0xff]
    %v2689 = vld [vmem:[%s13 + $0x28] sm:$0xff]
    %v2690 = vld [vmem:[%s13 + $0x30] sm:$0xff]
    %v2691 = vld [vmem:[%s13 + $0x38] sm:$0xff]
    %v2692 = vld [vmem:[%s13 + $0x40] sm:$0xff]
    %v2693 = vld [vmem:[%s13 + $0x48] sm:$0xff]
    %v2694 = vld [vmem:[%s13 + $0x50] sm:$0xff]
    %v2695 = vld [vmem:[%s13 + $0x58] sm:$0xff]
    %v2696 = vld [vmem:[%s13 + $0x60] sm:$0xff]
    %v2697 = vld [vmem:[%s13 + $0x68] sm:$0xff]
    %v2698 = vld [vmem:[%s13 + $0x70] sm:$0xff]
    %v2699 = vld [vmem:[%s13 + $0x78] sm:$0xff]
    %v2700 = vsel %vm1516, %v2657, 0
    %2702 = vmatpush.msra.mxu0 0.0
    %2703 = vmatpush.msra.mxu0 0.0
    %2704 = vmatpush.msra.mxu0 0.0
    %2705 = vmatpush.msra.mxu0 0.0
    %2706 = vmatpush.msra.mxu0 0.0
    %2707 = vmatpush.msra.mxu0 0.0
    %2708 = vmatpush.msra.mxu0 0.0
    %2709 = vmatpush.msra.mxu0 0.0
    %2710 = vmatpush.msra.mxu0 %v2698
    %2711 = vmatpush.msra.mxu0 %v2696
    %2712 = vmatpush.msra.mxu0 %v2694
    %2713 = vmatpush.msra.mxu0 %v2692
    %2714 = vmatpush.msra.mxu0 %v2690
    %2715 = vmatpush.msra.mxu0 %v2688
    %2716 = vmatpush.msra.mxu0 %v2686
    %2717 = vmatpush.msra.mxu0 %v2684
    %2718 = vmatmul.f32.gmra.mxu0 %v2700
    %v2719 = vpop.f32.mrf.mxu0
    %v2720 = vadd.f32 0.0, %v2719
    %2721 = vdwg.mxu0
    %2722 = vmatpush.msra.mxu0 0.0
    %2723 = vmatpush.msra.mxu0 0.0
    %2724 = vmatpush.msra.mxu0 0.0
    %2725 = vmatpush.msra.mxu0 0.0
    %2726 = vmatpush.msra.mxu0 0.0
    %2727 = vmatpush.msra.mxu0 0.0
    %2728 = vmatpush.msra.mxu0 0.0
    %2729 = vmatpush.msra.mxu0 0.0
    %2730 = vmatpush.msra.mxu0 %v2699
    %2731 = vmatpush.msra.mxu0 %v2697
    %2732 = vmatpush.msra.mxu0 %v2695
    %2733 = vmatpush.msra.mxu0 %v2693
    %2734 = vmatpush.msra.mxu0 %v2691
    %2735 = vmatpush.msra.mxu0 %v2689
    %2736 = vmatpush.msra.mxu0 %v2687
    %2737 = vmatpush.msra.mxu0 %v2685
    %2738 = vmatmul.f32.gmra.mxu0 %v2700
    %v2739 = vpop.f32.mrf.mxu0
    %v2740 = vadd.f32 0.0, %v2739
    %2741 = vdwg.mxu0
    %v2744 = vrot.slane %v2740, 6
    %v2745 = vsel %vm1106, %v2720, %v2744
    %v2747 = vadd.f32 %v2683, %v2745
    %v2748 = vxor.u32 %v2747, 2147483648
    %v2749 = vmul.f32 %v2748, 1.442695
    %v2750 = vpow.pop %v2749
    %v2751 = vadd.f32 %v2750, 1.0
    %v2752 = vrcp.pop %v2751
    %v2753 = vmul.f32 %v2751, %v2752
    %v2754 = vsub.f32 1.0, %v2753
    %v2755 = vmul.f32 %v2752, %v2754
    %v2756 = vadd.f32 %v2752, %v2755
    %vm2757 = vweird.f32 %v2751
    %vm2758 = vweird.f32 %v2752
    %vm2759 = vmor %vm2757, %vm2758
    %v2760 = vsel %vm2759, %v2752, %v2756
    %v2761 = vand.u32 2147483647, %v2751
    %vm2762 = vcmp.eq.f32.partialorder %v2761, 8.507059e+37
    %v2763 = vand.u32 %v2751, 2147483648
    %v2764 = vor.u32 1.1754944e-38, %v2763
    %v2765 = vsel %vm2762, %v2764, %v2760
    %v2766 = vmul.f32 1.0, %v2765
    %2768 = vrot.lane.b32.xlu0 %v2747, 64
    %v2769 = vpop.permute.xlu0 %2768
    %v2770 = vrot.slane %v2769, 2
    %v2772 = vtanh.pop %v2770
    %v2773 = vmul.f32 %v2766, %v2648
    %v2774 = vmul.f32 %v2766, %v2772
    %2776 = vrot.lane.b32.xlu0 %v2774, 64
    %v2777 = vpop.permute.xlu0 %2776
    %v2779 = vadd.f32 %v2773, %v2777
    %v2780 = vtanh.pop %v2779
    %v2782 = vrot.slane %v2766, 2
    %2785 = vrot.lane.b32.xlu0 %v2780, 64
    %v2786 = vpop.permute.xlu0 %2785
    %v2788 = vmul.f32 %v2782, %v2786
    %v2790 = vrot.slane %v2788, 1
    %v2791 = vrot.slane %v2788, 2
    %v2792 = vrot.slane %v2788, 3
    %v2793 = vsel %vm1611, %v2788, %v2790
    %v2794 = vsel %vm1109, %v2791, %v2792
    %v2795 = vsel %vm1106, %v2793, %v2794
    %v2796 = vsel %vm1115, %v2788, %v2790
    %v2797 = vsel %vm1117, %v2791, %v2792
    %v2798 = vsel %vm1617, %v2796, %v2797
    %v2799 = vrot.slane %v2798, 1
    %2802 = vst.msk [vmem:[#allocation6 + $0x9] sm:$0x1] %vm1622, %v2795
    %2803 = vst.msk [vmem:[#allocation6 + $0x19] sm:$0x1] %vm1622, %v2799
    %v2804 = vperm.slane %v2795, 0
    %v2805 = vperm.slane %v2799, 0
    %2806 = vrot.lane.b32.xlu0 %v2804, 96
    %v2807 = vpop.permute.xlu0 %2806
    %2808 = vrot.lane.b32.xlu0 %v2805, 96
    %v2809 = vpop.permute.xlu0 %2808
    %2812 = vst.msk [vmem:[#allocation7 + $0x6] sm:$0x1] %vm1622, %v2807
    %2813 = vst.msk [vmem:[#allocation7 + $0x16] sm:$0x1] %vm1622, %v2809
    %v2814 = vld [vmem:[%s1391] sm:$0xf]
    %v2815 = vld [vmem:[%s13] sm:$0xff]
    %v2816 = vld [vmem:[%s13 + $0x8] sm:$0xff]
    %v2817 = vld [vmem:[%s13 + $0x10] sm:$0xff]
    %v2818 = vld [vmem:[%s13 + $0x18] sm:$0xff]
    %v2819 = vld [vmem:[%s13 + $0x20] sm:$0xff]
    %v2820 = vld [vmem:[%s13 + $0x28] sm:$0xff]
    %v2821 = vld [vmem:[%s13 + $0x30] sm:$0xff]
    %v2822 = vld [vmem:[%s13 + $0x38] sm:$0xff]
    %v2823 = vld [vmem:[%s13 + $0x40] sm:$0xff]
    %v2824 = vld [vmem:[%s13 + $0x48] sm:$0xff]
    %v2825 = vld [vmem:[%s13 + $0x50] sm:$0xff]
    %v2826 = vld [vmem:[%s13 + $0x58] sm:$0xff]
    %v2827 = vld [vmem:[%s13 + $0x60] sm:$0xff]
    %v2828 = vld [vmem:[%s13 + $0x68] sm:$0xff]
    %v2829 = vld [vmem:[%s13 + $0x70] sm:$0xff]
    %v2830 = vld [vmem:[%s13 + $0x78] sm:$0xff]
    %v2831 = vsel %vm1516, %v2788, 0
    %2833 = vmatpush.msra.mxu0 0.0
    %2834 = vmatpush.msra.mxu0 0.0
    %2835 = vmatpush.msra.mxu0 0.0
    %2836 = vmatpush.msra.mxu0 0.0
    %2837 = vmatpush.msra.mxu0 0.0
    %2838 = vmatpush.msra.mxu0 0.0
    %2839 = vmatpush.msra.mxu0 0.0
    %2840 = vmatpush.msra.mxu0 0.0
    %2841 = vmatpush.msra.mxu0 %v2829
    %2842 = vmatpush.msra.mxu0 %v2827
    %2843 = vmatpush.msra.mxu0 %v2825
    %2844 = vmatpush.msra.mxu0 %v2823
    %2845 = vmatpush.msra.mxu0 %v2821
    %2846 = vmatpush.msra.mxu0 %v2819
    %2847 = vmatpush.msra.mxu0 %v2817
    %2848 = vmatpush.msra.mxu0 %v2815
    %2849 = vmatmul.f32.gmra.mxu0 %v2831
    %v2850 = vpop.f32.mrf.mxu0
    %v2851 = vadd.f32 0.0, %v2850
    %2852 = vdwg.mxu0
    %2853 = vmatpush.msra.mxu0 0.0
    %2854 = vmatpush.msra.mxu0 0.0
    %2855 = vmatpush.msra.mxu0 0.0
    %2856 = vmatpush.msra.mxu0 0.0
    %2857 = vmatpush.msra.mxu0 0.0
    %2858 = vmatpush.msra.mxu0 0.0
    %2859 = vmatpush.msra.mxu0 0.0
    %2860 = vmatpush.msra.mxu0 0.0
    %2861 = vmatpush.msra.mxu0 %v2830
    %2862 = vmatpush.msra.mxu0 %v2828
    %2863 = vmatpush.msra.mxu0 %v2826
    %2864 = vmatpush.msra.mxu0 %v2824
    %2865 = vmatpush.msra.mxu0 %v2822
    %2866 = vmatpush.msra.mxu0 %v2820
    %2867 = vmatpush.msra.mxu0 %v2818
    %2868 = vmatpush.msra.mxu0 %v2816
    %2869 = vmatmul.f32.gmra.mxu0 %v2831
    %v2870 = vpop.f32.mrf.mxu0
    %v2871 = vadd.f32 0.0, %v2870
    %2872 = vdwg.mxu0
    %v2875 = vrot.slane %v2871, 6
    %v2876 = vsel %vm1106, %v2851, %v2875
    %v2878 = vadd.f32 %v2814, %v2876
    %v2879 = vxor.u32 %v2878, 2147483648
    %v2880 = vmul.f32 %v2879, 1.442695
    %v2881 = vpow.pop %v2880
    %v2882 = vadd.f32 %v2881, 1.0
    %v2883 = vrcp.pop %v2882
    %v2884 = vmul.f32 %v2882, %v2883
    %v2885 = vsub.f32 1.0, %v2884
    %v2886 = vmul.f32 %v2883, %v2885
    %v2887 = vadd.f32 %v2883, %v2886
    %vm2888 = vweird.f32 %v2882
    %vm2889 = vweird.f32 %v2883
    %vm2890 = vmor %vm2888, %vm2889
    %v2891 = vsel %vm2890, %v2883, %v2887
    %v2892 = vand.u32 2147483647, %v2882
    %vm2893 = vcmp.eq.f32.partialorder %v2892, 8.507059e+37
    %v2894 = vand.u32 %v2882, 2147483648
    %v2895 = vor.u32 1.1754944e-38, %v2894
    %v2896 = vsel %vm2893, %v2895, %v2891
    %v2897 = vmul.f32 1.0, %v2896
    %2899 = vrot.lane.b32.xlu0 %v2878, 64
    %v2900 = vpop.permute.xlu0 %2899
    %v2901 = vrot.slane %v2900, 2
    %v2903 = vtanh.pop %v2901
    %v2904 = vmul.f32 %v2897, %v2779
    %v2905 = vmul.f32 %v2897, %v2903
    %2907 = vrot.lane.b32.xlu0 %v2905, 64
    %v2908 = vpop.permute.xlu0 %2907
    %v2910 = vadd.f32 %v2904, %v2908
    %v2911 = vtanh.pop %v2910
    %v2913 = vrot.slane %v2897, 2
    %2916 = vrot.lane.b32.xlu0 %v2911, 64
    %v2917 = vpop.permute.xlu0 %2916
    %v2919 = vmul.f32 %v2913, %v2917
    %v2921 = vrot.slane %v2919, 1
    %v2922 = vrot.slane %v2919, 2
    %v2923 = vrot.slane %v2919, 3
    %v2924 = vsel %vm1611, %v2919, %v2921
    %v2925 = vsel %vm1109, %v2922, %v2923
    %v2926 = vsel %vm1106, %v2924, %v2925
    %v2927 = vsel %vm1115, %v2919, %v2921
    %v2928 = vsel %vm1117, %v2922, %v2923
    %v2929 = vsel %vm1617, %v2927, %v2928
    %v2930 = vrot.slane %v2929, 1
    %2933 = vst.msk [vmem:[#allocation6 + $0xa] sm:$0x1] %vm1622, %v2926
    %2934 = vst.msk [vmem:[#allocation6 + $0x1a] sm:$0x1] %vm1622, %v2930
    %v2935 = vperm.slane %v2926, 0
    %v2936 = vperm.slane %v2930, 0
    %2937 = vrot.lane.b32.xlu0 %v2935, 96
    %v2938 = vpop.permute.xlu0 %2937
    %2939 = vrot.lane.b32.xlu0 %v2936, 96
    %v2940 = vpop.permute.xlu0 %2939
    %2943 = vst.msk [vmem:[#allocation7 + $0x5] sm:$0x1] %vm1622, %v2938
    %2944 = vst.msk [vmem:[#allocation7 + $0x15] sm:$0x1] %vm1622, %v2940
    %v2945 = vld [vmem:[%s1425] sm:$0xf]
    %v2946 = vld [vmem:[%s13] sm:$0xff]
    %v2947 = vld [vmem:[%s13 + $0x8] sm:$0xff]
    %v2948 = vld [vmem:[%s13 + $0x10] sm:$0xff]
    %v2949 = vld [vmem:[%s13 + $0x18] sm:$0xff]
    %v2950 = vld [vmem:[%s13 + $0x20] sm:$0xff]
    %v2951 = vld [vmem:[%s13 + $0x28] sm:$0xff]
    %v2952 = vld [vmem:[%s13 + $0x30] sm:$0xff]
    %v2953 = vld [vmem:[%s13 + $0x38] sm:$0xff]
    %v2954 = vld [vmem:[%s13 + $0x40] sm:$0xff]
    %v2955 = vld [vmem:[%s13 + $0x48] sm:$0xff]
    %v2956 = vld [vmem:[%s13 + $0x50] sm:$0xff]
    %v2957 = vld [vmem:[%s13 + $0x58] sm:$0xff]
    %v2958 = vld [vmem:[%s13 + $0x60] sm:$0xff]
    %v2959 = vld [vmem:[%s13 + $0x68] sm:$0xff]
    %v2960 = vld [vmem:[%s13 + $0x70] sm:$0xff]
    %v2961 = vld [vmem:[%s13 + $0x78] sm:$0xff]
    %v2962 = vsel %vm1516, %v2919, 0
    %2964 = vmatpush.msra.mxu0 0.0
    %2965 = vmatpush.msra.mxu0 0.0
    %2966 = vmatpush.msra.mxu0 0.0
    %2967 = vmatpush.msra.mxu0 0.0
    %2968 = vmatpush.msra.mxu0 0.0
    %2969 = vmatpush.msra.mxu0 0.0
    %2970 = vmatpush.msra.mxu0 0.0
    %2971 = vmatpush.msra.mxu0 0.0
    %2972 = vmatpush.msra.mxu0 %v2960
    %2973 = vmatpush.msra.mxu0 %v2958
    %2974 = vmatpush.msra.mxu0 %v2956
    %2975 = vmatpush.msra.mxu0 %v2954
    %2976 = vmatpush.msra.mxu0 %v2952
    %2977 = vmatpush.msra.mxu0 %v2950
    %2978 = vmatpush.msra.mxu0 %v2948
    %2979 = vmatpush.msra.mxu0 %v2946
    %2980 = vmatmul.f32.gmra.mxu0 %v2962
    %v2981 = vpop.f32.mrf.mxu0
    %v2982 = vadd.f32 0.0, %v2981
    %2983 = vdwg.mxu0
    %2984 = vmatpush.msra.mxu0 0.0
    %2985 = vmatpush.msra.mxu0 0.0
    %2986 = vmatpush.msra.mxu0 0.0
    %2987 = vmatpush.msra.mxu0 0.0
    %2988 = vmatpush.msra.mxu0 0.0
    %2989 = vmatpush.msra.mxu0 0.0
    %2990 = vmatpush.msra.mxu0 0.0
    %2991 = vmatpush.msra.mxu0 0.0
    %2992 = vmatpush.msra.mxu0 %v2961
    %2993 = vmatpush.msra.mxu0 %v2959
    %2994 = vmatpush.msra.mxu0 %v2957
    %2995 = vmatpush.msra.mxu0 %v2955
    %2996 = vmatpush.msra.mxu0 %v2953
    %2997 = vmatpush.msra.mxu0 %v2951
    %2998 = vmatpush.msra.mxu0 %v2949
    %2999 = vmatpush.msra.mxu0 %v2947
    %3000 = vmatmul.f32.gmra.mxu0 %v2962
    %v3001 = vpop.f32.mrf.mxu0
    %v3002 = vadd.f32 0.0, %v3001
    %3003 = vdwg.mxu0
    %v3006 = vrot.slane %v3002, 6
    %v3007 = vsel %vm1106, %v2982, %v3006
    %v3009 = vadd.f32 %v2945, %v3007
    %v3010 = vxor.u32 %v3009, 2147483648
    %v3011 = vmul.f32 %v3010, 1.442695
    %v3012 = vpow.pop %v3011
    %v3013 = vadd.f32 %v3012, 1.0
    %v3014 = vrcp.pop %v3013
    %v3015 = vmul.f32 %v3013, %v3014
    %v3016 = vsub.f32 1.0, %v3015
    %v3017 = vmul.f32 %v3014, %v3016
    %v3018 = vadd.f32 %v3014, %v3017
    %vm3019 = vweird.f32 %v3013
    %vm3020 = vweird.f32 %v3014
    %vm3021 = vmor %vm3019, %vm3020
    %v3022 = vsel %vm3021, %v3014, %v3018
    %v3023 = vand.u32 2147483647, %v3013
    %vm3024 = vcmp.eq.f32.partialorder %v3023, 8.507059e+37
    %v3025 = vand.u32 %v3013, 2147483648
    %v3026 = vor.u32 1.1754944e-38, %v3025
    %v3027 = vsel %vm3024, %v3026, %v3022
    %v3028 = vmul.f32 1.0, %v3027
    %3030 = vrot.lane.b32.xlu0 %v3009, 64
    %v3031 = vpop.permute.xlu0 %3030
    %v3032 = vrot.slane %v3031, 2
    %v3034 = vtanh.pop %v3032
    %v3035 = vmul.f32 %v3028, %v2910
    %v3036 = vmul.f32 %v3028, %v3034
    %3038 = vrot.lane.b32.xlu0 %v3036, 64
    %v3039 = vpop.permute.xlu0 %3038
    %v3041 = vadd.f32 %v3035, %v3039
    %v3042 = vtanh.pop %v3041
    %v3044 = vrot.slane %v3028, 2
    %3047 = vrot.lane.b32.xlu0 %v3042, 64
    %v3048 = vpop.permute.xlu0 %3047
    %v3050 = vmul.f32 %v3044, %v3048
    %v3052 = vrot.slane %v3050, 1
    %v3053 = vrot.slane %v3050, 2
    %v3054 = vrot.slane %v3050, 3
    %v3055 = vsel %vm1611, %v3050, %v3052
    %v3056 = vsel %vm1109, %v3053, %v3054
    %v3057 = vsel %vm1106, %v3055, %v3056
    %v3058 = vsel %vm1115, %v3050, %v3052
    %v3059 = vsel %vm1117, %v3053, %v3054
    %v3060 = vsel %vm1617, %v3058, %v3059
    %v3061 = vrot.slane %v3060, 1
    %3064 = vst.msk [vmem:[#allocation6 + $0xb] sm:$0x1] %vm1622, %v3057
    %3065 = vst.msk [vmem:[#allocation6 + $0x1b] sm:$0x1] %vm1622, %v3061
    %v3066 = vperm.slane %v3057, 0
    %v3067 = vperm.slane %v3061, 0
    %3068 = vrot.lane.b32.xlu0 %v3066, 96
    %v3069 = vpop.permute.xlu0 %3068
    %3070 = vrot.lane.b32.xlu0 %v3067, 96
    %v3071 = vpop.permute.xlu0 %3070
    %3074 = vst.msk [vmem:[#allocation7 + $0x4] sm:$0x1] %vm1622, %v3069
    %3075 = vst.msk [vmem:[#allocation7 + $0x14] sm:$0x1] %vm1622, %v3071
    %v3076 = vld [vmem:[%s1443] sm:$0xf]
    %v3077 = vld [vmem:[%s13] sm:$0xff]
    %v3078 = vld [vmem:[%s13 + $0x8] sm:$0xff]
    %v3079 = vld [vmem:[%s13 + $0x10] sm:$0xff]
    %v3080 = vld [vmem:[%s13 + $0x18] sm:$0xff]
    %v3081 = vld [vmem:[%s13 + $0x20] sm:$0xff]
    %v3082 = vld [vmem:[%s13 + $0x28] sm:$0xff]
    %v3083 = vld [vmem:[%s13 + $0x30] sm:$0xff]
    %v3084 = vld [vmem:[%s13 + $0x38] sm:$0xff]
    %v3085 = vld [vmem:[%s13 + $0x40] sm:$0xff]
    %v3086 = vld [vmem:[%s13 + $0x48] sm:$0xff]
    %v3087 = vld [vmem:[%s13 + $0x50] sm:$0xff]
    %v3088 = vld [vmem:[%s13 + $0x58] sm:$0xff]
    %v3089 = vld [vmem:[%s13 + $0x60] sm:$0xff]
    %v3090 = vld [vmem:[%s13 + $0x68] sm:$0xff]
    %v3091 = vld [vmem:[%s13 + $0x70] sm:$0xff]
    %v3092 = vld [vmem:[%s13 + $0x78] sm:$0xff]
    %v3093 = vsel %vm1516, %v3050, 0
    %3095 = vmatpush.msra.mxu0 0.0
    %3096 = vmatpush.msra.mxu0 0.0
    %3097 = vmatpush.msra.mxu0 0.0
    %3098 = vmatpush.msra.mxu0 0.0
    %3099 = vmatpush.msra.mxu0 0.0
    %3100 = vmatpush.msra.mxu0 0.0
    %3101 = vmatpush.msra.mxu0 0.0
    %3102 = vmatpush.msra.mxu0 0.0
    %3103 = vmatpush.msra.mxu0 %v3091
    %3104 = vmatpush.msra.mxu0 %v3089
    %3105 = vmatpush.msra.mxu0 %v3087
    %3106 = vmatpush.msra.mxu0 %v3085
    %3107 = vmatpush.msra.mxu0 %v3083
    %3108 = vmatpush.msra.mxu0 %v3081
    %3109 = vmatpush.msra.mxu0 %v3079
    %3110 = vmatpush.msra.mxu0 %v3077
    %3111 = vmatmul.f32.gmra.mxu0 %v3093
    %v3112 = vpop.f32.mrf.mxu0
    %v3113 = vadd.f32 0.0, %v3112
    %3114 = vdwg.mxu0
    %3115 = vmatpush.msra.mxu0 0.0
    %3116 = vmatpush.msra.mxu0 0.0
    %3117 = vmatpush.msra.mxu0 0.0
    %3118 = vmatpush.msra.mxu0 0.0
    %3119 = vmatpush.msra.mxu0 0.0
    %3120 = vmatpush.msra.mxu0 0.0
    %3121 = vmatpush.msra.mxu0 0.0
    %3122 = vmatpush.msra.mxu0 0.0
    %3123 = vmatpush.msra.mxu0 %v3092
    %3124 = vmatpush.msra.mxu0 %v3090
    %3125 = vmatpush.msra.mxu0 %v3088
    %3126 = vmatpush.msra.mxu0 %v3086
    %3127 = vmatpush.msra.mxu0 %v3084
    %3128 = vmatpush.msra.mxu0 %v3082
    %3129 = vmatpush.msra.mxu0 %v3080
    %3130 = vmatpush.msra.mxu0 %v3078
    %3131 = vmatmul.f32.gmra.mxu0 %v3093
    %v3132 = vpop.f32.mrf.mxu0
    %v3133 = vadd.f32 0.0, %v3132
    %3134 = vdwg.mxu0
    %v3137 = vrot.slane %v3133, 6
    %v3138 = vsel %vm1106, %v3113, %v3137
    %v3140 = vadd.f32 %v3076, %v3138
    %v3141 = vxor.u32 %v3140, 2147483648
    %v3142 = vmul.f32 %v3141, 1.442695
    %v3143 = vpow.pop %v3142
    %v3144 = vadd.f32 %v3143, 1.0
    %v3145 = vrcp.pop %v3144
    %v3146 = vmul.f32 %v3144, %v3145
    %v3147 = vsub.f32 1.0, %v3146
    %v3148 = vmul.f32 %v3145, %v3147
    %v3149 = vadd.f32 %v3145, %v3148
    %vm3150 = vweird.f32 %v3144
    %vm3151 = vweird.f32 %v3145
    %vm3152 = vmor %vm3150, %vm3151
    %v3153 = vsel %vm3152, %v3145, %v3149
    %v3154 = vand.u32 2147483647, %v3144
    %vm3155 = vcmp.eq.f32.partialorder %v3154, 8.507059e+37
    %v3156 = vand.u32 %v3144, 2147483648
    %v3157 = vor.u32 1.1754944e-38, %v3156
    %v3158 = vsel %vm3155, %v3157, %v3153
    %v3159 = vmul.f32 1.0, %v3158
    %3161 = vrot.lane.b32.xlu0 %v3140, 64
    %v3162 = vpop.permute.xlu0 %3161
    %v3163 = vrot.slane %v3162, 2
    %v3165 = vtanh.pop %v3163
    %v3166 = vmul.f32 %v3159, %v3041
    %v3167 = vmul.f32 %v3159, %v3165
    %3169 = vrot.lane.b32.xlu0 %v3167, 64
    %v3170 = vpop.permute.xlu0 %3169
    %v3172 = vadd.f32 %v3166, %v3170
    %v3173 = vtanh.pop %v3172
    %v3175 = vrot.slane %v3159, 2
    %3178 = vrot.lane.b32.xlu0 %v3173, 64
    %v3179 = vpop.permute.xlu0 %3178
    %v3181 = vmul.f32 %v3175, %v3179
    %v3183 = vrot.slane %v3181, 1
    %v3184 = vrot.slane %v3181, 2
    %v3185 = vrot.slane %v3181, 3
    %v3186 = vsel %vm1611, %v3181, %v3183
    %v3187 = vsel %vm1109, %v3184, %v3185
    %v3188 = vsel %vm1106, %v3186, %v3187
    %v3189 = vsel %vm1115, %v3181, %v3183
    %v3190 = vsel %vm1117, %v3184, %v3185
    %v3191 = vsel %vm1617, %v3189, %v3190
    %v3192 = vrot.slane %v3191, 1
    %3195 = vst.msk [vmem:[#allocation6 + $0xc] sm:$0x1] %vm1622, %v3188
    %3196 = vst.msk [vmem:[#allocation6 + $0x1c] sm:$0x1] %vm1622, %v3192
    %v3197 = vperm.slane %v3188, 0
    %v3198 = vperm.slane %v3192, 0
    %3199 = vrot.lane.b32.xlu0 %v3197, 96
    %v3200 = vpop.permute.xlu0 %3199
    %3201 = vrot.lane.b32.xlu0 %v3198, 96
    %v3202 = vpop.permute.xlu0 %3201
    %3205 = vst.msk [vmem:[#allocation7 + $0x3] sm:$0x1] %vm1622, %v3200
    %3206 = vst.msk [vmem:[#allocation7 + $0x13] sm:$0x1] %vm1622, %v3202
    %v3207 = vld [vmem:[%s1461] sm:$0xf]
    %v3208 = vld [vmem:[%s13] sm:$0xff]
    %v3209 = vld [vmem:[%s13 + $0x8] sm:$0xff]
    %v3210 = vld [vmem:[%s13 + $0x10] sm:$0xff]
    %v3211 = vld [vmem:[%s13 + $0x18] sm:$0xff]
    %v3212 = vld [vmem:[%s13 + $0x20] sm:$0xff]
    %v3213 = vld [vmem:[%s13 + $0x28] sm:$0xff]
    %v3214 = vld [vmem:[%s13 + $0x30] sm:$0xff]
    %v3215 = vld [vmem:[%s13 + $0x38] sm:$0xff]
    %v3216 = vld [vmem:[%s13 + $0x40] sm:$0xff]
    %v3217 = vld [vmem:[%s13 + $0x48] sm:$0xff]
    %v3218 = vld [vmem:[%s13 + $0x50] sm:$0xff]
    %v3219 = vld [vmem:[%s13 + $0x58] sm:$0xff]
    %v3220 = vld [vmem:[%s13 + $0x60] sm:$0xff]
    %v3221 = vld [vmem:[%s13 + $0x68] sm:$0xff]
    %v3222 = vld [vmem:[%s13 + $0x70] sm:$0xff]
    %v3223 = vld [vmem:[%s13 + $0x78] sm:$0xff]
    %v3224 = vsel %vm1516, %v3181, 0
    %3226 = vmatpush.msra.mxu0 0.0
    %3227 = vmatpush.msra.mxu0 0.0
    %3228 = vmatpush.msra.mxu0 0.0
    %3229 = vmatpush.msra.mxu0 0.0
    %3230 = vmatpush.msra.mxu0 0.0
    %3231 = vmatpush.msra.mxu0 0.0
    %3232 = vmatpush.msra.mxu0 0.0
    %3233 = vmatpush.msra.mxu0 0.0
    %3234 = vmatpush.msra.mxu0 %v3222
    %3235 = vmatpush.msra.mxu0 %v3220
    %3236 = vmatpush.msra.mxu0 %v3218
    %3237 = vmatpush.msra.mxu0 %v3216
    %3238 = vmatpush.msra.mxu0 %v3214
    %3239 = vmatpush.msra.mxu0 %v3212
    %3240 = vmatpush.msra.mxu0 %v3210
    %3241 = vmatpush.msra.mxu0 %v3208
    %3242 = vmatmul.f32.gmra.mxu0 %v3224
    %v3243 = vpop.f32.mrf.mxu0
    %v3244 = vadd.f32 0.0, %v3243
    %3245 = vdwg.mxu0
    %3246 = vmatpush.msra.mxu0 0.0
    %3247 = vmatpush.msra.mxu0 0.0
    %3248 = vmatpush.msra.mxu0 0.0
    %3249 = vmatpush.msra.mxu0 0.0
    %3250 = vmatpush.msra.mxu0 0.0
    %3251 = vmatpush.msra.mxu0 0.0
    %3252 = vmatpush.msra.mxu0 0.0
    %3253 = vmatpush.msra.mxu0 0.0
    %3254 = vmatpush.msra.mxu0 %v3223
    %3255 = vmatpush.msra.mxu0 %v3221
    %3256 = vmatpush.msra.mxu0 %v3219
    %3257 = vmatpush.msra.mxu0 %v3217
    %3258 = vmatpush.msra.mxu0 %v3215
    %3259 = vmatpush.msra.mxu0 %v3213
    %3260 = vmatpush.msra.mxu0 %v3211
    %3261 = vmatpush.msra.mxu0 %v3209
    %3262 = vmatmul.f32.gmra.mxu0 %v3224
    %v3263 = vpop.f32.mrf.mxu0
    %v3264 = vadd.f32 0.0, %v3263
    %3265 = vdwg.mxu0
    %v3268 = vrot.slane %v3264, 6
    %v3269 = vsel %vm1106, %v3244, %v3268
    %v3271 = vadd.f32 %v3207, %v3269
    %v3272 = vxor.u32 %v3271, 2147483648
    %v3273 = vmul.f32 %v3272, 1.442695
    %v3274 = vpow.pop %v3273
    %v3275 = vadd.f32 %v3274, 1.0
    %v3276 = vrcp.pop %v3275
    %v3277 = vmul.f32 %v3275, %v3276
    %v3278 = vsub.f32 1.0, %v3277
    %v3279 = vmul.f32 %v3276, %v3278
    %v3280 = vadd.f32 %v3276, %v3279
    %vm3281 = vweird.f32 %v3275
    %vm3282 = vweird.f32 %v3276
    %vm3283 = vmor %vm3281, %vm3282
    %v3284 = vsel %vm3283, %v3276, %v3280
    %v3285 = vand.u32 2147483647, %v3275
    %vm3286 = vcmp.eq.f32.partialorder %v3285, 8.507059e+37
    %v3287 = vand.u32 %v3275, 2147483648
    %v3288 = vor.u32 1.1754944e-38, %v3287
    %v3289 = vsel %vm3286, %v3288, %v3284
    %v3290 = vmul.f32 1.0, %v3289
    %3292 = vrot.lane.b32.xlu0 %v3271, 64
    %v3293 = vpop.permute.xlu0 %3292
    %v3294 = vrot.slane %v3293, 2
    %v3296 = vtanh.pop %v3294
    %v3297 = vmul.f32 %v3290, %v3172
    %v3298 = vmul.f32 %v3290, %v3296
    %3300 = vrot.lane.b32.xlu0 %v3298, 64
    %v3301 = vpop.permute.xlu0 %3300
    %v3303 = vadd.f32 %v3297, %v3301
    %v3304 = vtanh.pop %v3303
    %v3306 = vrot.slane %v3290, 2
    %3309 = vrot.lane.b32.xlu0 %v3304, 64
    %v3310 = vpop.permute.xlu0 %3309
    %v3312 = vmul.f32 %v3306, %v3310
    %v3314 = vrot.slane %v3312, 1
    %v3315 = vrot.slane %v3312, 2
    %v3316 = vrot.slane %v3312, 3
    %v3317 = vsel %vm1611, %v3312, %v3314
    %v3318 = vsel %vm1109, %v3315, %v3316
    %v3319 = vsel %vm1106, %v3317, %v3318
    %v3320 = vsel %vm1115, %v3312, %v3314
    %v3321 = vsel %vm1117, %v3315, %v3316
    %v3322 = vsel %vm1617, %v3320, %v3321
    %v3323 = vrot.slane %v3322, 1
    %3326 = vst.msk [vmem:[#allocation6 + $0xd] sm:$0x1] %vm1622, %v3319
    %3327 = vst.msk [vmem:[#allocation6 + $0x1d] sm:$0x1] %vm1622, %v3323
    %v3328 = vperm.slane %v3319, 0
    %v3329 = vperm.slane %v3323, 0
    %3330 = vrot.lane.b32.xlu0 %v3328, 96
    %v3331 = vpop.permute.xlu0 %3330
    %3332 = vrot.lane.b32.xlu0 %v3329, 96
    %v3333 = vpop.permute.xlu0 %3332
    %3336 = vst.msk [vmem:[#allocation7 + $0x2] sm:$0x1] %vm1622, %v3331
    %3337 = vst.msk [vmem:[#allocation7 + $0x12] sm:$0x1] %vm1622, %v3333
    %v3338 = vld [vmem:[%s1479] sm:$0xf]
    %v3339 = vld [vmem:[%s13] sm:$0xff]
    %v3340 = vld [vmem:[%s13 + $0x8] sm:$0xff]
    %v3341 = vld [vmem:[%s13 + $0x10] sm:$0xff]
    %v3342 = vld [vmem:[%s13 + $0x18] sm:$0xff]
    %v3343 = vld [vmem:[%s13 + $0x20] sm:$0xff]
    %v3344 = vld [vmem:[%s13 + $0x28] sm:$0xff]
    %v3345 = vld [vmem:[%s13 + $0x30] sm:$0xff]
    %v3346 = vld [vmem:[%s13 + $0x38] sm:$0xff]
    %v3347 = vld [vmem:[%s13 + $0x40] sm:$0xff]
    %v3348 = vld [vmem:[%s13 + $0x48] sm:$0xff]
    %v3349 = vld [vmem:[%s13 + $0x50] sm:$0xff]
    %v3350 = vld [vmem:[%s13 + $0x58] sm:$0xff]
    %v3351 = vld [vmem:[%s13 + $0x60] sm:$0xff]
    %v3352 = vld [vmem:[%s13 + $0x68] sm:$0xff]
    %v3353 = vld [vmem:[%s13 + $0x70] sm:$0xff]
    %v3354 = vld [vmem:[%s13 + $0x78] sm:$0xff]
    %v3355 = vsel %vm1516, %v3312, 0
    %3357 = vmatpush.msra.mxu0 0.0
    %3358 = vmatpush.msra.mxu0 0.0
    %3359 = vmatpush.msra.mxu0 0.0
    %3360 = vmatpush.msra.mxu0 0.0
    %3361 = vmatpush.msra.mxu0 0.0
    %3362 = vmatpush.msra.mxu0 0.0
    %3363 = vmatpush.msra.mxu0 0.0
    %3364 = vmatpush.msra.mxu0 0.0
    %3365 = vmatpush.msra.mxu0 %v3353
    %3366 = vmatpush.msra.mxu0 %v3351
    %3367 = vmatpush.msra.mxu0 %v3349
    %3368 = vmatpush.msra.mxu0 %v3347
    %3369 = vmatpush.msra.mxu0 %v3345
    %3370 = vmatpush.msra.mxu0 %v3343
    %3371 = vmatpush.msra.mxu0 %v3341
    %3372 = vmatpush.msra.mxu0 %v3339
    %3373 = vmatmul.f32.gmra.mxu0 %v3355
    %v3374 = vpop.f32.mrf.mxu0
    %v3375 = vadd.f32 0.0, %v3374
    %3376 = vdwg.mxu0
    %3377 = vmatpush.msra.mxu0 0.0
    %3378 = vmatpush.msra.mxu0 0.0
    %3379 = vmatpush.msra.mxu0 0.0
    %3380 = vmatpush.msra.mxu0 0.0
    %3381 = vmatpush.msra.mxu0 0.0
    %3382 = vmatpush.msra.mxu0 0.0
    %3383 = vmatpush.msra.mxu0 0.0
    %3384 = vmatpush.msra.mxu0 0.0
    %3385 = vmatpush.msra.mxu0 %v3354
    %3386 = vmatpush.msra.mxu0 %v3352
    %3387 = vmatpush.msra.mxu0 %v3350
    %3388 = vmatpush.msra.mxu0 %v3348
    %3389 = vmatpush.msra.mxu0 %v3346
    %3390 = vmatpush.msra.mxu0 %v3344
    %3391 = vmatpush.msra.mxu0 %v3342
    %3392 = vmatpush.msra.mxu0 %v3340
    %3393 = vmatmul.f32.gmra.mxu0 %v3355
    %v3394 = vpop.f32.mrf.mxu0
    %v3395 = vadd.f32 0.0, %v3394
    %3396 = vdwg.mxu0
    %v3399 = vrot.slane %v3395, 6
    %v3400 = vsel %vm1106, %v3375, %v3399
    %v3402 = vadd.f32 %v3338, %v3400
    %v3403 = vxor.u32 %v3402, 2147483648
    %v3404 = vmul.f32 %v3403, 1.442695
    %v3405 = vpow.pop %v3404
    %v3406 = vadd.f32 %v3405, 1.0
    %v3407 = vrcp.pop %v3406
    %v3408 = vmul.f32 %v3406, %v3407
    %v3409 = vsub.f32 1.0, %v3408
    %v3410 = vmul.f32 %v3407, %v3409
    %v3411 = vadd.f32 %v3407, %v3410
    %vm3412 = vweird.f32 %v3406
    %vm3413 = vweird.f32 %v3407
    %vm3414 = vmor %vm3412, %vm3413
    %v3415 = vsel %vm3414, %v3407, %v3411
    %v3416 = vand.u32 2147483647, %v3406
    %vm3417 = vcmp.eq.f32.partialorder %v3416, 8.507059e+37
    %v3418 = vand.u32 %v3406, 2147483648
    %v3419 = vor.u32 1.1754944e-38, %v3418
    %v3420 = vsel %vm3417, %v3419, %v3415
    %v3421 = vmul.f32 1.0, %v3420
    %3423 = vrot.lane.b32.xlu0 %v3402, 64
    %v3424 = vpop.permute.xlu0 %3423
    %v3425 = vrot.slane %v3424, 2
    %v3427 = vtanh.pop %v3425
    %v3428 = vmul.f32 %v3421, %v3303
    %v3429 = vmul.f32 %v3421, %v3427
    %3431 = vrot.lane.b32.xlu0 %v3429, 64
    %v3432 = vpop.permute.xlu0 %3431
    %v3434 = vadd.f32 %v3428, %v3432
    %v3435 = vtanh.pop %v3434
    %v3437 = vrot.slane %v3421, 2
    %3440 = vrot.lane.b32.xlu0 %v3435, 64
    %v3441 = vpop.permute.xlu0 %3440
    %v3443 = vmul.f32 %v3437, %v3441
    %v3445 = vrot.slane %v3443, 1
    %v3446 = vrot.slane %v3443, 2
    %v3447 = vrot.slane %v3443, 3
    %v3448 = vsel %vm1611, %v3443, %v3445
    %v3449 = vsel %vm1109, %v3446, %v3447
    %v3450 = vsel %vm1106, %v3448, %v3449
    %v3451 = vsel %vm1115, %v3443, %v3445
    %v3452 = vsel %vm1117, %v3446, %v3447
    %v3453 = vsel %vm1617, %v3451, %v3452
    %v3454 = vrot.slane %v3453, 1
    %3457 = vst.msk [vmem:[#allocation6 + $0xe] sm:$0x1] %vm1622, %v3450
    %3458 = vst.msk [vmem:[#allocation6 + $0x1e] sm:$0x1] %vm1622, %v3454
    %v3459 = vperm.slane %v3450, 0
    %v3460 = vperm.slane %v3454, 0
    %3461 = vrot.lane.b32.xlu0 %v3459, 96
    %v3462 = vpop.permute.xlu0 %3461
    %3463 = vrot.lane.b32.xlu0 %v3460, 96
    %v3464 = vpop.permute.xlu0 %3463
    %3467 = vst.msk [vmem:[#allocation7 + $0x1] sm:$0x1] %vm1622, %v3462
    %3468 = vst.msk [vmem:[#allocation7 + $0x11] sm:$0x1] %vm1622, %v3464
    %v3469 = vld [vmem:[%s1497] sm:$0xf]
    %v3470 = vld [vmem:[%s13] sm:$0xff]
    %v3471 = vld [vmem:[%s13 + $0x8] sm:$0xff]
    %v3472 = vld [vmem:[%s13 + $0x10] sm:$0xff]
    %v3473 = vld [vmem:[%s13 + $0x18] sm:$0xff]
    %v3474 = vld [vmem:[%s13 + $0x20] sm:$0xff]
    %v3475 = vld [vmem:[%s13 + $0x28] sm:$0xff]
    %v3476 = vld [vmem:[%s13 + $0x30] sm:$0xff]
    %v3477 = vld [vmem:[%s13 + $0x38] sm:$0xff]
    %v3478 = vld [vmem:[%s13 + $0x40] sm:$0xff]
    %v3479 = vld [vmem:[%s13 + $0x48] sm:$0xff]
    %v3480 = vld [vmem:[%s13 + $0x50] sm:$0xff]
    %v3481 = vld [vmem:[%s13 + $0x58] sm:$0xff]
    %v3482 = vld [vmem:[%s13 + $0x60] sm:$0xff]
    %v3483 = vld [vmem:[%s13 + $0x68] sm:$0xff]
    %v3484 = vld [vmem:[%s13 + $0x70] sm:$0xff]
    %v3485 = vld [vmem:[%s13 + $0x78] sm:$0xff]
    %v3486 = vsel %vm1516, %v3443, 0
    %3488 = vmatpush.msra.mxu0 0.0
    %3489 = vmatpush.msra.mxu0 0.0
    %3490 = vmatpush.msra.mxu0 0.0
    %3491 = vmatpush.msra.mxu0 0.0
    %3492 = vmatpush.msra.mxu0 0.0
    %3493 = vmatpush.msra.mxu0 0.0
    %3494 = vmatpush.msra.mxu0 0.0
    %3495 = vmatpush.msra.mxu0 0.0
    %3496 = vmatpush.msra.mxu0 %v3484
    %3497 = vmatpush.msra.mxu0 %v3482
    %3498 = vmatpush.msra.mxu0 %v3480
    %3499 = vmatpush.msra.mxu0 %v3478
    %3500 = vmatpush.msra.mxu0 %v3476
    %3501 = vmatpush.msra.mxu0 %v3474
    %3502 = vmatpush.msra.mxu0 %v3472
    %3503 = vmatpush.msra.mxu0 %v3470
    %3504 = vmatmul.f32.gmra.mxu0 %v3486
    %v3505 = vpop.f32.mrf.mxu0
    %v3506 = vadd.f32 0.0, %v3505
    %3507 = vdwg.mxu0
    %3508 = vmatpush.msra.mxu0 0.0
    %3509 = vmatpush.msra.mxu0 0.0
    %3510 = vmatpush.msra.mxu0 0.0
    %3511 = vmatpush.msra.mxu0 0.0
    %3512 = vmatpush.msra.mxu0 0.0
    %3513 = vmatpush.msra.mxu0 0.0
    %3514 = vmatpush.msra.mxu0 0.0
    %3515 = vmatpush.msra.mxu0 0.0
    %3516 = vmatpush.msra.mxu0 %v3485
    %3517 = vmatpush.msra.mxu0 %v3483
    %3518 = vmatpush.msra.mxu0 %v3481
    %3519 = vmatpush.msra.mxu0 %v3479
    %3520 = vmatpush.msra.mxu0 %v3477
    %3521 = vmatpush.msra.mxu0 %v3475
    %3522 = vmatpush.msra.mxu0 %v3473
    %3523 = vmatpush.msra.mxu0 %v3471
    %3524 = vmatmul.f32.gmra.mxu0 %v3486
    %v3525 = vpop.f32.mrf.mxu0
    %v3526 = vadd.f32 0.0, %v3525
    %3527 = vdwg.mxu0
    %v3530 = vrot.slane %v3526, 6
    %v3531 = vsel %vm1106, %v3506, %v3530
    %v3533 = vadd.f32 %v3469, %v3531
    %v3534 = vxor.u32 %v3533, 2147483648
    %v3535 = vmul.f32 %v3534, 1.442695
    %v3536 = vpow.pop %v3535
    %v3537 = vadd.f32 %v3536, 1.0
    %v3538 = vrcp.pop %v3537
    %v3539 = vmul.f32 %v3537, %v3538
    %v3540 = vsub.f32 1.0, %v3539
    %v3541 = vmul.f32 %v3538, %v3540
    %v3542 = vadd.f32 %v3538, %v3541
    %vm3543 = vweird.f32 %v3537
    %vm3544 = vweird.f32 %v3538
    %vm3545 = vmor %vm3543, %vm3544
    %v3546 = vsel %vm3545, %v3538, %v3542
    %v3547 = vand.u32 2147483647, %v3537
    %vm3548 = vcmp.eq.f32.partialorder %v3547, 8.507059e+37
    %v3549 = vand.u32 %v3537, 2147483648
    %v3550 = vor.u32 1.1754944e-38, %v3549
    %v3551 = vsel %vm3548, %v3550, %v3546
    %v3552 = vmul.f32 1.0, %v3551
    %3554 = vrot.lane.b32.xlu0 %v3533, 64
    %v3555 = vpop.permute.xlu0 %3554
    %v3556 = vrot.slane %v3555, 2
    %v3558 = vtanh.pop %v3556
    %v3559 = vmul.f32 %v3552, %v3434
    %v3560 = vmul.f32 %v3552, %v3558
    %3562 = vrot.lane.b32.xlu0 %v3560, 64
    %v3563 = vpop.permute.xlu0 %3562
    %v3565 = vadd.f32 %v3559, %v3563
    %v3566 = vtanh.pop %v3565
    %v3568 = vrot.slane %v3552, 2
    %3571 = vrot.lane.b32.xlu0 %v3566, 64
    %v3572 = vpop.permute.xlu0 %3571
    %v3574 = vmul.f32 %v3568, %v3572
    %v3576 = vrot.slane %v3574, 1
    %v3577 = vrot.slane %v3574, 2
    %v3578 = vrot.slane %v3574, 3
    %v3579 = vsel %vm1611, %v3574, %v3576
    %v3580 = vsel %vm1109, %v3577, %v3578
    %v3581 = vsel %vm1106, %v3579, %v3580
    %v3582 = vsel %vm1115, %v3574, %v3576
    %v3583 = vsel %vm1117, %v3577, %v3578
    %v3584 = vsel %vm1617, %v3582, %v3583
    %v3585 = vrot.slane %v3584, 1
    %3588 = vst.msk [vmem:[#allocation6 + $0xf] sm:$0x1] %vm1622, %v3581
    %3589 = vst.msk [vmem:[#allocation6 + $0x1f] sm:$0x1] %vm1622, %v3585
    %v3590 = vperm.slane %v3581, 0
    %v3591 = vperm.slane %v3585, 0
    %3592 = vrot.lane.b32.xlu0 %v3590, 96
    %v3593 = vpop.permute.xlu0 %3592
    %3594 = vrot.lane.b32.xlu0 %v3591, 96
    %v3595 = vpop.permute.xlu0 %3594
    %3598 = vst.msk [vmem:[#allocation7] sm:$0x1] %vm1622, %v3593
    %3599 = vst.msk [vmem:[#allocation7 + $0x10] sm:$0x1] %vm1622, %v3595
    %v3600 = vld [vmem:[#allocation6] sm:$0xff]
    %v3601 = vld [vmem:[#allocation6 + $0x8] sm:$0xff]
    %v3602 = vld [vmem:[#allocation6 + $0x10] sm:$0xff]
    %v3603 = vld [vmem:[#allocation6 + $0x18] sm:$0xff]
    %v3604 = vld [vmem:[%s14] sm:$0xff]
    %v3605 = vld [vmem:[%s14 + $0x8] sm:$0xff]
    %v3606 = vld [vmem:[%s14 + $0x10] sm:$0xff]
    %v3607 = vld [vmem:[%s14 + $0x18] sm:$0xff]
    %v3608 = vld [vmem:[#allocation7] sm:$0xff]
    %v3609 = vld [vmem:[#allocation7 + $0x8] sm:$0xff]
    %v3610 = vld [vmem:[#allocation7 + $0x10] sm:$0xff]
    %v3611 = vld [vmem:[#allocation7 + $0x18] sm:$0xff]
    %v3612 = vld [vmem:[%s15] sm:$0xff]
    %v3613 = vld [vmem:[%s15 + $0x8] sm:$0xff]
    %v3614 = vld [vmem:[%s15 + $0x10] sm:$0xff]
    %v3615 = vld [vmem:[%s15 + $0x18] sm:$0xff]
    %v3617 = vsel %vm947, %v3608, 0
    %v3620 = vsel %vm947, %v3609, 0
    %v3623 = vsel %vm947, %v3610, 0
    %v3626 = vsel %vm947, %v3611, 0
    %3628 = vmatpush.msra.mxu0 0.0
    %3629 = vmatpush.msra.mxu0 0.0
    %3630 = vmatpush.msra.mxu0 0.0
    %3631 = vmatpush.msra.mxu0 0.0
    %3632 = vmatpush.msra.mxu0 0.0
    %3633 = vmatpush.msra.mxu0 0.0
    %3634 = vmatpush.msra.mxu0 0.0
    %3635 = vmatpush.msra.mxu0 0.0
    %3636 = vmatpush.msra.mxu0 0.0
    %3637 = vmatpush.msra.mxu0 0.0
    %3638 = vmatpush.msra.mxu0 0.0
    %3639 = vmatpush.msra.mxu0 0.0
    %3640 = vmatpush.msra.mxu0 %v3615
    %3641 = vmatpush.msra.mxu0 %v3614
    %3642 = vmatpush.msra.mxu0 %v3613
    %3643 = vmatpush.msra.mxu0 %v3612
    %3644 = vmatmul.f32.gmra.mxu0 %v3617
    %v3645 = vpop.f32.mrf.mxu0
    %v3646 = vadd.f32 0.0, %v3645
    %3647 = vmatmul.f32.gmra.mxu0 %v3620
    %v3648 = vpop.f32.mrf.mxu0
    %v3649 = vadd.f32 0.0, %v3648
    %3650 = vmatmul.f32.gmra.mxu0 %v3623
    %v3651 = vpop.f32.mrf.mxu0
    %v3652 = vadd.f32 0.0, %v3651
    %3653 = vmatmul.f32.gmra.mxu0 %v3626
    %v3654 = vpop.f32.mrf.mxu0
    %v3655 = vadd.f32 0.0, %v3654
    %3656 = vdwg.mxu0
    %v3658 = vsel %vm947, %v3600, 0
    %v3661 = vsel %vm947, %v3601, 0
    %v3664 = vsel %vm947, %v3602, 0
    %v3667 = vsel %vm947, %v3603, 0
    %3669 = vmatpush.msra.mxu0 0.0
    %3670 = vmatpush.msra.mxu0 0.0
    %3671 = vmatpush.msra.mxu0 0.0
    %3672 = vmatpush.msra.mxu0 0.0
    %3673 = vmatpush.msra.mxu0 0.0
    %3674 = vmatpush.msra.mxu0 0.0
    %3675 = vmatpush.msra.mxu0 0.0
    %3676 = vmatpush.msra.mxu0 0.0
    %3677 = vmatpush.msra.mxu0 0.0
    %3678 = vmatpush.msra.mxu0 0.0
    %3679 = vmatpush.msra.mxu0 0.0
    %3680 = vmatpush.msra.mxu0 0.0
    %3681 = vmatpush.msra.mxu0 %v3607
    %3682 = vmatpush.msra.mxu0 %v3606
    %3683 = vmatpush.msra.mxu0 %v3605
    %3684 = vmatpush.msra.mxu0 %v3604
    %3685 = vmatmul.f32.gmra.mxu0 %v3658
    %v3686 = vpop.f32.mrf.mxu0
    %v3687 = vadd.f32 %v3646, %v3686
    %3688 = vmatmul.f32.gmra.mxu0 %v3661
    %v3689 = vpop.f32.mrf.mxu0
    %v3690 = vadd.f32 %v3649, %v3689
    %3691 = vmatmul.f32.gmra.mxu0 %v3664
    %v3692 = vpop.f32.mrf.mxu0
    %v3693 = vadd.f32 %v3652, %v3692
    %3694 = vmatmul.f32.gmra.mxu0 %v3667
    %v3695 = vpop.f32.mrf.mxu0
    %v3696 = vadd.f32 %v3655, %v3695
    %3697 = vdwg.mxu0
    %v3698 = vld [vmem:[%s16] sm:$0x1]
    %v3700 = vperm.slane %v3698, 0
    %v3702 = vadd.f32 %v3687, %v3700
    %v3703 = vadd.f32 %v3690, %v3700
    %v3704 = vadd.f32 %v3693, %v3700
    %v3705 = vadd.f32 %v3696, %v3700
    %v3708 = vrot.slane %v3704, 7
    %v3709 = vsel %vm1115, %v3708, %v3702
    %3711 = vst [vmem:[#allocation8] sm:$0x3] %v3709
    %v3712 = vsel %vm1109, %v3708, %v3702
    %s3714 = scalar_lea.vmem [#allocation8], 2
    %3715 = vst [vmem:[%s3714 - $0x1] sm:$0x6] %v3712
    %v3716 = vsel %vm1117, %v3708, %v3702
    %s3718 = scalar_lea.vmem [#allocation8], 4
    %3719 = vst [vmem:[%s3718 - $0x2] sm:$0xc] %v3716
    %v3720 = vsel %vm1110, %v3708, %v3702
    %s3722 = scalar_lea.vmem [#allocation8], 6
    %3723 = vst [vmem:[%s3722 - $0x3] sm:$0x18] %v3720
    %v3724 = vsel %vm1119, %v3708, %v3702
    %s3726 = scalar_lea.vmem [#allocation8], 8
    %3727 = vst [vmem:[%s3726 - $0x4] sm:$0x30] %v3724
    %v3728 = vsel %vm1112, %v3708, %v3702
    %s3730 = scalar_lea.vmem [#allocation8], 10
    %3731 = vst [vmem:[%s3730 - $0x5] sm:$0x60] %v3728
    %v3732 = vsel %vm1121, %v3708, %v3702
    %s3734 = scalar_lea.vmem [#allocation8], 12
    %3735 = vst [vmem:[%s3734 - $0x6] sm:$0xc0] %v3732
    %s3738 = scalar_lea.vmem [#allocation8], 14
    %3739 = vst [vmem:[%s3738 - $0x7] sm:$0x80] %v3702
    %3740 = vst [vmem:[%s3738 + $0x1] sm:$0x1] %v3708
    %v3743 = vrot.slane %v3705, 7
    %v3744 = vsel %vm1115, %v3743, %v3703
    %s3746 = scalar_lea.vmem [#allocation8], 16
    %3747 = vst [vmem:[%s3746] sm:$0x3] %v3744
    %v3748 = vsel %vm1109, %v3743, %v3703
    %s3750 = scalar_lea.vmem [#allocation8], 18
    %3751 = vst [vmem:[%s3750 - $0x1] sm:$0x6] %v3748
    %v3752 = vsel %vm1117, %v3743, %v3703
    %s3754 = scalar_lea.vmem [#allocation8], 20
    %3755 = vst [vmem:[%s3754 - $0x2] sm:$0xc] %v3752
    %v3756 = vsel %vm1110, %v3743, %v3703
    %s3758 = scalar_lea.vmem [#allocation8], 22
    %3759 = vst [vmem:[%s3758 - $0x3] sm:$0x18] %v3756
    %v3760 = vsel %vm1119, %v3743, %v3703
    %s3762 = scalar_lea.vmem [#allocation8], 24
    %3763 = vst [vmem:[%s3762 - $0x4] sm:$0x30] %v3760
    %v3764 = vsel %vm1112, %v3743, %v3703
    %s3766 = scalar_lea.vmem [#allocation8], 26
    %3767 = vst [vmem:[%s3766 - $0x5] sm:$0x60] %v3764
    %v3768 = vsel %vm1121, %v3743, %v3703
    %s3770 = scalar_lea.vmem [#allocation8], 28
    %3771 = vst [vmem:[%s3770 - $0x6] sm:$0xc0] %v3768
    %s3774 = scalar_lea.vmem [#allocation8], 30
    %3775 = vst [vmem:[%s3774 - $0x7] sm:$0x80] %v3703
    %3776 = vst [vmem:[%s3774 + $0x1] sm:$0x1] %v3743
    %v3777 = vsel %vm947, %v3574, %v1606
    %v3778 = vld [vmem:[%s18] sm:$0xff]
    %v3779 = vld [vmem:[%s18 + $0x8] sm:$0xff]
    %v3780 = vld [vmem:[%s18 + $0x10] sm:$0xff]
    %v3781 = vld [vmem:[%s18 + $0x18] sm:$0xff]
    %v3782 = vld [vmem:[%s18 + $0x20] sm:$0xff]
    %v3783 = vld [vmem:[%s18 + $0x28] sm:$0xff]
    %v3784 = vld [vmem:[%s18 + $0x30] sm:$0xff]
    %v3785 = vld [vmem:[%s18 + $0x38] sm:$0xff]
    %v3786 = vld [vmem:[%s19] sm:$0x1]
    %v3788 = vperm.slane %v3786, 0
    %v3791 = vsel %vm1516, %v3777, 0
    %3793 = vmatpush.msra.mxu0 0.0
    %3794 = vmatpush.msra.mxu0 0.0
    %3795 = vmatpush.msra.mxu0 0.0
    %3796 = vmatpush.msra.mxu0 0.0
    %3797 = vmatpush.msra.mxu0 0.0
    %3798 = vmatpush.msra.mxu0 0.0
    %3799 = vmatpush.msra.mxu0 0.0
    %3800 = vmatpush.msra.mxu0 0.0
    %3801 = vmatpush.msra.mxu0 %v3785
    %3802 = vmatpush.msra.mxu0 %v3784
    %3803 = vmatpush.msra.mxu0 %v3783
    %3804 = vmatpush.msra.mxu0 %v3782
    %3805 = vmatpush.msra.mxu0 %v3781
    %3806 = vmatpush.msra.mxu0 %v3780
    %3807 = vmatpush.msra.mxu0 %v3779
    %3808 = vmatpush.msra.mxu0 %v3778
    %3809 = vmatmul.f32.gmra.mxu0 %v3791
    %v3810 = vpop.f32.mrf.mxu0
    %v3811 = vadd.f32 %v3788, %v3810
    %3812 = vdwg.mxu0
    %v3813 = vxor.u32 %v3811, 2147483648
    %v3814 = vmul.f32 %v3813, 1.442695
    %v3815 = vpow.pop %v3814
    %v3816 = vadd.f32 %v3815, 1.0
    %v3817 = vrcp.pop %v3816
    %v3818 = vmul.f32 %v3816, %v3817
    %v3819 = vsub.f32 1.0, %v3818
    %v3820 = vmul.f32 %v3817, %v3819
    %v3821 = vadd.f32 %v3817, %v3820
    %vm3822 = vweird.f32 %v3816
    %vm3823 = vweird.f32 %v3817
    %vm3824 = vmor %vm3822, %vm3823
    %v3825 = vsel %vm3824, %v3817, %v3821
    %v3826 = vand.u32 2147483647, %v3816
    %vm3827 = vcmp.eq.f32.partialorder %v3826, 8.507059e+37
    %v3828 = vand.u32 %v3816, 2147483648
    %v3829 = vor.u32 1.1754944e-38, %v3828
    %v3830 = vsel %vm3827, %v3829, %v3825
    %v3831 = vmul.f32 1.0, %v3830
    %v3832 = vtanh.pop %v3811
    %3834 = vrot.lane.b32.xlu0 %v3832, 32
    %v3835 = vpop.permute.xlu0 %3834
    %v3837 = vmul.f32 %v3831, %v3835
    %v3838 = vtanh.pop %v3837
    %3840 = vrot.lane.b32.xlu0 %v3838, 64
    %v3841 = vpop.permute.xlu0 %3840
    %v3843 = vmul.f32 %v3831, %v3841
    %v3844 = vld [vmem:[#allocation8] sm:$0x3]
    %v3845 = vld [vmem:[%s17] sm:$0xff]
    %v3846 = vld [vmem:[%s17 + $0x8] sm:$0xff]
    %v3847 = vld [vmem:[%s17 + $0x10] sm:$0xff]
    %v3848 = vld [vmem:[%s17 + $0x18] sm:$0xff]
    %v3849 = vsel %vm947, 0.0, 0
    %3851 = vmatpush.msra.mxu0 0.0
    %3852 = vmatpush.msra.mxu0 0.0
    %3853 = vmatpush.msra.mxu0 0.0
    %3854 = vmatpush.msra.mxu0 0.0
    %3855 = vmatpush.msra.mxu0 0.0
    %3856 = vmatpush.msra.mxu0 0.0
    %3857 = vmatpush.msra.mxu0 0.0
    %3858 = vmatpush.msra.mxu0 0.0
    %3859 = vmatpush.msra.mxu0 0.0
    %3860 = vmatpush.msra.mxu0 0.0
    %3861 = vmatpush.msra.mxu0 0.0
    %3862 = vmatpush.msra.mxu0 0.0
    %3863 = vmatpush.msra.mxu0 %v3848
    %3864 = vmatpush.msra.mxu0 %v3847
    %3865 = vmatpush.msra.mxu0 %v3846
    %3866 = vmatpush.msra.mxu0 %v3845
    %3867 = vmatmul.f32.gmra.mxu0 %v3849
    %v3868 = vpop.f32.mrf.mxu0
    %v3869 = vadd.f32 0.0, %v3868
    %3870 = vdwg.mxu0
    %v3871 = vadd.f32 %v3844, %v3869
    %v3872 = vxor.u32 %v3871, 2147483648
    %v3873 = vmul.f32 %v3872, 1.442695
    %v3874 = vpow.pop %v3873
    %v3875 = vadd.f32 %v3874, 1.0
    %v3876 = vrcp.pop %v3875
    %v3877 = vmul.f32 %v3875, %v3876
    %v3878 = vsub.f32 1.0, %v3877
    %v3879 = vmul.f32 %v3876, %v3878
    %v3880 = vadd.f32 %v3876, %v3879
    %vm3881 = vweird.f32 %v3875
    %vm3882 = vweird.f32 %v3876
    %vm3883 = vmor %vm3881, %vm3882
    %v3884 = vsel %vm3883, %v3876, %v3880
    %v3885 = vand.u32 2147483647, %v3875
    %vm3886 = vcmp.eq.f32.partialorder %v3885, 8.507059e+37
    %v3887 = vand.u32 %v3875, 2147483648
    %v3888 = vor.u32 1.1754944e-38, %v3887
    %v3889 = vsel %vm3886, %v3888, %v3884
    %v3890 = vmul.f32 1.0, %v3889
    %v3891 = vtanh.pop %v3871
    %v3892 = vmul.f32 %v3890, 0.0
    %3894 = vrot.lane.b32.xlu0 %v3891, 32
    %v3895 = vpop.permute.xlu0 %3894
    %v3897 = vmul.f32 %v3890, %v3895
    %3899 = vrot.lane.b32.xlu0 %v3897, 32
    %v3900 = vpop.permute.xlu0 %3899
    %v3902 = vadd.f32 %v3892, %v3900
    %v3903 = vtanh.pop %v3902
    %3905 = vrot.lane.b32.xlu0 %v3903, 32
    %v3906 = vpop.permute.xlu0 %3905
    %v3908 = vmul.f32 %v3890, %v3906
    %v3909 = vld [vmem:[%s3714] sm:$0x3]
    %3911 = vrot.lane.b32.xlu0 %v3908, 64
    %v3912 = vpop.permute.xlu0 %3911
    %v3913 = vsel %vm947, %v3912, 0
    %3915 = vmatpush.msra.mxu0 0.0
    %3916 = vmatpush.msra.mxu0 0.0
    %3917 = vmatpush.msra.mxu0 0.0
    %3918 = vmatpush.msra.mxu0 0.0
    %3919 = vmatpush.msra.mxu0 0.0
    %3920 = vmatpush.msra.mxu0 0.0
    %3921 = vmatpush.msra.mxu0 0.0
    %3922 = vmatpush.msra.mxu0 0.0
    %3923 = vmatpush.msra.mxu0 0.0
    %3924 = vmatpush.msra.mxu0 0.0
    %3925 = vmatpush.msra.mxu0 0.0
    %3926 = vmatpush.msra.mxu0 0.0
    %3927 = vmatpush.msra.mxu0 %v3848
    %3928 = vmatpush.msra.mxu0 %v3847
    %3929 = vmatpush.msra.mxu0 %v3846
    %3930 = vmatpush.msra.mxu0 %v3845
    %3931 = vmatmul.f32.gmra.mxu0 %v3913
    %v3932 = vpop.f32.mrf.mxu0
    %v3933 = vadd.f32 0.0, %v3932
    %3934 = vdwg.mxu0
    %v3935 = vadd.f32 %v3909, %v3933
    %v3936 = vxor.u32 %v3935, 2147483648
    %v3937 = vmul.f32 %v3936, 1.442695
    %v3938 = vpow.pop %v3937
    %v3939 = vadd.f32 %v3938, 1.0
    %v3940 = vrcp.pop %v3939
    %v3941 = vmul.f32 %v3939, %v3940
    %v3942 = vsub.f32 1.0, %v3941
    %v3943 = vmul.f32 %v3940, %v3942
    %v3944 = vadd.f32 %v3940, %v3943
    %vm3945 = vweird.f32 %v3939
    %vm3946 = vweird.f32 %v3940
    %vm3947 = vmor %vm3945, %vm3946
    %v3948 = vsel %vm3947, %v3940, %v3944
    %v3949 = vand.u32 2147483647, %v3939
    %vm3950 = vcmp.eq.f32.partialorder %v3949, 8.507059e+37
    %v3951 = vand.u32 %v3939, 2147483648
    %v3952 = vor.u32 1.1754944e-38, %v3951
    %v3953 = vsel %vm3950, %v3952, %v3948
    %v3954 = vmul.f32 1.0, %v3953
    %v3955 = vtanh.pop %v3935
    %v3956 = vmul.f32 %v3954, %v3902
    %3958 = vrot.lane.b32.xlu0 %v3955, 32
    %v3959 = vpop.permute.xlu0 %3958
    %v3961 = vmul.f32 %v3954, %v3959
    %3963 = vrot.lane.b32.xlu0 %v3961, 32
    %v3964 = vpop.permute.xlu0 %3963
    %v3966 = vadd.f32 %v3956, %v3964
    %v3967 = vtanh.pop %v3966
    %3969 = vrot.lane.b32.xlu0 %v3967, 32
    %v3970 = vpop.permute.xlu0 %3969
    %v3972 = vmul.f32 %v3954, %v3970
    %v3973 = vld [vmem:[%s3718] sm:$0x3]
    %3975 = vrot.lane.b32.xlu0 %v3972, 64
    %v3976 = vpop.permute.xlu0 %3975
    %v3977 = vsel %vm947, %v3976, 0
    %3979 = vmatpush.msra.mxu0 0.0
    %3980 = vmatpush.msra.mxu0 0.0
    %3981 = vmatpush.msra.mxu0 0.0
    %3982 = vmatpush.msra.mxu0 0.0
    %3983 = vmatpush.msra.mxu0 0.0
    %3984 = vmatpush.msra.mxu0 0.0
    %3985 = vmatpush.msra.mxu0 0.0
    %3986 = vmatpush.msra.mxu0 0.0
    %3987 = vmatpush.msra.mxu0 0.0
    %3988 = vmatpush.msra.mxu0 0.0
    %3989 = vmatpush.msra.mxu0 0.0
    %3990 = vmatpush.msra.mxu0 0.0
    %3991 = vmatpush.msra.mxu0 %v3848
    %3992 = vmatpush.msra.mxu0 %v3847
    %3993 = vmatpush.msra.mxu0 %v3846
    %3994 = vmatpush.msra.mxu0 %v3845
    %3995 = vmatmul.f32.gmra.mxu0 %v3977
    %v3996 = vpop.f32.mrf.mxu0
    %v3997 = vadd.f32 0.0, %v3996
    %3998 = vdwg.mxu0
    %v3999 = vadd.f32 %v3973, %v3997
    %v4000 = vxor.u32 %v3999, 2147483648
    %v4001 = vmul.f32 %v4000, 1.442695
    %v4002 = vpow.pop %v4001
    %v4003 = vadd.f32 %v4002, 1.0
    %v4004 = vrcp.pop %v4003
    %v4005 = vmul.f32 %v4003, %v4004
    %v4006 = vsub.f32 1.0, %v4005
    %v4007 = vmul.f32 %v4004, %v4006
    %v4008 = vadd.f32 %v4004, %v4007
    %vm4009 = vweird.f32 %v4003
    %vm4010 = vweird.f32 %v4004
    %vm4011 = vmor %vm4009, %vm4010
    %v4012 = vsel %vm4011, %v4004, %v4008
    %v4013 = vand.u32 2147483647, %v4003
    %vm4014 = vcmp.eq.f32.partialorder %v4013, 8.507059e+37
    %v4015 = vand.u32 %v4003, 2147483648
    %v4016 = vor.u32 1.1754944e-38, %v4015
    %v4017 = vsel %vm4014, %v4016, %v4012
    %v4018 = vmul.f32 1.0, %v4017
    %v4019 = vtanh.pop %v3999
    %v4020 = vmul.f32 %v4018, %v3966
    %4022 = vrot.lane.b32.xlu0 %v4019, 32
    %v4023 = vpop.permute.xlu0 %4022
    %v4025 = vmul.f32 %v4018, %v4023
    %4027 = vrot.lane.b32.xlu0 %v4025, 32
    %v4028 = vpop.permute.xlu0 %4027
    %v4030 = vadd.f32 %v4020, %v4028
    %v4031 = vtanh.pop %v4030
    %4033 = vrot.lane.b32.xlu0 %v4031, 32
    %v4034 = vpop.permute.xlu0 %4033
    %v4036 = vmul.f32 %v4018, %v4034
    %v4037 = vld [vmem:[%s3722] sm:$0x3]
    %4039 = vrot.lane.b32.xlu0 %v4036, 64
    %v4040 = vpop.permute.xlu0 %4039
    %v4041 = vsel %vm947, %v4040, 0
    %4043 = vmatpush.msra.mxu0 0.0
    %4044 = vmatpush.msra.mxu0 0.0
    %4045 = vmatpush.msra.mxu0 0.0
    %4046 = vmatpush.msra.mxu0 0.0
    %4047 = vmatpush.msra.mxu0 0.0
    %4048 = vmatpush.msra.mxu0 0.0
    %4049 = vmatpush.msra.mxu0 0.0
    %4050 = vmatpush.msra.mxu0 0.0
    %4051 = vmatpush.msra.mxu0 0.0
    %4052 = vmatpush.msra.mxu0 0.0
    %4053 = vmatpush.msra.mxu0 0.0
    %4054 = vmatpush.msra.mxu0 0.0
    %4055 = vmatpush.msra.mxu0 %v3848
    %4056 = vmatpush.msra.mxu0 %v3847
    %4057 = vmatpush.msra.mxu0 %v3846
    %4058 = vmatpush.msra.mxu0 %v3845
    %4059 = vmatmul.f32.gmra.mxu0 %v4041
    %v4060 = vpop.f32.mrf.mxu0
    %v4061 = vadd.f32 0.0, %v4060
    %4062 = vdwg.mxu0
    %v4063 = vadd.f32 %v4037, %v4061
    %v4064 = vxor.u32 %v4063, 2147483648
    %v4065 = vmul.f32 %v4064, 1.442695
    %v4066 = vpow.pop %v4065
    %v4067 = vadd.f32 %v4066, 1.0
    %v4068 = vrcp.pop %v4067
    %v4069 = vmul.f32 %v4067, %v4068
    %v4070 = vsub.f32 1.0, %v4069
    %v4071 = vmul.f32 %v4068, %v4070
    %v4072 = vadd.f32 %v4068, %v4071
    %vm4073 = vweird.f32 %v4067
    %vm4074 = vweird.f32 %v4068
    %vm4075 = vmor %vm4073, %vm4074
    %v4076 = vsel %vm4075, %v4068, %v4072
    %v4077 = vand.u32 2147483647, %v4067
    %vm4078 = vcmp.eq.f32.partialorder %v4077, 8.507059e+37
    %v4079 = vand.u32 %v4067, 2147483648
    %v4080 = vor.u32 1.1754944e-38, %v4079
    %v4081 = vsel %vm4078, %v4080, %v4076
    %v4082 = vmul.f32 1.0, %v4081
    %v4083 = vtanh.pop %v4063
    %v4084 = vmul.f32 %v4082, %v4030
    %4086 = vrot.lane.b32.xlu0 %v4083, 32
    %v4087 = vpop.permute.xlu0 %4086
    %v4089 = vmul.f32 %v4082, %v4087
    %4091 = vrot.lane.b32.xlu0 %v4089, 32
    %v4092 = vpop.permute.xlu0 %4091
    %v4094 = vadd.f32 %v4084, %v4092
    %v4095 = vtanh.pop %v4094
    %4097 = vrot.lane.b32.xlu0 %v4095, 32
    %v4098 = vpop.permute.xlu0 %4097
    %v4100 = vmul.f32 %v4082, %v4098
    %v4101 = vld [vmem:[%s3726] sm:$0x3]
    %4103 = vrot.lane.b32.xlu0 %v4100, 64
    %v4104 = vpop.permute.xlu0 %4103
    %v4105 = vsel %vm947, %v4104, 0
    %4107 = vmatpush.msra.mxu0 0.0
    %4108 = vmatpush.msra.mxu0 0.0
    %4109 = vmatpush.msra.mxu0 0.0
    %4110 = vmatpush.msra.mxu0 0.0
    %4111 = vmatpush.msra.mxu0 0.0
    %4112 = vmatpush.msra.mxu0 0.0
    %4113 = vmatpush.msra.mxu0 0.0
    %4114 = vmatpush.msra.mxu0 0.0
    %4115 = vmatpush.msra.mxu0 0.0
    %4116 = vmatpush.msra.mxu0 0.0
    %4117 = vmatpush.msra.mxu0 0.0
    %4118 = vmatpush.msra.mxu0 0.0
    %4119 = vmatpush.msra.mxu0 %v3848
    %4120 = vmatpush.msra.mxu0 %v3847
    %4121 = vmatpush.msra.mxu0 %v3846
    %4122 = vmatpush.msra.mxu0 %v3845
    %4123 = vmatmul.f32.gmra.mxu0 %v4105
    %v4124 = vpop.f32.mrf.mxu0
    %v4125 = vadd.f32 0.0, %v4124
    %4126 = vdwg.mxu0
    %v4127 = vadd.f32 %v4101, %v4125
    %v4128 = vxor.u32 %v4127, 2147483648
    %v4129 = vmul.f32 %v4128, 1.442695
    %v4130 = vpow.pop %v4129
    %v4131 = vadd.f32 %v4130, 1.0
    %v4132 = vrcp.pop %v4131
    %v4133 = vmul.f32 %v4131, %v4132
    %v4134 = vsub.f32 1.0, %v4133
    %v4135 = vmul.f32 %v4132, %v4134
    %v4136 = vadd.f32 %v4132, %v4135
    %vm4137 = vweird.f32 %v4131
    %vm4138 = vweird.f32 %v4132
    %vm4139 = vmor %vm4137, %vm4138
    %v4140 = vsel %vm4139, %v4132, %v4136
    %v4141 = vand.u32 2147483647, %v4131
    %vm4142 = vcmp.eq.f32.partialorder %v4141, 8.507059e+37
    %v4143 = vand.u32 %v4131, 2147483648
    %v4144 = vor.u32 1.1754944e-38, %v4143
    %v4145 = vsel %vm4142, %v4144, %v4140
    %v4146 = vmul.f32 1.0, %v4145
    %v4147 = vtanh.pop %v4127
    %v4148 = vmul.f32 %v4146, %v4094
    %4150 = vrot.lane.b32.xlu0 %v4147, 32
    %v4151 = vpop.permute.xlu0 %4150
    %v4153 = vmul.f32 %v4146, %v4151
    %4155 = vrot.lane.b32.xlu0 %v4153, 32
    %v4156 = vpop.permute.xlu0 %4155
    %v4158 = vadd.f32 %v4148, %v4156
    %v4159 = vtanh.pop %v4158
    %4161 = vrot.lane.b32.xlu0 %v4159, 32
    %v4162 = vpop.permute.xlu0 %4161
    %v4164 = vmul.f32 %v4146, %v4162
    %v4165 = vld [vmem:[%s3730] sm:$0x3]
    %4167 = vrot.lane.b32.xlu0 %v4164, 64
    %v4168 = vpop.permute.xlu0 %4167
    %v4169 = vsel %vm947, %v4168, 0
    %4171 = vmatpush.msra.mxu0 0.0
    %4172 = vmatpush.msra.mxu0 0.0
    %4173 = vmatpush.msra.mxu0 0.0
    %4174 = vmatpush.msra.mxu0 0.0
    %4175 = vmatpush.msra.mxu0 0.0
    %4176 = vmatpush.msra.mxu0 0.0
    %4177 = vmatpush.msra.mxu0 0.0
    %4178 = vmatpush.msra.mxu0 0.0
    %4179 = vmatpush.msra.mxu0 0.0
    %4180 = vmatpush.msra.mxu0 0.0
    %4181 = vmatpush.msra.mxu0 0.0
    %4182 = vmatpush.msra.mxu0 0.0
    %4183 = vmatpush.msra.mxu0 %v3848
    %4184 = vmatpush.msra.mxu0 %v3847
    %4185 = vmatpush.msra.mxu0 %v3846
    %4186 = vmatpush.msra.mxu0 %v3845
    %4187 = vmatmul.f32.gmra.mxu0 %v4169
    %v4188 = vpop.f32.mrf.mxu0
    %v4189 = vadd.f32 0.0, %v4188
    %4190 = vdwg.mxu0
    %v4191 = vadd.f32 %v4165, %v4189
    %v4192 = vxor.u32 %v4191, 2147483648
    %v4193 = vmul.f32 %v4192, 1.442695
    %v4194 = vpow.pop %v4193
    %v4195 = vadd.f32 %v4194, 1.0
    %v4196 = vrcp.pop %v4195
    %v4197 = vmul.f32 %v4195, %v4196
    %v4198 = vsub.f32 1.0, %v4197
    %v4199 = vmul.f32 %v4196, %v4198
    %v4200 = vadd.f32 %v4196, %v4199
    %vm4201 = vweird.f32 %v4195
    %vm4202 = vweird.f32 %v4196
    %vm4203 = vmor %vm4201, %vm4202
    %v4204 = vsel %vm4203, %v4196, %v4200
    %v4205 = vand.u32 2147483647, %v4195
    %vm4206 = vcmp.eq.f32.partialorder %v4205, 8.507059e+37
    %v4207 = vand.u32 %v4195, 2147483648
    %v4208 = vor.u32 1.1754944e-38, %v4207
    %v4209 = vsel %vm4206, %v4208, %v4204
    %v4210 = vmul.f32 1.0, %v4209
    %v4211 = vtanh.pop %v4191
    %v4212 = vmul.f32 %v4210, %v4158
    %4214 = vrot.lane.b32.xlu0 %v4211, 32
    %v4215 = vpop.permute.xlu0 %4214
    %v4217 = vmul.f32 %v4210, %v4215
    %4219 = vrot.lane.b32.xlu0 %v4217, 32
    %v4220 = vpop.permute.xlu0 %4219
    %v4222 = vadd.f32 %v4212, %v4220
    %v4223 = vtanh.pop %v4222
    %4225 = vrot.lane.b32.xlu0 %v4223, 32
    %v4226 = vpop.permute.xlu0 %4225
    %v4228 = vmul.f32 %v4210, %v4226
    %v4229 = vld [vmem:[%s3734] sm:$0x3]
    %4231 = vrot.lane.b32.xlu0 %v4228, 64
    %v4232 = vpop.permute.xlu0 %4231
    %v4233 = vsel %vm947, %v4232, 0
    %4235 = vmatpush.msra.mxu0 0.0
    %4236 = vmatpush.msra.mxu0 0.0
    %4237 = vmatpush.msra.mxu0 0.0
    %4238 = vmatpush.msra.mxu0 0.0
    %4239 = vmatpush.msra.mxu0 0.0
    %4240 = vmatpush.msra.mxu0 0.0
    %4241 = vmatpush.msra.mxu0 0.0
    %4242 = vmatpush.msra.mxu0 0.0
    %4243 = vmatpush.msra.mxu0 0.0
    %4244 = vmatpush.msra.mxu0 0.0
    %4245 = vmatpush.msra.mxu0 0.0
    %4246 = vmatpush.msra.mxu0 0.0
    %4247 = vmatpush.msra.mxu0 %v3848
    %4248 = vmatpush.msra.mxu0 %v3847
    %4249 = vmatpush.msra.mxu0 %v3846
    %4250 = vmatpush.msra.mxu0 %v3845
    %4251 = vmatmul.f32.gmra.mxu0 %v4233
    %v4252 = vpop.f32.mrf.mxu0
    %v4253 = vadd.f32 0.0, %v4252
    %4254 = vdwg.mxu0
    %v4255 = vadd.f32 %v4229, %v4253
    %v4256 = vxor.u32 %v4255, 2147483648
    %v4257 = vmul.f32 %v4256, 1.442695
    %v4258 = vpow.pop %v4257
    %v4259 = vadd.f32 %v4258, 1.0
    %v4260 = vrcp.pop %v4259
    %v4261 = vmul.f32 %v4259, %v4260
    %v4262 = vsub.f32 1.0, %v4261
    %v4263 = vmul.f32 %v4260, %v4262
    %v4264 = vadd.f32 %v4260, %v4263
    %vm4265 = vweird.f32 %v4259
    %vm4266 = vweird.f32 %v4260
    %vm4267 = vmor %vm4265, %vm4266
    %v4268 = vsel %vm4267, %v4260, %v4264
    %v4269 = vand.u32 2147483647, %v4259
    %vm4270 = vcmp.eq.f32.partialorder %v4269, 8.507059e+37
    %v4271 = vand.u32 %v4259, 2147483648
    %v4272 = vor.u32 1.1754944e-38, %v4271
    %v4273 = vsel %vm4270, %v4272, %v4268
    %v4274 = vmul.f32 1.0, %v4273
    %v4275 = vtanh.pop %v4255
    %v4276 = vmul.f32 %v4274, %v4222
    %4278 = vrot.lane.b32.xlu0 %v4275, 32
    %v4279 = vpop.permute.xlu0 %4278
    %v4281 = vmul.f32 %v4274, %v4279
    %4283 = vrot.lane.b32.xlu0 %v4281, 32
    %v4284 = vpop.permute.xlu0 %4283
    %v4286 = vadd.f32 %v4276, %v4284
    %v4287 = vtanh.pop %v4286
    %4289 = vrot.lane.b32.xlu0 %v4287, 32
    %v4290 = vpop.permute.xlu0 %4289
    %v4292 = vmul.f32 %v4274, %v4290
    %v4293 = vld [vmem:[%s3738] sm:$0x3]
    %4295 = vrot.lane.b32.xlu0 %v4292, 64
    %v4296 = vpop.permute.xlu0 %4295
    %v4297 = vsel %vm947, %v4296, 0
    %4299 = vmatpush.msra.mxu0 0.0
    %4300 = vmatpush.msra.mxu0 0.0
    %4301 = vmatpush.msra.mxu0 0.0
    %4302 = vmatpush.msra.mxu0 0.0
    %4303 = vmatpush.msra.mxu0 0.0
    %4304 = vmatpush.msra.mxu0 0.0
    %4305 = vmatpush.msra.mxu0 0.0
    %4306 = vmatpush.msra.mxu0 0.0
    %4307 = vmatpush.msra.mxu0 0.0
    %4308 = vmatpush.msra.mxu0 0.0
    %4309 = vmatpush.msra.mxu0 0.0
    %4310 = vmatpush.msra.mxu0 0.0
    %4311 = vmatpush.msra.mxu0 %v3848
    %4312 = vmatpush.msra.mxu0 %v3847
    %4313 = vmatpush.msra.mxu0 %v3846
    %4314 = vmatpush.msra.mxu0 %v3845
    %4315 = vmatmul.f32.gmra.mxu0 %v4297
    %v4316 = vpop.f32.mrf.mxu0
    %v4317 = vadd.f32 0.0, %v4316
    %4318 = vdwg.mxu0
    %v4319 = vadd.f32 %v4293, %v4317
    %v4320 = vxor.u32 %v4319, 2147483648
    %v4321 = vmul.f32 %v4320, 1.442695
    %v4322 = vpow.pop %v4321
    %v4323 = vadd.f32 %v4322, 1.0
    %v4324 = vrcp.pop %v4323
    %v4325 = vmul.f32 %v4323, %v4324
    %v4326 = vsub.f32 1.0, %v4325
    %v4327 = vmul.f32 %v4324, %v4326
    %v4328 = vadd.f32 %v4324, %v4327
    %vm4329 = vweird.f32 %v4323
    %vm4330 = vweird.f32 %v4324
    %vm4331 = vmor %vm4329, %vm4330
    %v4332 = vsel %vm4331, %v4324, %v4328
    %v4333 = vand.u32 2147483647, %v4323
    %vm4334 = vcmp.eq.f32.partialorder %v4333, 8.507059e+37
    %v4335 = vand.u32 %v4323, 2147483648
    %v4336 = vor.u32 1.1754944e-38, %v4335
    %v4337 = vsel %vm4334, %v4336, %v4332
    %v4338 = vmul.f32 1.0, %v4337
    %v4339 = vtanh.pop %v4319
    %v4340 = vmul.f32 %v4338, %v4286
    %4342 = vrot.lane.b32.xlu0 %v4339, 32
    %v4343 = vpop.permute.xlu0 %4342
    %v4345 = vmul.f32 %v4338, %v4343
    %4347 = vrot.lane.b32.xlu0 %v4345, 32
    %v4348 = vpop.permute.xlu0 %4347
    %v4350 = vadd.f32 %v4340, %v4348
    %v4351 = vtanh.pop %v4350
    %4353 = vrot.lane.b32.xlu0 %v4351, 32
    %v4354 = vpop.permute.xlu0 %4353
    %v4356 = vmul.f32 %v4338, %v4354
    %v4357 = vld [vmem:[%s3746] sm:$0x3]
    %4359 = vrot.lane.b32.xlu0 %v4356, 64
    %v4360 = vpop.permute.xlu0 %4359
    %v4361 = vsel %vm947, %v4360, 0
    %4363 = vmatpush.msra.mxu0 0.0
    %4364 = vmatpush.msra.mxu0 0.0
    %4365 = vmatpush.msra.mxu0 0.0
    %4366 = vmatpush.msra.mxu0 0.0
    %4367 = vmatpush.msra.mxu0 0.0
    %4368 = vmatpush.msra.mxu0 0.0
    %4369 = vmatpush.msra.mxu0 0.0
    %4370 = vmatpush.msra.mxu0 0.0
    %4371 = vmatpush.msra.mxu0 0.0
    %4372 = vmatpush.msra.mxu0 0.0
    %4373 = vmatpush.msra.mxu0 0.0
    %4374 = vmatpush.msra.mxu0 0.0
    %4375 = vmatpush.msra.mxu0 %v3848
    %4376 = vmatpush.msra.mxu0 %v3847
    %4377 = vmatpush.msra.mxu0 %v3846
    %4378 = vmatpush.msra.mxu0 %v3845
    %4379 = vmatmul.f32.gmra.mxu0 %v4361
    %v4380 = vpop.f32.mrf.mxu0
    %v4381 = vadd.f32 0.0, %v4380
    %4382 = vdwg.mxu0
    %v4383 = vadd.f32 %v4357, %v4381
    %v4384 = vxor.u32 %v4383, 2147483648
    %v4385 = vmul.f32 %v4384, 1.442695
    %v4386 = vpow.pop %v4385
    %v4387 = vadd.f32 %v4386, 1.0
    %v4388 = vrcp.pop %v4387
    %v4389 = vmul.f32 %v4387, %v4388
    %v4390 = vsub.f32 1.0, %v4389
    %v4391 = vmul.f32 %v4388, %v4390
    %v4392 = vadd.f32 %v4388, %v4391
    %vm4393 = vweird.f32 %v4387
    %vm4394 = vweird.f32 %v4388
    %vm4395 = vmor %vm4393, %vm4394
    %v4396 = vsel %vm4395, %v4388, %v4392
    %v4397 = vand.u32 2147483647, %v4387
    %vm4398 = vcmp.eq.f32.partialorder %v4397, 8.507059e+37
    %v4399 = vand.u32 %v4387, 2147483648
    %v4400 = vor.u32 1.1754944e-38, %v4399
    %v4401 = vsel %vm4398, %v4400, %v4396
    %v4402 = vmul.f32 1.0, %v4401
    %v4403 = vtanh.pop %v4383
    %v4404 = vmul.f32 %v4402, %v4350
    %4406 = vrot.lane.b32.xlu0 %v4403, 32
    %v4407 = vpop.permute.xlu0 %4406
    %v4409 = vmul.f32 %v4402, %v4407
    %4411 = vrot.lane.b32.xlu0 %v4409, 32
    %v4412 = vpop.permute.xlu0 %4411
    %v4414 = vadd.f32 %v4404, %v4412
    %v4415 = vtanh.pop %v4414
    %4417 = vrot.lane.b32.xlu0 %v4415, 32
    %v4418 = vpop.permute.xlu0 %4417
    %v4420 = vmul.f32 %v4402, %v4418
    %v4421 = vld [vmem:[%s3750] sm:$0x3]
    %4423 = vrot.lane.b32.xlu0 %v4420, 64
    %v4424 = vpop.permute.xlu0 %4423
    %v4425 = vsel %vm947, %v4424, 0
    %4427 = vmatpush.msra.mxu0 0.0
    %4428 = vmatpush.msra.mxu0 0.0
    %4429 = vmatpush.msra.mxu0 0.0
    %4430 = vmatpush.msra.mxu0 0.0
    %4431 = vmatpush.msra.mxu0 0.0
    %4432 = vmatpush.msra.mxu0 0.0
    %4433 = vmatpush.msra.mxu0 0.0
    %4434 = vmatpush.msra.mxu0 0.0
    %4435 = vmatpush.msra.mxu0 0.0
    %4436 = vmatpush.msra.mxu0 0.0
    %4437 = vmatpush.msra.mxu0 0.0
    %4438 = vmatpush.msra.mxu0 0.0
    %4439 = vmatpush.msra.mxu0 %v3848
    %4440 = vmatpush.msra.mxu0 %v3847
    %4441 = vmatpush.msra.mxu0 %v3846
    %4442 = vmatpush.msra.mxu0 %v3845
    %4443 = vmatmul.f32.gmra.mxu0 %v4425
    %v4444 = vpop.f32.mrf.mxu0
    %v4445 = vadd.f32 0.0, %v4444
    %4446 = vdwg.mxu0
    %v4447 = vadd.f32 %v4421, %v4445
    %v4448 = vxor.u32 %v4447, 2147483648
    %v4449 = vmul.f32 %v4448, 1.442695
    %v4450 = vpow.pop %v4449
    %v4451 = vadd.f32 %v4450, 1.0
    %v4452 = vrcp.pop %v4451
    %v4453 = vmul.f32 %v4451, %v4452
    %v4454 = vsub.f32 1.0, %v4453
    %v4455 = vmul.f32 %v4452, %v4454
    %v4456 = vadd.f32 %v4452, %v4455
    %vm4457 = vweird.f32 %v4451
    %vm4458 = vweird.f32 %v4452
    %vm4459 = vmor %vm4457, %vm4458
    %v4460 = vsel %vm4459, %v4452, %v4456
    %v4461 = vand.u32 2147483647, %v4451
    %vm4462 = vcmp.eq.f32.partialorder %v4461, 8.507059e+37
    %v4463 = vand.u32 %v4451, 2147483648
    %v4464 = vor.u32 1.1754944e-38, %v4463
    %v4465 = vsel %vm4462, %v4464, %v4460
    %v4466 = vmul.f32 1.0, %v4465
    %v4467 = vtanh.pop %v4447
    %v4468 = vmul.f32 %v4466, %v4414
    %4470 = vrot.lane.b32.xlu0 %v4467, 32
    %v4471 = vpop.permute.xlu0 %4470
    %v4473 = vmul.f32 %v4466, %v4471
    %4475 = vrot.lane.b32.xlu0 %v4473, 32
    %v4476 = vpop.permute.xlu0 %4475
    %v4478 = vadd.f32 %v4468, %v4476
    %v4479 = vtanh.pop %v4478
    %4481 = vrot.lane.b32.xlu0 %v4479, 32
    %v4482 = vpop.permute.xlu0 %4481
    %v4484 = vmul.f32 %v4466, %v4482
    %v4485 = vld [vmem:[%s3754] sm:$0x3]
    %4487 = vrot.lane.b32.xlu0 %v4484, 64
    %v4488 = vpop.permute.xlu0 %4487
    %v4489 = vsel %vm947, %v4488, 0
    %4491 = vmatpush.msra.mxu0 0.0
    %4492 = vmatpush.msra.mxu0 0.0
    %4493 = vmatpush.msra.mxu0 0.0
    %4494 = vmatpush.msra.mxu0 0.0
    %4495 = vmatpush.msra.mxu0 0.0
    %4496 = vmatpush.msra.mxu0 0.0
    %4497 = vmatpush.msra.mxu0 0.0
    %4498 = vmatpush.msra.mxu0 0.0
    %4499 = vmatpush.msra.mxu0 0.0
    %4500 = vmatpush.msra.mxu0 0.0
    %4501 = vmatpush.msra.mxu0 0.0
    %4502 = vmatpush.msra.mxu0 0.0
    %4503 = vmatpush.msra.mxu0 %v3848
    %4504 = vmatpush.msra.mxu0 %v3847
    %4505 = vmatpush.msra.mxu0 %v3846
    %4506 = vmatpush.msra.mxu0 %v3845
    %4507 = vmatmul.f32.gmra.mxu0 %v4489
    %v4508 = vpop.f32.mrf.mxu0
    %v4509 = vadd.f32 0.0, %v4508
    %4510 = vdwg.mxu0
    %v4511 = vadd.f32 %v4485, %v4509
    %v4512 = vxor.u32 %v4511, 2147483648
    %v4513 = vmul.f32 %v4512, 1.442695
    %v4514 = vpow.pop %v4513
    %v4515 = vadd.f32 %v4514, 1.0
    %v4516 = vrcp.pop %v4515
    %v4517 = vmul.f32 %v4515, %v4516
    %v4518 = vsub.f32 1.0, %v4517
    %v4519 = vmul.f32 %v4516, %v4518
    %v4520 = vadd.f32 %v4516, %v4519
    %vm4521 = vweird.f32 %v4515
    %vm4522 = vweird.f32 %v4516
    %vm4523 = vmor %vm4521, %vm4522
    %v4524 = vsel %vm4523, %v4516, %v4520
    %v4525 = vand.u32 2147483647, %v4515
    %vm4526 = vcmp.eq.f32.partialorder %v4525, 8.507059e+37
    %v4527 = vand.u32 %v4515, 2147483648
    %v4528 = vor.u32 1.1754944e-38, %v4527
    %v4529 = vsel %vm4526, %v4528, %v4524
    %v4530 = vmul.f32 1.0, %v4529
    %v4531 = vtanh.pop %v4511
    %v4532 = vmul.f32 %v4530, %v4478
    %4534 = vrot.lane.b32.xlu0 %v4531, 32
    %v4535 = vpop.permute.xlu0 %4534
    %v4537 = vmul.f32 %v4530, %v4535
    %4539 = vrot.lane.b32.xlu0 %v4537, 32
    %v4540 = vpop.permute.xlu0 %4539
    %v4542 = vadd.f32 %v4532, %v4540
    %v4543 = vtanh.pop %v4542
    %4545 = vrot.lane.b32.xlu0 %v4543, 32
    %v4546 = vpop.permute.xlu0 %4545
    %v4548 = vmul.f32 %v4530, %v4546
    %v4549 = vld [vmem:[%s3758] sm:$0x3]
    %4551 = vrot.lane.b32.xlu0 %v4548, 64
    %v4552 = vpop.permute.xlu0 %4551
    %v4553 = vsel %vm947, %v4552, 0
    %4555 = vmatpush.msra.mxu0 0.0
    %4556 = vmatpush.msra.mxu0 0.0
    %4557 = vmatpush.msra.mxu0 0.0
    %4558 = vmatpush.msra.mxu0 0.0
    %4559 = vmatpush.msra.mxu0 0.0
    %4560 = vmatpush.msra.mxu0 0.0
    %4561 = vmatpush.msra.mxu0 0.0
    %4562 = vmatpush.msra.mxu0 0.0
    %4563 = vmatpush.msra.mxu0 0.0
    %4564 = vmatpush.msra.mxu0 0.0
    %4565 = vmatpush.msra.mxu0 0.0
    %4566 = vmatpush.msra.mxu0 0.0
    %4567 = vmatpush.msra.mxu0 %v3848
    %4568 = vmatpush.msra.mxu0 %v3847
    %4569 = vmatpush.msra.mxu0 %v3846
    %4570 = vmatpush.msra.mxu0 %v3845
    %4571 = vmatmul.f32.gmra.mxu0 %v4553
    %v4572 = vpop.f32.mrf.mxu0
    %v4573 = vadd.f32 0.0, %v4572
    %4574 = vdwg.mxu0
    %v4575 = vadd.f32 %v4549, %v4573
    %v4576 = vxor.u32 %v4575, 2147483648
    %v4577 = vmul.f32 %v4576, 1.442695
    %v4578 = vpow.pop %v4577
    %v4579 = vadd.f32 %v4578, 1.0
    %v4580 = vrcp.pop %v4579
    %v4581 = vmul.f32 %v4579, %v4580
    %v4582 = vsub.f32 1.0, %v4581
    %v4583 = vmul.f32 %v4580, %v4582
    %v4584 = vadd.f32 %v4580, %v4583
    %vm4585 = vweird.f32 %v4579
    %vm4586 = vweird.f32 %v4580
    %vm4587 = vmor %vm4585, %vm4586
    %v4588 = vsel %vm4587, %v4580, %v4584
    %v4589 = vand.u32 2147483647, %v4579
    %vm4590 = vcmp.eq.f32.partialorder %v4589, 8.507059e+37
    %v4591 = vand.u32 %v4579, 2147483648
    %v4592 = vor.u32 1.1754944e-38, %v4591
    %v4593 = vsel %vm4590, %v4592, %v4588
    %v4594 = vmul.f32 1.0, %v4593
    %v4595 = vtanh.pop %v4575
    %v4596 = vmul.f32 %v4594, %v4542
    %4598 = vrot.lane.b32.xlu0 %v4595, 32
    %v4599 = vpop.permute.xlu0 %4598
    %v4601 = vmul.f32 %v4594, %v4599
    %4603 = vrot.lane.b32.xlu0 %v4601, 32
    %v4604 = vpop.permute.xlu0 %4603
    %v4606 = vadd.f32 %v4596, %v4604
    %v4607 = vtanh.pop %v4606
    %4609 = vrot.lane.b32.xlu0 %v4607, 32
    %v4610 = vpop.permute.xlu0 %4609
    %v4612 = vmul.f32 %v4594, %v4610
    %v4613 = vld [vmem:[%s3762] sm:$0x3]
    %4615 = vrot.lane.b32.xlu0 %v4612, 64
    %v4616 = vpop.permute.xlu0 %4615
    %v4617 = vsel %vm947, %v4616, 0
    %4619 = vmatpush.msra.mxu0 0.0
    %4620 = vmatpush.msra.mxu0 0.0
    %4621 = vmatpush.msra.mxu0 0.0
    %4622 = vmatpush.msra.mxu0 0.0
    %4623 = vmatpush.msra.mxu0 0.0
    %4624 = vmatpush.msra.mxu0 0.0
    %4625 = vmatpush.msra.mxu0 0.0
    %4626 = vmatpush.msra.mxu0 0.0
    %4627 = vmatpush.msra.mxu0 0.0
    %4628 = vmatpush.msra.mxu0 0.0
    %4629 = vmatpush.msra.mxu0 0.0
    %4630 = vmatpush.msra.mxu0 0.0
    %4631 = vmatpush.msra.mxu0 %v3848
    %4632 = vmatpush.msra.mxu0 %v3847
    %4633 = vmatpush.msra.mxu0 %v3846
    %4634 = vmatpush.msra.mxu0 %v3845
    %4635 = vmatmul.f32.gmra.mxu0 %v4617
    %v4636 = vpop.f32.mrf.mxu0
    %v4637 = vadd.f32 0.0, %v4636
    %4638 = vdwg.mxu0
    %v4639 = vadd.f32 %v4613, %v4637
    %v4640 = vxor.u32 %v4639, 2147483648
    %v4641 = vmul.f32 %v4640, 1.442695
    %v4642 = vpow.pop %v4641
    %v4643 = vadd.f32 %v4642, 1.0
    %v4644 = vrcp.pop %v4643
    %v4645 = vmul.f32 %v4643, %v4644
    %v4646 = vsub.f32 1.0, %v4645
    %v4647 = vmul.f32 %v4644, %v4646
    %v4648 = vadd.f32 %v4644, %v4647
    %vm4649 = vweird.f32 %v4643
    %vm4650 = vweird.f32 %v4644
    %vm4651 = vmor %vm4649, %vm4650
    %v4652 = vsel %vm4651, %v4644, %v4648
    %v4653 = vand.u32 2147483647, %v4643
    %vm4654 = vcmp.eq.f32.partialorder %v4653, 8.507059e+37
    %v4655 = vand.u32 %v4643, 2147483648
    %v4656 = vor.u32 1.1754944e-38, %v4655
    %v4657 = vsel %vm4654, %v4656, %v4652
    %v4658 = vmul.f32 1.0, %v4657
    %v4659 = vtanh.pop %v4639
    %v4660 = vmul.f32 %v4658, %v4606
    %4662 = vrot.lane.b32.xlu0 %v4659, 32
    %v4663 = vpop.permute.xlu0 %4662
    %v4665 = vmul.f32 %v4658, %v4663
    %4667 = vrot.lane.b32.xlu0 %v4665, 32
    %v4668 = vpop.permute.xlu0 %4667
    %v4670 = vadd.f32 %v4660, %v4668
    %v4671 = vtanh.pop %v4670
    %4673 = vrot.lane.b32.xlu0 %v4671, 32
    %v4674 = vpop.permute.xlu0 %4673
    %v4676 = vmul.f32 %v4658, %v4674
    %v4677 = vld [vmem:[%s3766] sm:$0x3]
    %4679 = vrot.lane.b32.xlu0 %v4676, 64
    %v4680 = vpop.permute.xlu0 %4679
    %v4681 = vsel %vm947, %v4680, 0
    %4683 = vmatpush.msra.mxu0 0.0
    %4684 = vmatpush.msra.mxu0 0.0
    %4685 = vmatpush.msra.mxu0 0.0
    %4686 = vmatpush.msra.mxu0 0.0
    %4687 = vmatpush.msra.mxu0 0.0
    %4688 = vmatpush.msra.mxu0 0.0
    %4689 = vmatpush.msra.mxu0 0.0
    %4690 = vmatpush.msra.mxu0 0.0
    %4691 = vmatpush.msra.mxu0 0.0
    %4692 = vmatpush.msra.mxu0 0.0
    %4693 = vmatpush.msra.mxu0 0.0
    %4694 = vmatpush.msra.mxu0 0.0
    %4695 = vmatpush.msra.mxu0 %v3848
    %4696 = vmatpush.msra.mxu0 %v3847
    %4697 = vmatpush.msra.mxu0 %v3846
    %4698 = vmatpush.msra.mxu0 %v3845
    %4699 = vmatmul.f32.gmra.mxu0 %v4681
    %v4700 = vpop.f32.mrf.mxu0
    %v4701 = vadd.f32 0.0, %v4700
    %4702 = vdwg.mxu0
    %v4703 = vadd.f32 %v4677, %v4701
    %v4704 = vxor.u32 %v4703, 2147483648
    %v4705 = vmul.f32 %v4704, 1.442695
    %v4706 = vpow.pop %v4705
    %v4707 = vadd.f32 %v4706, 1.0
    %v4708 = vrcp.pop %v4707
    %v4709 = vmul.f32 %v4707, %v4708
    %v4710 = vsub.f32 1.0, %v4709
    %v4711 = vmul.f32 %v4708, %v4710
    %v4712 = vadd.f32 %v4708, %v4711
    %vm4713 = vweird.f32 %v4707
    %vm4714 = vweird.f32 %v4708
    %vm4715 = vmor %vm4713, %vm4714
    %v4716 = vsel %vm4715, %v4708, %v4712
    %v4717 = vand.u32 2147483647, %v4707
    %vm4718 = vcmp.eq.f32.partialorder %v4717, 8.507059e+37
    %v4719 = vand.u32 %v4707, 2147483648
    %v4720 = vor.u32 1.1754944e-38, %v4719
    %v4721 = vsel %vm4718, %v4720, %v4716
    %v4722 = vmul.f32 1.0, %v4721
    %v4723 = vtanh.pop %v4703
    %v4724 = vmul.f32 %v4722, %v4670
    %4726 = vrot.lane.b32.xlu0 %v4723, 32
    %v4727 = vpop.permute.xlu0 %4726
    %v4729 = vmul.f32 %v4722, %v4727
    %4731 = vrot.lane.b32.xlu0 %v4729, 32
    %v4732 = vpop.permute.xlu0 %4731
    %v4734 = vadd.f32 %v4724, %v4732
    %v4735 = vtanh.pop %v4734
    %4737 = vrot.lane.b32.xlu0 %v4735, 32
    %v4738 = vpop.permute.xlu0 %4737
    %v4740 = vmul.f32 %v4722, %v4738
    %v4741 = vld [vmem:[%s3770] sm:$0x3]
    %4743 = vrot.lane.b32.xlu0 %v4740, 64
    %v4744 = vpop.permute.xlu0 %4743
    %v4745 = vsel %vm947, %v4744, 0
    %4747 = vmatpush.msra.mxu0 0.0
    %4748 = vmatpush.msra.mxu0 0.0
    %4749 = vmatpush.msra.mxu0 0.0
    %4750 = vmatpush.msra.mxu0 0.0
    %4751 = vmatpush.msra.mxu0 0.0
    %4752 = vmatpush.msra.mxu0 0.0
    %4753 = vmatpush.msra.mxu0 0.0
    %4754 = vmatpush.msra.mxu0 0.0
    %4755 = vmatpush.msra.mxu0 0.0
    %4756 = vmatpush.msra.mxu0 0.0
    %4757 = vmatpush.msra.mxu0 0.0
    %4758 = vmatpush.msra.mxu0 0.0
    %4759 = vmatpush.msra.mxu0 %v3848
    %4760 = vmatpush.msra.mxu0 %v3847
    %4761 = vmatpush.msra.mxu0 %v3846
    %4762 = vmatpush.msra.mxu0 %v3845
    %4763 = vmatmul.f32.gmra.mxu0 %v4745
    %v4764 = vpop.f32.mrf.mxu0
    %v4765 = vadd.f32 0.0, %v4764
    %4766 = vdwg.mxu0
    %v4767 = vadd.f32 %v4741, %v4765
    %v4768 = vxor.u32 %v4767, 2147483648
    %v4769 = vmul.f32 %v4768, 1.442695
    %v4770 = vpow.pop %v4769
    %v4771 = vadd.f32 %v4770, 1.0
    %v4772 = vrcp.pop %v4771
    %v4773 = vmul.f32 %v4771, %v4772
    %v4774 = vsub.f32 1.0, %v4773
    %v4775 = vmul.f32 %v4772, %v4774
    %v4776 = vadd.f32 %v4772, %v4775
    %vm4777 = vweird.f32 %v4771
    %vm4778 = vweird.f32 %v4772
    %vm4779 = vmor %vm4777, %vm4778
    %v4780 = vsel %vm4779, %v4772, %v4776
    %v4781 = vand.u32 2147483647, %v4771
    %vm4782 = vcmp.eq.f32.partialorder %v4781, 8.507059e+37
    %v4783 = vand.u32 %v4771, 2147483648
    %v4784 = vor.u32 1.1754944e-38, %v4783
    %v4785 = vsel %vm4782, %v4784, %v4780
    %v4786 = vmul.f32 1.0, %v4785
    %v4787 = vtanh.pop %v4767
    %v4788 = vmul.f32 %v4786, %v4734
    %4790 = vrot.lane.b32.xlu0 %v4787, 32
    %v4791 = vpop.permute.xlu0 %4790
    %v4793 = vmul.f32 %v4786, %v4791
    %4795 = vrot.lane.b32.xlu0 %v4793, 32
    %v4796 = vpop.permute.xlu0 %4795
    %v4798 = vadd.f32 %v4788, %v4796
    %v4799 = vtanh.pop %v4798
    %4801 = vrot.lane.b32.xlu0 %v4799, 32
    %v4802 = vpop.permute.xlu0 %4801
    %v4804 = vmul.f32 %v4786, %v4802
    %v4805 = vld [vmem:[%s3774] sm:$0x3]
    %4807 = vrot.lane.b32.xlu0 %v4804, 64
    %v4808 = vpop.permute.xlu0 %4807
    %v4809 = vsel %vm947, %v4808, 0
    %4811 = vmatpush.msra.mxu0 0.0
    %4812 = vmatpush.msra.mxu0 0.0
    %4813 = vmatpush.msra.mxu0 0.0
    %4814 = vmatpush.msra.mxu0 0.0
    %4815 = vmatpush.msra.mxu0 0.0
    %4816 = vmatpush.msra.mxu0 0.0
    %4817 = vmatpush.msra.mxu0 0.0
    %4818 = vmatpush.msra.mxu0 0.0
    %4819 = vmatpush.msra.mxu0 0.0
    %4820 = vmatpush.msra.mxu0 0.0
    %4821 = vmatpush.msra.mxu0 0.0
    %4822 = vmatpush.msra.mxu0 0.0
    %4823 = vmatpush.msra.mxu0 %v3848
    %4824 = vmatpush.msra.mxu0 %v3847
    %4825 = vmatpush.msra.mxu0 %v3846
    %4826 = vmatpush.msra.mxu0 %v3845
    %4827 = vmatmul.f32.gmra.mxu0 %v4809
    %v4828 = vpop.f32.mrf.mxu0
    %v4829 = vadd.f32 0.0, %v4828
    %4830 = vdwg.mxu0
    %v4831 = vadd.f32 %v4805, %v4829
    %v4832 = vxor.u32 %v4831, 2147483648
    %v4833 = vmul.f32 %v4832, 1.442695
    %v4834 = vpow.pop %v4833
    %v4835 = vadd.f32 %v4834, 1.0
    %v4836 = vrcp.pop %v4835
    %v4837 = vmul.f32 %v4835, %v4836
    %v4838 = vsub.f32 1.0, %v4837
    %v4839 = vmul.f32 %v4836, %v4838
    %v4840 = vadd.f32 %v4836, %v4839
    %vm4841 = vweird.f32 %v4835
    %vm4842 = vweird.f32 %v4836
    %vm4843 = vmor %vm4841, %vm4842
    %v4844 = vsel %vm4843, %v4836, %v4840
    %v4845 = vand.u32 2147483647, %v4835
    %vm4846 = vcmp.eq.f32.partialorder %v4845, 8.507059e+37
    %v4847 = vand.u32 %v4835, 2147483648
    %v4848 = vor.u32 1.1754944e-38, %v4847
    %v4849 = vsel %vm4846, %v4848, %v4844
    %v4850 = vmul.f32 1.0, %v4849
    %v4851 = vtanh.pop %v4831
    %v4852 = vmul.f32 %v4850, %v4798
    %4854 = vrot.lane.b32.xlu0 %v4851, 32
    %v4855 = vpop.permute.xlu0 %4854
    %v4857 = vmul.f32 %v4850, %v4855
    %4859 = vrot.lane.b32.xlu0 %v4857, 32
    %v4860 = vpop.permute.xlu0 %4859
    %v4862 = vadd.f32 %v4852, %v4860
    %v4863 = vtanh.pop %v4862
    %4865 = vrot.lane.b32.xlu0 %v4863, 32
    %v4866 = vpop.permute.xlu0 %4865
    %v4868 = vmul.f32 %v4850, %v4866
    %4870 = vrot.lane.b32.xlu0 %v4868, 64
    %v4871 = vpop.permute.xlu0 %4870
    %4874 = vrot.lane.b32.xlu0 %v3843, 96
    %v4875 = vpop.permute.xlu0 %4874
    %v4877 = vsel %vm947, %v4871, %v4875
    %v4878 = vld [vmem:[%s20] sm:$0xff]
    %v4879 = vld [vmem:[%s20 + $0x8] sm:$0xff]
    %v4880 = vld [vmem:[%s20 + $0x10] sm:$0xff]
    %v4881 = vld [vmem:[%s20 + $0x18] sm:$0xff]
    %v4882 = vld [vmem:[%s20 + $0x20] sm:$0xff]
    %v4883 = vld [vmem:[%s20 + $0x28] sm:$0xff]
    %v4884 = vld [vmem:[%s20 + $0x30] sm:$0xff]
    %v4885 = vld [vmem:[%s20 + $0x38] sm:$0xff]
    %v4886 = vld [vmem:[%s21] sm:$0x1]
    %v4888 = vperm.slane %v4886, 0
    %v4891 = vsel %vm1516, %v4877, 0
    %4893 = vmatpush.msra.mxu0 0.0
    %4894 = vmatpush.msra.mxu0 0.0
    %4895 = vmatpush.msra.mxu0 0.0
    %4896 = vmatpush.msra.mxu0 0.0
    %4897 = vmatpush.msra.mxu0 0.0
    %4898 = vmatpush.msra.mxu0 0.0
    %4899 = vmatpush.msra.mxu0 0.0
    %4900 = vmatpush.msra.mxu0 0.0
    %4901 = vmatpush.msra.mxu0 %v4885
    %4902 = vmatpush.msra.mxu0 %v4884
    %4903 = vmatpush.msra.mxu0 %v4883
    %4904 = vmatpush.msra.mxu0 %v4882
    %4905 = vmatpush.msra.mxu0 %v4881
    %4906 = vmatpush.msra.mxu0 %v4880
    %4907 = vmatpush.msra.mxu0 %v4879
    %4908 = vmatpush.msra.mxu0 %v4878
    %4909 = vmatmul.f32.gmra.mxu0 %v4891
    %v4910 = vpop.f32.mrf.mxu0
    %v4911 = vadd.f32 %v4888, %v4910
    %4912 = vdwg.mxu0
    %v4913 = vmax.f32 %v4911, 0.0
    %vm4914 = vcmask 254976
    %v4915 = vsel %vm4914, %v4913, 0.0
    %4916 = vadd.xlane.f32.xlu0 %v4915
    %v4917 = vpop.xlane.xlu0 %4916
    %v4918 = vrcp.pop 32.0
    %v4919 = vmul.f32 32.0, %v4918
    %v4920 = vsub.f32 1.0, %v4919
    %v4921 = vmul.f32 %v4918, %v4920
    %v4922 = vadd.f32 %v4918, %v4921
    %vm4923 = vweird.f32 %v4918
    %v4924 = vsel %vm4923, %v4918, %v4922
    %v4925 = vmul.f32 %v4917, %v4924
    %v4926 = vsub.f32 %v4913, %v4925
    %v4927 = vmul.f32 %v4926, %v4926
    %v4928 = vsel %vm4914, %v4927, 0.0
    %4929 = vadd.xlane.f32.xlu0 %v4928
    %v4930 = vpop.xlane.xlu0 %4929
    %v4931 = vmul.f32 %v4930, %v4924
    %v4932 = vadd.f32 %v4931, 1e-05
    %v4933 = vrsqrt.pop %v4932
    %v4934 = vmul.f32 %v4933, %v4932
    %v4935 = vmul.f32 %v4934, %v4933
    %v4936 = vmul.f32 0.5, %v4935
    %v4937 = vsub.f32 1.5, %v4936
    %v4938 = vmul.f32 %v4933, %v4937
    %vm4939 = vweird.f32 %v4932
    %vm4940 = vweird.f32 %v4933
    %vm4941 = vmor %vm4939, %vm4940
    %v4942 = vsel %vm4941, %v4933, %v4938
    %v4943 = vmul.f32 %v4926, %v4942
    %v4944 = vld [vmem:[%s22] sm:$0x1]
    %v4946 = vperm.slane %v4944, 0
    %v4948 = vmul.f32 %v4943, %v4946
    %v4949 = vld [vmem:[%s23] sm:$0x1]
    %v4951 = vperm.slane %v4949, 0
    %v4953 = vadd.f32 %v4948, %v4951
    %v4954 = vld [vmem:[%s24] sm:$0xff]
    %v4955 = vld [vmem:[%s24 + $0x8] sm:$0xff]
    %v4956 = vld [vmem:[%s24 + $0x10] sm:$0xff]
    %v4957 = vld [vmem:[%s24 + $0x18] sm:$0xff]
    %v4958 = vld [vmem:[%s25] sm:$0x1]
    %v4960 = vperm.slane %v4958, 0
    %v4963 = vsel %vm947, %v4953, 0
    %4965 = vmatpush.msra.mxu0 0.0
    %4966 = vmatpush.msra.mxu0 0.0
    %4967 = vmatpush.msra.mxu0 0.0
    %4968 = vmatpush.msra.mxu0 0.0
    %4969 = vmatpush.msra.mxu0 0.0
    %4970 = vmatpush.msra.mxu0 0.0
    %4971 = vmatpush.msra.mxu0 0.0
    %4972 = vmatpush.msra.mxu0 0.0
    %4973 = vmatpush.msra.mxu0 0.0
    %4974 = vmatpush.msra.mxu0 0.0
    %4975 = vmatpush.msra.mxu0 0.0
    %4976 = vmatpush.msra.mxu0 0.0
    %4977 = vmatpush.msra.mxu0 %v4957
    %4978 = vmatpush.msra.mxu0 %v4956
    %4979 = vmatpush.msra.mxu0 %v4955
    %4980 = vmatpush.msra.mxu0 %v4954
    %4981 = vmatmul.f32.gmra.mxu0 %v4963
    %v4982 = vpop.f32.mrf.mxu0
    %v4983 = vadd.f32 %v4960, %v4982
    %4984 = vdwg.mxu0
    %vm4985 = vcmask 17408
    %4986 = vst.msk [vmem:[#allocation9] sm:$0x3] %vm4985, %v4983
    // Predicated region
    $region106: #{cnn_lstm_forward.1} parent=1 // pred_check
      _
    $region107: #{cnn_lstm_forward.1} parent=1 // pred_check_branch
      %4988 = sbr.rel (0) target = $region109
    $region108: #{cnn_lstm_forward.1} parent=1 // pred_region
      %4990 = vsyncadd [#allocation10], 0
      %s4992 = sshll.u32 [#allocation9], 4
      %s4993 = int_to_ptr.vmem [resolvable:$true] %s4992
      %s4994 = sshll.u32 %s26, 4
      %s4995 = int_to_ptr.hbm [resolvable:$true] %s4994
      %4997 = dma.vmem_to_hbm [thread:$0]  %s4993, 32, %s4995, [#allocation10]
    $region109: #{cnn_lstm_forward.1} parent=1 // pred_fallthru
      _
    // Predicated region
    $region110: #{cnn_lstm_forward.1} parent=1 // pred_check
      _
    $region111: #{cnn_lstm_forward.1} parent=1 // pred_check_branch
      %4999 = sbr.rel (0) target = $region113
    $region112: #{cnn_lstm_forward.1} parent=1 // pred_region
      %5001 = dma.done [#allocation10], 32
    $region113: #{cnn_lstm_forward.1} parent=1 // pred_fallthru
      _
    %5002 = vsyncpa [#allocation10], 1

</llo_original>
